<compile_context>
chip_gen: v6e
topology: v6e:2x2x1
jax: 0.10.0
libtpu: 0.0.40
codegen_flags: <defaults>
</compile_context>

<pallas_src>
import functools

import numpy as np
import jax
import jax.numpy as jnp
from jax import lax
from jax.experimental import pallas as pl
from jax.experimental.pallas import tpu as pltpu


def _round_up(v, m):
    return (v + m - 1) // m * m


# ---------------------------------------------------------------------------
# Fused Pallas kernel:
#   bilinear x2 upsample + replicate pad  ->  conv3x3 -> PReLU -> conv3x3 -> PReLU -> conv3x3
# ---------------------------------------------------------------------------
def _fused_kernel(rc_ref, x_ref, m_ref, w1_ref, w2_ref, w3_ref, alpha_ref,
                  o_ref, patches_ref, act_ref, *, Hp, Wp, Lp, Kin, Nb, CP):
    """One grid step = one group of Nb images concatenated on the lane axis.

    rc_ref      (2, Nb*Lp)    int32  [row ; col] of each flat padded position (-1 on pad)
    x_ref       (1, CP, Nb*Kin) f32  raw input images, spatial flattened onto lanes
    m_ref       (Kin, Lp)     bf16   fused (bilinear x2 upsample + replicate pad) operator
    w*_ref      (CP, 9*CP)    f32    conv weights, col = (dy*3+dx)*CP + cin
    alpha_ref   (1,)          f32    shared PReLU slope (SMEM)
    o_ref       (1, CP, Nb*Lp) f32   pixel (i,j) of image b lives at lane b*Lp + i*Wp + j
    patches_ref (9*CP, Nb*Lp) f32    reused im2col scratch
    act_ref     (CP, Nb*Lp)   f32    upsampled + replicate-padded activation
    """
    NbLp = Nb * Lp
    Ho, Wo = Hp - 2, Wp - 2
    alpha = alpha_ref[0]

    def shl(a, s):   # a'[:, p] = a[:, p + s]   (circular over Nb*Lp lanes)
        return pltpu.roll(a, NbLp - s, axis=1) if s else a

    def shr(a, s):   # a'[:, p] = a[:, p - s]
        return pltpu.roll(a, s, axis=1) if s else a

    def prelu(y):
        return jnp.where(y >= 0.0, y, alpha * y)

    def dot_patches(w_ref):
        # one (CP, 9*CP) @ (9*CP, Nb*Lp) MXU contraction per stage
        return jnp.dot(w_ref[...], patches_ref[...],
                       preferred_element_type=jnp.float32)

    # ---- fused bilinear x2 upsample + replicate pad: one bf16 matmul per image -------
    x_all = x_ref[0].astype(jnp.bfloat16)                       # (CP, Nb*Kin)
    for b in range(Nb):
        act_ref[:, b * Lp:(b + 1) * Lp] = jnp.dot(
            x_all[:, b * Kin:(b + 1) * Kin], m_ref[...],
            preferred_element_type=jnp.float32)                 # (CP, Lp)

    # ---- conv1: taps read straight off the replicate-padded image --------------------
    a0 = act_ref[...]                                           # (CP, Nb*Lp)
    for dy in range(3):
        for dx in range(3):
            t = dy * 3 + dx
            patches_ref[t * CP:(t + 1) * CP, :] = shl(a0, dy * Wp + dx)
    y = prelu(dot_patches(w1_ref))      # valid pixels now at flat p = i*Wp + j

    # ---- conv2 / conv3: replicate padding folded into tap generation -----------------
    def folded_stage(y, w_ref):
        # tap(dy,dx)[i*Wp+j] = y[clamp(i+dy-1,0,Ho-1), clamp(j+dx-1,0,Wo-1)]
        # built from 8 rolls + per-tap border selects; masks recomputed here at
        # (1, Nb*Lp) width and broadcast by jnp.where (short live ranges, no spills).
        row = rc_ref[0:1, :]
        col = rc_ref[1:2, :]
        m_t = row == 0
        m_b = row == (Ho - 1)
        for dx in range(3):
            if dx == 0:
                cc = jnp.where(col == 0, y, shr(y, 1))          # col j-1, clamp at j==0
            elif dx == 1:
                cc = y
            else:
                cc = jnp.where(col == (Wo - 1), y, shl(y, 1))   # col j+1, clamp at j==Wo-1
            patches_ref[(3 + dx) * CP:(4 + dx) * CP, :] = cc                          # dy=1
            patches_ref[dx * CP:(dx + 1) * CP, :] = jnp.where(m_t, cc, shr(cc, Wp))   # dy=0
            patches_ref[(6 + dx) * CP:(7 + dx) * CP, :] = jnp.where(m_b, cc, shl(cc, Wp))  # dy=2
        return dot_patches(w_ref)

    y = prelu(folded_stage(y, w2_ref))
    y = folded_stage(y, w3_ref)
    # full-CP lane-dense store (unmasked); wrapper slices the 3 RGB rows
    o_ref[0, :, :] = y


def _pallas_forward(rc, x_lanes, m_mat, w1m, w2m, w3m, alpha, *,
                    Hp, Wp, Lp, Kin, Nb, CP):
    Ng = x_lanes.shape[0]
    NbLp = Nb * Lp
    kernel = functools.partial(_fused_kernel, Hp=Hp, Wp=Wp, Lp=Lp, Kin=Kin,
                               Nb=Nb, CP=CP)
    return pl.pallas_call(
        kernel,
        out_shape=jax.ShapeDtypeStruct((Ng, CP, NbLp), jnp.float32),
        grid=(Ng,),
        in_specs=[
            pl.BlockSpec((2, NbLp), lambda g: (0, 0)),
            pl.BlockSpec((1, CP, Nb * Kin), lambda g: (g, 0, 0)),
            pl.BlockSpec((Kin, Lp), lambda g: (0, 0)),
            pl.BlockSpec((CP, 9 * CP), lambda g: (0, 0)),
            pl.BlockSpec((CP, 9 * CP), lambda g: (0, 0)),
            pl.BlockSpec((CP, 9 * CP), lambda g: (0, 0)),
            pl.BlockSpec(memory_space=pltpu.MemorySpace.SMEM),
        ],
        out_specs=pl.BlockSpec((1, CP, NbLp), lambda g: (g, 0, 0)),
        scratch_shapes=[
            pltpu.VMEM((9 * CP, NbLp), jnp.float32),   # reused im2col patches
            pltpu.VMEM((CP, NbLp), jnp.float32),       # upsampled + padded activation
        ],
        compiler_params=pltpu.CompilerParams(dimension_semantics=("parallel",)),
    )(rc, x_lanes, m_mat, w1m, w2m, w3m, alpha)


# ---------------------------------------------------------------------------
# Trace-time constants: fused upsample+pad operator and weight matrices
# ---------------------------------------------------------------------------
def _upsample_1d_matrix(n_in, scale):
    """1-D operator of F.interpolate(mode='bilinear', align_corners=False)."""
    n_out = n_in * scale
    A = np.zeros((n_out, n_in), np.float64)
    for d in range(n_out):
        src = max((d + 0.5) / scale - 0.5, 0.0)
        i0 = min(int(np.floor(src)), n_in - 1)
        i1 = min(i0 + 1, n_in - 1)
        w1 = src - i0
        A[d, i0] += 1.0 - w1
        A[d, i1] += w1
    return A


def _replicate_pad_rows(A):
    return np.concatenate([A[:1], A, A[-1:]], axis=0)


def _upsample_pad_matrix(H, W, scale, Kin, Lp):
    """(Kin, Lp) operator:  padded_upsampled[r*Wp+s] = sum_k x_flat[k] * M[k, r*Wp+s]."""
    Ar = _replicate_pad_rows(_upsample_1d_matrix(H, scale))     # (Hp, H)
    Bc = _replicate_pad_rows(_upsample_1d_matrix(W, scale))     # (Wp, W)
    Hp, Wp = Ar.shape[0], Bc.shape[0]
    M = np.einsum('ri,sj->ijrs', Ar, Bc).reshape(H * W, Hp * Wp)
    Mp = np.zeros((Kin, Lp), np.float32)
    Mp[:H * W, :Hp * Wp] = M
    # entries are products of {0, 0.25, 0.75, 1.0}: exact in bf16
    return jnp.asarray(Mp, dtype=jnp.bfloat16)


def _w_to_mat(w, ci_pad, co_pad):
    """PyTorch OIHW (cout, cin, 3, 3) -> (co_pad, 9*ci_pad), col=(dy*3+dx)*ci_pad+cin."""
    cout, cin = w.shape[0], w.shape[1]
    wt = jnp.transpose(w, (0, 2, 3, 1))                              # (cout, 3, 3, cin)
    wt = jnp.pad(wt, ((0, co_pad - cout), (0, 0), (0, 0), (0, ci_pad - cin)))
    return wt.reshape(co_pad, 9 * ci_pad).astype(jnp.float32)


# ---------------------------------------------------------------------------
# Parameters (deterministic, synthetic) + forward
# ---------------------------------------------------------------------------
def init_params(key, in_feat):
    n_feat = in_feat // 2
    k1, k2, k3 = jax.random.split(key, 3)

    def conv_w(k, cin, cout):
        return jax.random.normal(k, (cout, cin, 3, 3), jnp.float32) * 0.1

    return {
        "w1": conv_w(k1, in_feat, n_feat),
        "w2": conv_w(k2, n_feat, n_feat),
        "w3": conv_w(k3, n_feat, 3),
        # a single nn.PReLU() instance is shared by both activation slots in the spec
        "alpha": jnp.array([0.25], jnp.float32),
    }


def make_feat_2_img(x_nchw, params, *, upscale, batch_block=None):
    x_nchw = x_nchw.astype(jnp.float32)
    N, Cin, H, W = x_nchw.shape
    n_feat = params["w1"].shape[0]
    Ho, Wo = H * upscale, W * upscale
    Hp, Wp = Ho + 2, Wo + 2
    L = Hp * Wp
    Lp = _round_up(L, 128)
    Kin = _round_up(H * W, 128)
    CP = max(_round_up(Cin, 8), _round_up(n_feat, 8))

    # Batch blocking: Nb images share one grid step (lane-concatenated).
    # (On v7x prefer Nb <= ceil(N/2) so both TensorCores get a parallel step.)
    Nb = batch_block if batch_block is not None else max(1, min(N, 4))
    Ng = -(-N // Nb)
    Npad = Ng * Nb

    # Raw input only: spatial flattened onto lanes, Nb images per grid step (tiny op).
    xr = x_nchw.reshape(N, Cin, H * W)
    xr = jnp.pad(xr, ((0, Npad - N), (0, CP - Cin), (0, Kin - H * W)))
    xr = xr.reshape(Ng, Nb, CP, Kin).transpose(0, 2, 1, 3).reshape(Ng, CP, Nb * Kin)

    # trace-time constants
    m_mat = _upsample_pad_matrix(H, W, upscale, Kin, Lp)
    pos = np.arange(Lp, dtype=np.int32)
    row = np.where(pos < L, pos // Wp, -1).astype(np.int32)
    col = np.where(pos < L, pos % Wp, -1).astype(np.int32)
    rc = jnp.asarray(np.tile(np.stack([row, col], axis=0), (1, Nb)))

    w1m = _w_to_mat(params["w1"], CP, CP)
    w2m = _w_to_mat(params["w2"], CP, CP)
    w3m = _w_to_mat(params["w3"], CP, CP)

    out = _pallas_forward(rc, xr, m_mat, w1m, w2m, w3m, params["alpha"],
                          Hp=Hp, Wp=Wp, Lp=Lp, Kin=Kin, Nb=Nb, CP=CP)  # (Ng, CP, Nb*Lp)

    # pixel (i, j) of image b sits at lane b*Lp + i*Wp + j
    out = out.reshape(Ng, CP, Nb, Lp).transpose(0, 2, 1, 3).reshape(Npad, CP, Lp)
    return out[:N, :3, :L].reshape(N, 3, Hp, Wp)[:, :, :Ho, :Wo]


# ---------------------------------------------------------------------------
# Pure-JAX reference for correctness
# ---------------------------------------------------------------------------
def bilinear_upsample_nchw(x, scale):
    N, C, H, W = x.shape
    Ho, Wo = H * scale, W * scale

    def idx_w(out_size, in_size):
        d = jnp.arange(out_size, dtype=jnp.float32)
        src = (d + 0.5) / float(scale) - 0.5
        src = jnp.maximum(src, 0.0)
        i0 = jnp.minimum(jnp.floor(src).astype(jnp.int32), in_size - 1)
        i1 = jnp.minimum(i0 + 1, in_size - 1)
        w1 = src - i0.astype(jnp.float32)
        return i0, i1, 1.0 - w1, w1

    h0, h1, wh0, wh1 = idx_w(Ho, H)
    v0, v1, wv0, wv1 = idx_w(Wo, W)

    r0 = x[:, :, h0, :]
    r1 = x[:, :, h1, :]
    row0 = r0[:, :, :, v0] * wv0 + r0[:, :, :, v1] * wv1
    row1 = r1[:, :, :, v0] * wv0 + r1[:, :, :, v1] * wv1
    return row0 * wh0[:, None] + row1 * wh1[:, None]


def _ref_conv3x3(x_nchw, w_oihw, alpha, apply_act):
    xp = jnp.pad(x_nchw, ((0, 0), (0, 0), (1, 1), (1, 1)), mode="edge")
    y = lax.conv_general_dilated(xp, w_oihw, (1, 1), "VALID",
                                 dimension_numbers=("NCHW", "OIHW", "NCHW"),
                                 precision=lax.Precision.HIGHEST)
    if apply_act:
        y = jnp.where(y >= 0, y, alpha[0] * y)
    return y


def make_feat_2_img_ref(x_nchw, params, upscale):
    y = bilinear_upsample_nchw(x_nchw.astype(jnp.float32), upscale)
    y = _ref_conv3x3(y, params["w1"], params["alpha"], True)
    y = _ref_conv3x3(y, params["w2"], params["alpha"], True)
    y = _ref_conv3x3(y, params["w3"], params["alpha"], False)
    return y


if __name__ == "__main__":
    key = jax.random.PRNGKey(0)
    kx, kp = jax.random.split(key)

    N, in_feat, H, W, upscale = 2, 8, 16, 16, 2
    x = jax.random.normal(kx, (N, in_feat, H, W), jnp.float32)
    params = init_params(kp, in_feat)

    fwd = jax.jit(functools.partial(make_feat_2_img, upscale=upscale))
    out = jax.block_until_ready(fwd(x, params))
    assert out.shape == (N, 3, H * upscale, W * upscale), out.shape

    ref = jax.block_until_ready(make_feat_2_img_ref(x, params, upscale))
    # tolerance accounts for the bf16 MXU operands of the fused upsample matmul
    if not jnp.allclose(out, ref, atol=5e-3, rtol=5e-3):
        err = float(jnp.max(jnp.abs(out - ref)))
        raise AssertionError(f"Pallas output mismatches JAX reference (max err {err})")

    print("KERNEL_OK")
</pallas_src>

<mosaic_0001>
module attributes {stable_mosaic.version = 11 : i64} {
  func.func @_fused_kernel(%arg0: i32, %arg1: memref<2x2560xi32, #tpu.memory_space<vmem>>, %arg2: memref<1x8x512xf32, #tpu.memory_space<vmem>>, %arg3: memref<256x1280xbf16, #tpu.memory_space<vmem>>, %arg4: memref<8x72xf32, #tpu.memory_space<vmem>>, %arg5: memref<8x72xf32, #tpu.memory_space<vmem>>, %arg6: memref<8x72xf32, #tpu.memory_space<vmem>>, %arg7: memref<1xf32, #tpu.memory_space<smem>>, %arg8: memref<1x8x2560xf32, #tpu.memory_space<vmem>>, %arg9: memref<72x2560xf32, #tpu.memory_space<vmem>>, %arg10: memref<8x2560xf32, #tpu.memory_space<vmem>>) attributes {dimension_semantics = [#tpu.dimension_semantics<parallel>], iteration_bounds = array<i64: 1>, scalar_prefetch = 0 : i64, scratch_operands = 2 : i64, tpu.core_type = #tpu.core_type<tc>, window_params = [{pipeline_mode = #tpu.pipeline_mode<synchronous>, transform_indices = @transform_0, window_bounds = array<i64: 2, 2560>}, {transform_indices = @transform_1, window_bounds = array<i64: 1, 8, 512>}, {pipeline_mode = #tpu.pipeline_mode<synchronous>, transform_indices = @transform_2, window_bounds = array<i64: 256, 1280>}, {pipeline_mode = #tpu.pipeline_mode<synchronous>, transform_indices = @transform_3, window_bounds = array<i64: 8, 72>}, {pipeline_mode = #tpu.pipeline_mode<synchronous>, transform_indices = @transform_4, window_bounds = array<i64: 8, 72>}, {pipeline_mode = #tpu.pipeline_mode<synchronous>, transform_indices = @transform_5, window_bounds = array<i64: 8, 72>}, {transform_indices = @transform_6, window_bounds = array<i64: 1>}, {transform_indices = @transform_7, window_bounds = array<i64: 1, 8, 2560>}]} {
    %c0 = arith.constant 0 : index
    %0 = memref.load %arg7[%c0] : memref<1xf32, #tpu.memory_space<smem>>
    %c0_0 = arith.constant 0 : index
    %c0_1 = arith.constant 0 : index
    %c0_2 = arith.constant 0 : index
    %1 = vector.load %arg2[%c0_0, %c0_1, %c0_2] : memref<1x8x512xf32, #tpu.memory_space<vmem>>, vector<1x8x512xf32>
    %2 = vector.shape_cast %1 : vector<1x8x512xf32> to vector<8x512xf32>
    %3 = arith.truncf %2 : vector<8x512xf32> to vector<8x512xbf16>
    %4 = vector.extract_strided_slice %3 {offsets = [0, 0], sizes = [8, 256], strides = [1, 1]} : vector<8x512xbf16> to vector<8x256xbf16>
    %c0_3 = arith.constant 0 : index
    %c0_4 = arith.constant 0 : index
    %5 = vector.load %arg3[%c0_3, %c0_4] : memref<256x1280xbf16, #tpu.memory_space<vmem>>, vector<256x1280xbf16>
    %cst = arith.constant dense<0.000000e+00> : vector<8x1280xf32>
    %6 = tpu.matmul %4, %5, %cst {dimension_numbers = #tpu.dot_dimension_numbers<[1], [0], [0], [1], [0, 0, 1, 1], [], []>} : vector<8x256xbf16>, vector<256x1280xbf16>, vector<8x1280xf32> -> vector<8x1280xf32>
    %c0_5 = arith.constant 0 : index
    %c0_6 = arith.constant 0 : index
    %7 = vector.load %arg10[%c0_5, %c0_6] : memref<8x2560xf32, #tpu.memory_space<vmem>>, vector<8x1280xf32>
    tpu.vector_store %arg10[%c0_5, %c0_6], %6 {strides = array<i32>} : memref<8x2560xf32, #tpu.memory_space<vmem>>, vector<8x1280xf32>,
    %8 = vector.extract_strided_slice %3 {offsets = [0, 256], sizes = [8, 256], strides = [1, 1]} : vector<8x512xbf16> to vector<8x256xbf16>
    %c0_7 = arith.constant 0 : index
    %c0_8 = arith.constant 0 : index
    %9 = vector.load %arg3[%c0_7, %c0_8] : memref<256x1280xbf16, #tpu.memory_space<vmem>>, vector<256x1280xbf16>
    %cst_9 = arith.constant dense<0.000000e+00> : vector<8x1280xf32>
    %10 = tpu.matmul %8, %9, %cst_9 {dimension_numbers = #tpu.dot_dimension_numbers<[1], [0], [0], [1], [0, 0, 1, 1], [], []>} : vector<8x256xbf16>, vector<256x1280xbf16>, vector<8x1280xf32> -> vector<8x1280xf32>
    %c0_10 = arith.constant 0 : index
    %c1280 = arith.constant 1280 : index
    %11 = vector.load %arg10[%c0_10, %c1280] : memref<8x2560xf32, #tpu.memory_space<vmem>>, vector<8x1280xf32>
    tpu.vector_store %arg10[%c0_10, %c1280], %10 {strides = array<i32>} : memref<8x2560xf32, #tpu.memory_space<vmem>>, vector<8x1280xf32>,
    %c0_11 = arith.constant 0 : index
    %c0_12 = arith.constant 0 : index
    %12 = vector.load %arg10[%c0_11, %c0_12] : memref<8x2560xf32, #tpu.memory_space<vmem>>, vector<8x2560xf32>
    %c0_13 = arith.constant 0 : index
    %c0_14 = arith.constant 0 : index
    %13 = vector.load %arg9[%c0_13, %c0_14] : memref<72x2560xf32, #tpu.memory_space<vmem>>, vector<8x2560xf32>
    tpu.vector_store %arg9[%c0_13, %c0_14], %12 {strides = array<i32>} : memref<72x2560xf32, #tpu.memory_space<vmem>>, vector<8x2560xf32>,
    %c2559_i32 = arith.constant 2559 : i32
    %14 = tpu.dynamic_rotate %12 by %c2559_i32 dim 1 : vector<8x2560xf32>, i32 -> vector<8x2560xf32>
    %c8 = arith.constant 8 : index
    %c0_15 = arith.constant 0 : index
    %15 = vector.load %arg9[%c8, %c0_15] : memref<72x2560xf32, #tpu.memory_space<vmem>>, vector<8x2560xf32>
    tpu.vector_store %arg9[%c8, %c0_15], %14 {strides = array<i32>} : memref<72x2560xf32, #tpu.memory_space<vmem>>, vector<8x2560xf32>,
    %c2558_i32 = arith.constant 2558 : i32
    %16 = tpu.dynamic_rotate %12 by %c2558_i32 dim 1 : vector<8x2560xf32>, i32 -> vector<8x2560xf32>
    %c16 = arith.constant 16 : index
    %c0_16 = arith.constant 0 : index
    %17 = vector.load %arg9[%c16, %c0_16] : memref<72x2560xf32, #tpu.memory_space<vmem>>, vector<8x2560xf32>
    tpu.vector_store %arg9[%c16, %c0_16], %16 {strides = array<i32>} : memref<72x2560xf32, #tpu.memory_space<vmem>>, vector<8x2560xf32>,
    %c2526_i32 = arith.constant 2526 : i32
    %18 = tpu.dynamic_rotate %12 by %c2526_i32 dim 1 : vector<8x2560xf32>, i32 -> vector<8x2560xf32>
    %c24 = arith.constant 24 : index
    %c0_17 = arith.constant 0 : index
    %19 = vector.load %arg9[%c24, %c0_17] : memref<72x2560xf32, #tpu.memory_space<vmem>>, vector<8x2560xf32>
    tpu.vector_store %arg9[%c24, %c0_17], %18 {strides = array<i32>} : memref<72x2560xf32, #tpu.memory_space<vmem>>, vector<8x2560xf32>,
    %c2525_i32 = arith.constant 2525 : i32
    %20 = tpu.dynamic_rotate %12 by %c2525_i32 dim 1 : vector<8x2560xf32>, i32 -> vector<8x2560xf32>
    %c32 = arith.constant 32 : index
    %c0_18 = arith.constant 0 : index
    %21 = vector.load %arg9[%c32, %c0_18] : memref<72x2560xf32, #tpu.memory_space<vmem>>, vector<8x2560xf32>
    tpu.vector_store %arg9[%c32, %c0_18], %20 {strides = array<i32>} : memref<72x2560xf32, #tpu.memory_space<vmem>>, vector<8x2560xf32>,
    %c2524_i32 = arith.constant 2524 : i32
    %22 = tpu.dynamic_rotate %12 by %c2524_i32 dim 1 : vector<8x2560xf32>, i32 -> vector<8x2560xf32>
    %c40 = arith.constant 40 : index
    %c0_19 = arith.constant 0 : index
    %23 = vector.load %arg9[%c40, %c0_19] : memref<72x2560xf32, #tpu.memory_space<vmem>>, vector<8x2560xf32>
    tpu.vector_store %arg9[%c40, %c0_19], %22 {strides = array<i32>} : memref<72x2560xf32, #tpu.memory_space<vmem>>, vector<8x2560xf32>,
    %c2492_i32 = arith.constant 2492 : i32
    %24 = tpu.dynamic_rotate %12 by %c2492_i32 dim 1 : vector<8x2560xf32>, i32 -> vector<8x2560xf32>
    %c48 = arith.constant 48 : index
    %c0_20 = arith.constant 0 : index
    %25 = vector.load %arg9[%c48, %c0_20] : memref<72x2560xf32, #tpu.memory_space<vmem>>, vector<8x2560xf32>
    tpu.vector_store %arg9[%c48, %c0_20], %24 {strides = array<i32>} : memref<72x2560xf32, #tpu.memory_space<vmem>>, vector<8x2560xf32>,
    %c2491_i32 = arith.constant 2491 : i32
    %26 = tpu.dynamic_rotate %12 by %c2491_i32 dim 1 : vector<8x2560xf32>, i32 -> vector<8x2560xf32>
    %c56 = arith.constant 56 : index
    %c0_21 = arith.constant 0 : index
    %27 = vector.load %arg9[%c56, %c0_21] : memref<72x2560xf32, #tpu.memory_space<vmem>>, vector<8x2560xf32>
    tpu.vector_store %arg9[%c56, %c0_21], %26 {strides = array<i32>} : memref<72x2560xf32, #tpu.memory_space<vmem>>, vector<8x2560xf32>,
    %c2490_i32 = arith.constant 2490 : i32
    %28 = tpu.dynamic_rotate %12 by %c2490_i32 dim 1 : vector<8x2560xf32>, i32 -> vector<8x2560xf32>
    %c64 = arith.constant 64 : index
    %c0_22 = arith.constant 0 : index
    %29 = vector.load %arg9[%c64, %c0_22] : memref<72x2560xf32, #tpu.memory_space<vmem>>, vector<8x2560xf32>
    tpu.vector_store %arg9[%c64, %c0_22], %28 {strides = array<i32>} : memref<72x2560xf32, #tpu.memory_space<vmem>>, vector<8x2560xf32>,
    %c0_23 = arith.constant 0 : index
    %c0_24 = arith.constant 0 : index
    %30 = vector.load %arg4[%c0_23, %c0_24] : memref<8x72xf32, #tpu.memory_space<vmem>>, vector<8x72xf32>
    %c0_25 = arith.constant 0 : index
    %c0_26 = arith.constant 0 : index
    %31 = vector.load %arg9[%c0_25, %c0_26] : memref<72x2560xf32, #tpu.memory_space<vmem>>, vector<72x2560xf32>
    %cst_27 = arith.constant dense<0.000000e+00> : vector<8x2560xf32>
    %32 = tpu.matmul %30, %31, %cst_27 {dimension_numbers = #tpu.dot_dimension_numbers<[1], [0], [0], [1], [0, 0, 1, 1], [], []>} : vector<8x72xf32>, vector<72x2560xf32>, vector<8x2560xf32> -> vector<8x2560xf32>
    %cst_28 = arith.constant 0.000000e+00 : f32
    %33 = vector.broadcast %cst_28 : f32 to vector<8x2560xf32>
    %34 = arith.cmpf oge, %32, %33 : vector<8x2560xf32>
    %35 = vector.broadcast %0 : f32 to vector<8x2560xf32>
    %36 = arith.mulf %35, %32 : vector<8x2560xf32>
    %37 = arith.select %34, %32, %36 : vector<8x2560xi1>, vector<8x2560xf32>
    %c0_29 = arith.constant 0 : index
    %c0_30 = arith.constant 0 : index
    %38 = vector.load %arg1[%c0_29, %c0_30] : memref<2x2560xi32, #tpu.memory_space<vmem>>, vector<1x2560xi32>
    %c1 = arith.constant 1 : index
    %c0_31 = arith.constant 0 : index
    %39 = vector.load %arg1[%c1, %c0_31] : memref<2x2560xi32, #tpu.memory_space<vmem>>, vector<1x2560xi32>
    %c0_i32 = arith.constant 0 : i32
    %40 = vector.broadcast %c0_i32 : i32 to vector<1x2560xi32>
    %41 = arith.cmpi eq, %38, %40 : vector<1x2560xi32>
    %c31_i32 = arith.constant 31 : i32
    %42 = vector.broadcast %c31_i32 : i32 to vector<1x2560xi32>
    %43 = arith.cmpi eq, %38, %42 : vector<1x2560xi32>
    %c0_i32_32 = arith.constant 0 : i32
    %44 = vector.broadcast %c0_i32_32 : i32 to vector<1x2560xi32>
    %45 = arith.cmpi eq, %39, %44 : vector<1x2560xi32>
    %c1_i32 = arith.constant 1 : i32
    %46 = tpu.dynamic_rotate %37 by %c1_i32 dim 1 : vector<8x2560xf32>, i32 -> vector<8x2560xf32>
    %47 = vector.shape_cast %45 : vector<1x2560xi1> to vector<1x2560xi1>
    %48 = vector.broadcast %47 : vector<1x2560xi1> to vector<8x2560xi1>
    %49 = arith.select %48, %37, %46 : vector<8x2560xi1>, vector<8x2560xf32>
    %c24_33 = arith.constant 24 : index
    %c0_34 = arith.constant 0 : index
    %50 = vector.load %arg9[%c24_33, %c0_34] : memref<72x2560xf32, #tpu.memory_space<vmem>>, vector<8x2560xf32>
    tpu.vector_store %arg9[%c24_33, %c0_34], %49 {strides = array<i32>} : memref<72x2560xf32, #tpu.memory_space<vmem>>, vector<8x2560xf32>,
    %c34_i32 = arith.constant 34 : i32
    %51 = tpu.dynamic_rotate %49 by %c34_i32 dim 1 : vector<8x2560xf32>, i32 -> vector<8x2560xf32>
    %52 = vector.shape_cast %41 : vector<1x2560xi1> to vector<1x2560xi1>
    %53 = vector.broadcast %52 : vector<1x2560xi1> to vector<8x2560xi1>
    %54 = arith.select %53, %49, %51 : vector<8x2560xi1>, vector<8x2560xf32>
    %c0_35 = arith.constant 0 : index
    %c0_36 = arith.constant 0 : index
    %55 = vector.load %arg9[%c0_35, %c0_36] : memref<72x2560xf32, #tpu.memory_space<vmem>>, vector<8x2560xf32>
    tpu.vector_store %arg9[%c0_35, %c0_36], %54 {strides = array<i32>} : memref<72x2560xf32, #tpu.memory_space<vmem>>, vector<8x2560xf32>,
    %c2526_i32_37 = arith.constant 2526 : i32
    %56 = tpu.dynamic_rotate %49 by %c2526_i32_37 dim 1 : vector<8x2560xf32>, i32 -> vector<8x2560xf32>
    %57 = vector.shape_cast %43 : vector<1x2560xi1> to vector<1x2560xi1>
    %58 = vector.broadcast %57 : vector<1x2560xi1> to vector<8x2560xi1>
    %59 = arith.select %58, %49, %56 : vector<8x2560xi1>, vector<8x2560xf32>
    %c48_38 = arith.constant 48 : index
    %c0_39 = arith.constant 0 : index
    %60 = vector.load %arg9[%c48_38, %c0_39] : memref<72x2560xf32, #tpu.memory_space<vmem>>, vector<8x2560xf32>
    tpu.vector_store %arg9[%c48_38, %c0_39], %59 {strides = array<i32>} : memref<72x2560xf32, #tpu.memory_space<vmem>>, vector<8x2560xf32>,
    %c32_40 = arith.constant 32 : index
    %c0_41 = arith.constant 0 : index
    %61 = vector.load %arg9[%c32_40, %c0_41] : memref<72x2560xf32, #tpu.memory_space<vmem>>, vector<8x2560xf32>
    tpu.vector_store %arg9[%c32_40, %c0_41], %37 {strides = array<i32>} : memref<72x2560xf32, #tpu.memory_space<vmem>>, vector<8x2560xf32>,
    %c34_i32_42 = arith.constant 34 : i32
    %62 = tpu.dynamic_rotate %37 by %c34_i32_42 dim 1 : vector<8x2560xf32>, i32 -> vector<8x2560xf32>
    %63 = vector.shape_cast %41 : vector<1x2560xi1> to vector<1x2560xi1>
    %64 = vector.broadcast %63 : vector<1x2560xi1> to vector<8x2560xi1>
    %65 = arith.select %64, %37, %62 : vector<8x2560xi1>, vector<8x2560xf32>
    %c8_43 = arith.constant 8 : index
    %c0_44 = arith.constant 0 : index
    %66 = vector.load %arg9[%c8_43, %c0_44] : memref<72x2560xf32, #tpu.memory_space<vmem>>, vector<8x2560xf32>
    tpu.vector_store %arg9[%c8_43, %c0_44], %65 {strides = array<i32>} : memref<72x2560xf32, #tpu.memory_space<vmem>>, vector<8x2560xf32>,
    %c2526_i32_45 = arith.constant 2526 : i32
    %67 = tpu.dynamic_rotate %37 by %c2526_i32_45 dim 1 : vector<8x2560xf32>, i32 -> vector<8x2560xf32>
    %68 = vector.shape_cast %43 : vector<1x2560xi1> to vector<1x2560xi1>
    %69 = vector.broadcast %68 : vector<1x2560xi1> to vector<8x2560xi1>
    %70 = arith.select %69, %37, %67 : vector<8x2560xi1>, vector<8x2560xf32>
    %c56_46 = arith.constant 56 : index
    %c0_47 = arith.constant 0 : index
    %71 = vector.load %arg9[%c56_46, %c0_47] : memref<72x2560xf32, #tpu.memory_space<vmem>>, vector<8x2560xf32>
    tpu.vector_store %arg9[%c56_46, %c0_47], %70 {strides = array<i32>} : memref<72x2560xf32, #tpu.memory_space<vmem>>, vector<8x2560xf32>,
    %c31_i32_48 = arith.constant 31 : i32
    %72 = vector.broadcast %c31_i32_48 : i32 to vector<1x2560xi32>
    %73 = arith.cmpi eq, %39, %72 : vector<1x2560xi32>
    %c2559_i32_49 = arith.constant 2559 : i32
    %74 = tpu.dynamic_rotate %37 by %c2559_i32_49 dim 1 : vector<8x2560xf32>, i32 -> vector<8x2560xf32>
    %75 = vector.shape_cast %73 : vector<1x2560xi1> to vector<1x2560xi1>
    %76 = vector.broadcast %75 : vector<1x2560xi1> to vector<8x2560xi1>
    %77 = arith.select %76, %37, %74 : vector<8x2560xi1>, vector<8x2560xf32>
    %c40_50 = arith.constant 40 : index
    %c0_51 = arith.constant 0 : index
    %78 = vector.load %arg9[%c40_50, %c0_51] : memref<72x2560xf32, #tpu.memory_space<vmem>>, vector<8x2560xf32>
    tpu.vector_store %arg9[%c40_50, %c0_51], %77 {strides = array<i32>} : memref<72x2560xf32, #tpu.memory_space<vmem>>, vector<8x2560xf32>,
    %c34_i32_52 = arith.constant 34 : i32
    %79 = tpu.dynamic_rotate %77 by %c34_i32_52 dim 1 : vector<8x2560xf32>, i32 -> vector<8x2560xf32>
    %80 = vector.shape_cast %41 : vector<1x2560xi1> to vector<1x2560xi1>
    %81 = vector.broadcast %80 : vector<1x2560xi1> to vector<8x2560xi1>
    %82 = arith.select %81, %77, %79 : vector<8x2560xi1>, vector<8x2560xf32>
    %c16_53 = arith.constant 16 : index
    %c0_54 = arith.constant 0 : index
    %83 = vector.load %arg9[%c16_53, %c0_54] : memref<72x2560xf32, #tpu.memory_space<vmem>>, vector<8x2560xf32>
    tpu.vector_store %arg9[%c16_53, %c0_54], %82 {strides = array<i32>} : memref<72x2560xf32, #tpu.memory_space<vmem>>, vector<8x2560xf32>,
    %c2526_i32_55 = arith.constant 2526 : i32
    %84 = tpu.dynamic_rotate %77 by %c2526_i32_55 dim 1 : vector<8x2560xf32>, i32 -> vector<8x2560xf32>
    %85 = vector.shape_cast %43 : vector<1x2560xi1> to vector<1x2560xi1>
    %86 = vector.broadcast %85 : vector<1x2560xi1> to vector<8x2560xi1>
    %87 = arith.select %86, %77, %84 : vector<8x2560xi1>, vector<8x2560xf32>
    %c64_56 = arith.constant 64 : index
    %c0_57 = arith.constant 0 : index
    %88 = vector.load %arg9[%c64_56, %c0_57] : memref<72x2560xf32, #tpu.memory_space<vmem>>, vector<8x2560xf32>
    tpu.vector_store %arg9[%c64_56, %c0_57], %87 {strides = array<i32>} : memref<72x2560xf32, #tpu.memory_space<vmem>>, vector<8x2560xf32>,
    %c0_58 = arith.constant 0 : index
    %c0_59 = arith.constant 0 : index
    %89 = vector.load %arg5[%c0_58, %c0_59] : memref<8x72xf32, #tpu.memory_space<vmem>>, vector<8x72xf32>
    %c0_60 = arith.constant 0 : index
    %c0_61 = arith.constant 0 : index
    %90 = vector.load %arg9[%c0_60, %c0_61] : memref<72x2560xf32, #tpu.memory_space<vmem>>, vector<72x2560xf32>
    %cst_62 = arith.constant dense<0.000000e+00> : vector<8x2560xf32>
    %91 = tpu.matmul %89, %90, %cst_62 {dimension_numbers = #tpu.dot_dimension_numbers<[1], [0], [0], [1], [0, 0, 1, 1], [], []>} : vector<8x72xf32>, vector<72x2560xf32>, vector<8x2560xf32> -> vector<8x2560xf32>
    %cst_63 = arith.constant 0.000000e+00 : f32
    %92 = vector.broadcast %cst_63 : f32 to vector<8x2560xf32>
    %93 = arith.cmpf oge, %91, %92 : vector<8x2560xf32>
    %94 = vector.broadcast %0 : f32 to vector<8x2560xf32>
    %95 = arith.mulf %94, %91 : vector<8x2560xf32>
    %96 = arith.select %93, %91, %95 : vector<8x2560xi1>, vector<8x2560xf32>
    %c0_64 = arith.constant 0 : index
    %c0_65 = arith.constant 0 : index
    %97 = vector.load %arg1[%c0_64, %c0_65] : memref<2x2560xi32, #tpu.memory_space<vmem>>, vector<1x2560xi32>
    %c1_66 = arith.constant 1 : index
    %c0_67 = arith.constant 0 : index
    %98 = vector.load %arg1[%c1_66, %c0_67] : memref<2x2560xi32, #tpu.memory_space<vmem>>, vector<1x2560xi32>
    %c0_i32_68 = arith.constant 0 : i32
    %99 = vector.broadcast %c0_i32_68 : i32 to vector<1x2560xi32>
    %100 = arith.cmpi eq, %97, %99 : vector<1x2560xi32>
    %c31_i32_69 = arith.constant 31 : i32
    %101 = vector.broadcast %c31_i32_69 : i32 to vector<1x2560xi32>
    %102 = arith.cmpi eq, %97, %101 : vector<1x2560xi32>
    %c0_i32_70 = arith.constant 0 : i32
    %103 = vector.broadcast %c0_i32_70 : i32 to vector<1x2560xi32>
    %104 = arith.cmpi eq, %98, %103 : vector<1x2560xi32>
    %c1_i32_71 = arith.constant 1 : i32
    %105 = tpu.dynamic_rotate %96 by %c1_i32_71 dim 1 : vector<8x2560xf32>, i32 -> vector<8x2560xf32>
    %106 = vector.shape_cast %104 : vector<1x2560xi1> to vector<1x2560xi1>
    %107 = vector.broadcast %106 : vector<1x2560xi1> to vector<8x2560xi1>
    %108 = arith.select %107, %96, %105 : vector<8x2560xi1>, vector<8x2560xf32>
    %c24_72 = arith.constant 24 : index
    %c0_73 = arith.constant 0 : index
    %109 = vector.load %arg9[%c24_72, %c0_73] : memref<72x2560xf32, #tpu.memory_space<vmem>>, vector<8x2560xf32>
    tpu.vector_store %arg9[%c24_72, %c0_73], %108 {strides = array<i32>} : memref<72x2560xf32, #tpu.memory_space<vmem>>, vector<8x2560xf32>,
    %c34_i32_74 = arith.constant 34 : i32
    %110 = tpu.dynamic_rotate %108 by %c34_i32_74 dim 1 : vector<8x2560xf32>, i32 -> vector<8x2560xf32>
    %111 = vector.shape_cast %100 : vector<1x2560xi1> to vector<1x2560xi1>
    %112 = vector.broadcast %111 : vector<1x2560xi1> to vector<8x2560xi1>
    %113 = arith.select %112, %108, %110 : vector<8x2560xi1>, vector<8x2560xf32>
    %c0_75 = arith.constant 0 : index
    %c0_76 = arith.constant 0 : index
    %114 = vector.load %arg9[%c0_75, %c0_76] : memref<72x2560xf32, #tpu.memory_space<vmem>>, vector<8x2560xf32>
    tpu.vector_store %arg9[%c0_75, %c0_76], %113 {strides = array<i32>} : memref<72x2560xf32, #tpu.memory_space<vmem>>, vector<8x2560xf32>,
    %c2526_i32_77 = arith.constant 2526 : i32
    %115 = tpu.dynamic_rotate %108 by %c2526_i32_77 dim 1 : vector<8x2560xf32>, i32 -> vector<8x2560xf32>
    %116 = vector.shape_cast %102 : vector<1x2560xi1> to vector<1x2560xi1>
    %117 = vector.broadcast %116 : vector<1x2560xi1> to vector<8x2560xi1>
    %118 = arith.select %117, %108, %115 : vector<8x2560xi1>, vector<8x2560xf32>
    %c48_78 = arith.constant 48 : index
    %c0_79 = arith.constant 0 : index
    %119 = vector.load %arg9[%c48_78, %c0_79] : memref<72x2560xf32, #tpu.memory_space<vmem>>, vector<8x2560xf32>
    tpu.vector_store %arg9[%c48_78, %c0_79], %118 {strides = array<i32>} : memref<72x2560xf32, #tpu.memory_space<vmem>>, vector<8x2560xf32>,
    %c32_80 = arith.constant 32 : index
    %c0_81 = arith.constant 0 : index
    %120 = vector.load %arg9[%c32_80, %c0_81] : memref<72x2560xf32, #tpu.memory_space<vmem>>, vector<8x2560xf32>
    tpu.vector_store %arg9[%c32_80, %c0_81], %96 {strides = array<i32>} : memref<72x2560xf32, #tpu.memory_space<vmem>>, vector<8x2560xf32>,
    %c34_i32_82 = arith.constant 34 : i32
    %121 = tpu.dynamic_rotate %96 by %c34_i32_82 dim 1 : vector<8x2560xf32>, i32 -> vector<8x2560xf32>
    %122 = vector.shape_cast %100 : vector<1x2560xi1> to vector<1x2560xi1>
    %123 = vector.broadcast %122 : vector<1x2560xi1> to vector<8x2560xi1>
    %124 = arith.select %123, %96, %121 : vector<8x2560xi1>, vector<8x2560xf32>
    %c8_83 = arith.constant 8 : index
    %c0_84 = arith.constant 0 : index
    %125 = vector.load %arg9[%c8_83, %c0_84] : memref<72x2560xf32, #tpu.memory_space<vmem>>, vector<8x2560xf32>
    tpu.vector_store %arg9[%c8_83, %c0_84], %124 {strides = array<i32>} : memref<72x2560xf32, #tpu.memory_space<vmem>>, vector<8x2560xf32>,
    %c2526_i32_85 = arith.constant 2526 : i32
    %126 = tpu.dynamic_rotate %96 by %c2526_i32_85 dim 1 : vector<8x2560xf32>, i32 -> vector<8x2560xf32>
    %127 = vector.shape_cast %102 : vector<1x2560xi1> to vector<1x2560xi1>
    %128 = vector.broadcast %127 : vector<1x2560xi1> to vector<8x2560xi1>
    %129 = arith.select %128, %96, %126 : vector<8x2560xi1>, vector<8x2560xf32>
    %c56_86 = arith.constant 56 : index
    %c0_87 = arith.constant 0 : index
    %130 = vector.load %arg9[%c56_86, %c0_87] : memref<72x2560xf32, #tpu.memory_space<vmem>>, vector<8x2560xf32>
    tpu.vector_store %arg9[%c56_86, %c0_87], %129 {strides = array<i32>} : memref<72x2560xf32, #tpu.memory_space<vmem>>, vector<8x2560xf32>,
    %c31_i32_88 = arith.constant 31 : i32
    %131 = vector.broadcast %c31_i32_88 : i32 to vector<1x2560xi32>
    %132 = arith.cmpi eq, %98, %131 : vector<1x2560xi32>
    %c2559_i32_89 = arith.constant 2559 : i32
    %133 = tpu.dynamic_rotate %96 by %c2559_i32_89 dim 1 : vector<8x2560xf32>, i32 -> vector<8x2560xf32>
    %134 = vector.shape_cast %132 : vector<1x2560xi1> to vector<1x2560xi1>
    %135 = vector.broadcast %134 : vector<1x2560xi1> to vector<8x2560xi1>
    %136 = arith.select %135, %96, %133 : vector<8x2560xi1>, vector<8x2560xf32>
    %c40_90 = arith.constant 40 : index
    %c0_91 = arith.constant 0 : index
    %137 = vector.load %arg9[%c40_90, %c0_91] : memref<72x2560xf32, #tpu.memory_space<vmem>>, vector<8x2560xf32>
    tpu.vector_store %arg9[%c40_90, %c0_91], %136 {strides = array<i32>} : memref<72x2560xf32, #tpu.memory_space<vmem>>, vector<8x2560xf32>,
    %c34_i32_92 = arith.constant 34 : i32
    %138 = tpu.dynamic_rotate %136 by %c34_i32_92 dim 1 : vector<8x2560xf32>, i32 -> vector<8x2560xf32>
    %139 = vector.shape_cast %100 : vector<1x2560xi1> to vector<1x2560xi1>
    %140 = vector.broadcast %139 : vector<1x2560xi1> to vector<8x2560xi1>
    %141 = arith.select %140, %136, %138 : vector<8x2560xi1>, vector<8x2560xf32>
    %c16_93 = arith.constant 16 : index
    %c0_94 = arith.constant 0 : index
    %142 = vector.load %arg9[%c16_93, %c0_94] : memref<72x2560xf32, #tpu.memory_space<vmem>>, vector<8x2560xf32>
    tpu.vector_store %arg9[%c16_93, %c0_94], %141 {strides = array<i32>} : memref<72x2560xf32, #tpu.memory_space<vmem>>, vector<8x2560xf32>,
    %c2526_i32_95 = arith.constant 2526 : i32
    %143 = tpu.dynamic_rotate %136 by %c2526_i32_95 dim 1 : vector<8x2560xf32>, i32 -> vector<8x2560xf32>
    %144 = vector.shape_cast %102 : vector<1x2560xi1> to vector<1x2560xi1>
    %145 = vector.broadcast %144 : vector<1x2560xi1> to vector<8x2560xi1>
    %146 = arith.select %145, %136, %143 : vector<8x2560xi1>, vector<8x2560xf32>
    %c64_96 = arith.constant 64 : index
    %c0_97 = arith.constant 0 : index
    %147 = vector.load %arg9[%c64_96, %c0_97] : memref<72x2560xf32, #tpu.memory_space<vmem>>, vector<8x2560xf32>
    tpu.vector_store %arg9[%c64_96, %c0_97], %146 {strides = array<i32>} : memref<72x2560xf32, #tpu.memory_space<vmem>>, vector<8x2560xf32>,
    %c0_98 = arith.constant 0 : index
    %c0_99 = arith.constant 0 : index
    %148 = vector.load %arg6[%c0_98, %c0_99] : memref<8x72xf32, #tpu.memory_space<vmem>>, vector<8x72xf32>
    %c0_100 = arith.constant 0 : index
    %c0_101 = arith.constant 0 : index
    %149 = vector.load %arg9[%c0_100, %c0_101] : memref<72x2560xf32, #tpu.memory_space<vmem>>, vector<72x2560xf32>
    %cst_102 = arith.constant dense<0.000000e+00> : vector<8x2560xf32>
    %150 = tpu.matmul %148, %149, %cst_102 {dimension_numbers = #tpu.dot_dimension_numbers<[1], [0], [0], [1], [0, 0, 1, 1], [], []>} : vector<8x72xf32>, vector<72x2560xf32>, vector<8x2560xf32> -> vector<8x2560xf32>
    %c0_103 = arith.constant 0 : index
    %c0_104 = arith.constant 0 : index
    %c0_105 = arith.constant 0 : index
    %151 = vector.load %arg8[%c0_103, %c0_104, %c0_105] : memref<1x8x2560xf32, #tpu.memory_space<vmem>>, vector<1x8x2560xf32>
    %152 = vector.shape_cast %151 : vector<1x8x2560xf32> to vector<8x2560xf32>
    %153 = vector.shape_cast %150 : vector<8x2560xf32> to vector<1x8x2560xf32>
    tpu.vector_store %arg8[%c0_103, %c0_104, %c0_105], %153 {strides = array<i32>} : memref<1x8x2560xf32, #tpu.memory_space<vmem>>, vector<1x8x2560xf32>,
    return
  }
  func.func @transform_0(%arg0: i32) -> (i32, i32) {
    %c0_i32 = arith.constant 0 : i32
    %c0_i32_0 = arith.constant 0 : i32
    %c0_i32_1 = arith.constant 0 : i32
    return %c0_i32, %c0_i32_0 : i32, i32
  }
  func.func @transform_1(%arg0: i32) -> (i32, i32, i32) {
    %c0_i32 = arith.constant 0 : i32
    %c0_i32_0 = arith.constant 0 : i32
    %c0_i32_1 = arith.constant 0 : i32
    return %arg0, %c0_i32, %c0_i32_0 : i32, i32, i32
  }
  func.func @transform_2(%arg0: i32) -> (i32, i32) {
    %c0_i32 = arith.constant 0 : i32
    %c0_i32_0 = arith.constant 0 : i32
    %c0_i32_1 = arith.constant 0 : i32
    return %c0_i32, %c0_i32_0 : i32, i32
  }
  func.func @transform_3(%arg0: i32) -> (i32, i32) {
    %c0_i32 = arith.constant 0 : i32
    %c0_i32_0 = arith.constant 0 : i32
    %c0_i32_1 = arith.constant 0 : i32
    return %c0_i32, %c0_i32_0 : i32, i32
  }
  func.func @transform_4(%arg0: i32) -> (i32, i32) {
    %c0_i32 = arith.constant 0 : i32
    %c0_i32_0 = arith.constant 0 : i32
    %c0_i32_1 = arith.constant 0 : i32
    return %c0_i32, %c0_i32_0 : i32, i32
  }
  func.func @transform_5(%arg0: i32) -> (i32, i32) {
    %c0_i32 = arith.constant 0 : i32
    %c0_i32_0 = arith.constant 0 : i32
    %c0_i32_1 = arith.constant 0 : i32
    return %c0_i32, %c0_i32_0 : i32, i32
  }
  func.func @transform_6(%arg0: i32) -> i32 {
    %c0_i32 = arith.constant 0 : i32
    %c0_i32_0 = arith.constant 0 : i32
    return %c0_i32 : i32
  }
  func.func @transform_7(%arg0: i32) -> (i32, i32, i32) {
    %c0_i32 = arith.constant 0 : i32
    %c0_i32_0 = arith.constant 0 : i32
    %c0_i32_1 = arith.constant 0 : i32
    return %arg0, %c0_i32, %c0_i32_0 : i32, i32, i32
  }
}

</mosaic_0001>

<llo_original>
// kernel: make_feat_2_img.1
$region0: #{make_feat_2_img.1}
  #allocation0 [shape = 'u32[]', space=smem, size = 0x4, offset = 0x4, fixed_abs, tag = 'smem constant byte address 0x4 - core index']
  #allocation1 [shape = 'u32[144,128]{1,0:T(1,128)}', space=vmem, size = 0x12000, scoped, tag = 'internal scratch']
  #allocation2 [shape = 'f32[72,2560]{1,0:T(8,128)}', space=vmem, size = 0xb4000, scoped, tag = 'scratch operand']
  #allocation3 [shape = 'f32[8,2560]{1,0:T(8,128)}', space=vmem, size = 0x14000, scoped, tag = 'scratch operand']
  #allocation4 [shape = 'f32[1]{0:T(128)S(6)}', space=smem, size = 0x200, scoped, tag = 'scoped memory for make_feat_2_img.1']
  %s0 = inlined_call_operand.hbm [shape: s32[2,2560], index: 0, kind: input, shape index: {}]
  %s1 = inlined_call_operand.vmem [shape: f32[1,8,512], index: 1, kind: input, shape index: {}]
  %s2 = inlined_call_operand.vmem [shape: bf16[256,1280], index: 2, kind: input, shape index: {}]
  %s3 = inlined_call_operand.vmem [shape: f32[8,72], index: 3, kind: input, shape index: {}]
  %s4 = inlined_call_operand.vmem [shape: f32[8,72], index: 4, kind: input, shape index: {}]
  %s5 = inlined_call_operand.vmem [shape: f32[8,72], index: 5, kind: input, shape index: {}]
  %s6 = inlined_call_operand.<no memory space> [shape: f32[1], index: 6, kind: input, shape index: {}]
  %s7 = inlined_call_operand.vmem [shape: f32[1,8,2560], index: 7, kind: output, shape index: {}]
  %s8 = sld [smem:[#allocation0]]
  $region42: #{make_feat_2_img.1} parent=0
    _
  %s10 = ssub.s32 1, %s8
  %s11 = scalar_select 0, %s10, %s8
  %12 = sst [smem:[#allocation4]] %s6
  $region1: #{make_feat_2_img.1} parent=0
    #allocation5 [shape = 'u8[20480]{0}', space=vmem, size = 0x5000, scoped, tag = 'input window, operand 0, single buffered']
    #allocation6 [shape = 's32[1]{0}', space=sflag, size = 0x4, scoped, tag = 'scoped memory for make_feat_2_img.1']
    %13 = vsyncpa [#allocation6], 0
    // Predicated region
    $region2: #{make_feat_2_img.1} parent=1 // pred_check
      _
    $region3: #{make_feat_2_img.1} parent=1 // pred_check_branch
      %15 = sbr.rel (0) target = $region5
    $region4: #{make_feat_2_img.1} parent=1 // pred_region
      %s17 = ssub.s32 640, 640
      %18 = vsyncadd [#allocation6], %s17
      %s20 = sshll.u32 [#allocation5], 4
      %s21 = int_to_ptr.vmem [resolvable:$true] %s20
      %23 = dma.hbm_to_vmem [thread:$0]  %s0, 640, %s21, [#allocation6]
    $region5: #{make_feat_2_img.1} parent=1 // pred_fallthru
      _
    // Predicated region
    $region6: #{make_feat_2_img.1} parent=1 // pred_check
      _
    $region7: #{make_feat_2_img.1} parent=1 // pred_check_branch
      %25 = sbr.rel (0) target = $region9
    $region8: #{make_feat_2_img.1} parent=1 // pred_region
      _
    $region9: #{make_feat_2_img.1} parent=1 // pred_fallthru
      _
    // Predicated region
    $region10: #{make_feat_2_img.1} parent=1 // pred_check
      _
    $region11: #{make_feat_2_img.1} parent=1 // pred_check_branch
      %27 = sbr.rel (0) target = $region13
    $region12: #{make_feat_2_img.1} parent=1 // pred_region
      _
    $region13: #{make_feat_2_img.1} parent=1 // pred_fallthru
      _
    // Predicated region
    $region14: #{make_feat_2_img.1} parent=1 // pred_check
      _
    $region15: #{make_feat_2_img.1} parent=1 // pred_check_branch
      %29 = sbr.rel (0) target = $region17
    $region16: #{make_feat_2_img.1} parent=1 // pred_region
      _
    $region17: #{make_feat_2_img.1} parent=1 // pred_fallthru
      _
    // Predicated region
    $region18: #{make_feat_2_img.1} parent=1 // pred_check
      _
    $region19: #{make_feat_2_img.1} parent=1 // pred_check_branch
      %31 = sbr.rel (0) target = $region21
    $region20: #{make_feat_2_img.1} parent=1 // pred_region
      _
    $region21: #{make_feat_2_img.1} parent=1 // pred_fallthru
      _
    // Predicated region
    $region22: #{make_feat_2_img.1} parent=1 // pred_check
      _
    $region23: #{make_feat_2_img.1} parent=1 // pred_check_branch
      %33 = sbr.rel (0) target = $region25
    $region24: #{make_feat_2_img.1} parent=1 // pred_region
      _
    $region25: #{make_feat_2_img.1} parent=1 // pred_fallthru
      _
    // Predicated region
    $region26: #{make_feat_2_img.1} parent=1 // pred_check
      _
    $region27: #{make_feat_2_img.1} parent=1 // pred_check_branch
      %35 = sbr.rel (0) target = $region29
    $region28: #{make_feat_2_img.1} parent=1 // pred_region
      _
    $region29: #{make_feat_2_img.1} parent=1 // pred_fallthru
      _
    // Predicated region
    $region30: #{make_feat_2_img.1} parent=1 // pred_check
      _
    $region31: #{make_feat_2_img.1} parent=1 // pred_check_branch
      %37 = sbr.rel (0) target = $region33
    $region32: #{make_feat_2_img.1} parent=1 // pred_region
      %38 = dma.done [#allocation6], 640
    $region33: #{make_feat_2_img.1} parent=1 // pred_fallthru
      _
    %s39 = sld [smem:[#allocation4]]
    %v40 = vld [vmem:[%s1] sm:$0xff]
    %v41 = vld [vmem:[%s1 + $0x8] sm:$0xff]
    %v42 = vld [vmem:[%s1 + $0x10] sm:$0xff]
    %v43 = vld [vmem:[%s1 + $0x18] sm:$0xff]
    %v44 = vpack.c.bf16 %v40, %v40
    %v45 = vpack.c.bf16 %v41, %v41
    %v46 = vpack.c.bf16 %v42, %v42
    %v47 = vpack.c.bf16 %v43, %v43
    %v48 = vld [vmem:[%s2] sm:$0xff]
    %v49 = vld [vmem:[%s2 + $0x8] sm:$0xff]
    %v50 = vld [vmem:[%s2 + $0x10] sm:$0xff]
    %v51 = vld [vmem:[%s2 + $0x18] sm:$0xff]
    %v52 = vld [vmem:[%s2 + $0x20] sm:$0xff]
    %v53 = vld [vmem:[%s2 + $0x28] sm:$0xff]
    %v54 = vld [vmem:[%s2 + $0x30] sm:$0xff]
    %v55 = vld [vmem:[%s2 + $0x38] sm:$0xff]
    %v56 = vld [vmem:[%s2 + $0x40] sm:$0xff]
    %v57 = vld [vmem:[%s2 + $0x48] sm:$0xff]
    %v58 = vld [vmem:[%s2 + $0x50] sm:$0xff]
    %v59 = vld [vmem:[%s2 + $0x58] sm:$0xff]
    %v60 = vld [vmem:[%s2 + $0x60] sm:$0xff]
    %v61 = vld [vmem:[%s2 + $0x68] sm:$0xff]
    %v62 = vld [vmem:[%s2 + $0x70] sm:$0xff]
    %v63 = vld [vmem:[%s2 + $0x78] sm:$0xff]
    %v64 = vld [vmem:[%s2 + $0x80] sm:$0xff]
    %v65 = vld [vmem:[%s2 + $0x88] sm:$0xff]
    %v66 = vld [vmem:[%s2 + $0x90] sm:$0xff]
    %v67 = vld [vmem:[%s2 + $0x98] sm:$0xff]
    %v68 = vld [vmem:[%s2 + $0xa0] sm:$0xff]
    %v69 = vld [vmem:[%s2 + $0xa8] sm:$0xff]
    %v70 = vld [vmem:[%s2 + $0xb0] sm:$0xff]
    %v71 = vld [vmem:[%s2 + $0xb8] sm:$0xff]
    %v72 = vld [vmem:[%s2 + $0xc0] sm:$0xff]
    %v73 = vld [vmem:[%s2 + $0xc8] sm:$0xff]
    %v74 = vld [vmem:[%s2 + $0xd0] sm:$0xff]
    %v75 = vld [vmem:[%s2 + $0xd8] sm:$0xff]
    %v76 = vld [vmem:[%s2 + $0xe0] sm:$0xff]
    %v77 = vld [vmem:[%s2 + $0xe8] sm:$0xff]
    %v78 = vld [vmem:[%s2 + $0xf0] sm:$0xff]
    %v79 = vld [vmem:[%s2 + $0xf8] sm:$0xff]
    %v80 = vld [vmem:[%s2 + $0x100] sm:$0xff]
    %v81 = vld [vmem:[%s2 + $0x108] sm:$0xff]
    %v82 = vld [vmem:[%s2 + $0x110] sm:$0xff]
    %v83 = vld [vmem:[%s2 + $0x118] sm:$0xff]
    %v84 = vld [vmem:[%s2 + $0x120] sm:$0xff]
    %v85 = vld [vmem:[%s2 + $0x128] sm:$0xff]
    %v86 = vld [vmem:[%s2 + $0x130] sm:$0xff]
    %v87 = vld [vmem:[%s2 + $0x138] sm:$0xff]
    %v88 = vld [vmem:[%s2 + $0x140] sm:$0xff]
    %v89 = vld [vmem:[%s2 + $0x148] sm:$0xff]
    %v90 = vld [vmem:[%s2 + $0x150] sm:$0xff]
    %v91 = vld [vmem:[%s2 + $0x158] sm:$0xff]
    %v92 = vld [vmem:[%s2 + $0x160] sm:$0xff]
    %v93 = vld [vmem:[%s2 + $0x168] sm:$0xff]
    %v94 = vld [vmem:[%s2 + $0x170] sm:$0xff]
    %v95 = vld [vmem:[%s2 + $0x178] sm:$0xff]
    %v96 = vld [vmem:[%s2 + $0x180] sm:$0xff]
    %v97 = vld [vmem:[%s2 + $0x188] sm:$0xff]
    %v98 = vld [vmem:[%s2 + $0x190] sm:$0xff]
    %v99 = vld [vmem:[%s2 + $0x198] sm:$0xff]
    %v100 = vld [vmem:[%s2 + $0x1a0] sm:$0xff]
    %v101 = vld [vmem:[%s2 + $0x1a8] sm:$0xff]
    %v102 = vld [vmem:[%s2 + $0x1b0] sm:$0xff]
    %v103 = vld [vmem:[%s2 + $0x1b8] sm:$0xff]
    %v104 = vld [vmem:[%s2 + $0x1c0] sm:$0xff]
    %v105 = vld [vmem:[%s2 + $0x1c8] sm:$0xff]
    %v106 = vld [vmem:[%s2 + $0x1d0] sm:$0xff]
    %v107 = vld [vmem:[%s2 + $0x1d8] sm:$0xff]
    %v108 = vld [vmem:[%s2 + $0x1e0] sm:$0xff]
    %v109 = vld [vmem:[%s2 + $0x1e8] sm:$0xff]
    %v110 = vld [vmem:[%s2 + $0x1f0] sm:$0xff]
    %v111 = vld [vmem:[%s2 + $0x1f8] sm:$0xff]
    %v112 = vld [vmem:[%s2 + $0x200] sm:$0xff]
    %v113 = vld [vmem:[%s2 + $0x208] sm:$0xff]
    %v114 = vld [vmem:[%s2 + $0x210] sm:$0xff]
    %v115 = vld [vmem:[%s2 + $0x218] sm:$0xff]
    %v116 = vld [vmem:[%s2 + $0x220] sm:$0xff]
    %v117 = vld [vmem:[%s2 + $0x228] sm:$0xff]
    %v118 = vld [vmem:[%s2 + $0x230] sm:$0xff]
    %v119 = vld [vmem:[%s2 + $0x238] sm:$0xff]
    %v120 = vld [vmem:[%s2 + $0x240] sm:$0xff]
    %v121 = vld [vmem:[%s2 + $0x248] sm:$0xff]
    %v122 = vld [vmem:[%s2 + $0x250] sm:$0xff]
    %v123 = vld [vmem:[%s2 + $0x258] sm:$0xff]
    %v124 = vld [vmem:[%s2 + $0x260] sm:$0xff]
    %v125 = vld [vmem:[%s2 + $0x268] sm:$0xff]
    %v126 = vld [vmem:[%s2 + $0x270] sm:$0xff]
    %v127 = vld [vmem:[%s2 + $0x278] sm:$0xff]
    %v128 = vld [vmem:[%s2 + $0x280] sm:$0xff]
    %v129 = vld [vmem:[%s2 + $0x288] sm:$0xff]
    %v130 = vld [vmem:[%s2 + $0x290] sm:$0xff]
    %v131 = vld [vmem:[%s2 + $0x298] sm:$0xff]
    %v132 = vld [vmem:[%s2 + $0x2a0] sm:$0xff]
    %v133 = vld [vmem:[%s2 + $0x2a8] sm:$0xff]
    %v134 = vld [vmem:[%s2 + $0x2b0] sm:$0xff]
    %v135 = vld [vmem:[%s2 + $0x2b8] sm:$0xff]
    %v136 = vld [vmem:[%s2 + $0x2c0] sm:$0xff]
    %v137 = vld [vmem:[%s2 + $0x2c8] sm:$0xff]
    %v138 = vld [vmem:[%s2 + $0x2d0] sm:$0xff]
    %v139 = vld [vmem:[%s2 + $0x2d8] sm:$0xff]
    %v140 = vld [vmem:[%s2 + $0x2e0] sm:$0xff]
    %v141 = vld [vmem:[%s2 + $0x2e8] sm:$0xff]
    %v142 = vld [vmem:[%s2 + $0x2f0] sm:$0xff]
    %v143 = vld [vmem:[%s2 + $0x2f8] sm:$0xff]
    %v144 = vld [vmem:[%s2 + $0x300] sm:$0xff]
    %v145 = vld [vmem:[%s2 + $0x308] sm:$0xff]
    %v146 = vld [vmem:[%s2 + $0x310] sm:$0xff]
    %v147 = vld [vmem:[%s2 + $0x318] sm:$0xff]
    %v148 = vld [vmem:[%s2 + $0x320] sm:$0xff]
    %v149 = vld [vmem:[%s2 + $0x328] sm:$0xff]
    %v150 = vld [vmem:[%s2 + $0x330] sm:$0xff]
    %v151 = vld [vmem:[%s2 + $0x338] sm:$0xff]
    %v152 = vld [vmem:[%s2 + $0x340] sm:$0xff]
    %v153 = vld [vmem:[%s2 + $0x348] sm:$0xff]
    %v154 = vld [vmem:[%s2 + $0x350] sm:$0xff]
    %v155 = vld [vmem:[%s2 + $0x358] sm:$0xff]
    %v156 = vld [vmem:[%s2 + $0x360] sm:$0xff]
    %v157 = vld [vmem:[%s2 + $0x368] sm:$0xff]
    %v158 = vld [vmem:[%s2 + $0x370] sm:$0xff]
    %v159 = vld [vmem:[%s2 + $0x378] sm:$0xff]
    %v160 = vld [vmem:[%s2 + $0x380] sm:$0xff]
    %v161 = vld [vmem:[%s2 + $0x388] sm:$0xff]
    %v162 = vld [vmem:[%s2 + $0x390] sm:$0xff]
    %v163 = vld [vmem:[%s2 + $0x398] sm:$0xff]
    %v164 = vld [vmem:[%s2 + $0x3a0] sm:$0xff]
    %v165 = vld [vmem:[%s2 + $0x3a8] sm:$0xff]
    %v166 = vld [vmem:[%s2 + $0x3b0] sm:$0xff]
    %v167 = vld [vmem:[%s2 + $0x3b8] sm:$0xff]
    %v168 = vld [vmem:[%s2 + $0x3c0] sm:$0xff]
    %v169 = vld [vmem:[%s2 + $0x3c8] sm:$0xff]
    %v170 = vld [vmem:[%s2 + $0x3d0] sm:$0xff]
    %v171 = vld [vmem:[%s2 + $0x3d8] sm:$0xff]
    %v172 = vld [vmem:[%s2 + $0x3e0] sm:$0xff]
    %v173 = vld [vmem:[%s2 + $0x3e8] sm:$0xff]
    %v174 = vld [vmem:[%s2 + $0x3f0] sm:$0xff]
    %v175 = vld [vmem:[%s2 + $0x3f8] sm:$0xff]
    %v176 = vld [vmem:[%s2 + $0x400] sm:$0xff]
    %v177 = vld [vmem:[%s2 + $0x408] sm:$0xff]
    %v178 = vld [vmem:[%s2 + $0x410] sm:$0xff]
    %v179 = vld [vmem:[%s2 + $0x418] sm:$0xff]
    %v180 = vld [vmem:[%s2 + $0x420] sm:$0xff]
    %v181 = vld [vmem:[%s2 + $0x428] sm:$0xff]
    %v182 = vld [vmem:[%s2 + $0x430] sm:$0xff]
    %v183 = vld [vmem:[%s2 + $0x438] sm:$0xff]
    %v184 = vld [vmem:[%s2 + $0x440] sm:$0xff]
    %v185 = vld [vmem:[%s2 + $0x448] sm:$0xff]
    %v186 = vld [vmem:[%s2 + $0x450] sm:$0xff]
    %v187 = vld [vmem:[%s2 + $0x458] sm:$0xff]
    %v188 = vld [vmem:[%s2 + $0x460] sm:$0xff]
    %v189 = vld [vmem:[%s2 + $0x468] sm:$0xff]
    %v190 = vld [vmem:[%s2 + $0x470] sm:$0xff]
    %v191 = vld [vmem:[%s2 + $0x478] sm:$0xff]
    %v192 = vld [vmem:[%s2 + $0x480] sm:$0xff]
    %v193 = vld [vmem:[%s2 + $0x488] sm:$0xff]
    %v194 = vld [vmem:[%s2 + $0x490] sm:$0xff]
    %v195 = vld [vmem:[%s2 + $0x498] sm:$0xff]
    %v196 = vld [vmem:[%s2 + $0x4a0] sm:$0xff]
    %v197 = vld [vmem:[%s2 + $0x4a8] sm:$0xff]
    %v198 = vld [vmem:[%s2 + $0x4b0] sm:$0xff]
    %v199 = vld [vmem:[%s2 + $0x4b8] sm:$0xff]
    %v200 = vld [vmem:[%s2 + $0x4c0] sm:$0xff]
    %v201 = vld [vmem:[%s2 + $0x4c8] sm:$0xff]
    %v202 = vld [vmem:[%s2 + $0x4d0] sm:$0xff]
    %v203 = vld [vmem:[%s2 + $0x4d8] sm:$0xff]
    %v204 = vld [vmem:[%s2 + $0x4e0] sm:$0xff]
    %v205 = vld [vmem:[%s2 + $0x4e8] sm:$0xff]
    %v206 = vld [vmem:[%s2 + $0x4f0] sm:$0xff]
    %v207 = vld [vmem:[%s2 + $0x4f8] sm:$0xff]
    %v368 = vunpack.c.l.b16 %v48
    %v369 = vunpack.c.h.b16 %v48
    %v370 = vunpack.c.l.b16 %v49
    %v371 = vunpack.c.h.b16 %v49
    %v372 = vunpack.c.l.b16 %v50
    %v373 = vunpack.c.h.b16 %v50
    %v374 = vunpack.c.l.b16 %v51
    %v375 = vunpack.c.h.b16 %v51
    %v376 = vunpack.c.l.b16 %v52
    %v377 = vunpack.c.h.b16 %v52
    %v378 = vunpack.c.l.b16 %v53
    %v379 = vunpack.c.h.b16 %v53
    %v380 = vunpack.c.l.b16 %v54
    %v381 = vunpack.c.h.b16 %v54
    %v382 = vunpack.c.l.b16 %v55
    %v383 = vunpack.c.h.b16 %v55
    %v384 = vunpack.c.l.b16 %v56
    %v385 = vunpack.c.h.b16 %v56
    %v386 = vunpack.c.l.b16 %v57
    %v387 = vunpack.c.h.b16 %v57
    %v388 = vunpack.c.l.b16 %v58
    %v389 = vunpack.c.h.b16 %v58
    %v390 = vunpack.c.l.b16 %v59
    %v391 = vunpack.c.h.b16 %v59
    %v392 = vunpack.c.l.b16 %v60
    %v393 = vunpack.c.h.b16 %v60
    %v394 = vunpack.c.l.b16 %v61
    %v395 = vunpack.c.h.b16 %v61
    %v396 = vunpack.c.l.b16 %v62
    %v397 = vunpack.c.h.b16 %v62
    %v398 = vunpack.c.l.b16 %v63
    %v399 = vunpack.c.h.b16 %v63
    %v400 = vunpack.c.l.b16 %v64
    %v401 = vunpack.c.h.b16 %v64
    %v402 = vunpack.c.l.b16 %v65
    %v403 = vunpack.c.h.b16 %v65
    %v404 = vunpack.c.l.b16 %v66
    %v405 = vunpack.c.h.b16 %v66
    %v406 = vunpack.c.l.b16 %v67
    %v407 = vunpack.c.h.b16 %v67
    %v408 = vunpack.c.l.b16 %v68
    %v409 = vunpack.c.h.b16 %v68
    %v410 = vunpack.c.l.b16 %v69
    %v411 = vunpack.c.h.b16 %v69
    %v412 = vunpack.c.l.b16 %v70
    %v413 = vunpack.c.h.b16 %v70
    %v414 = vunpack.c.l.b16 %v71
    %v415 = vunpack.c.h.b16 %v71
    %v416 = vunpack.c.l.b16 %v72
    %v417 = vunpack.c.h.b16 %v72
    %v418 = vunpack.c.l.b16 %v73
    %v419 = vunpack.c.h.b16 %v73
    %v420 = vunpack.c.l.b16 %v74
    %v421 = vunpack.c.h.b16 %v74
    %v422 = vunpack.c.l.b16 %v75
    %v423 = vunpack.c.h.b16 %v75
    %v424 = vunpack.c.l.b16 %v76
    %v425 = vunpack.c.h.b16 %v76
    %v426 = vunpack.c.l.b16 %v77
    %v427 = vunpack.c.h.b16 %v77
    %v428 = vunpack.c.l.b16 %v78
    %v429 = vunpack.c.h.b16 %v78
    %v430 = vunpack.c.l.b16 %v79
    %v431 = vunpack.c.h.b16 %v79
    %v432 = vunpack.c.l.b16 %v80
    %v433 = vunpack.c.h.b16 %v80
    %v434 = vunpack.c.l.b16 %v81
    %v435 = vunpack.c.h.b16 %v81
    %v436 = vunpack.c.l.b16 %v82
    %v437 = vunpack.c.h.b16 %v82
    %v438 = vunpack.c.l.b16 %v83
    %v439 = vunpack.c.h.b16 %v83
    %v440 = vunpack.c.l.b16 %v84
    %v441 = vunpack.c.h.b16 %v84
    %v442 = vunpack.c.l.b16 %v85
    %v443 = vunpack.c.h.b16 %v85
    %v444 = vunpack.c.l.b16 %v86
    %v445 = vunpack.c.h.b16 %v86
    %v446 = vunpack.c.l.b16 %v87
    %v447 = vunpack.c.h.b16 %v87
    %v448 = vunpack.c.l.b16 %v88
    %v449 = vunpack.c.h.b16 %v88
    %v450 = vunpack.c.l.b16 %v89
    %v451 = vunpack.c.h.b16 %v89
    %v452 = vunpack.c.l.b16 %v90
    %v453 = vunpack.c.h.b16 %v90
    %v454 = vunpack.c.l.b16 %v91
    %v455 = vunpack.c.h.b16 %v91
    %v456 = vunpack.c.l.b16 %v92
    %v457 = vunpack.c.h.b16 %v92
    %v458 = vunpack.c.l.b16 %v93
    %v459 = vunpack.c.h.b16 %v93
    %v460 = vunpack.c.l.b16 %v94
    %v461 = vunpack.c.h.b16 %v94
    %v462 = vunpack.c.l.b16 %v95
    %v463 = vunpack.c.h.b16 %v95
    %v464 = vunpack.c.l.b16 %v96
    %v465 = vunpack.c.h.b16 %v96
    %v466 = vunpack.c.l.b16 %v97
    %v467 = vunpack.c.h.b16 %v97
    %v468 = vunpack.c.l.b16 %v98
    %v469 = vunpack.c.h.b16 %v98
    %v470 = vunpack.c.l.b16 %v99
    %v471 = vunpack.c.h.b16 %v99
    %v472 = vunpack.c.l.b16 %v100
    %v473 = vunpack.c.h.b16 %v100
    %v474 = vunpack.c.l.b16 %v101
    %v475 = vunpack.c.h.b16 %v101
    %v476 = vunpack.c.l.b16 %v102
    %v477 = vunpack.c.h.b16 %v102
    %v478 = vunpack.c.l.b16 %v103
    %v479 = vunpack.c.h.b16 %v103
    %v480 = vunpack.c.l.b16 %v104
    %v481 = vunpack.c.h.b16 %v104
    %v482 = vunpack.c.l.b16 %v105
    %v483 = vunpack.c.h.b16 %v105
    %v484 = vunpack.c.l.b16 %v106
    %v485 = vunpack.c.h.b16 %v106
    %v486 = vunpack.c.l.b16 %v107
    %v487 = vunpack.c.h.b16 %v107
    %v488 = vunpack.c.l.b16 %v108
    %v489 = vunpack.c.h.b16 %v108
    %v490 = vunpack.c.l.b16 %v109
    %v491 = vunpack.c.h.b16 %v109
    %v492 = vunpack.c.l.b16 %v110
    %v493 = vunpack.c.h.b16 %v110
    %v494 = vunpack.c.l.b16 %v111
    %v495 = vunpack.c.h.b16 %v111
    %v496 = vunpack.c.l.b16 %v112
    %v497 = vunpack.c.h.b16 %v112
    %v498 = vunpack.c.l.b16 %v113
    %v499 = vunpack.c.h.b16 %v113
    %v500 = vunpack.c.l.b16 %v114
    %v501 = vunpack.c.h.b16 %v114
    %v502 = vunpack.c.l.b16 %v115
    %v503 = vunpack.c.h.b16 %v115
    %v504 = vunpack.c.l.b16 %v116
    %v505 = vunpack.c.h.b16 %v116
    %v506 = vunpack.c.l.b16 %v117
    %v507 = vunpack.c.h.b16 %v117
    %v508 = vunpack.c.l.b16 %v118
    %v509 = vunpack.c.h.b16 %v118
    %v510 = vunpack.c.l.b16 %v119
    %v511 = vunpack.c.h.b16 %v119
    %v512 = vunpack.c.l.b16 %v120
    %v513 = vunpack.c.h.b16 %v120
    %v514 = vunpack.c.l.b16 %v121
    %v515 = vunpack.c.h.b16 %v121
    %v516 = vunpack.c.l.b16 %v122
    %v517 = vunpack.c.h.b16 %v122
    %v518 = vunpack.c.l.b16 %v123
    %v519 = vunpack.c.h.b16 %v123
    %v520 = vunpack.c.l.b16 %v124
    %v521 = vunpack.c.h.b16 %v124
    %v522 = vunpack.c.l.b16 %v125
    %v523 = vunpack.c.h.b16 %v125
    %v524 = vunpack.c.l.b16 %v126
    %v525 = vunpack.c.h.b16 %v126
    %v526 = vunpack.c.l.b16 %v127
    %v527 = vunpack.c.h.b16 %v127
    %v528 = vunpack.c.l.b16 %v128
    %v529 = vunpack.c.h.b16 %v128
    %v530 = vunpack.c.l.b16 %v129
    %v531 = vunpack.c.h.b16 %v129
    %v532 = vunpack.c.l.b16 %v130
    %v533 = vunpack.c.h.b16 %v130
    %v534 = vunpack.c.l.b16 %v131
    %v535 = vunpack.c.h.b16 %v131
    %v536 = vunpack.c.l.b16 %v132
    %v537 = vunpack.c.h.b16 %v132
    %v538 = vunpack.c.l.b16 %v133
    %v539 = vunpack.c.h.b16 %v133
    %v540 = vunpack.c.l.b16 %v134
    %v541 = vunpack.c.h.b16 %v134
    %v542 = vunpack.c.l.b16 %v135
    %v543 = vunpack.c.h.b16 %v135
    %v544 = vunpack.c.l.b16 %v136
    %v545 = vunpack.c.h.b16 %v136
    %v546 = vunpack.c.l.b16 %v137
    %v547 = vunpack.c.h.b16 %v137
    %v548 = vunpack.c.l.b16 %v138
    %v549 = vunpack.c.h.b16 %v138
    %v550 = vunpack.c.l.b16 %v139
    %v551 = vunpack.c.h.b16 %v139
    %v552 = vunpack.c.l.b16 %v140
    %v553 = vunpack.c.h.b16 %v140
    %v554 = vunpack.c.l.b16 %v141
    %v555 = vunpack.c.h.b16 %v141
    %v556 = vunpack.c.l.b16 %v142
    %v557 = vunpack.c.h.b16 %v142
    %v558 = vunpack.c.l.b16 %v143
    %v559 = vunpack.c.h.b16 %v143
    %v560 = vunpack.c.l.b16 %v144
    %v561 = vunpack.c.h.b16 %v144
    %v562 = vunpack.c.l.b16 %v145
    %v563 = vunpack.c.h.b16 %v145
    %v564 = vunpack.c.l.b16 %v146
    %v565 = vunpack.c.h.b16 %v146
    %v566 = vunpack.c.l.b16 %v147
    %v567 = vunpack.c.h.b16 %v147
    %v568 = vunpack.c.l.b16 %v148
    %v569 = vunpack.c.h.b16 %v148
    %v570 = vunpack.c.l.b16 %v149
    %v571 = vunpack.c.h.b16 %v149
    %v572 = vunpack.c.l.b16 %v150
    %v573 = vunpack.c.h.b16 %v150
    %v574 = vunpack.c.l.b16 %v151
    %v575 = vunpack.c.h.b16 %v151
    %v576 = vunpack.c.l.b16 %v152
    %v577 = vunpack.c.h.b16 %v152
    %v578 = vunpack.c.l.b16 %v153
    %v579 = vunpack.c.h.b16 %v153
    %v580 = vunpack.c.l.b16 %v154
    %v581 = vunpack.c.h.b16 %v154
    %v582 = vunpack.c.l.b16 %v155
    %v583 = vunpack.c.h.b16 %v155
    %v584 = vunpack.c.l.b16 %v156
    %v585 = vunpack.c.h.b16 %v156
    %v586 = vunpack.c.l.b16 %v157
    %v587 = vunpack.c.h.b16 %v157
    %v588 = vunpack.c.l.b16 %v158
    %v589 = vunpack.c.h.b16 %v158
    %v590 = vunpack.c.l.b16 %v159
    %v591 = vunpack.c.h.b16 %v159
    %v592 = vunpack.c.l.b16 %v160
    %v593 = vunpack.c.h.b16 %v160
    %v594 = vunpack.c.l.b16 %v161
    %v595 = vunpack.c.h.b16 %v161
    %v596 = vunpack.c.l.b16 %v162
    %v597 = vunpack.c.h.b16 %v162
    %v598 = vunpack.c.l.b16 %v163
    %v599 = vunpack.c.h.b16 %v163
    %v600 = vunpack.c.l.b16 %v164
    %v601 = vunpack.c.h.b16 %v164
    %v602 = vunpack.c.l.b16 %v165
    %v603 = vunpack.c.h.b16 %v165
    %v604 = vunpack.c.l.b16 %v166
    %v605 = vunpack.c.h.b16 %v166
    %v606 = vunpack.c.l.b16 %v167
    %v607 = vunpack.c.h.b16 %v167
    %v608 = vunpack.c.l.b16 %v168
    %v609 = vunpack.c.h.b16 %v168
    %v610 = vunpack.c.l.b16 %v169
    %v611 = vunpack.c.h.b16 %v169
    %v612 = vunpack.c.l.b16 %v170
    %v613 = vunpack.c.h.b16 %v170
    %v614 = vunpack.c.l.b16 %v171
    %v615 = vunpack.c.h.b16 %v171
    %v616 = vunpack.c.l.b16 %v172
    %v617 = vunpack.c.h.b16 %v172
    %v618 = vunpack.c.l.b16 %v173
    %v619 = vunpack.c.h.b16 %v173
    %v620 = vunpack.c.l.b16 %v174
    %v621 = vunpack.c.h.b16 %v174
    %v622 = vunpack.c.l.b16 %v175
    %v623 = vunpack.c.h.b16 %v175
    %v624 = vunpack.c.l.b16 %v176
    %v625 = vunpack.c.h.b16 %v176
    %v626 = vunpack.c.l.b16 %v177
    %v627 = vunpack.c.h.b16 %v177
    %v628 = vunpack.c.l.b16 %v178
    %v629 = vunpack.c.h.b16 %v178
    %v630 = vunpack.c.l.b16 %v179
    %v631 = vunpack.c.h.b16 %v179
    %v632 = vunpack.c.l.b16 %v180
    %v633 = vunpack.c.h.b16 %v180
    %v634 = vunpack.c.l.b16 %v181
    %v635 = vunpack.c.h.b16 %v181
    %v636 = vunpack.c.l.b16 %v182
    %v637 = vunpack.c.h.b16 %v182
    %v638 = vunpack.c.l.b16 %v183
    %v639 = vunpack.c.h.b16 %v183
    %v640 = vunpack.c.l.b16 %v184
    %v641 = vunpack.c.h.b16 %v184
    %v642 = vunpack.c.l.b16 %v185
    %v643 = vunpack.c.h.b16 %v185
    %v644 = vunpack.c.l.b16 %v186
    %v645 = vunpack.c.h.b16 %v186
    %v646 = vunpack.c.l.b16 %v187
    %v647 = vunpack.c.h.b16 %v187
    %v648 = vunpack.c.l.b16 %v188
    %v649 = vunpack.c.h.b16 %v188
    %v650 = vunpack.c.l.b16 %v189
    %v651 = vunpack.c.h.b16 %v189
    %v652 = vunpack.c.l.b16 %v190
    %v653 = vunpack.c.h.b16 %v190
    %v654 = vunpack.c.l.b16 %v191
    %v655 = vunpack.c.h.b16 %v191
    %v656 = vunpack.c.l.b16 %v192
    %v657 = vunpack.c.h.b16 %v192
    %v658 = vunpack.c.l.b16 %v193
    %v659 = vunpack.c.h.b16 %v193
    %v660 = vunpack.c.l.b16 %v194
    %v661 = vunpack.c.h.b16 %v194
    %v662 = vunpack.c.l.b16 %v195
    %v663 = vunpack.c.h.b16 %v195
    %v664 = vunpack.c.l.b16 %v196
    %v665 = vunpack.c.h.b16 %v196
    %v666 = vunpack.c.l.b16 %v197
    %v667 = vunpack.c.h.b16 %v197
    %v668 = vunpack.c.l.b16 %v198
    %v669 = vunpack.c.h.b16 %v198
    %v670 = vunpack.c.l.b16 %v199
    %v671 = vunpack.c.h.b16 %v199
    %v672 = vunpack.c.l.b16 %v200
    %v673 = vunpack.c.h.b16 %v200
    %v674 = vunpack.c.l.b16 %v201
    %v675 = vunpack.c.h.b16 %v201
    %v676 = vunpack.c.l.b16 %v202
    %v677 = vunpack.c.h.b16 %v202
    %v678 = vunpack.c.l.b16 %v203
    %v679 = vunpack.c.h.b16 %v203
    %v680 = vunpack.c.l.b16 %v204
    %v681 = vunpack.c.h.b16 %v204
    %v682 = vunpack.c.l.b16 %v205
    %v683 = vunpack.c.h.b16 %v205
    %v684 = vunpack.c.l.b16 %v206
    %v685 = vunpack.c.h.b16 %v206
    %v686 = vunpack.c.l.b16 %v207
    %v687 = vunpack.c.h.b16 %v207
    %v688 = vpack.c.b16 %v378, %v368
    %v689 = vpack.c.b16 %v379, %v369
    %v690 = vpack.c.b16 %v380, %v370
    %v691 = vpack.c.b16 %v381, %v371
    %v692 = vpack.c.b16 %v382, %v372
    %v693 = vpack.c.b16 %v383, %v373
    %v694 = vpack.c.b16 %v384, %v374
    %v695 = vpack.c.b16 %v385, %v375
    %v696 = vpack.c.b16 %v386, %v376
    %v697 = vpack.c.b16 %v387, %v377
    %v698 = vpack.c.b16 %v398, %v388
    %v699 = vpack.c.b16 %v399, %v389
    %v700 = vpack.c.b16 %v400, %v390
    %v701 = vpack.c.b16 %v401, %v391
    %v702 = vpack.c.b16 %v402, %v392
    %v703 = vpack.c.b16 %v403, %v393
    %v704 = vpack.c.b16 %v404, %v394
    %v705 = vpack.c.b16 %v405, %v395
    %v706 = vpack.c.b16 %v406, %v396
    %v707 = vpack.c.b16 %v407, %v397
    %v708 = vpack.c.b16 %v418, %v408
    %v709 = vpack.c.b16 %v419, %v409
    %v710 = vpack.c.b16 %v420, %v410
    %v711 = vpack.c.b16 %v421, %v411
    %v712 = vpack.c.b16 %v422, %v412
    %v713 = vpack.c.b16 %v423, %v413
    %v714 = vpack.c.b16 %v424, %v414
    %v715 = vpack.c.b16 %v425, %v415
    %v716 = vpack.c.b16 %v426, %v416
    %v717 = vpack.c.b16 %v427, %v417
    %v718 = vpack.c.b16 %v438, %v428
    %v719 = vpack.c.b16 %v439, %v429
    %v720 = vpack.c.b16 %v440, %v430
    %v721 = vpack.c.b16 %v441, %v431
    %v722 = vpack.c.b16 %v442, %v432
    %v723 = vpack.c.b16 %v443, %v433
    %v724 = vpack.c.b16 %v444, %v434
    %v725 = vpack.c.b16 %v445, %v435
    %v726 = vpack.c.b16 %v446, %v436
    %v727 = vpack.c.b16 %v447, %v437
    %v728 = vpack.c.b16 %v458, %v448
    %v729 = vpack.c.b16 %v459, %v449
    %v730 = vpack.c.b16 %v460, %v450
    %v731 = vpack.c.b16 %v461, %v451
    %v732 = vpack.c.b16 %v462, %v452
    %v733 = vpack.c.b16 %v463, %v453
    %v734 = vpack.c.b16 %v464, %v454
    %v735 = vpack.c.b16 %v465, %v455
    %v736 = vpack.c.b16 %v466, %v456
    %v737 = vpack.c.b16 %v467, %v457
    %v738 = vpack.c.b16 %v478, %v468
    %v739 = vpack.c.b16 %v479, %v469
    %v740 = vpack.c.b16 %v480, %v470
    %v741 = vpack.c.b16 %v481, %v471
    %v742 = vpack.c.b16 %v482, %v472
    %v743 = vpack.c.b16 %v483, %v473
    %v744 = vpack.c.b16 %v484, %v474
    %v745 = vpack.c.b16 %v485, %v475
    %v746 = vpack.c.b16 %v486, %v476
    %v747 = vpack.c.b16 %v487, %v477
    %v748 = vpack.c.b16 %v498, %v488
    %v749 = vpack.c.b16 %v499, %v489
    %v750 = vpack.c.b16 %v500, %v490
    %v751 = vpack.c.b16 %v501, %v491
    %v752 = vpack.c.b16 %v502, %v492
    %v753 = vpack.c.b16 %v503, %v493
    %v754 = vpack.c.b16 %v504, %v494
    %v755 = vpack.c.b16 %v505, %v495
    %v756 = vpack.c.b16 %v506, %v496
    %v757 = vpack.c.b16 %v507, %v497
    %v758 = vpack.c.b16 %v518, %v508
    %v759 = vpack.c.b16 %v519, %v509
    %v760 = vpack.c.b16 %v520, %v510
    %v761 = vpack.c.b16 %v521, %v511
    %v762 = vpack.c.b16 %v522, %v512
    %v763 = vpack.c.b16 %v523, %v513
    %v764 = vpack.c.b16 %v524, %v514
    %v765 = vpack.c.b16 %v525, %v515
    %v766 = vpack.c.b16 %v526, %v516
    %v767 = vpack.c.b16 %v527, %v517
    %v768 = vpack.c.b16 %v538, %v528
    %v769 = vpack.c.b16 %v539, %v529
    %v770 = vpack.c.b16 %v540, %v530
    %v771 = vpack.c.b16 %v541, %v531
    %v772 = vpack.c.b16 %v542, %v532
    %v773 = vpack.c.b16 %v543, %v533
    %v774 = vpack.c.b16 %v544, %v534
    %v775 = vpack.c.b16 %v545, %v535
    %v776 = vpack.c.b16 %v546, %v536
    %v777 = vpack.c.b16 %v547, %v537
    %v778 = vpack.c.b16 %v558, %v548
    %v779 = vpack.c.b16 %v559, %v549
    %v780 = vpack.c.b16 %v560, %v550
    %v781 = vpack.c.b16 %v561, %v551
    %v782 = vpack.c.b16 %v562, %v552
    %v783 = vpack.c.b16 %v563, %v553
    %v784 = vpack.c.b16 %v564, %v554
    %v785 = vpack.c.b16 %v565, %v555
    %v786 = vpack.c.b16 %v566, %v556
    %v787 = vpack.c.b16 %v567, %v557
    %v788 = vpack.c.b16 %v578, %v568
    %v789 = vpack.c.b16 %v579, %v569
    %v790 = vpack.c.b16 %v580, %v570
    %v791 = vpack.c.b16 %v581, %v571
    %v792 = vpack.c.b16 %v582, %v572
    %v793 = vpack.c.b16 %v583, %v573
    %v794 = vpack.c.b16 %v584, %v574
    %v795 = vpack.c.b16 %v585, %v575
    %v796 = vpack.c.b16 %v586, %v576
    %v797 = vpack.c.b16 %v587, %v577
    %v798 = vpack.c.b16 %v598, %v588
    %v799 = vpack.c.b16 %v599, %v589
    %v800 = vpack.c.b16 %v600, %v590
    %v801 = vpack.c.b16 %v601, %v591
    %v802 = vpack.c.b16 %v602, %v592
    %v803 = vpack.c.b16 %v603, %v593
    %v804 = vpack.c.b16 %v604, %v594
    %v805 = vpack.c.b16 %v605, %v595
    %v806 = vpack.c.b16 %v606, %v596
    %v807 = vpack.c.b16 %v607, %v597
    %v808 = vpack.c.b16 %v618, %v608
    %v809 = vpack.c.b16 %v619, %v609
    %v810 = vpack.c.b16 %v620, %v610
    %v811 = vpack.c.b16 %v621, %v611
    %v812 = vpack.c.b16 %v622, %v612
    %v813 = vpack.c.b16 %v623, %v613
    %v814 = vpack.c.b16 %v624, %v614
    %v815 = vpack.c.b16 %v625, %v615
    %v816 = vpack.c.b16 %v626, %v616
    %v817 = vpack.c.b16 %v627, %v617
    %v818 = vpack.c.b16 %v638, %v628
    %v819 = vpack.c.b16 %v639, %v629
    %v820 = vpack.c.b16 %v640, %v630
    %v821 = vpack.c.b16 %v641, %v631
    %v822 = vpack.c.b16 %v642, %v632
    %v823 = vpack.c.b16 %v643, %v633
    %v824 = vpack.c.b16 %v644, %v634
    %v825 = vpack.c.b16 %v645, %v635
    %v826 = vpack.c.b16 %v646, %v636
    %v827 = vpack.c.b16 %v647, %v637
    %v828 = vpack.c.b16 %v658, %v648
    %v829 = vpack.c.b16 %v659, %v649
    %v830 = vpack.c.b16 %v660, %v650
    %v831 = vpack.c.b16 %v661, %v651
    %v832 = vpack.c.b16 %v662, %v652
    %v833 = vpack.c.b16 %v663, %v653
    %v834 = vpack.c.b16 %v664, %v654
    %v835 = vpack.c.b16 %v665, %v655
    %v836 = vpack.c.b16 %v666, %v656
    %v837 = vpack.c.b16 %v667, %v657
    %v838 = vpack.c.b16 %v678, %v668
    %v839 = vpack.c.b16 %v679, %v669
    %v840 = vpack.c.b16 %v680, %v670
    %v841 = vpack.c.b16 %v681, %v671
    %v842 = vpack.c.b16 %v682, %v672
    %v843 = vpack.c.b16 %v683, %v673
    %v844 = vpack.c.b16 %v684, %v674
    %v845 = vpack.c.b16 %v685, %v675
    %v846 = vpack.c.b16 %v686, %v676
    %v847 = vpack.c.b16 %v687, %v677
    %1008 = vmatprep.subr.bf16.mxu0 %v759
    %1009 = vmatpush1.bf16.msra.mxu0 %v758
    %1010 = vmatprep.subr.bf16.mxu0 %v749
    %1011 = vmatpush1.bf16.msra.mxu0 %v748
    %1012 = vmatprep.subr.bf16.mxu0 %v739
    %1013 = vmatpush1.bf16.msra.mxu0 %v738
    %1014 = vmatprep.subr.bf16.mxu0 %v729
    %1015 = vmatpush1.bf16.msra.mxu0 %v728
    %1016 = vmatprep.subr.bf16.mxu0 %v719
    %1017 = vmatpush1.bf16.msra.mxu0 %v718
    %1018 = vmatprep.subr.bf16.mxu0 %v709
    %1019 = vmatpush1.bf16.msra.mxu0 %v708
    %1020 = vmatprep.subr.bf16.mxu0 %v699
    %1021 = vmatpush1.bf16.msra.mxu0 %v698
    %1022 = vmatprep.subr.bf16.mxu0 %v689
    %1023 = vmatpush1.bf16.msra.mxu0 %v688
    %1024 = vmatprep.subr.bf16.mxu0 %v839
    %1025 = vmatpush2.bf16.msra.mxu0 %v838
    %1026 = vmatprep.subr.bf16.mxu0 %v829
    %1027 = vmatpush2.bf16.msra.mxu0 %v828
    %1028 = vmatprep.subr.bf16.mxu0 %v819
    %1029 = vmatpush2.bf16.msra.mxu0 %v818
    %1030 = vmatprep.subr.bf16.mxu0 %v809
    %1031 = vmatpush2.bf16.msra.mxu0 %v808
    %1032 = vmatprep.subr.bf16.mxu0 %v799
    %1033 = vmatpush2.bf16.msra.mxu0 %v798
    %1034 = vmatprep.subr.bf16.mxu0 %v789
    %1035 = vmatpush2.bf16.msra.mxu0 %v788
    %1036 = vmatprep.subr.bf16.mxu0 %v779
    %1037 = vmatpush2.bf16.msra.mxu0 %v778
    %1038 = vmatprep.subr.bf16.mxu0 %v769
    %1039 = vmatpush2.bf16.msra.mxu0 %v768
    %1040 = vmatprep.mubr.bf16.mxu0 %v45
    %1041 = vmatmul.mubr.bf16.gmra.mxu0 %v44
    %v1042 = vpop.f32.mrf.mxu0
    %v1043 = vadd.f32 0.0, %v1042
    %v1044 = vpop.f32.mrf.mxu0
    %v1045 = vadd.f32 0.0, %v1044
    %v1046 = vpop.f32.mrf.mxu0
    %v1047 = vpop.f32.mrf.mxu0
    %1048 = vdwg.mxu0
    %1049 = vmatprep.subr.bf16.mxu0 %v761
    %1050 = vmatpush1.bf16.msra.mxu0 %v760
    %1051 = vmatprep.subr.bf16.mxu0 %v751
    %1052 = vmatpush1.bf16.msra.mxu0 %v750
    %1053 = vmatprep.subr.bf16.mxu0 %v741
    %1054 = vmatpush1.bf16.msra.mxu0 %v740
    %1055 = vmatprep.subr.bf16.mxu0 %v731
    %1056 = vmatpush1.bf16.msra.mxu0 %v730
    %1057 = vmatprep.subr.bf16.mxu0 %v721
    %1058 = vmatpush1.bf16.msra.mxu0 %v720
    %1059 = vmatprep.subr.bf16.mxu0 %v711
    %1060 = vmatpush1.bf16.msra.mxu0 %v710
    %1061 = vmatprep.subr.bf16.mxu0 %v701
    %1062 = vmatpush1.bf16.msra.mxu0 %v700
    %1063 = vmatprep.subr.bf16.mxu0 %v691
    %1064 = vmatpush1.bf16.msra.mxu0 %v690
    %1065 = vmatprep.subr.bf16.mxu0 %v841
    %1066 = vmatpush2.bf16.msra.mxu0 %v840
    %1067 = vmatprep.subr.bf16.mxu0 %v831
    %1068 = vmatpush2.bf16.msra.mxu0 %v830
    %1069 = vmatprep.subr.bf16.mxu0 %v821
    %1070 = vmatpush2.bf16.msra.mxu0 %v820
    %1071 = vmatprep.subr.bf16.mxu0 %v811
    %1072 = vmatpush2.bf16.msra.mxu0 %v810
    %1073 = vmatprep.subr.bf16.mxu0 %v801
    %1074 = vmatpush2.bf16.msra.mxu0 %v800
    %1075 = vmatprep.subr.bf16.mxu0 %v791
    %1076 = vmatpush2.bf16.msra.mxu0 %v790
    %1077 = vmatprep.subr.bf16.mxu0 %v781
    %1078 = vmatpush2.bf16.msra.mxu0 %v780
    %1079 = vmatprep.subr.bf16.mxu0 %v771
    %1080 = vmatpush2.bf16.msra.mxu0 %v770
    %1081 = vmatprep.mubr.bf16.mxu0 %v45
    %1082 = vmatmul.mubr.bf16.gmra.mxu0 %v44
    %v1083 = vpop.f32.mrf.mxu0
    %v1084 = vadd.f32 0.0, %v1083
    %v1085 = vpop.f32.mrf.mxu0
    %v1086 = vadd.f32 0.0, %v1085
    %v1087 = vpop.f32.mrf.mxu0
    %v1088 = vpop.f32.mrf.mxu0
    %1089 = vdwg.mxu0
    %1090 = vmatprep.subr.bf16.mxu0 %v763
    %1091 = vmatpush1.bf16.msra.mxu0 %v762
    %1092 = vmatprep.subr.bf16.mxu0 %v753
    %1093 = vmatpush1.bf16.msra.mxu0 %v752
    %1094 = vmatprep.subr.bf16.mxu0 %v743
    %1095 = vmatpush1.bf16.msra.mxu0 %v742
    %1096 = vmatprep.subr.bf16.mxu0 %v733
    %1097 = vmatpush1.bf16.msra.mxu0 %v732
    %1098 = vmatprep.subr.bf16.mxu0 %v723
    %1099 = vmatpush1.bf16.msra.mxu0 %v722
    %1100 = vmatprep.subr.bf16.mxu0 %v713
    %1101 = vmatpush1.bf16.msra.mxu0 %v712
    %1102 = vmatprep.subr.bf16.mxu0 %v703
    %1103 = vmatpush1.bf16.msra.mxu0 %v702
    %1104 = vmatprep.subr.bf16.mxu0 %v693
    %1105 = vmatpush1.bf16.msra.mxu0 %v692
    %1106 = vmatprep.subr.bf16.mxu0 %v843
    %1107 = vmatpush2.bf16.msra.mxu0 %v842
    %1108 = vmatprep.subr.bf16.mxu0 %v833
    %1109 = vmatpush2.bf16.msra.mxu0 %v832
    %1110 = vmatprep.subr.bf16.mxu0 %v823
    %1111 = vmatpush2.bf16.msra.mxu0 %v822
    %1112 = vmatprep.subr.bf16.mxu0 %v813
    %1113 = vmatpush2.bf16.msra.mxu0 %v812
    %1114 = vmatprep.subr.bf16.mxu0 %v803
    %1115 = vmatpush2.bf16.msra.mxu0 %v802
    %1116 = vmatprep.subr.bf16.mxu0 %v793
    %1117 = vmatpush2.bf16.msra.mxu0 %v792
    %1118 = vmatprep.subr.bf16.mxu0 %v783
    %1119 = vmatpush2.bf16.msra.mxu0 %v782
    %1120 = vmatprep.subr.bf16.mxu0 %v773
    %1121 = vmatpush2.bf16.msra.mxu0 %v772
    %1122 = vmatprep.mubr.bf16.mxu0 %v45
    %1123 = vmatmul.mubr.bf16.gmra.mxu0 %v44
    %v1124 = vpop.f32.mrf.mxu0
    %v1125 = vadd.f32 0.0, %v1124
    %v1126 = vpop.f32.mrf.mxu0
    %v1127 = vadd.f32 0.0, %v1126
    %v1128 = vpop.f32.mrf.mxu0
    %v1129 = vpop.f32.mrf.mxu0
    %1130 = vdwg.mxu0
    %1131 = vmatprep.subr.bf16.mxu0 %v765
    %1132 = vmatpush1.bf16.msra.mxu0 %v764
    %1133 = vmatprep.subr.bf16.mxu0 %v755
    %1134 = vmatpush1.bf16.msra.mxu0 %v754
    %1135 = vmatprep.subr.bf16.mxu0 %v745
    %1136 = vmatpush1.bf16.msra.mxu0 %v744
    %1137 = vmatprep.subr.bf16.mxu0 %v735
    %1138 = vmatpush1.bf16.msra.mxu0 %v734
    %1139 = vmatprep.subr.bf16.mxu0 %v725
    %1140 = vmatpush1.bf16.msra.mxu0 %v724
    %1141 = vmatprep.subr.bf16.mxu0 %v715
    %1142 = vmatpush1.bf16.msra.mxu0 %v714
    %1143 = vmatprep.subr.bf16.mxu0 %v705
    %1144 = vmatpush1.bf16.msra.mxu0 %v704
    %1145 = vmatprep.subr.bf16.mxu0 %v695
    %1146 = vmatpush1.bf16.msra.mxu0 %v694
    %1147 = vmatprep.subr.bf16.mxu0 %v845
    %1148 = vmatpush2.bf16.msra.mxu0 %v844
    %1149 = vmatprep.subr.bf16.mxu0 %v835
    %1150 = vmatpush2.bf16.msra.mxu0 %v834
    %1151 = vmatprep.subr.bf16.mxu0 %v825
    %1152 = vmatpush2.bf16.msra.mxu0 %v824
    %1153 = vmatprep.subr.bf16.mxu0 %v815
    %1154 = vmatpush2.bf16.msra.mxu0 %v814
    %1155 = vmatprep.subr.bf16.mxu0 %v805
    %1156 = vmatpush2.bf16.msra.mxu0 %v804
    %1157 = vmatprep.subr.bf16.mxu0 %v795
    %1158 = vmatpush2.bf16.msra.mxu0 %v794
    %1159 = vmatprep.subr.bf16.mxu0 %v785
    %1160 = vmatpush2.bf16.msra.mxu0 %v784
    %1161 = vmatprep.subr.bf16.mxu0 %v775
    %1162 = vmatpush2.bf16.msra.mxu0 %v774
    %1163 = vmatprep.mubr.bf16.mxu0 %v45
    %1164 = vmatmul.mubr.bf16.gmra.mxu0 %v44
    %v1165 = vpop.f32.mrf.mxu0
    %v1166 = vadd.f32 0.0, %v1165
    %v1167 = vpop.f32.mrf.mxu0
    %v1168 = vadd.f32 0.0, %v1167
    %v1169 = vpop.f32.mrf.mxu0
    %v1170 = vpop.f32.mrf.mxu0
    %1171 = vdwg.mxu0
    %1172 = vmatprep.subr.bf16.mxu0 %v767
    %1173 = vmatpush1.bf16.msra.mxu0 %v766
    %1174 = vmatprep.subr.bf16.mxu0 %v757
    %1175 = vmatpush1.bf16.msra.mxu0 %v756
    %1176 = vmatprep.subr.bf16.mxu0 %v747
    %1177 = vmatpush1.bf16.msra.mxu0 %v746
    %1178 = vmatprep.subr.bf16.mxu0 %v737
    %1179 = vmatpush1.bf16.msra.mxu0 %v736
    %1180 = vmatprep.subr.bf16.mxu0 %v727
    %1181 = vmatpush1.bf16.msra.mxu0 %v726
    %1182 = vmatprep.subr.bf16.mxu0 %v717
    %1183 = vmatpush1.bf16.msra.mxu0 %v716
    %1184 = vmatprep.subr.bf16.mxu0 %v707
    %1185 = vmatpush1.bf16.msra.mxu0 %v706
    %1186 = vmatprep.subr.bf16.mxu0 %v697
    %1187 = vmatpush1.bf16.msra.mxu0 %v696
    %1188 = vmatprep.subr.bf16.mxu0 %v847
    %1189 = vmatpush2.bf16.msra.mxu0 %v846
    %1190 = vmatprep.subr.bf16.mxu0 %v837
    %1191 = vmatpush2.bf16.msra.mxu0 %v836
    %1192 = vmatprep.subr.bf16.mxu0 %v827
    %1193 = vmatpush2.bf16.msra.mxu0 %v826
    %1194 = vmatprep.subr.bf16.mxu0 %v817
    %1195 = vmatpush2.bf16.msra.mxu0 %v816
    %1196 = vmatprep.subr.bf16.mxu0 %v807
    %1197 = vmatpush2.bf16.msra.mxu0 %v806
    %1198 = vmatprep.subr.bf16.mxu0 %v797
    %1199 = vmatpush2.bf16.msra.mxu0 %v796
    %1200 = vmatprep.subr.bf16.mxu0 %v787
    %1201 = vmatpush2.bf16.msra.mxu0 %v786
    %1202 = vmatprep.subr.bf16.mxu0 %v777
    %1203 = vmatpush2.bf16.msra.mxu0 %v776
    %1204 = vmatprep.mubr.bf16.mxu0 %v45
    %1205 = vmatmul.mubr.bf16.gmra.mxu0 %v44
    %v1206 = vpop.f32.mrf.mxu0
    %v1207 = vadd.f32 0.0, %v1206
    %v1208 = vpop.f32.mrf.mxu0
    %v1209 = vadd.f32 0.0, %v1208
    %v1210 = vpop.f32.mrf.mxu0
    %v1211 = vpop.f32.mrf.mxu0
    %1212 = vdwg.mxu0
    %1213 = vst [vmem:[#allocation3] sm:$0xff] %v1043
    %1214 = vst [vmem:[#allocation3 + $0x8] sm:$0xff] %v1045
    %1215 = vst [vmem:[#allocation3 + $0x10] sm:$0xff] %v1084
    %1216 = vst [vmem:[#allocation3 + $0x18] sm:$0xff] %v1086
    %1217 = vst [vmem:[#allocation3 + $0x20] sm:$0xff] %v1125
    %1218 = vst [vmem:[#allocation3 + $0x28] sm:$0xff] %v1127
    %1219 = vst [vmem:[#allocation3 + $0x30] sm:$0xff] %v1166
    %1220 = vst [vmem:[#allocation3 + $0x38] sm:$0xff] %v1168
    %1221 = vst [vmem:[#allocation3 + $0x40] sm:$0xff] %v1207
    %1222 = vst [vmem:[#allocation3 + $0x48] sm:$0xff] %v1209
    %v1223 = vld [vmem:[%s2] sm:$0xff]
    %v1224 = vld [vmem:[%s2 + $0x8] sm:$0xff]
    %v1225 = vld [vmem:[%s2 + $0x10] sm:$0xff]
    %v1226 = vld [vmem:[%s2 + $0x18] sm:$0xff]
    %v1227 = vld [vmem:[%s2 + $0x20] sm:$0xff]
    %v1228 = vld [vmem:[%s2 + $0x28] sm:$0xff]
    %v1229 = vld [vmem:[%s2 + $0x30] sm:$0xff]
    %v1230 = vld [vmem:[%s2 + $0x38] sm:$0xff]
    %v1231 = vld [vmem:[%s2 + $0x40] sm:$0xff]
    %v1232 = vld [vmem:[%s2 + $0x48] sm:$0xff]
    %v1233 = vld [vmem:[%s2 + $0x50] sm:$0xff]
    %v1234 = vld [vmem:[%s2 + $0x58] sm:$0xff]
    %v1235 = vld [vmem:[%s2 + $0x60] sm:$0xff]
    %v1236 = vld [vmem:[%s2 + $0x68] sm:$0xff]
    %v1237 = vld [vmem:[%s2 + $0x70] sm:$0xff]
    %v1238 = vld [vmem:[%s2 + $0x78] sm:$0xff]
    %v1239 = vld [vmem:[%s2 + $0x80] sm:$0xff]
    %v1240 = vld [vmem:[%s2 + $0x88] sm:$0xff]
    %v1241 = vld [vmem:[%s2 + $0x90] sm:$0xff]
    %v1242 = vld [vmem:[%s2 + $0x98] sm:$0xff]
    %v1243 = vld [vmem:[%s2 + $0xa0] sm:$0xff]
    %v1244 = vld [vmem:[%s2 + $0xa8] sm:$0xff]
    %v1245 = vld [vmem:[%s2 + $0xb0] sm:$0xff]
    %v1246 = vld [vmem:[%s2 + $0xb8] sm:$0xff]
    %v1247 = vld [vmem:[%s2 + $0xc0] sm:$0xff]
    %v1248 = vld [vmem:[%s2 + $0xc8] sm:$0xff]
    %v1249 = vld [vmem:[%s2 + $0xd0] sm:$0xff]
    %v1250 = vld [vmem:[%s2 + $0xd8] sm:$0xff]
    %v1251 = vld [vmem:[%s2 + $0xe0] sm:$0xff]
    %v1252 = vld [vmem:[%s2 + $0xe8] sm:$0xff]
    %v1253 = vld [vmem:[%s2 + $0xf0] sm:$0xff]
    %v1254 = vld [vmem:[%s2 + $0xf8] sm:$0xff]
    %v1255 = vld [vmem:[%s2 + $0x100] sm:$0xff]
    %v1256 = vld [vmem:[%s2 + $0x108] sm:$0xff]
    %v1257 = vld [vmem:[%s2 + $0x110] sm:$0xff]
    %v1258 = vld [vmem:[%s2 + $0x118] sm:$0xff]
    %v1259 = vld [vmem:[%s2 + $0x120] sm:$0xff]
    %v1260 = vld [vmem:[%s2 + $0x128] sm:$0xff]
    %v1261 = vld [vmem:[%s2 + $0x130] sm:$0xff]
    %v1262 = vld [vmem:[%s2 + $0x138] sm:$0xff]
    %v1263 = vld [vmem:[%s2 + $0x140] sm:$0xff]
    %v1264 = vld [vmem:[%s2 + $0x148] sm:$0xff]
    %v1265 = vld [vmem:[%s2 + $0x150] sm:$0xff]
    %v1266 = vld [vmem:[%s2 + $0x158] sm:$0xff]
    %v1267 = vld [vmem:[%s2 + $0x160] sm:$0xff]
    %v1268 = vld [vmem:[%s2 + $0x168] sm:$0xff]
    %v1269 = vld [vmem:[%s2 + $0x170] sm:$0xff]
    %v1270 = vld [vmem:[%s2 + $0x178] sm:$0xff]
    %v1271 = vld [vmem:[%s2 + $0x180] sm:$0xff]
    %v1272 = vld [vmem:[%s2 + $0x188] sm:$0xff]
    %v1273 = vld [vmem:[%s2 + $0x190] sm:$0xff]
    %v1274 = vld [vmem:[%s2 + $0x198] sm:$0xff]
    %v1275 = vld [vmem:[%s2 + $0x1a0] sm:$0xff]
    %v1276 = vld [vmem:[%s2 + $0x1a8] sm:$0xff]
    %v1277 = vld [vmem:[%s2 + $0x1b0] sm:$0xff]
    %v1278 = vld [vmem:[%s2 + $0x1b8] sm:$0xff]
    %v1279 = vld [vmem:[%s2 + $0x1c0] sm:$0xff]
    %v1280 = vld [vmem:[%s2 + $0x1c8] sm:$0xff]
    %v1281 = vld [vmem:[%s2 + $0x1d0] sm:$0xff]
    %v1282 = vld [vmem:[%s2 + $0x1d8] sm:$0xff]
    %v1283 = vld [vmem:[%s2 + $0x1e0] sm:$0xff]
    %v1284 = vld [vmem:[%s2 + $0x1e8] sm:$0xff]
    %v1285 = vld [vmem:[%s2 + $0x1f0] sm:$0xff]
    %v1286 = vld [vmem:[%s2 + $0x1f8] sm:$0xff]
    %v1287 = vld [vmem:[%s2 + $0x200] sm:$0xff]
    %v1288 = vld [vmem:[%s2 + $0x208] sm:$0xff]
    %v1289 = vld [vmem:[%s2 + $0x210] sm:$0xff]
    %v1290 = vld [vmem:[%s2 + $0x218] sm:$0xff]
    %v1291 = vld [vmem:[%s2 + $0x220] sm:$0xff]
    %v1292 = vld [vmem:[%s2 + $0x228] sm:$0xff]
    %v1293 = vld [vmem:[%s2 + $0x230] sm:$0xff]
    %v1294 = vld [vmem:[%s2 + $0x238] sm:$0xff]
    %v1295 = vld [vmem:[%s2 + $0x240] sm:$0xff]
    %v1296 = vld [vmem:[%s2 + $0x248] sm:$0xff]
    %v1297 = vld [vmem:[%s2 + $0x250] sm:$0xff]
    %v1298 = vld [vmem:[%s2 + $0x258] sm:$0xff]
    %v1299 = vld [vmem:[%s2 + $0x260] sm:$0xff]
    %v1300 = vld [vmem:[%s2 + $0x268] sm:$0xff]
    %v1301 = vld [vmem:[%s2 + $0x270] sm:$0xff]
    %v1302 = vld [vmem:[%s2 + $0x278] sm:$0xff]
    %v1303 = vld [vmem:[%s2 + $0x280] sm:$0xff]
    %v1304 = vld [vmem:[%s2 + $0x288] sm:$0xff]
    %v1305 = vld [vmem:[%s2 + $0x290] sm:$0xff]
    %v1306 = vld [vmem:[%s2 + $0x298] sm:$0xff]
    %v1307 = vld [vmem:[%s2 + $0x2a0] sm:$0xff]
    %v1308 = vld [vmem:[%s2 + $0x2a8] sm:$0xff]
    %v1309 = vld [vmem:[%s2 + $0x2b0] sm:$0xff]
    %v1310 = vld [vmem:[%s2 + $0x2b8] sm:$0xff]
    %v1311 = vld [vmem:[%s2 + $0x2c0] sm:$0xff]
    %v1312 = vld [vmem:[%s2 + $0x2c8] sm:$0xff]
    %v1313 = vld [vmem:[%s2 + $0x2d0] sm:$0xff]
    %v1314 = vld [vmem:[%s2 + $0x2d8] sm:$0xff]
    %v1315 = vld [vmem:[%s2 + $0x2e0] sm:$0xff]
    %v1316 = vld [vmem:[%s2 + $0x2e8] sm:$0xff]
    %v1317 = vld [vmem:[%s2 + $0x2f0] sm:$0xff]
    %v1318 = vld [vmem:[%s2 + $0x2f8] sm:$0xff]
    %v1319 = vld [vmem:[%s2 + $0x300] sm:$0xff]
    %v1320 = vld [vmem:[%s2 + $0x308] sm:$0xff]
    %v1321 = vld [vmem:[%s2 + $0x310] sm:$0xff]
    %v1322 = vld [vmem:[%s2 + $0x318] sm:$0xff]
    %v1323 = vld [vmem:[%s2 + $0x320] sm:$0xff]
    %v1324 = vld [vmem:[%s2 + $0x328] sm:$0xff]
    %v1325 = vld [vmem:[%s2 + $0x330] sm:$0xff]
    %v1326 = vld [vmem:[%s2 + $0x338] sm:$0xff]
    %v1327 = vld [vmem:[%s2 + $0x340] sm:$0xff]
    %v1328 = vld [vmem:[%s2 + $0x348] sm:$0xff]
    %v1329 = vld [vmem:[%s2 + $0x350] sm:$0xff]
    %v1330 = vld [vmem:[%s2 + $0x358] sm:$0xff]
    %v1331 = vld [vmem:[%s2 + $0x360] sm:$0xff]
    %v1332 = vld [vmem:[%s2 + $0x368] sm:$0xff]
    %v1333 = vld [vmem:[%s2 + $0x370] sm:$0xff]
    %v1334 = vld [vmem:[%s2 + $0x378] sm:$0xff]
    %v1335 = vld [vmem:[%s2 + $0x380] sm:$0xff]
    %v1336 = vld [vmem:[%s2 + $0x388] sm:$0xff]
    %v1337 = vld [vmem:[%s2 + $0x390] sm:$0xff]
    %v1338 = vld [vmem:[%s2 + $0x398] sm:$0xff]
    %v1339 = vld [vmem:[%s2 + $0x3a0] sm:$0xff]
    %v1340 = vld [vmem:[%s2 + $0x3a8] sm:$0xff]
    %v1341 = vld [vmem:[%s2 + $0x3b0] sm:$0xff]
    %v1342 = vld [vmem:[%s2 + $0x3b8] sm:$0xff]
    %v1343 = vld [vmem:[%s2 + $0x3c0] sm:$0xff]
    %v1344 = vld [vmem:[%s2 + $0x3c8] sm:$0xff]
    %v1345 = vld [vmem:[%s2 + $0x3d0] sm:$0xff]
    %v1346 = vld [vmem:[%s2 + $0x3d8] sm:$0xff]
    %v1347 = vld [vmem:[%s2 + $0x3e0] sm:$0xff]
    %v1348 = vld [vmem:[%s2 + $0x3e8] sm:$0xff]
    %v1349 = vld [vmem:[%s2 + $0x3f0] sm:$0xff]
    %v1350 = vld [vmem:[%s2 + $0x3f8] sm:$0xff]
    %v1351 = vld [vmem:[%s2 + $0x400] sm:$0xff]
    %v1352 = vld [vmem:[%s2 + $0x408] sm:$0xff]
    %v1353 = vld [vmem:[%s2 + $0x410] sm:$0xff]
    %v1354 = vld [vmem:[%s2 + $0x418] sm:$0xff]
    %v1355 = vld [vmem:[%s2 + $0x420] sm:$0xff]
    %v1356 = vld [vmem:[%s2 + $0x428] sm:$0xff]
    %v1357 = vld [vmem:[%s2 + $0x430] sm:$0xff]
    %v1358 = vld [vmem:[%s2 + $0x438] sm:$0xff]
    %v1359 = vld [vmem:[%s2 + $0x440] sm:$0xff]
    %v1360 = vld [vmem:[%s2 + $0x448] sm:$0xff]
    %v1361 = vld [vmem:[%s2 + $0x450] sm:$0xff]
    %v1362 = vld [vmem:[%s2 + $0x458] sm:$0xff]
    %v1363 = vld [vmem:[%s2 + $0x460] sm:$0xff]
    %v1364 = vld [vmem:[%s2 + $0x468] sm:$0xff]
    %v1365 = vld [vmem:[%s2 + $0x470] sm:$0xff]
    %v1366 = vld [vmem:[%s2 + $0x478] sm:$0xff]
    %v1367 = vld [vmem:[%s2 + $0x480] sm:$0xff]
    %v1368 = vld [vmem:[%s2 + $0x488] sm:$0xff]
    %v1369 = vld [vmem:[%s2 + $0x490] sm:$0xff]
    %v1370 = vld [vmem:[%s2 + $0x498] sm:$0xff]
    %v1371 = vld [vmem:[%s2 + $0x4a0] sm:$0xff]
    %v1372 = vld [vmem:[%s2 + $0x4a8] sm:$0xff]
    %v1373 = vld [vmem:[%s2 + $0x4b0] sm:$0xff]
    %v1374 = vld [vmem:[%s2 + $0x4b8] sm:$0xff]
    %v1375 = vld [vmem:[%s2 + $0x4c0] sm:$0xff]
    %v1376 = vld [vmem:[%s2 + $0x4c8] sm:$0xff]
    %v1377 = vld [vmem:[%s2 + $0x4d0] sm:$0xff]
    %v1378 = vld [vmem:[%s2 + $0x4d8] sm:$0xff]
    %v1379 = vld [vmem:[%s2 + $0x4e0] sm:$0xff]
    %v1380 = vld [vmem:[%s2 + $0x4e8] sm:$0xff]
    %v1381 = vld [vmem:[%s2 + $0x4f0] sm:$0xff]
    %v1382 = vld [vmem:[%s2 + $0x4f8] sm:$0xff]
    %v1543 = vunpack.c.l.b16 %v1223
    %v1544 = vunpack.c.h.b16 %v1223
    %v1545 = vunpack.c.l.b16 %v1224
    %v1546 = vunpack.c.h.b16 %v1224
    %v1547 = vunpack.c.l.b16 %v1225
    %v1548 = vunpack.c.h.b16 %v1225
    %v1549 = vunpack.c.l.b16 %v1226
    %v1550 = vunpack.c.h.b16 %v1226
    %v1551 = vunpack.c.l.b16 %v1227
    %v1552 = vunpack.c.h.b16 %v1227
    %v1553 = vunpack.c.l.b16 %v1228
    %v1554 = vunpack.c.h.b16 %v1228
    %v1555 = vunpack.c.l.b16 %v1229
    %v1556 = vunpack.c.h.b16 %v1229
    %v1557 = vunpack.c.l.b16 %v1230
    %v1558 = vunpack.c.h.b16 %v1230
    %v1559 = vunpack.c.l.b16 %v1231
    %v1560 = vunpack.c.h.b16 %v1231
    %v1561 = vunpack.c.l.b16 %v1232
    %v1562 = vunpack.c.h.b16 %v1232
    %v1563 = vunpack.c.l.b16 %v1233
    %v1564 = vunpack.c.h.b16 %v1233
    %v1565 = vunpack.c.l.b16 %v1234
    %v1566 = vunpack.c.h.b16 %v1234
    %v1567 = vunpack.c.l.b16 %v1235
    %v1568 = vunpack.c.h.b16 %v1235
    %v1569 = vunpack.c.l.b16 %v1236
    %v1570 = vunpack.c.h.b16 %v1236
    %v1571 = vunpack.c.l.b16 %v1237
    %v1572 = vunpack.c.h.b16 %v1237
    %v1573 = vunpack.c.l.b16 %v1238
    %v1574 = vunpack.c.h.b16 %v1238
    %v1575 = vunpack.c.l.b16 %v1239
    %v1576 = vunpack.c.h.b16 %v1239
    %v1577 = vunpack.c.l.b16 %v1240
    %v1578 = vunpack.c.h.b16 %v1240
    %v1579 = vunpack.c.l.b16 %v1241
    %v1580 = vunpack.c.h.b16 %v1241
    %v1581 = vunpack.c.l.b16 %v1242
    %v1582 = vunpack.c.h.b16 %v1242
    %v1583 = vunpack.c.l.b16 %v1243
    %v1584 = vunpack.c.h.b16 %v1243
    %v1585 = vunpack.c.l.b16 %v1244
    %v1586 = vunpack.c.h.b16 %v1244
    %v1587 = vunpack.c.l.b16 %v1245
    %v1588 = vunpack.c.h.b16 %v1245
    %v1589 = vunpack.c.l.b16 %v1246
    %v1590 = vunpack.c.h.b16 %v1246
    %v1591 = vunpack.c.l.b16 %v1247
    %v1592 = vunpack.c.h.b16 %v1247
    %v1593 = vunpack.c.l.b16 %v1248
    %v1594 = vunpack.c.h.b16 %v1248
    %v1595 = vunpack.c.l.b16 %v1249
    %v1596 = vunpack.c.h.b16 %v1249
    %v1597 = vunpack.c.l.b16 %v1250
    %v1598 = vunpack.c.h.b16 %v1250
    %v1599 = vunpack.c.l.b16 %v1251
    %v1600 = vunpack.c.h.b16 %v1251
    %v1601 = vunpack.c.l.b16 %v1252
    %v1602 = vunpack.c.h.b16 %v1252
    %v1603 = vunpack.c.l.b16 %v1253
    %v1604 = vunpack.c.h.b16 %v1253
    %v1605 = vunpack.c.l.b16 %v1254
    %v1606 = vunpack.c.h.b16 %v1254
    %v1607 = vunpack.c.l.b16 %v1255
    %v1608 = vunpack.c.h.b16 %v1255
    %v1609 = vunpack.c.l.b16 %v1256
    %v1610 = vunpack.c.h.b16 %v1256
    %v1611 = vunpack.c.l.b16 %v1257
    %v1612 = vunpack.c.h.b16 %v1257
    %v1613 = vunpack.c.l.b16 %v1258
    %v1614 = vunpack.c.h.b16 %v1258
    %v1615 = vunpack.c.l.b16 %v1259
    %v1616 = vunpack.c.h.b16 %v1259
    %v1617 = vunpack.c.l.b16 %v1260
    %v1618 = vunpack.c.h.b16 %v1260
    %v1619 = vunpack.c.l.b16 %v1261
    %v1620 = vunpack.c.h.b16 %v1261
    %v1621 = vunpack.c.l.b16 %v1262
    %v1622 = vunpack.c.h.b16 %v1262
    %v1623 = vunpack.c.l.b16 %v1263
    %v1624 = vunpack.c.h.b16 %v1263
    %v1625 = vunpack.c.l.b16 %v1264
    %v1626 = vunpack.c.h.b16 %v1264
    %v1627 = vunpack.c.l.b16 %v1265
    %v1628 = vunpack.c.h.b16 %v1265
    %v1629 = vunpack.c.l.b16 %v1266
    %v1630 = vunpack.c.h.b16 %v1266
    %v1631 = vunpack.c.l.b16 %v1267
    %v1632 = vunpack.c.h.b16 %v1267
    %v1633 = vunpack.c.l.b16 %v1268
    %v1634 = vunpack.c.h.b16 %v1268
    %v1635 = vunpack.c.l.b16 %v1269
    %v1636 = vunpack.c.h.b16 %v1269
    %v1637 = vunpack.c.l.b16 %v1270
    %v1638 = vunpack.c.h.b16 %v1270
    %v1639 = vunpack.c.l.b16 %v1271
    %v1640 = vunpack.c.h.b16 %v1271
    %v1641 = vunpack.c.l.b16 %v1272
    %v1642 = vunpack.c.h.b16 %v1272
    %v1643 = vunpack.c.l.b16 %v1273
    %v1644 = vunpack.c.h.b16 %v1273
    %v1645 = vunpack.c.l.b16 %v1274
    %v1646 = vunpack.c.h.b16 %v1274
    %v1647 = vunpack.c.l.b16 %v1275
    %v1648 = vunpack.c.h.b16 %v1275
    %v1649 = vunpack.c.l.b16 %v1276
    %v1650 = vunpack.c.h.b16 %v1276
    %v1651 = vunpack.c.l.b16 %v1277
    %v1652 = vunpack.c.h.b16 %v1277
    %v1653 = vunpack.c.l.b16 %v1278
    %v1654 = vunpack.c.h.b16 %v1278
    %v1655 = vunpack.c.l.b16 %v1279
    %v1656 = vunpack.c.h.b16 %v1279
    %v1657 = vunpack.c.l.b16 %v1280
    %v1658 = vunpack.c.h.b16 %v1280
    %v1659 = vunpack.c.l.b16 %v1281
    %v1660 = vunpack.c.h.b16 %v1281
    %v1661 = vunpack.c.l.b16 %v1282
    %v1662 = vunpack.c.h.b16 %v1282
    %v1663 = vunpack.c.l.b16 %v1283
    %v1664 = vunpack.c.h.b16 %v1283
    %v1665 = vunpack.c.l.b16 %v1284
    %v1666 = vunpack.c.h.b16 %v1284
    %v1667 = vunpack.c.l.b16 %v1285
    %v1668 = vunpack.c.h.b16 %v1285
    %v1669 = vunpack.c.l.b16 %v1286
    %v1670 = vunpack.c.h.b16 %v1286
    %v1671 = vunpack.c.l.b16 %v1287
    %v1672 = vunpack.c.h.b16 %v1287
    %v1673 = vunpack.c.l.b16 %v1288
    %v1674 = vunpack.c.h.b16 %v1288
    %v1675 = vunpack.c.l.b16 %v1289
    %v1676 = vunpack.c.h.b16 %v1289
    %v1677 = vunpack.c.l.b16 %v1290
    %v1678 = vunpack.c.h.b16 %v1290
    %v1679 = vunpack.c.l.b16 %v1291
    %v1680 = vunpack.c.h.b16 %v1291
    %v1681 = vunpack.c.l.b16 %v1292
    %v1682 = vunpack.c.h.b16 %v1292
    %v1683 = vunpack.c.l.b16 %v1293
    %v1684 = vunpack.c.h.b16 %v1293
    %v1685 = vunpack.c.l.b16 %v1294
    %v1686 = vunpack.c.h.b16 %v1294
    %v1687 = vunpack.c.l.b16 %v1295
    %v1688 = vunpack.c.h.b16 %v1295
    %v1689 = vunpack.c.l.b16 %v1296
    %v1690 = vunpack.c.h.b16 %v1296
    %v1691 = vunpack.c.l.b16 %v1297
    %v1692 = vunpack.c.h.b16 %v1297
    %v1693 = vunpack.c.l.b16 %v1298
    %v1694 = vunpack.c.h.b16 %v1298
    %v1695 = vunpack.c.l.b16 %v1299
    %v1696 = vunpack.c.h.b16 %v1299
    %v1697 = vunpack.c.l.b16 %v1300
    %v1698 = vunpack.c.h.b16 %v1300
    %v1699 = vunpack.c.l.b16 %v1301
    %v1700 = vunpack.c.h.b16 %v1301
    %v1701 = vunpack.c.l.b16 %v1302
    %v1702 = vunpack.c.h.b16 %v1302
    %v1703 = vunpack.c.l.b16 %v1303
    %v1704 = vunpack.c.h.b16 %v1303
    %v1705 = vunpack.c.l.b16 %v1304
    %v1706 = vunpack.c.h.b16 %v1304
    %v1707 = vunpack.c.l.b16 %v1305
    %v1708 = vunpack.c.h.b16 %v1305
    %v1709 = vunpack.c.l.b16 %v1306
    %v1710 = vunpack.c.h.b16 %v1306
    %v1711 = vunpack.c.l.b16 %v1307
    %v1712 = vunpack.c.h.b16 %v1307
    %v1713 = vunpack.c.l.b16 %v1308
    %v1714 = vunpack.c.h.b16 %v1308
    %v1715 = vunpack.c.l.b16 %v1309
    %v1716 = vunpack.c.h.b16 %v1309
    %v1717 = vunpack.c.l.b16 %v1310
    %v1718 = vunpack.c.h.b16 %v1310
    %v1719 = vunpack.c.l.b16 %v1311
    %v1720 = vunpack.c.h.b16 %v1311
    %v1721 = vunpack.c.l.b16 %v1312
    %v1722 = vunpack.c.h.b16 %v1312
    %v1723 = vunpack.c.l.b16 %v1313
    %v1724 = vunpack.c.h.b16 %v1313
    %v1725 = vunpack.c.l.b16 %v1314
    %v1726 = vunpack.c.h.b16 %v1314
    %v1727 = vunpack.c.l.b16 %v1315
    %v1728 = vunpack.c.h.b16 %v1315
    %v1729 = vunpack.c.l.b16 %v1316
    %v1730 = vunpack.c.h.b16 %v1316
    %v1731 = vunpack.c.l.b16 %v1317
    %v1732 = vunpack.c.h.b16 %v1317
    %v1733 = vunpack.c.l.b16 %v1318
    %v1734 = vunpack.c.h.b16 %v1318
    %v1735 = vunpack.c.l.b16 %v1319
    %v1736 = vunpack.c.h.b16 %v1319
    %v1737 = vunpack.c.l.b16 %v1320
    %v1738 = vunpack.c.h.b16 %v1320
    %v1739 = vunpack.c.l.b16 %v1321
    %v1740 = vunpack.c.h.b16 %v1321
    %v1741 = vunpack.c.l.b16 %v1322
    %v1742 = vunpack.c.h.b16 %v1322
    %v1743 = vunpack.c.l.b16 %v1323
    %v1744 = vunpack.c.h.b16 %v1323
    %v1745 = vunpack.c.l.b16 %v1324
    %v1746 = vunpack.c.h.b16 %v1324
    %v1747 = vunpack.c.l.b16 %v1325
    %v1748 = vunpack.c.h.b16 %v1325
    %v1749 = vunpack.c.l.b16 %v1326
    %v1750 = vunpack.c.h.b16 %v1326
    %v1751 = vunpack.c.l.b16 %v1327
    %v1752 = vunpack.c.h.b16 %v1327
    %v1753 = vunpack.c.l.b16 %v1328
    %v1754 = vunpack.c.h.b16 %v1328
    %v1755 = vunpack.c.l.b16 %v1329
    %v1756 = vunpack.c.h.b16 %v1329
    %v1757 = vunpack.c.l.b16 %v1330
    %v1758 = vunpack.c.h.b16 %v1330
    %v1759 = vunpack.c.l.b16 %v1331
    %v1760 = vunpack.c.h.b16 %v1331
    %v1761 = vunpack.c.l.b16 %v1332
    %v1762 = vunpack.c.h.b16 %v1332
    %v1763 = vunpack.c.l.b16 %v1333
    %v1764 = vunpack.c.h.b16 %v1333
    %v1765 = vunpack.c.l.b16 %v1334
    %v1766 = vunpack.c.h.b16 %v1334
    %v1767 = vunpack.c.l.b16 %v1335
    %v1768 = vunpack.c.h.b16 %v1335
    %v1769 = vunpack.c.l.b16 %v1336
    %v1770 = vunpack.c.h.b16 %v1336
    %v1771 = vunpack.c.l.b16 %v1337
    %v1772 = vunpack.c.h.b16 %v1337
    %v1773 = vunpack.c.l.b16 %v1338
    %v1774 = vunpack.c.h.b16 %v1338
    %v1775 = vunpack.c.l.b16 %v1339
    %v1776 = vunpack.c.h.b16 %v1339
    %v1777 = vunpack.c.l.b16 %v1340
    %v1778 = vunpack.c.h.b16 %v1340
    %v1779 = vunpack.c.l.b16 %v1341
    %v1780 = vunpack.c.h.b16 %v1341
    %v1781 = vunpack.c.l.b16 %v1342
    %v1782 = vunpack.c.h.b16 %v1342
    %v1783 = vunpack.c.l.b16 %v1343
    %v1784 = vunpack.c.h.b16 %v1343
    %v1785 = vunpack.c.l.b16 %v1344
    %v1786 = vunpack.c.h.b16 %v1344
    %v1787 = vunpack.c.l.b16 %v1345
    %v1788 = vunpack.c.h.b16 %v1345
    %v1789 = vunpack.c.l.b16 %v1346
    %v1790 = vunpack.c.h.b16 %v1346
    %v1791 = vunpack.c.l.b16 %v1347
    %v1792 = vunpack.c.h.b16 %v1347
    %v1793 = vunpack.c.l.b16 %v1348
    %v1794 = vunpack.c.h.b16 %v1348
    %v1795 = vunpack.c.l.b16 %v1349
    %v1796 = vunpack.c.h.b16 %v1349
    %v1797 = vunpack.c.l.b16 %v1350
    %v1798 = vunpack.c.h.b16 %v1350
    %v1799 = vunpack.c.l.b16 %v1351
    %v1800 = vunpack.c.h.b16 %v1351
    %v1801 = vunpack.c.l.b16 %v1352
    %v1802 = vunpack.c.h.b16 %v1352
    %v1803 = vunpack.c.l.b16 %v1353
    %v1804 = vunpack.c.h.b16 %v1353
    %v1805 = vunpack.c.l.b16 %v1354
    %v1806 = vunpack.c.h.b16 %v1354
    %v1807 = vunpack.c.l.b16 %v1355
    %v1808 = vunpack.c.h.b16 %v1355
    %v1809 = vunpack.c.l.b16 %v1356
    %v1810 = vunpack.c.h.b16 %v1356
    %v1811 = vunpack.c.l.b16 %v1357
    %v1812 = vunpack.c.h.b16 %v1357
    %v1813 = vunpack.c.l.b16 %v1358
    %v1814 = vunpack.c.h.b16 %v1358
    %v1815 = vunpack.c.l.b16 %v1359
    %v1816 = vunpack.c.h.b16 %v1359
    %v1817 = vunpack.c.l.b16 %v1360
    %v1818 = vunpack.c.h.b16 %v1360
    %v1819 = vunpack.c.l.b16 %v1361
    %v1820 = vunpack.c.h.b16 %v1361
    %v1821 = vunpack.c.l.b16 %v1362
    %v1822 = vunpack.c.h.b16 %v1362
    %v1823 = vunpack.c.l.b16 %v1363
    %v1824 = vunpack.c.h.b16 %v1363
    %v1825 = vunpack.c.l.b16 %v1364
    %v1826 = vunpack.c.h.b16 %v1364
    %v1827 = vunpack.c.l.b16 %v1365
    %v1828 = vunpack.c.h.b16 %v1365
    %v1829 = vunpack.c.l.b16 %v1366
    %v1830 = vunpack.c.h.b16 %v1366
    %v1831 = vunpack.c.l.b16 %v1367
    %v1832 = vunpack.c.h.b16 %v1367
    %v1833 = vunpack.c.l.b16 %v1368
    %v1834 = vunpack.c.h.b16 %v1368
    %v1835 = vunpack.c.l.b16 %v1369
    %v1836 = vunpack.c.h.b16 %v1369
    %v1837 = vunpack.c.l.b16 %v1370
    %v1838 = vunpack.c.h.b16 %v1370
    %v1839 = vunpack.c.l.b16 %v1371
    %v1840 = vunpack.c.h.b16 %v1371
    %v1841 = vunpack.c.l.b16 %v1372
    %v1842 = vunpack.c.h.b16 %v1372
    %v1843 = vunpack.c.l.b16 %v1373
    %v1844 = vunpack.c.h.b16 %v1373
    %v1845 = vunpack.c.l.b16 %v1374
    %v1846 = vunpack.c.h.b16 %v1374
    %v1847 = vunpack.c.l.b16 %v1375
    %v1848 = vunpack.c.h.b16 %v1375
    %v1849 = vunpack.c.l.b16 %v1376
    %v1850 = vunpack.c.h.b16 %v1376
    %v1851 = vunpack.c.l.b16 %v1377
    %v1852 = vunpack.c.h.b16 %v1377
    %v1853 = vunpack.c.l.b16 %v1378
    %v1854 = vunpack.c.h.b16 %v1378
    %v1855 = vunpack.c.l.b16 %v1379
    %v1856 = vunpack.c.h.b16 %v1379
    %v1857 = vunpack.c.l.b16 %v1380
    %v1858 = vunpack.c.h.b16 %v1380
    %v1859 = vunpack.c.l.b16 %v1381
    %v1860 = vunpack.c.h.b16 %v1381
    %v1861 = vunpack.c.l.b16 %v1382
    %v1862 = vunpack.c.h.b16 %v1382
    %v1863 = vpack.c.b16 %v1553, %v1543
    %v1864 = vpack.c.b16 %v1554, %v1544
    %v1865 = vpack.c.b16 %v1555, %v1545
    %v1866 = vpack.c.b16 %v1556, %v1546
    %v1867 = vpack.c.b16 %v1557, %v1547
    %v1868 = vpack.c.b16 %v1558, %v1548
    %v1869 = vpack.c.b16 %v1559, %v1549
    %v1870 = vpack.c.b16 %v1560, %v1550
    %v1871 = vpack.c.b16 %v1561, %v1551
    %v1872 = vpack.c.b16 %v1562, %v1552
    %v1873 = vpack.c.b16 %v1573, %v1563
    %v1874 = vpack.c.b16 %v1574, %v1564
    %v1875 = vpack.c.b16 %v1575, %v1565
    %v1876 = vpack.c.b16 %v1576, %v1566
    %v1877 = vpack.c.b16 %v1577, %v1567
    %v1878 = vpack.c.b16 %v1578, %v1568
    %v1879 = vpack.c.b16 %v1579, %v1569
    %v1880 = vpack.c.b16 %v1580, %v1570
    %v1881 = vpack.c.b16 %v1581, %v1571
    %v1882 = vpack.c.b16 %v1582, %v1572
    %v1883 = vpack.c.b16 %v1593, %v1583
    %v1884 = vpack.c.b16 %v1594, %v1584
    %v1885 = vpack.c.b16 %v1595, %v1585
    %v1886 = vpack.c.b16 %v1596, %v1586
    %v1887 = vpack.c.b16 %v1597, %v1587
    %v1888 = vpack.c.b16 %v1598, %v1588
    %v1889 = vpack.c.b16 %v1599, %v1589
    %v1890 = vpack.c.b16 %v1600, %v1590
    %v1891 = vpack.c.b16 %v1601, %v1591
    %v1892 = vpack.c.b16 %v1602, %v1592
    %v1893 = vpack.c.b16 %v1613, %v1603
    %v1894 = vpack.c.b16 %v1614, %v1604
    %v1895 = vpack.c.b16 %v1615, %v1605
    %v1896 = vpack.c.b16 %v1616, %v1606
    %v1897 = vpack.c.b16 %v1617, %v1607
    %v1898 = vpack.c.b16 %v1618, %v1608
    %v1899 = vpack.c.b16 %v1619, %v1609
    %v1900 = vpack.c.b16 %v1620, %v1610
    %v1901 = vpack.c.b16 %v1621, %v1611
    %v1902 = vpack.c.b16 %v1622, %v1612
    %v1903 = vpack.c.b16 %v1633, %v1623
    %v1904 = vpack.c.b16 %v1634, %v1624
    %v1905 = vpack.c.b16 %v1635, %v1625
    %v1906 = vpack.c.b16 %v1636, %v1626
    %v1907 = vpack.c.b16 %v1637, %v1627
    %v1908 = vpack.c.b16 %v1638, %v1628
    %v1909 = vpack.c.b16 %v1639, %v1629
    %v1910 = vpack.c.b16 %v1640, %v1630
    %v1911 = vpack.c.b16 %v1641, %v1631
    %v1912 = vpack.c.b16 %v1642, %v1632
    %v1913 = vpack.c.b16 %v1653, %v1643
    %v1914 = vpack.c.b16 %v1654, %v1644
    %v1915 = vpack.c.b16 %v1655, %v1645
    %v1916 = vpack.c.b16 %v1656, %v1646
    %v1917 = vpack.c.b16 %v1657, %v1647
    %v1918 = vpack.c.b16 %v1658, %v1648
    %v1919 = vpack.c.b16 %v1659, %v1649
    %v1920 = vpack.c.b16 %v1660, %v1650
    %v1921 = vpack.c.b16 %v1661, %v1651
    %v1922 = vpack.c.b16 %v1662, %v1652
    %v1923 = vpack.c.b16 %v1673, %v1663
    %v1924 = vpack.c.b16 %v1674, %v1664
    %v1925 = vpack.c.b16 %v1675, %v1665
    %v1926 = vpack.c.b16 %v1676, %v1666
    %v1927 = vpack.c.b16 %v1677, %v1667
    %v1928 = vpack.c.b16 %v1678, %v1668
    %v1929 = vpack.c.b16 %v1679, %v1669
    %v1930 = vpack.c.b16 %v1680, %v1670
    %v1931 = vpack.c.b16 %v1681, %v1671
    %v1932 = vpack.c.b16 %v1682, %v1672
    %v1933 = vpack.c.b16 %v1693, %v1683
    %v1934 = vpack.c.b16 %v1694, %v1684
    %v1935 = vpack.c.b16 %v1695, %v1685
    %v1936 = vpack.c.b16 %v1696, %v1686
    %v1937 = vpack.c.b16 %v1697, %v1687
    %v1938 = vpack.c.b16 %v1698, %v1688
    %v1939 = vpack.c.b16 %v1699, %v1689
    %v1940 = vpack.c.b16 %v1700, %v1690
    %v1941 = vpack.c.b16 %v1701, %v1691
    %v1942 = vpack.c.b16 %v1702, %v1692
    %v1943 = vpack.c.b16 %v1713, %v1703
    %v1944 = vpack.c.b16 %v1714, %v1704
    %v1945 = vpack.c.b16 %v1715, %v1705
    %v1946 = vpack.c.b16 %v1716, %v1706
    %v1947 = vpack.c.b16 %v1717, %v1707
    %v1948 = vpack.c.b16 %v1718, %v1708
    %v1949 = vpack.c.b16 %v1719, %v1709
    %v1950 = vpack.c.b16 %v1720, %v1710
    %v1951 = vpack.c.b16 %v1721, %v1711
    %v1952 = vpack.c.b16 %v1722, %v1712
    %v1953 = vpack.c.b16 %v1733, %v1723
    %v1954 = vpack.c.b16 %v1734, %v1724
    %v1955 = vpack.c.b16 %v1735, %v1725
    %v1956 = vpack.c.b16 %v1736, %v1726
    %v1957 = vpack.c.b16 %v1737, %v1727
    %v1958 = vpack.c.b16 %v1738, %v1728
    %v1959 = vpack.c.b16 %v1739, %v1729
    %v1960 = vpack.c.b16 %v1740, %v1730
    %v1961 = vpack.c.b16 %v1741, %v1731
    %v1962 = vpack.c.b16 %v1742, %v1732
    %v1963 = vpack.c.b16 %v1753, %v1743
    %v1964 = vpack.c.b16 %v1754, %v1744
    %v1965 = vpack.c.b16 %v1755, %v1745
    %v1966 = vpack.c.b16 %v1756, %v1746
    %v1967 = vpack.c.b16 %v1757, %v1747
    %v1968 = vpack.c.b16 %v1758, %v1748
    %v1969 = vpack.c.b16 %v1759, %v1749
    %v1970 = vpack.c.b16 %v1760, %v1750
    %v1971 = vpack.c.b16 %v1761, %v1751
    %v1972 = vpack.c.b16 %v1762, %v1752
    %v1973 = vpack.c.b16 %v1773, %v1763
    %v1974 = vpack.c.b16 %v1774, %v1764
    %v1975 = vpack.c.b16 %v1775, %v1765
    %v1976 = vpack.c.b16 %v1776, %v1766
    %v1977 = vpack.c.b16 %v1777, %v1767
    %v1978 = vpack.c.b16 %v1778, %v1768
    %v1979 = vpack.c.b16 %v1779, %v1769
    %v1980 = vpack.c.b16 %v1780, %v1770
    %v1981 = vpack.c.b16 %v1781, %v1771
    %v1982 = vpack.c.b16 %v1782, %v1772
    %v1983 = vpack.c.b16 %v1793, %v1783
    %v1984 = vpack.c.b16 %v1794, %v1784
    %v1985 = vpack.c.b16 %v1795, %v1785
    %v1986 = vpack.c.b16 %v1796, %v1786
    %v1987 = vpack.c.b16 %v1797, %v1787
    %v1988 = vpack.c.b16 %v1798, %v1788
    %v1989 = vpack.c.b16 %v1799, %v1789
    %v1990 = vpack.c.b16 %v1800, %v1790
    %v1991 = vpack.c.b16 %v1801, %v1791
    %v1992 = vpack.c.b16 %v1802, %v1792
    %v1993 = vpack.c.b16 %v1813, %v1803
    %v1994 = vpack.c.b16 %v1814, %v1804
    %v1995 = vpack.c.b16 %v1815, %v1805
    %v1996 = vpack.c.b16 %v1816, %v1806
    %v1997 = vpack.c.b16 %v1817, %v1807
    %v1998 = vpack.c.b16 %v1818, %v1808
    %v1999 = vpack.c.b16 %v1819, %v1809
    %v2000 = vpack.c.b16 %v1820, %v1810
    %v2001 = vpack.c.b16 %v1821, %v1811
    %v2002 = vpack.c.b16 %v1822, %v1812
    %v2003 = vpack.c.b16 %v1833, %v1823
    %v2004 = vpack.c.b16 %v1834, %v1824
    %v2005 = vpack.c.b16 %v1835, %v1825
    %v2006 = vpack.c.b16 %v1836, %v1826
    %v2007 = vpack.c.b16 %v1837, %v1827
    %v2008 = vpack.c.b16 %v1838, %v1828
    %v2009 = vpack.c.b16 %v1839, %v1829
    %v2010 = vpack.c.b16 %v1840, %v1830
    %v2011 = vpack.c.b16 %v1841, %v1831
    %v2012 = vpack.c.b16 %v1842, %v1832
    %v2013 = vpack.c.b16 %v1853, %v1843
    %v2014 = vpack.c.b16 %v1854, %v1844
    %v2015 = vpack.c.b16 %v1855, %v1845
    %v2016 = vpack.c.b16 %v1856, %v1846
    %v2017 = vpack.c.b16 %v1857, %v1847
    %v2018 = vpack.c.b16 %v1858, %v1848
    %v2019 = vpack.c.b16 %v1859, %v1849
    %v2020 = vpack.c.b16 %v1860, %v1850
    %v2021 = vpack.c.b16 %v1861, %v1851
    %v2022 = vpack.c.b16 %v1862, %v1852
    %2183 = vmatprep.subr.bf16.mxu0 %v1934
    %2184 = vmatpush1.bf16.msra.mxu0 %v1933
    %2185 = vmatprep.subr.bf16.mxu0 %v1924
    %2186 = vmatpush1.bf16.msra.mxu0 %v1923
    %2187 = vmatprep.subr.bf16.mxu0 %v1914
    %2188 = vmatpush1.bf16.msra.mxu0 %v1913
    %2189 = vmatprep.subr.bf16.mxu0 %v1904
    %2190 = vmatpush1.bf16.msra.mxu0 %v1903
    %2191 = vmatprep.subr.bf16.mxu0 %v1894
    %2192 = vmatpush1.bf16.msra.mxu0 %v1893
    %2193 = vmatprep.subr.bf16.mxu0 %v1884
    %2194 = vmatpush1.bf16.msra.mxu0 %v1883
    %2195 = vmatprep.subr.bf16.mxu0 %v1874
    %2196 = vmatpush1.bf16.msra.mxu0 %v1873
    %2197 = vmatprep.subr.bf16.mxu0 %v1864
    %2198 = vmatpush1.bf16.msra.mxu0 %v1863
    %2199 = vmatprep.subr.bf16.mxu0 %v2014
    %2200 = vmatpush2.bf16.msra.mxu0 %v2013
    %2201 = vmatprep.subr.bf16.mxu0 %v2004
    %2202 = vmatpush2.bf16.msra.mxu0 %v2003
    %2203 = vmatprep.subr.bf16.mxu0 %v1994
    %2204 = vmatpush2.bf16.msra.mxu0 %v1993
    %2205 = vmatprep.subr.bf16.mxu0 %v1984
    %2206 = vmatpush2.bf16.msra.mxu0 %v1983
    %2207 = vmatprep.subr.bf16.mxu0 %v1974
    %2208 = vmatpush2.bf16.msra.mxu0 %v1973
    %2209 = vmatprep.subr.bf16.mxu0 %v1964
    %2210 = vmatpush2.bf16.msra.mxu0 %v1963
    %2211 = vmatprep.subr.bf16.mxu0 %v1954
    %2212 = vmatpush2.bf16.msra.mxu0 %v1953
    %2213 = vmatprep.subr.bf16.mxu0 %v1944
    %2214 = vmatpush2.bf16.msra.mxu0 %v1943
    %2215 = vmatprep.mubr.bf16.mxu0 %v47
    %2216 = vmatmul.mubr.bf16.gmra.mxu0 %v46
    %v2217 = vpop.f32.mrf.mxu0
    %v2218 = vadd.f32 0.0, %v2217
    %v2219 = vpop.f32.mrf.mxu0
    %v2220 = vadd.f32 0.0, %v2219
    %v2221 = vpop.f32.mrf.mxu0
    %v2222 = vpop.f32.mrf.mxu0
    %2223 = vdwg.mxu0
    %2224 = vmatprep.subr.bf16.mxu0 %v1936
    %2225 = vmatpush1.bf16.msra.mxu0 %v1935
    %2226 = vmatprep.subr.bf16.mxu0 %v1926
    %2227 = vmatpush1.bf16.msra.mxu0 %v1925
    %2228 = vmatprep.subr.bf16.mxu0 %v1916
    %2229 = vmatpush1.bf16.msra.mxu0 %v1915
    %2230 = vmatprep.subr.bf16.mxu0 %v1906
    %2231 = vmatpush1.bf16.msra.mxu0 %v1905
    %2232 = vmatprep.subr.bf16.mxu0 %v1896
    %2233 = vmatpush1.bf16.msra.mxu0 %v1895
    %2234 = vmatprep.subr.bf16.mxu0 %v1886
    %2235 = vmatpush1.bf16.msra.mxu0 %v1885
    %2236 = vmatprep.subr.bf16.mxu0 %v1876
    %2237 = vmatpush1.bf16.msra.mxu0 %v1875
    %2238 = vmatprep.subr.bf16.mxu0 %v1866
    %2239 = vmatpush1.bf16.msra.mxu0 %v1865
    %2240 = vmatprep.subr.bf16.mxu0 %v2016
    %2241 = vmatpush2.bf16.msra.mxu0 %v2015
    %2242 = vmatprep.subr.bf16.mxu0 %v2006
    %2243 = vmatpush2.bf16.msra.mxu0 %v2005
    %2244 = vmatprep.subr.bf16.mxu0 %v1996
    %2245 = vmatpush2.bf16.msra.mxu0 %v1995
    %2246 = vmatprep.subr.bf16.mxu0 %v1986
    %2247 = vmatpush2.bf16.msra.mxu0 %v1985
    %2248 = vmatprep.subr.bf16.mxu0 %v1976
    %2249 = vmatpush2.bf16.msra.mxu0 %v1975
    %2250 = vmatprep.subr.bf16.mxu0 %v1966
    %2251 = vmatpush2.bf16.msra.mxu0 %v1965
    %2252 = vmatprep.subr.bf16.mxu0 %v1956
    %2253 = vmatpush2.bf16.msra.mxu0 %v1955
    %2254 = vmatprep.subr.bf16.mxu0 %v1946
    %2255 = vmatpush2.bf16.msra.mxu0 %v1945
    %2256 = vmatprep.mubr.bf16.mxu0 %v47
    %2257 = vmatmul.mubr.bf16.gmra.mxu0 %v46
    %v2258 = vpop.f32.mrf.mxu0
    %v2259 = vadd.f32 0.0, %v2258
    %v2260 = vpop.f32.mrf.mxu0
    %v2261 = vadd.f32 0.0, %v2260
    %v2262 = vpop.f32.mrf.mxu0
    %v2263 = vpop.f32.mrf.mxu0
    %2264 = vdwg.mxu0
    %2265 = vmatprep.subr.bf16.mxu0 %v1938
    %2266 = vmatpush1.bf16.msra.mxu0 %v1937
    %2267 = vmatprep.subr.bf16.mxu0 %v1928
    %2268 = vmatpush1.bf16.msra.mxu0 %v1927
    %2269 = vmatprep.subr.bf16.mxu0 %v1918
    %2270 = vmatpush1.bf16.msra.mxu0 %v1917
    %2271 = vmatprep.subr.bf16.mxu0 %v1908
    %2272 = vmatpush1.bf16.msra.mxu0 %v1907
    %2273 = vmatprep.subr.bf16.mxu0 %v1898
    %2274 = vmatpush1.bf16.msra.mxu0 %v1897
    %2275 = vmatprep.subr.bf16.mxu0 %v1888
    %2276 = vmatpush1.bf16.msra.mxu0 %v1887
    %2277 = vmatprep.subr.bf16.mxu0 %v1878
    %2278 = vmatpush1.bf16.msra.mxu0 %v1877
    %2279 = vmatprep.subr.bf16.mxu0 %v1868
    %2280 = vmatpush1.bf16.msra.mxu0 %v1867
    %2281 = vmatprep.subr.bf16.mxu0 %v2018
    %2282 = vmatpush2.bf16.msra.mxu0 %v2017
    %2283 = vmatprep.subr.bf16.mxu0 %v2008
    %2284 = vmatpush2.bf16.msra.mxu0 %v2007
    %2285 = vmatprep.subr.bf16.mxu0 %v1998
    %2286 = vmatpush2.bf16.msra.mxu0 %v1997
    %2287 = vmatprep.subr.bf16.mxu0 %v1988
    %2288 = vmatpush2.bf16.msra.mxu0 %v1987
    %2289 = vmatprep.subr.bf16.mxu0 %v1978
    %2290 = vmatpush2.bf16.msra.mxu0 %v1977
    %2291 = vmatprep.subr.bf16.mxu0 %v1968
    %2292 = vmatpush2.bf16.msra.mxu0 %v1967
    %2293 = vmatprep.subr.bf16.mxu0 %v1958
    %2294 = vmatpush2.bf16.msra.mxu0 %v1957
    %2295 = vmatprep.subr.bf16.mxu0 %v1948
    %2296 = vmatpush2.bf16.msra.mxu0 %v1947
    %2297 = vmatprep.mubr.bf16.mxu0 %v47
    %2298 = vmatmul.mubr.bf16.gmra.mxu0 %v46
    %v2299 = vpop.f32.mrf.mxu0
    %v2300 = vadd.f32 0.0, %v2299
    %v2301 = vpop.f32.mrf.mxu0
    %v2302 = vadd.f32 0.0, %v2301
    %v2303 = vpop.f32.mrf.mxu0
    %v2304 = vpop.f32.mrf.mxu0
    %2305 = vdwg.mxu0
    %2306 = vmatprep.subr.bf16.mxu0 %v1940
    %2307 = vmatpush1.bf16.msra.mxu0 %v1939
    %2308 = vmatprep.subr.bf16.mxu0 %v1930
    %2309 = vmatpush1.bf16.msra.mxu0 %v1929
    %2310 = vmatprep.subr.bf16.mxu0 %v1920
    %2311 = vmatpush1.bf16.msra.mxu0 %v1919
    %2312 = vmatprep.subr.bf16.mxu0 %v1910
    %2313 = vmatpush1.bf16.msra.mxu0 %v1909
    %2314 = vmatprep.subr.bf16.mxu0 %v1900
    %2315 = vmatpush1.bf16.msra.mxu0 %v1899
    %2316 = vmatprep.subr.bf16.mxu0 %v1890
    %2317 = vmatpush1.bf16.msra.mxu0 %v1889
    %2318 = vmatprep.subr.bf16.mxu0 %v1880
    %2319 = vmatpush1.bf16.msra.mxu0 %v1879
    %2320 = vmatprep.subr.bf16.mxu0 %v1870
    %2321 = vmatpush1.bf16.msra.mxu0 %v1869
    %2322 = vmatprep.subr.bf16.mxu0 %v2020
    %2323 = vmatpush2.bf16.msra.mxu0 %v2019
    %2324 = vmatprep.subr.bf16.mxu0 %v2010
    %2325 = vmatpush2.bf16.msra.mxu0 %v2009
    %2326 = vmatprep.subr.bf16.mxu0 %v2000
    %2327 = vmatpush2.bf16.msra.mxu0 %v1999
    %2328 = vmatprep.subr.bf16.mxu0 %v1990
    %2329 = vmatpush2.bf16.msra.mxu0 %v1989
    %2330 = vmatprep.subr.bf16.mxu0 %v1980
    %2331 = vmatpush2.bf16.msra.mxu0 %v1979
    %2332 = vmatprep.subr.bf16.mxu0 %v1970
    %2333 = vmatpush2.bf16.msra.mxu0 %v1969
    %2334 = vmatprep.subr.bf16.mxu0 %v1960
    %2335 = vmatpush2.bf16.msra.mxu0 %v1959
    %2336 = vmatprep.subr.bf16.mxu0 %v1950
    %2337 = vmatpush2.bf16.msra.mxu0 %v1949
    %2338 = vmatprep.mubr.bf16.mxu0 %v47
    %2339 = vmatmul.mubr.bf16.gmra.mxu0 %v46
    %v2340 = vpop.f32.mrf.mxu0
    %v2341 = vadd.f32 0.0, %v2340
    %v2342 = vpop.f32.mrf.mxu0
    %v2343 = vadd.f32 0.0, %v2342
    %v2344 = vpop.f32.mrf.mxu0
    %v2345 = vpop.f32.mrf.mxu0
    %2346 = vdwg.mxu0
    %2347 = vmatprep.subr.bf16.mxu0 %v1942
    %2348 = vmatpush1.bf16.msra.mxu0 %v1941
    %2349 = vmatprep.subr.bf16.mxu0 %v1932
    %2350 = vmatpush1.bf16.msra.mxu0 %v1931
    %2351 = vmatprep.subr.bf16.mxu0 %v1922
    %2352 = vmatpush1.bf16.msra.mxu0 %v1921
    %2353 = vmatprep.subr.bf16.mxu0 %v1912
    %2354 = vmatpush1.bf16.msra.mxu0 %v1911
    %2355 = vmatprep.subr.bf16.mxu0 %v1902
    %2356 = vmatpush1.bf16.msra.mxu0 %v1901
    %2357 = vmatprep.subr.bf16.mxu0 %v1892
    %2358 = vmatpush1.bf16.msra.mxu0 %v1891
    %2359 = vmatprep.subr.bf16.mxu0 %v1882
    %2360 = vmatpush1.bf16.msra.mxu0 %v1881
    %2361 = vmatprep.subr.bf16.mxu0 %v1872
    %2362 = vmatpush1.bf16.msra.mxu0 %v1871
    %2363 = vmatprep.subr.bf16.mxu0 %v2022
    %2364 = vmatpush2.bf16.msra.mxu0 %v2021
    %2365 = vmatprep.subr.bf16.mxu0 %v2012
    %2366 = vmatpush2.bf16.msra.mxu0 %v2011
    %2367 = vmatprep.subr.bf16.mxu0 %v2002
    %2368 = vmatpush2.bf16.msra.mxu0 %v2001
    %2369 = vmatprep.subr.bf16.mxu0 %v1992
    %2370 = vmatpush2.bf16.msra.mxu0 %v1991
    %2371 = vmatprep.subr.bf16.mxu0 %v1982
    %2372 = vmatpush2.bf16.msra.mxu0 %v1981
    %2373 = vmatprep.subr.bf16.mxu0 %v1972
    %2374 = vmatpush2.bf16.msra.mxu0 %v1971
    %2375 = vmatprep.subr.bf16.mxu0 %v1962
    %2376 = vmatpush2.bf16.msra.mxu0 %v1961
    %2377 = vmatprep.subr.bf16.mxu0 %v1952
    %2378 = vmatpush2.bf16.msra.mxu0 %v1951
    %2379 = vmatprep.mubr.bf16.mxu0 %v47
    %2380 = vmatmul.mubr.bf16.gmra.mxu0 %v46
    %v2381 = vpop.f32.mrf.mxu0
    %v2382 = vadd.f32 0.0, %v2381
    %v2383 = vpop.f32.mrf.mxu0
    %v2384 = vadd.f32 0.0, %v2383
    %v2385 = vpop.f32.mrf.mxu0
    %v2386 = vpop.f32.mrf.mxu0
    %2387 = vdwg.mxu0
    %2388 = vst [vmem:[#allocation3 + $0x50] sm:$0xff] %v2218
    %2389 = vst [vmem:[#allocation3 + $0x58] sm:$0xff] %v2220
    %2390 = vst [vmem:[#allocation3 + $0x60] sm:$0xff] %v2259
    %2391 = vst [vmem:[#allocation3 + $0x68] sm:$0xff] %v2261
    %2392 = vst [vmem:[#allocation3 + $0x70] sm:$0xff] %v2300
    %2393 = vst [vmem:[#allocation3 + $0x78] sm:$0xff] %v2302
    %2394 = vst [vmem:[#allocation3 + $0x80] sm:$0xff] %v2341
    %2395 = vst [vmem:[#allocation3 + $0x88] sm:$0xff] %v2343
    %2396 = vst [vmem:[#allocation3 + $0x90] sm:$0xff] %v2382
    %2397 = vst [vmem:[#allocation3 + $0x98] sm:$0xff] %v2384
    %v2398 = vld [vmem:[#allocation3] sm:$0xff]
    %v2399 = vld [vmem:[#allocation3 + $0x8] sm:$0xff]
    %v2400 = vld [vmem:[#allocation3 + $0x10] sm:$0xff]
    %v2401 = vld [vmem:[#allocation3 + $0x18] sm:$0xff]
    %v2402 = vld [vmem:[#allocation3 + $0x20] sm:$0xff]
    %v2403 = vld [vmem:[#allocation3 + $0x28] sm:$0xff]
    %v2404 = vld [vmem:[#allocation3 + $0x30] sm:$0xff]
    %v2405 = vld [vmem:[#allocation3 + $0x38] sm:$0xff]
    %v2406 = vld [vmem:[#allocation3 + $0x40] sm:$0xff]
    %v2407 = vld [vmem:[#allocation3 + $0x48] sm:$0xff]
    %v2408 = vld [vmem:[#allocation3 + $0x50] sm:$0xff]
    %v2409 = vld [vmem:[#allocation3 + $0x58] sm:$0xff]
    %v2410 = vld [vmem:[#allocation3 + $0x60] sm:$0xff]
    %v2411 = vld [vmem:[#allocation3 + $0x68] sm:$0xff]
    %v2412 = vld [vmem:[#allocation3 + $0x70] sm:$0xff]
    %v2413 = vld [vmem:[#allocation3 + $0x78] sm:$0xff]
    %v2414 = vld [vmem:[#allocation3 + $0x80] sm:$0xff]
    %v2415 = vld [vmem:[#allocation3 + $0x88] sm:$0xff]
    %v2416 = vld [vmem:[#allocation3 + $0x90] sm:$0xff]
    %v2417 = vld [vmem:[#allocation3 + $0x98] sm:$0xff]
    %2418 = vst [vmem:[#allocation2] sm:$0xff] %v2398
    %2419 = vst [vmem:[#allocation2 + $0x8] sm:$0xff] %v2399
    %2420 = vst [vmem:[#allocation2 + $0x10] sm:$0xff] %v2400
    %2421 = vst [vmem:[#allocation2 + $0x18] sm:$0xff] %v2401
    %2422 = vst [vmem:[#allocation2 + $0x20] sm:$0xff] %v2402
    %2423 = vst [vmem:[#allocation2 + $0x28] sm:$0xff] %v2403
    %2424 = vst [vmem:[#allocation2 + $0x30] sm:$0xff] %v2404
    %2425 = vst [vmem:[#allocation2 + $0x38] sm:$0xff] %v2405
    %2426 = vst [vmem:[#allocation2 + $0x40] sm:$0xff] %v2406
    %2427 = vst [vmem:[#allocation2 + $0x48] sm:$0xff] %v2407
    %2428 = vst [vmem:[#allocation2 + $0x50] sm:$0xff] %v2408
    %2429 = vst [vmem:[#allocation2 + $0x58] sm:$0xff] %v2409
    %2430 = vst [vmem:[#allocation2 + $0x60] sm:$0xff] %v2410
    %2431 = vst [vmem:[#allocation2 + $0x68] sm:$0xff] %v2411
    %2432 = vst [vmem:[#allocation2 + $0x70] sm:$0xff] %v2412
    %2433 = vst [vmem:[#allocation2 + $0x78] sm:$0xff] %v2413
    %2434 = vst [vmem:[#allocation2 + $0x80] sm:$0xff] %v2414
    %2435 = vst [vmem:[#allocation2 + $0x88] sm:$0xff] %v2415
    %2436 = vst [vmem:[#allocation2 + $0x90] sm:$0xff] %v2416
    %2437 = vst [vmem:[#allocation2 + $0x98] sm:$0xff] %v2417
    %2438 = vrot.lane.b32.xlu0 %v2398, 127
    %v2439 = vpop.permute.xlu0 %2438
    %2440 = vrot.lane.b32.xlu0 %v2399, 127
    %v2441 = vpop.permute.xlu0 %2440
    %2442 = vrot.lane.b32.xlu0 %v2400, 127
    %v2443 = vpop.permute.xlu0 %2442
    %2444 = vrot.lane.b32.xlu0 %v2401, 127
    %v2445 = vpop.permute.xlu0 %2444
    %2446 = vrot.lane.b32.xlu0 %v2402, 127
    %v2447 = vpop.permute.xlu0 %2446
    %2448 = vrot.lane.b32.xlu0 %v2403, 127
    %v2449 = vpop.permute.xlu0 %2448
    %2450 = vrot.lane.b32.xlu0 %v2404, 127
    %v2451 = vpop.permute.xlu0 %2450
    %2452 = vrot.lane.b32.xlu0 %v2405, 127
    %v2453 = vpop.permute.xlu0 %2452
    %2454 = vrot.lane.b32.xlu0 %v2406, 127
    %v2455 = vpop.permute.xlu0 %2454
    %2456 = vrot.lane.b32.xlu0 %v2407, 127
    %v2457 = vpop.permute.xlu0 %2456
    %2458 = vrot.lane.b32.xlu0 %v2408, 127
    %v2459 = vpop.permute.xlu0 %2458
    %2460 = vrot.lane.b32.xlu0 %v2409, 127
    %v2461 = vpop.permute.xlu0 %2460
    %2462 = vrot.lane.b32.xlu0 %v2410, 127
    %v2463 = vpop.permute.xlu0 %2462
    %2464 = vrot.lane.b32.xlu0 %v2411, 127
    %v2465 = vpop.permute.xlu0 %2464
    %2466 = vrot.lane.b32.xlu0 %v2412, 127
    %v2467 = vpop.permute.xlu0 %2466
    %2468 = vrot.lane.b32.xlu0 %v2413, 127
    %v2469 = vpop.permute.xlu0 %2468
    %2470 = vrot.lane.b32.xlu0 %v2414, 127
    %v2471 = vpop.permute.xlu0 %2470
    %2472 = vrot.lane.b32.xlu0 %v2415, 127
    %v2473 = vpop.permute.xlu0 %2472
    %2474 = vrot.lane.b32.xlu0 %v2416, 127
    %v2475 = vpop.permute.xlu0 %2474
    %2476 = vrot.lane.b32.xlu0 %v2417, 127
    %v2477 = vpop.permute.xlu0 %2476
    %v2478 = vlaneseq
    %v2479 = vand.u32 %v2478, 127
    %vm2480 = vcmp.lt.s32.totalorder %v2479, 127
    %v2481 = vsel %vm2480, %v2475, %v2477
    %v2482 = vsel %vm2480, %v2473, %v2475
    %v2483 = vsel %vm2480, %v2471, %v2473
    %v2484 = vsel %vm2480, %v2469, %v2471
    %v2485 = vsel %vm2480, %v2467, %v2469
    %v2486 = vsel %vm2480, %v2465, %v2467
    %v2487 = vsel %vm2480, %v2463, %v2465
    %v2488 = vsel %vm2480, %v2461, %v2463
    %v2489 = vsel %vm2480, %v2459, %v2461
    %v2490 = vsel %vm2480, %v2457, %v2459
    %v2491 = vsel %vm2480, %v2455, %v2457
    %v2492 = vsel %vm2480, %v2453, %v2455
    %v2493 = vsel %vm2480, %v2451, %v2453
    %v2494 = vsel %vm2480, %v2449, %v2451
    %v2495 = vsel %vm2480, %v2447, %v2449
    %v2496 = vsel %vm2480, %v2445, %v2447
    %v2497 = vsel %vm2480, %v2443, %v2445
    %v2498 = vsel %vm2480, %v2441, %v2443
    %v2499 = vsel %vm2480, %v2439, %v2441
    %v2500 = vsel %vm2480, %v2477, %v2439
    %2501 = vst [vmem:[#allocation2 + $0xa0] sm:$0xff] %v2499
    %2502 = vst [vmem:[#allocation2 + $0xa8] sm:$0xff] %v2498
    %2503 = vst [vmem:[#allocation2 + $0xb0] sm:$0xff] %v2497
    %2504 = vst [vmem:[#allocation2 + $0xb8] sm:$0xff] %v2496
    %2505 = vst [vmem:[#allocation2 + $0xc0] sm:$0xff] %v2495
    %2506 = vst [vmem:[#allocation2 + $0xc8] sm:$0xff] %v2494
    %2507 = vst [vmem:[#allocation2 + $0xd0] sm:$0xff] %v2493
    %2508 = vst [vmem:[#allocation2 + $0xd8] sm:$0xff] %v2492
    %2509 = vst [vmem:[#allocation2 + $0xe0] sm:$0xff] %v2491
    %2510 = vst [vmem:[#allocation2 + $0xe8] sm:$0xff] %v2490
    %2511 = vst [vmem:[#allocation2 + $0xf0] sm:$0xff] %v2489
    %2512 = vst [vmem:[#allocation2 + $0xf8] sm:$0xff] %v2488
    %2513 = vst [vmem:[#allocation2 + $0x100] sm:$0xff] %v2487
    %2514 = vst [vmem:[#allocation2 + $0x108] sm:$0xff] %v2486
    %2515 = vst [vmem:[#allocation2 + $0x110] sm:$0xff] %v2485
    %2516 = vst [vmem:[#allocation2 + $0x118] sm:$0xff] %v2484
    %2517 = vst [vmem:[#allocation2 + $0x120] sm:$0xff] %v2483
    %2518 = vst [vmem:[#allocation2 + $0x128] sm:$0xff] %v2482
    %2519 = vst [vmem:[#allocation2 + $0x130] sm:$0xff] %v2481
    %2520 = vst [vmem:[#allocation2 + $0x138] sm:$0xff] %v2500
    %2521 = vrot.lane.b32.xlu0 %v2398, 126
    %v2522 = vpop.permute.xlu0 %2521
    %2523 = vrot.lane.b32.xlu0 %v2399, 126
    %v2524 = vpop.permute.xlu0 %2523
    %2525 = vrot.lane.b32.xlu0 %v2400, 126
    %v2526 = vpop.permute.xlu0 %2525
    %2527 = vrot.lane.b32.xlu0 %v2401, 126
    %v2528 = vpop.permute.xlu0 %2527
    %2529 = vrot.lane.b32.xlu0 %v2402, 126
    %v2530 = vpop.permute.xlu0 %2529
    %2531 = vrot.lane.b32.xlu0 %v2403, 126
    %v2532 = vpop.permute.xlu0 %2531
    %2533 = vrot.lane.b32.xlu0 %v2404, 126
    %v2534 = vpop.permute.xlu0 %2533
    %2535 = vrot.lane.b32.xlu0 %v2405, 126
    %v2536 = vpop.permute.xlu0 %2535
    %2537 = vrot.lane.b32.xlu0 %v2406, 126
    %v2538 = vpop.permute.xlu0 %2537
    %2539 = vrot.lane.b32.xlu0 %v2407, 126
    %v2540 = vpop.permute.xlu0 %2539
    %2541 = vrot.lane.b32.xlu0 %v2408, 126
    %v2542 = vpop.permute.xlu0 %2541
    %2543 = vrot.lane.b32.xlu0 %v2409, 126
    %v2544 = vpop.permute.xlu0 %2543
    %2545 = vrot.lane.b32.xlu0 %v2410, 126
    %v2546 = vpop.permute.xlu0 %2545
    %2547 = vrot.lane.b32.xlu0 %v2411, 126
    %v2548 = vpop.permute.xlu0 %2547
    %2549 = vrot.lane.b32.xlu0 %v2412, 126
    %v2550 = vpop.permute.xlu0 %2549
    %2551 = vrot.lane.b32.xlu0 %v2413, 126
    %v2552 = vpop.permute.xlu0 %2551
    %2553 = vrot.lane.b32.xlu0 %v2414, 126
    %v2554 = vpop.permute.xlu0 %2553
    %2555 = vrot.lane.b32.xlu0 %v2415, 126
    %v2556 = vpop.permute.xlu0 %2555
    %2557 = vrot.lane.b32.xlu0 %v2416, 126
    %v2558 = vpop.permute.xlu0 %2557
    %2559 = vrot.lane.b32.xlu0 %v2417, 126
    %v2560 = vpop.permute.xlu0 %2559
    %vm2561 = vcmp.lt.s32.totalorder %v2479, 126
    %v2562 = vsel %vm2561, %v2558, %v2560
    %v2563 = vsel %vm2561, %v2556, %v2558
    %v2564 = vsel %vm2561, %v2554, %v2556
    %v2565 = vsel %vm2561, %v2552, %v2554
    %v2566 = vsel %vm2561, %v2550, %v2552
    %v2567 = vsel %vm2561, %v2548, %v2550
    %v2568 = vsel %vm2561, %v2546, %v2548
    %v2569 = vsel %vm2561, %v2544, %v2546
    %v2570 = vsel %vm2561, %v2542, %v2544
    %v2571 = vsel %vm2561, %v2540, %v2542
    %v2572 = vsel %vm2561, %v2538, %v2540
    %v2573 = vsel %vm2561, %v2536, %v2538
    %v2574 = vsel %vm2561, %v2534, %v2536
    %v2575 = vsel %vm2561, %v2532, %v2534
    %v2576 = vsel %vm2561, %v2530, %v2532
    %v2577 = vsel %vm2561, %v2528, %v2530
    %v2578 = vsel %vm2561, %v2526, %v2528
    %v2579 = vsel %vm2561, %v2524, %v2526
    %v2580 = vsel %vm2561, %v2522, %v2524
    %v2581 = vsel %vm2561, %v2560, %v2522
    %2582 = vst [vmem:[#allocation2 + $0x140] sm:$0xff] %v2580
    %2583 = vst [vmem:[#allocation2 + $0x148] sm:$0xff] %v2579
    %2584 = vst [vmem:[#allocation2 + $0x150] sm:$0xff] %v2578
    %2585 = vst [vmem:[#allocation2 + $0x158] sm:$0xff] %v2577
    %2586 = vst [vmem:[#allocation2 + $0x160] sm:$0xff] %v2576
    %2587 = vst [vmem:[#allocation2 + $0x168] sm:$0xff] %v2575
    %2588 = vst [vmem:[#allocation2 + $0x170] sm:$0xff] %v2574
    %2589 = vst [vmem:[#allocation2 + $0x178] sm:$0xff] %v2573
    %2590 = vst [vmem:[#allocation2 + $0x180] sm:$0xff] %v2572
    %2591 = vst [vmem:[#allocation2 + $0x188] sm:$0xff] %v2571
    %2592 = vst [vmem:[#allocation2 + $0x190] sm:$0xff] %v2570
    %2593 = vst [vmem:[#allocation2 + $0x198] sm:$0xff] %v2569
    %2594 = vst [vmem:[#allocation2 + $0x1a0] sm:$0xff] %v2568
    %2595 = vst [vmem:[#allocation2 + $0x1a8] sm:$0xff] %v2567
    %2596 = vst [vmem:[#allocation2 + $0x1b0] sm:$0xff] %v2566
    %2597 = vst [vmem:[#allocation2 + $0x1b8] sm:$0xff] %v2565
    %2598 = vst [vmem:[#allocation2 + $0x1c0] sm:$0xff] %v2564
    %2599 = vst [vmem:[#allocation2 + $0x1c8] sm:$0xff] %v2563
    %2600 = vst [vmem:[#allocation2 + $0x1d0] sm:$0xff] %v2562
    %2601 = vst [vmem:[#allocation2 + $0x1d8] sm:$0xff] %v2581
    %2602 = vrot.lane.b32.xlu0 %v2398, 94
    %v2603 = vpop.permute.xlu0 %2602
    %2604 = vrot.lane.b32.xlu0 %v2399, 94
    %v2605 = vpop.permute.xlu0 %2604
    %2606 = vrot.lane.b32.xlu0 %v2400, 94
    %v2607 = vpop.permute.xlu0 %2606
    %2608 = vrot.lane.b32.xlu0 %v2401, 94
    %v2609 = vpop.permute.xlu0 %2608
    %2610 = vrot.lane.b32.xlu0 %v2402, 94
    %v2611 = vpop.permute.xlu0 %2610
    %2612 = vrot.lane.b32.xlu0 %v2403, 94
    %v2613 = vpop.permute.xlu0 %2612
    %2614 = vrot.lane.b32.xlu0 %v2404, 94
    %v2615 = vpop.permute.xlu0 %2614
    %2616 = vrot.lane.b32.xlu0 %v2405, 94
    %v2617 = vpop.permute.xlu0 %2616
    %2618 = vrot.lane.b32.xlu0 %v2406, 94
    %v2619 = vpop.permute.xlu0 %2618
    %2620 = vrot.lane.b32.xlu0 %v2407, 94
    %v2621 = vpop.permute.xlu0 %2620
    %2622 = vrot.lane.b32.xlu0 %v2408, 94
    %v2623 = vpop.permute.xlu0 %2622
    %2624 = vrot.lane.b32.xlu0 %v2409, 94
    %v2625 = vpop.permute.xlu0 %2624
    %2626 = vrot.lane.b32.xlu0 %v2410, 94
    %v2627 = vpop.permute.xlu0 %2626
    %2628 = vrot.lane.b32.xlu0 %v2411, 94
    %v2629 = vpop.permute.xlu0 %2628
    %2630 = vrot.lane.b32.xlu0 %v2412, 94
    %v2631 = vpop.permute.xlu0 %2630
    %2632 = vrot.lane.b32.xlu0 %v2413, 94
    %v2633 = vpop.permute.xlu0 %2632
    %2634 = vrot.lane.b32.xlu0 %v2414, 94
    %v2635 = vpop.permute.xlu0 %2634
    %2636 = vrot.lane.b32.xlu0 %v2415, 94
    %v2637 = vpop.permute.xlu0 %2636
    %2638 = vrot.lane.b32.xlu0 %v2416, 94
    %v2639 = vpop.permute.xlu0 %2638
    %2640 = vrot.lane.b32.xlu0 %v2417, 94
    %v2641 = vpop.permute.xlu0 %2640
    %vm2642 = vcmp.lt.s32.totalorder %v2479, 94
    %v2643 = vsel %vm2642, %v2639, %v2641
    %v2644 = vsel %vm2642, %v2637, %v2639
    %v2645 = vsel %vm2642, %v2635, %v2637
    %v2646 = vsel %vm2642, %v2633, %v2635
    %v2647 = vsel %vm2642, %v2631, %v2633
    %v2648 = vsel %vm2642, %v2629, %v2631
    %v2649 = vsel %vm2642, %v2627, %v2629
    %v2650 = vsel %vm2642, %v2625, %v2627
    %v2651 = vsel %vm2642, %v2623, %v2625
    %v2652 = vsel %vm2642, %v2621, %v2623
    %v2653 = vsel %vm2642, %v2619, %v2621
    %v2654 = vsel %vm2642, %v2617, %v2619
    %v2655 = vsel %vm2642, %v2615, %v2617
    %v2656 = vsel %vm2642, %v2613, %v2615
    %v2657 = vsel %vm2642, %v2611, %v2613
    %v2658 = vsel %vm2642, %v2609, %v2611
    %v2659 = vsel %vm2642, %v2607, %v2609
    %v2660 = vsel %vm2642, %v2605, %v2607
    %v2661 = vsel %vm2642, %v2603, %v2605
    %v2662 = vsel %vm2642, %v2641, %v2603
    %2663 = vst [vmem:[#allocation2 + $0x1e0] sm:$0xff] %v2661
    %2664 = vst [vmem:[#allocation2 + $0x1e8] sm:$0xff] %v2660
    %2665 = vst [vmem:[#allocation2 + $0x1f0] sm:$0xff] %v2659
    %2666 = vst [vmem:[#allocation2 + $0x1f8] sm:$0xff] %v2658
    %2667 = vst [vmem:[#allocation2 + $0x200] sm:$0xff] %v2657
    %2668 = vst [vmem:[#allocation2 + $0x208] sm:$0xff] %v2656
    %2669 = vst [vmem:[#allocation2 + $0x210] sm:$0xff] %v2655
    %2670 = vst [vmem:[#allocation2 + $0x218] sm:$0xff] %v2654
    %2671 = vst [vmem:[#allocation2 + $0x220] sm:$0xff] %v2653
    %2672 = vst [vmem:[#allocation2 + $0x228] sm:$0xff] %v2652
    %2673 = vst [vmem:[#allocation2 + $0x230] sm:$0xff] %v2651
    %2674 = vst [vmem:[#allocation2 + $0x238] sm:$0xff] %v2650
    %2675 = vst [vmem:[#allocation2 + $0x240] sm:$0xff] %v2649
    %2676 = vst [vmem:[#allocation2 + $0x248] sm:$0xff] %v2648
    %2677 = vst [vmem:[#allocation2 + $0x250] sm:$0xff] %v2647
    %2678 = vst [vmem:[#allocation2 + $0x258] sm:$0xff] %v2646
    %2679 = vst [vmem:[#allocation2 + $0x260] sm:$0xff] %v2645
    %2680 = vst [vmem:[#allocation2 + $0x268] sm:$0xff] %v2644
    %2681 = vst [vmem:[#allocation2 + $0x270] sm:$0xff] %v2643
    %2682 = vst [vmem:[#allocation2 + $0x278] sm:$0xff] %v2662
    %2683 = vrot.lane.b32.xlu0 %v2398, 93
    %v2684 = vpop.permute.xlu0 %2683
    %2685 = vrot.lane.b32.xlu0 %v2399, 93
    %v2686 = vpop.permute.xlu0 %2685
    %2687 = vrot.lane.b32.xlu0 %v2400, 93
    %v2688 = vpop.permute.xlu0 %2687
    %2689 = vrot.lane.b32.xlu0 %v2401, 93
    %v2690 = vpop.permute.xlu0 %2689
    %2691 = vrot.lane.b32.xlu0 %v2402, 93
    %v2692 = vpop.permute.xlu0 %2691
    %2693 = vrot.lane.b32.xlu0 %v2403, 93
    %v2694 = vpop.permute.xlu0 %2693
    %2695 = vrot.lane.b32.xlu0 %v2404, 93
    %v2696 = vpop.permute.xlu0 %2695
    %2697 = vrot.lane.b32.xlu0 %v2405, 93
    %v2698 = vpop.permute.xlu0 %2697
    %2699 = vrot.lane.b32.xlu0 %v2406, 93
    %v2700 = vpop.permute.xlu0 %2699
    %2701 = vrot.lane.b32.xlu0 %v2407, 93
    %v2702 = vpop.permute.xlu0 %2701
    %2703 = vrot.lane.b32.xlu0 %v2408, 93
    %v2704 = vpop.permute.xlu0 %2703
    %2705 = vrot.lane.b32.xlu0 %v2409, 93
    %v2706 = vpop.permute.xlu0 %2705
    %2707 = vrot.lane.b32.xlu0 %v2410, 93
    %v2708 = vpop.permute.xlu0 %2707
    %2709 = vrot.lane.b32.xlu0 %v2411, 93
    %v2710 = vpop.permute.xlu0 %2709
    %2711 = vrot.lane.b32.xlu0 %v2412, 93
    %v2712 = vpop.permute.xlu0 %2711
    %2713 = vrot.lane.b32.xlu0 %v2413, 93
    %v2714 = vpop.permute.xlu0 %2713
    %2715 = vrot.lane.b32.xlu0 %v2414, 93
    %v2716 = vpop.permute.xlu0 %2715
    %2717 = vrot.lane.b32.xlu0 %v2415, 93
    %v2718 = vpop.permute.xlu0 %2717
    %2719 = vrot.lane.b32.xlu0 %v2416, 93
    %v2720 = vpop.permute.xlu0 %2719
    %2721 = vrot.lane.b32.xlu0 %v2417, 93
    %v2722 = vpop.permute.xlu0 %2721
    %vm2723 = vcmp.lt.s32.totalorder %v2479, 93
    %v2724 = vsel %vm2723, %v2720, %v2722
    %v2725 = vsel %vm2723, %v2718, %v2720
    %v2726 = vsel %vm2723, %v2716, %v2718
    %v2727 = vsel %vm2723, %v2714, %v2716
    %v2728 = vsel %vm2723, %v2712, %v2714
    %v2729 = vsel %vm2723, %v2710, %v2712
    %v2730 = vsel %vm2723, %v2708, %v2710
    %v2731 = vsel %vm2723, %v2706, %v2708
    %v2732 = vsel %vm2723, %v2704, %v2706
    %v2733 = vsel %vm2723, %v2702, %v2704
    %v2734 = vsel %vm2723, %v2700, %v2702
    %v2735 = vsel %vm2723, %v2698, %v2700
    %v2736 = vsel %vm2723, %v2696, %v2698
    %v2737 = vsel %vm2723, %v2694, %v2696
    %v2738 = vsel %vm2723, %v2692, %v2694
    %v2739 = vsel %vm2723, %v2690, %v2692
    %v2740 = vsel %vm2723, %v2688, %v2690
    %v2741 = vsel %vm2723, %v2686, %v2688
    %v2742 = vsel %vm2723, %v2684, %v2686
    %v2743 = vsel %vm2723, %v2722, %v2684
    %2744 = vst [vmem:[#allocation2 + $0x280] sm:$0xff] %v2742
    %2745 = vst [vmem:[#allocation2 + $0x288] sm:$0xff] %v2741
    %2746 = vst [vmem:[#allocation2 + $0x290] sm:$0xff] %v2740
    %2747 = vst [vmem:[#allocation2 + $0x298] sm:$0xff] %v2739
    %2748 = vst [vmem:[#allocation2 + $0x2a0] sm:$0xff] %v2738
    %2749 = vst [vmem:[#allocation2 + $0x2a8] sm:$0xff] %v2737
    %2750 = vst [vmem:[#allocation2 + $0x2b0] sm:$0xff] %v2736
    %2751 = vst [vmem:[#allocation2 + $0x2b8] sm:$0xff] %v2735
    %2752 = vst [vmem:[#allocation2 + $0x2c0] sm:$0xff] %v2734
    %2753 = vst [vmem:[#allocation2 + $0x2c8] sm:$0xff] %v2733
    %2754 = vst [vmem:[#allocation2 + $0x2d0] sm:$0xff] %v2732
    %2755 = vst [vmem:[#allocation2 + $0x2d8] sm:$0xff] %v2731
    %2756 = vst [vmem:[#allocation2 + $0x2e0] sm:$0xff] %v2730
    %2757 = vst [vmem:[#allocation2 + $0x2e8] sm:$0xff] %v2729
    %2758 = vst [vmem:[#allocation2 + $0x2f0] sm:$0xff] %v2728
    %2759 = vst [vmem:[#allocation2 + $0x2f8] sm:$0xff] %v2727
    %2760 = vst [vmem:[#allocation2 + $0x300] sm:$0xff] %v2726
    %2761 = vst [vmem:[#allocation2 + $0x308] sm:$0xff] %v2725
    %2762 = vst [vmem:[#allocation2 + $0x310] sm:$0xff] %v2724
    %2763 = vst [vmem:[#allocation2 + $0x318] sm:$0xff] %v2743
    %2764 = vrot.lane.b32.xlu0 %v2398, 92
    %v2765 = vpop.permute.xlu0 %2764
    %2766 = vrot.lane.b32.xlu0 %v2399, 92
    %v2767 = vpop.permute.xlu0 %2766
    %2768 = vrot.lane.b32.xlu0 %v2400, 92
    %v2769 = vpop.permute.xlu0 %2768
    %2770 = vrot.lane.b32.xlu0 %v2401, 92
    %v2771 = vpop.permute.xlu0 %2770
    %2772 = vrot.lane.b32.xlu0 %v2402, 92
    %v2773 = vpop.permute.xlu0 %2772
    %2774 = vrot.lane.b32.xlu0 %v2403, 92
    %v2775 = vpop.permute.xlu0 %2774
    %2776 = vrot.lane.b32.xlu0 %v2404, 92
    %v2777 = vpop.permute.xlu0 %2776
    %2778 = vrot.lane.b32.xlu0 %v2405, 92
    %v2779 = vpop.permute.xlu0 %2778
    %2780 = vrot.lane.b32.xlu0 %v2406, 92
    %v2781 = vpop.permute.xlu0 %2780
    %2782 = vrot.lane.b32.xlu0 %v2407, 92
    %v2783 = vpop.permute.xlu0 %2782
    %2784 = vrot.lane.b32.xlu0 %v2408, 92
    %v2785 = vpop.permute.xlu0 %2784
    %2786 = vrot.lane.b32.xlu0 %v2409, 92
    %v2787 = vpop.permute.xlu0 %2786
    %2788 = vrot.lane.b32.xlu0 %v2410, 92
    %v2789 = vpop.permute.xlu0 %2788
    %2790 = vrot.lane.b32.xlu0 %v2411, 92
    %v2791 = vpop.permute.xlu0 %2790
    %2792 = vrot.lane.b32.xlu0 %v2412, 92
    %v2793 = vpop.permute.xlu0 %2792
    %2794 = vrot.lane.b32.xlu0 %v2413, 92
    %v2795 = vpop.permute.xlu0 %2794
    %2796 = vrot.lane.b32.xlu0 %v2414, 92
    %v2797 = vpop.permute.xlu0 %2796
    %2798 = vrot.lane.b32.xlu0 %v2415, 92
    %v2799 = vpop.permute.xlu0 %2798
    %2800 = vrot.lane.b32.xlu0 %v2416, 92
    %v2801 = vpop.permute.xlu0 %2800
    %2802 = vrot.lane.b32.xlu0 %v2417, 92
    %v2803 = vpop.permute.xlu0 %2802
    %vm2804 = vcmp.lt.s32.totalorder %v2479, 92
    %v2805 = vsel %vm2804, %v2801, %v2803
    %v2806 = vsel %vm2804, %v2799, %v2801
    %v2807 = vsel %vm2804, %v2797, %v2799
    %v2808 = vsel %vm2804, %v2795, %v2797
    %v2809 = vsel %vm2804, %v2793, %v2795
    %v2810 = vsel %vm2804, %v2791, %v2793
    %v2811 = vsel %vm2804, %v2789, %v2791
    %v2812 = vsel %vm2804, %v2787, %v2789
    %v2813 = vsel %vm2804, %v2785, %v2787
    %v2814 = vsel %vm2804, %v2783, %v2785
    %v2815 = vsel %vm2804, %v2781, %v2783
    %v2816 = vsel %vm2804, %v2779, %v2781
    %v2817 = vsel %vm2804, %v2777, %v2779
    %v2818 = vsel %vm2804, %v2775, %v2777
    %v2819 = vsel %vm2804, %v2773, %v2775
    %v2820 = vsel %vm2804, %v2771, %v2773
    %v2821 = vsel %vm2804, %v2769, %v2771
    %v2822 = vsel %vm2804, %v2767, %v2769
    %v2823 = vsel %vm2804, %v2765, %v2767
    %v2824 = vsel %vm2804, %v2803, %v2765
    %2825 = vst [vmem:[#allocation2 + $0x320] sm:$0xff] %v2823
    %2826 = vst [vmem:[#allocation2 + $0x328] sm:$0xff] %v2822
    %2827 = vst [vmem:[#allocation2 + $0x330] sm:$0xff] %v2821
    %2828 = vst [vmem:[#allocation2 + $0x338] sm:$0xff] %v2820
    %2829 = vst [vmem:[#allocation2 + $0x340] sm:$0xff] %v2819
    %2830 = vst [vmem:[#allocation2 + $0x348] sm:$0xff] %v2818
    %2831 = vst [vmem:[#allocation2 + $0x350] sm:$0xff] %v2817
    %2832 = vst [vmem:[#allocation2 + $0x358] sm:$0xff] %v2816
    %2833 = vst [vmem:[#allocation2 + $0x360] sm:$0xff] %v2815
    %2834 = vst [vmem:[#allocation2 + $0x368] sm:$0xff] %v2814
    %2835 = vst [vmem:[#allocation2 + $0x370] sm:$0xff] %v2813
    %2836 = vst [vmem:[#allocation2 + $0x378] sm:$0xff] %v2812
    %2837 = vst [vmem:[#allocation2 + $0x380] sm:$0xff] %v2811
    %2838 = vst [vmem:[#allocation2 + $0x388] sm:$0xff] %v2810
    %2839 = vst [vmem:[#allocation2 + $0x390] sm:$0xff] %v2809
    %2840 = vst [vmem:[#allocation2 + $0x398] sm:$0xff] %v2808
    %2841 = vst [vmem:[#allocation2 + $0x3a0] sm:$0xff] %v2807
    %2842 = vst [vmem:[#allocation2 + $0x3a8] sm:$0xff] %v2806
    %2843 = vst [vmem:[#allocation2 + $0x3b0] sm:$0xff] %v2805
    %2844 = vst [vmem:[#allocation2 + $0x3b8] sm:$0xff] %v2824
    %2845 = vrot.lane.b32.xlu0 %v2398, 60
    %v2846 = vpop.permute.xlu0 %2845
    %2847 = vrot.lane.b32.xlu0 %v2399, 60
    %v2848 = vpop.permute.xlu0 %2847
    %2849 = vrot.lane.b32.xlu0 %v2400, 60
    %v2850 = vpop.permute.xlu0 %2849
    %2851 = vrot.lane.b32.xlu0 %v2401, 60
    %v2852 = vpop.permute.xlu0 %2851
    %2853 = vrot.lane.b32.xlu0 %v2402, 60
    %v2854 = vpop.permute.xlu0 %2853
    %2855 = vrot.lane.b32.xlu0 %v2403, 60
    %v2856 = vpop.permute.xlu0 %2855
    %2857 = vrot.lane.b32.xlu0 %v2404, 60
    %v2858 = vpop.permute.xlu0 %2857
    %2859 = vrot.lane.b32.xlu0 %v2405, 60
    %v2860 = vpop.permute.xlu0 %2859
    %2861 = vrot.lane.b32.xlu0 %v2406, 60
    %v2862 = vpop.permute.xlu0 %2861
    %2863 = vrot.lane.b32.xlu0 %v2407, 60
    %v2864 = vpop.permute.xlu0 %2863
    %2865 = vrot.lane.b32.xlu0 %v2408, 60
    %v2866 = vpop.permute.xlu0 %2865
    %2867 = vrot.lane.b32.xlu0 %v2409, 60
    %v2868 = vpop.permute.xlu0 %2867
    %2869 = vrot.lane.b32.xlu0 %v2410, 60
    %v2870 = vpop.permute.xlu0 %2869
    %2871 = vrot.lane.b32.xlu0 %v2411, 60
    %v2872 = vpop.permute.xlu0 %2871
    %2873 = vrot.lane.b32.xlu0 %v2412, 60
    %v2874 = vpop.permute.xlu0 %2873
    %2875 = vrot.lane.b32.xlu0 %v2413, 60
    %v2876 = vpop.permute.xlu0 %2875
    %2877 = vrot.lane.b32.xlu0 %v2414, 60
    %v2878 = vpop.permute.xlu0 %2877
    %2879 = vrot.lane.b32.xlu0 %v2415, 60
    %v2880 = vpop.permute.xlu0 %2879
    %2881 = vrot.lane.b32.xlu0 %v2416, 60
    %v2882 = vpop.permute.xlu0 %2881
    %2883 = vrot.lane.b32.xlu0 %v2417, 60
    %v2884 = vpop.permute.xlu0 %2883
    %vm2885 = vcmp.lt.s32.totalorder %v2479, 60
    %v2886 = vsel %vm2885, %v2882, %v2884
    %v2887 = vsel %vm2885, %v2880, %v2882
    %v2888 = vsel %vm2885, %v2878, %v2880
    %v2889 = vsel %vm2885, %v2876, %v2878
    %v2890 = vsel %vm2885, %v2874, %v2876
    %v2891 = vsel %vm2885, %v2872, %v2874
    %v2892 = vsel %vm2885, %v2870, %v2872
    %v2893 = vsel %vm2885, %v2868, %v2870
    %v2894 = vsel %vm2885, %v2866, %v2868
    %v2895 = vsel %vm2885, %v2864, %v2866
    %v2896 = vsel %vm2885, %v2862, %v2864
    %v2897 = vsel %vm2885, %v2860, %v2862
    %v2898 = vsel %vm2885, %v2858, %v2860
    %v2899 = vsel %vm2885, %v2856, %v2858
    %v2900 = vsel %vm2885, %v2854, %v2856
    %v2901 = vsel %vm2885, %v2852, %v2854
    %v2902 = vsel %vm2885, %v2850, %v2852
    %v2903 = vsel %vm2885, %v2848, %v2850
    %v2904 = vsel %vm2885, %v2846, %v2848
    %v2905 = vsel %vm2885, %v2884, %v2846
    %2906 = vst [vmem:[#allocation2 + $0x3c0] sm:$0xff] %v2904
    %2907 = vst [vmem:[#allocation2 + $0x3c8] sm:$0xff] %v2903
    %2908 = vst [vmem:[#allocation2 + $0x3d0] sm:$0xff] %v2902
    %2909 = vst [vmem:[#allocation2 + $0x3d8] sm:$0xff] %v2901
    %2910 = vst [vmem:[#allocation2 + $0x3e0] sm:$0xff] %v2900
    %2911 = vst [vmem:[#allocation2 + $0x3e8] sm:$0xff] %v2899
    %2912 = vst [vmem:[#allocation2 + $0x3f0] sm:$0xff] %v2898
    %2913 = vst [vmem:[#allocation2 + $0x3f8] sm:$0xff] %v2897
    %2914 = vst [vmem:[#allocation2 + $0x400] sm:$0xff] %v2896
    %2915 = vst [vmem:[#allocation2 + $0x408] sm:$0xff] %v2895
    %2916 = vst [vmem:[#allocation2 + $0x410] sm:$0xff] %v2894
    %2917 = vst [vmem:[#allocation2 + $0x418] sm:$0xff] %v2893
    %2918 = vst [vmem:[#allocation2 + $0x420] sm:$0xff] %v2892
    %2919 = vst [vmem:[#allocation2 + $0x428] sm:$0xff] %v2891
    %2920 = vst [vmem:[#allocation2 + $0x430] sm:$0xff] %v2890
    %2921 = vst [vmem:[#allocation2 + $0x438] sm:$0xff] %v2889
    %2922 = vst [vmem:[#allocation2 + $0x440] sm:$0xff] %v2888
    %2923 = vst [vmem:[#allocation2 + $0x448] sm:$0xff] %v2887
    %2924 = vst [vmem:[#allocation2 + $0x450] sm:$0xff] %v2886
    %2925 = vst [vmem:[#allocation2 + $0x458] sm:$0xff] %v2905
    %2926 = vrot.lane.b32.xlu0 %v2398, 59
    %v2927 = vpop.permute.xlu0 %2926
    %2928 = vrot.lane.b32.xlu0 %v2399, 59
    %v2929 = vpop.permute.xlu0 %2928
    %2930 = vrot.lane.b32.xlu0 %v2400, 59
    %v2931 = vpop.permute.xlu0 %2930
    %2932 = vrot.lane.b32.xlu0 %v2401, 59
    %v2933 = vpop.permute.xlu0 %2932
    %2934 = vrot.lane.b32.xlu0 %v2402, 59
    %v2935 = vpop.permute.xlu0 %2934
    %2936 = vrot.lane.b32.xlu0 %v2403, 59
    %v2937 = vpop.permute.xlu0 %2936
    %2938 = vrot.lane.b32.xlu0 %v2404, 59
    %v2939 = vpop.permute.xlu0 %2938
    %2940 = vrot.lane.b32.xlu0 %v2405, 59
    %v2941 = vpop.permute.xlu0 %2940
    %2942 = vrot.lane.b32.xlu0 %v2406, 59
    %v2943 = vpop.permute.xlu0 %2942
    %2944 = vrot.lane.b32.xlu0 %v2407, 59
    %v2945 = vpop.permute.xlu0 %2944
    %2946 = vrot.lane.b32.xlu0 %v2408, 59
    %v2947 = vpop.permute.xlu0 %2946
    %2948 = vrot.lane.b32.xlu0 %v2409, 59
    %v2949 = vpop.permute.xlu0 %2948
    %2950 = vrot.lane.b32.xlu0 %v2410, 59
    %v2951 = vpop.permute.xlu0 %2950
    %2952 = vrot.lane.b32.xlu0 %v2411, 59
    %v2953 = vpop.permute.xlu0 %2952
    %2954 = vrot.lane.b32.xlu0 %v2412, 59
    %v2955 = vpop.permute.xlu0 %2954
    %2956 = vrot.lane.b32.xlu0 %v2413, 59
    %v2957 = vpop.permute.xlu0 %2956
    %2958 = vrot.lane.b32.xlu0 %v2414, 59
    %v2959 = vpop.permute.xlu0 %2958
    %2960 = vrot.lane.b32.xlu0 %v2415, 59
    %v2961 = vpop.permute.xlu0 %2960
    %2962 = vrot.lane.b32.xlu0 %v2416, 59
    %v2963 = vpop.permute.xlu0 %2962
    %2964 = vrot.lane.b32.xlu0 %v2417, 59
    %v2965 = vpop.permute.xlu0 %2964
    %vm2966 = vcmp.lt.s32.totalorder %v2479, 59
    %v2967 = vsel %vm2966, %v2963, %v2965
    %v2968 = vsel %vm2966, %v2961, %v2963
    %v2969 = vsel %vm2966, %v2959, %v2961
    %v2970 = vsel %vm2966, %v2957, %v2959
    %v2971 = vsel %vm2966, %v2955, %v2957
    %v2972 = vsel %vm2966, %v2953, %v2955
    %v2973 = vsel %vm2966, %v2951, %v2953
    %v2974 = vsel %vm2966, %v2949, %v2951
    %v2975 = vsel %vm2966, %v2947, %v2949
    %v2976 = vsel %vm2966, %v2945, %v2947
    %v2977 = vsel %vm2966, %v2943, %v2945
    %v2978 = vsel %vm2966, %v2941, %v2943
    %v2979 = vsel %vm2966, %v2939, %v2941
    %v2980 = vsel %vm2966, %v2937, %v2939
    %v2981 = vsel %vm2966, %v2935, %v2937
    %v2982 = vsel %vm2966, %v2933, %v2935
    %v2983 = vsel %vm2966, %v2931, %v2933
    %v2984 = vsel %vm2966, %v2929, %v2931
    %v2985 = vsel %vm2966, %v2927, %v2929
    %v2986 = vsel %vm2966, %v2965, %v2927
    %2987 = vst [vmem:[#allocation2 + $0x460] sm:$0xff] %v2985
    %2988 = vst [vmem:[#allocation2 + $0x468] sm:$0xff] %v2984
    %2989 = vst [vmem:[#allocation2 + $0x470] sm:$0xff] %v2983
    %2990 = vst [vmem:[#allocation2 + $0x478] sm:$0xff] %v2982
    %2991 = vst [vmem:[#allocation2 + $0x480] sm:$0xff] %v2981
    %2992 = vst [vmem:[#allocation2 + $0x488] sm:$0xff] %v2980
    %2993 = vst [vmem:[#allocation2 + $0x490] sm:$0xff] %v2979
    %2994 = vst [vmem:[#allocation2 + $0x498] sm:$0xff] %v2978
    %2995 = vst [vmem:[#allocation2 + $0x4a0] sm:$0xff] %v2977
    %2996 = vst [vmem:[#allocation2 + $0x4a8] sm:$0xff] %v2976
    %2997 = vst [vmem:[#allocation2 + $0x4b0] sm:$0xff] %v2975
    %2998 = vst [vmem:[#allocation2 + $0x4b8] sm:$0xff] %v2974
    %2999 = vst [vmem:[#allocation2 + $0x4c0] sm:$0xff] %v2973
    %3000 = vst [vmem:[#allocation2 + $0x4c8] sm:$0xff] %v2972
    %3001 = vst [vmem:[#allocation2 + $0x4d0] sm:$0xff] %v2971
    %3002 = vst [vmem:[#allocation2 + $0x4d8] sm:$0xff] %v2970
    %3003 = vst [vmem:[#allocation2 + $0x4e0] sm:$0xff] %v2969
    %3004 = vst [vmem:[#allocation2 + $0x4e8] sm:$0xff] %v2968
    %3005 = vst [vmem:[#allocation2 + $0x4f0] sm:$0xff] %v2967
    %3006 = vst [vmem:[#allocation2 + $0x4f8] sm:$0xff] %v2986
    %3007 = vrot.lane.b32.xlu0 %v2398, 58
    %v3008 = vpop.permute.xlu0 %3007
    %3009 = vrot.lane.b32.xlu0 %v2399, 58
    %v3010 = vpop.permute.xlu0 %3009
    %3011 = vrot.lane.b32.xlu0 %v2400, 58
    %v3012 = vpop.permute.xlu0 %3011
    %3013 = vrot.lane.b32.xlu0 %v2401, 58
    %v3014 = vpop.permute.xlu0 %3013
    %3015 = vrot.lane.b32.xlu0 %v2402, 58
    %v3016 = vpop.permute.xlu0 %3015
    %3017 = vrot.lane.b32.xlu0 %v2403, 58
    %v3018 = vpop.permute.xlu0 %3017
    %3019 = vrot.lane.b32.xlu0 %v2404, 58
    %v3020 = vpop.permute.xlu0 %3019
    %3021 = vrot.lane.b32.xlu0 %v2405, 58
    %v3022 = vpop.permute.xlu0 %3021
    %3023 = vrot.lane.b32.xlu0 %v2406, 58
    %v3024 = vpop.permute.xlu0 %3023
    %3025 = vrot.lane.b32.xlu0 %v2407, 58
    %v3026 = vpop.permute.xlu0 %3025
    %3027 = vrot.lane.b32.xlu0 %v2408, 58
    %v3028 = vpop.permute.xlu0 %3027
    %3029 = vrot.lane.b32.xlu0 %v2409, 58
    %v3030 = vpop.permute.xlu0 %3029
    %3031 = vrot.lane.b32.xlu0 %v2410, 58
    %v3032 = vpop.permute.xlu0 %3031
    %3033 = vrot.lane.b32.xlu0 %v2411, 58
    %v3034 = vpop.permute.xlu0 %3033
    %3035 = vrot.lane.b32.xlu0 %v2412, 58
    %v3036 = vpop.permute.xlu0 %3035
    %3037 = vrot.lane.b32.xlu0 %v2413, 58
    %v3038 = vpop.permute.xlu0 %3037
    %3039 = vrot.lane.b32.xlu0 %v2414, 58
    %v3040 = vpop.permute.xlu0 %3039
    %3041 = vrot.lane.b32.xlu0 %v2415, 58
    %v3042 = vpop.permute.xlu0 %3041
    %3043 = vrot.lane.b32.xlu0 %v2416, 58
    %v3044 = vpop.permute.xlu0 %3043
    %3045 = vrot.lane.b32.xlu0 %v2417, 58
    %v3046 = vpop.permute.xlu0 %3045
    %vm3047 = vcmp.lt.s32.totalorder %v2479, 58
    %v3048 = vsel %vm3047, %v3044, %v3046
    %v3049 = vsel %vm3047, %v3042, %v3044
    %v3050 = vsel %vm3047, %v3040, %v3042
    %v3051 = vsel %vm3047, %v3038, %v3040
    %v3052 = vsel %vm3047, %v3036, %v3038
    %v3053 = vsel %vm3047, %v3034, %v3036
    %v3054 = vsel %vm3047, %v3032, %v3034
    %v3055 = vsel %vm3047, %v3030, %v3032
    %v3056 = vsel %vm3047, %v3028, %v3030
    %v3057 = vsel %vm3047, %v3026, %v3028
    %v3058 = vsel %vm3047, %v3024, %v3026
    %v3059 = vsel %vm3047, %v3022, %v3024
    %v3060 = vsel %vm3047, %v3020, %v3022
    %v3061 = vsel %vm3047, %v3018, %v3020
    %v3062 = vsel %vm3047, %v3016, %v3018
    %v3063 = vsel %vm3047, %v3014, %v3016
    %v3064 = vsel %vm3047, %v3012, %v3014
    %v3065 = vsel %vm3047, %v3010, %v3012
    %v3066 = vsel %vm3047, %v3008, %v3010
    %v3067 = vsel %vm3047, %v3046, %v3008
    %3068 = vst [vmem:[#allocation2 + $0x500] sm:$0xff] %v3066
    %3069 = vst [vmem:[#allocation2 + $0x508] sm:$0xff] %v3065
    %3070 = vst [vmem:[#allocation2 + $0x510] sm:$0xff] %v3064
    %3071 = vst [vmem:[#allocation2 + $0x518] sm:$0xff] %v3063
    %3072 = vst [vmem:[#allocation2 + $0x520] sm:$0xff] %v3062
    %3073 = vst [vmem:[#allocation2 + $0x528] sm:$0xff] %v3061
    %3074 = vst [vmem:[#allocation2 + $0x530] sm:$0xff] %v3060
    %3075 = vst [vmem:[#allocation2 + $0x538] sm:$0xff] %v3059
    %3076 = vst [vmem:[#allocation2 + $0x540] sm:$0xff] %v3058
    %3077 = vst [vmem:[#allocation2 + $0x548] sm:$0xff] %v3057
    %3078 = vst [vmem:[#allocation2 + $0x550] sm:$0xff] %v3056
    %3079 = vst [vmem:[#allocation2 + $0x558] sm:$0xff] %v3055
    %3080 = vst [vmem:[#allocation2 + $0x560] sm:$0xff] %v3054
    %3081 = vst [vmem:[#allocation2 + $0x568] sm:$0xff] %v3053
    %3082 = vst [vmem:[#allocation2 + $0x570] sm:$0xff] %v3052
    %3083 = vst [vmem:[#allocation2 + $0x578] sm:$0xff] %v3051
    %3084 = vst [vmem:[#allocation2 + $0x580] sm:$0xff] %v3050
    %3085 = vst [vmem:[#allocation2 + $0x588] sm:$0xff] %v3049
    %3086 = vst [vmem:[#allocation2 + $0x590] sm:$0xff] %v3048
    %3087 = vst [vmem:[#allocation2 + $0x598] sm:$0xff] %v3067
    %v3088 = vld [vmem:[%s3] sm:$0xff]
    %v3089 = vld [vmem:[#allocation2] sm:$0xff]
    %v3090 = vld [vmem:[#allocation2 + $0x8] sm:$0xff]
    %v3091 = vld [vmem:[#allocation2 + $0x10] sm:$0xff]
    %v3092 = vld [vmem:[#allocation2 + $0x18] sm:$0xff]
    %v3093 = vld [vmem:[#allocation2 + $0x20] sm:$0xff]
    %v3094 = vld [vmem:[#allocation2 + $0x28] sm:$0xff]
    %v3095 = vld [vmem:[#allocation2 + $0x30] sm:$0xff]
    %v3096 = vld [vmem:[#allocation2 + $0x38] sm:$0xff]
    %v3097 = vld [vmem:[#allocation2 + $0x40] sm:$0xff]
    %v3098 = vld [vmem:[#allocation2 + $0x48] sm:$0xff]
    %v3099 = vld [vmem:[#allocation2 + $0x50] sm:$0xff]
    %v3100 = vld [vmem:[#allocation2 + $0x58] sm:$0xff]
    %v3101 = vld [vmem:[#allocation2 + $0x60] sm:$0xff]
    %v3102 = vld [vmem:[#allocation2 + $0x68] sm:$0xff]
    %v3103 = vld [vmem:[#allocation2 + $0x70] sm:$0xff]
    %v3104 = vld [vmem:[#allocation2 + $0x78] sm:$0xff]
    %v3105 = vld [vmem:[#allocation2 + $0x80] sm:$0xff]
    %v3106 = vld [vmem:[#allocation2 + $0x88] sm:$0xff]
    %v3107 = vld [vmem:[#allocation2 + $0x90] sm:$0xff]
    %v3108 = vld [vmem:[#allocation2 + $0x98] sm:$0xff]
    %v3109 = vld [vmem:[#allocation2 + $0xa0] sm:$0xff]
    %v3110 = vld [vmem:[#allocation2 + $0xa8] sm:$0xff]
    %v3111 = vld [vmem:[#allocation2 + $0xb0] sm:$0xff]
    %v3112 = vld [vmem:[#allocation2 + $0xb8] sm:$0xff]
    %v3113 = vld [vmem:[#allocation2 + $0xc0] sm:$0xff]
    %v3114 = vld [vmem:[#allocation2 + $0xc8] sm:$0xff]
    %v3115 = vld [vmem:[#allocation2 + $0xd0] sm:$0xff]
    %v3116 = vld [vmem:[#allocation2 + $0xd8] sm:$0xff]
    %v3117 = vld [vmem:[#allocation2 + $0xe0] sm:$0xff]
    %v3118 = vld [vmem:[#allocation2 + $0xe8] sm:$0xff]
    %v3119 = vld [vmem:[#allocation2 + $0xf0] sm:$0xff]
    %v3120 = vld [vmem:[#allocation2 + $0xf8] sm:$0xff]
    %v3121 = vld [vmem:[#allocation2 + $0x100] sm:$0xff]
    %v3122 = vld [vmem:[#allocation2 + $0x108] sm:$0xff]
    %v3123 = vld [vmem:[#allocation2 + $0x110] sm:$0xff]
    %v3124 = vld [vmem:[#allocation2 + $0x118] sm:$0xff]
    %v3125 = vld [vmem:[#allocation2 + $0x120] sm:$0xff]
    %v3126 = vld [vmem:[#allocation2 + $0x128] sm:$0xff]
    %v3127 = vld [vmem:[#allocation2 + $0x130] sm:$0xff]
    %v3128 = vld [vmem:[#allocation2 + $0x138] sm:$0xff]
    %v3129 = vld [vmem:[#allocation2 + $0x140] sm:$0xff]
    %v3130 = vld [vmem:[#allocation2 + $0x148] sm:$0xff]
    %v3131 = vld [vmem:[#allocation2 + $0x150] sm:$0xff]
    %v3132 = vld [vmem:[#allocation2 + $0x158] sm:$0xff]
    %v3133 = vld [vmem:[#allocation2 + $0x160] sm:$0xff]
    %v3134 = vld [vmem:[#allocation2 + $0x168] sm:$0xff]
    %v3135 = vld [vmem:[#allocation2 + $0x170] sm:$0xff]
    %v3136 = vld [vmem:[#allocation2 + $0x178] sm:$0xff]
    %v3137 = vld [vmem:[#allocation2 + $0x180] sm:$0xff]
    %v3138 = vld [vmem:[#allocation2 + $0x188] sm:$0xff]
    %v3139 = vld [vmem:[#allocation2 + $0x190] sm:$0xff]
    %v3140 = vld [vmem:[#allocation2 + $0x198] sm:$0xff]
    %v3141 = vld [vmem:[#allocation2 + $0x1a0] sm:$0xff]
    %v3142 = vld [vmem:[#allocation2 + $0x1a8] sm:$0xff]
    %v3143 = vld [vmem:[#allocation2 + $0x1b0] sm:$0xff]
    %v3144 = vld [vmem:[#allocation2 + $0x1b8] sm:$0xff]
    %v3145 = vld [vmem:[#allocation2 + $0x1c0] sm:$0xff]
    %v3146 = vld [vmem:[#allocation2 + $0x1c8] sm:$0xff]
    %v3147 = vld [vmem:[#allocation2 + $0x1d0] sm:$0xff]
    %v3148 = vld [vmem:[#allocation2 + $0x1d8] sm:$0xff]
    %v3149 = vld [vmem:[#allocation2 + $0x1e0] sm:$0xff]
    %v3150 = vld [vmem:[#allocation2 + $0x1e8] sm:$0xff]
    %v3151 = vld [vmem:[#allocation2 + $0x1f0] sm:$0xff]
    %v3152 = vld [vmem:[#allocation2 + $0x1f8] sm:$0xff]
    %v3153 = vld [vmem:[#allocation2 + $0x200] sm:$0xff]
    %v3154 = vld [vmem:[#allocation2 + $0x208] sm:$0xff]
    %v3155 = vld [vmem:[#allocation2 + $0x210] sm:$0xff]
    %v3156 = vld [vmem:[#allocation2 + $0x218] sm:$0xff]
    %v3157 = vld [vmem:[#allocation2 + $0x220] sm:$0xff]
    %v3158 = vld [vmem:[#allocation2 + $0x228] sm:$0xff]
    %v3159 = vld [vmem:[#allocation2 + $0x230] sm:$0xff]
    %v3160 = vld [vmem:[#allocation2 + $0x238] sm:$0xff]
    %v3161 = vld [vmem:[#allocation2 + $0x240] sm:$0xff]
    %v3162 = vld [vmem:[#allocation2 + $0x248] sm:$0xff]
    %v3163 = vld [vmem:[#allocation2 + $0x250] sm:$0xff]
    %v3164 = vld [vmem:[#allocation2 + $0x258] sm:$0xff]
    %v3165 = vld [vmem:[#allocation2 + $0x260] sm:$0xff]
    %v3166 = vld [vmem:[#allocation2 + $0x268] sm:$0xff]
    %v3167 = vld [vmem:[#allocation2 + $0x270] sm:$0xff]
    %v3168 = vld [vmem:[#allocation2 + $0x278] sm:$0xff]
    %v3169 = vld [vmem:[#allocation2 + $0x280] sm:$0xff]
    %v3170 = vld [vmem:[#allocation2 + $0x288] sm:$0xff]
    %v3171 = vld [vmem:[#allocation2 + $0x290] sm:$0xff]
    %v3172 = vld [vmem:[#allocation2 + $0x298] sm:$0xff]
    %v3173 = vld [vmem:[#allocation2 + $0x2a0] sm:$0xff]
    %v3174 = vld [vmem:[#allocation2 + $0x2a8] sm:$0xff]
    %v3175 = vld [vmem:[#allocation2 + $0x2b0] sm:$0xff]
    %v3176 = vld [vmem:[#allocation2 + $0x2b8] sm:$0xff]
    %v3177 = vld [vmem:[#allocation2 + $0x2c0] sm:$0xff]
    %v3178 = vld [vmem:[#allocation2 + $0x2c8] sm:$0xff]
    %v3179 = vld [vmem:[#allocation2 + $0x2d0] sm:$0xff]
    %v3180 = vld [vmem:[#allocation2 + $0x2d8] sm:$0xff]
    %v3181 = vld [vmem:[#allocation2 + $0x2e0] sm:$0xff]
    %v3182 = vld [vmem:[#allocation2 + $0x2e8] sm:$0xff]
    %v3183 = vld [vmem:[#allocation2 + $0x2f0] sm:$0xff]
    %v3184 = vld [vmem:[#allocation2 + $0x2f8] sm:$0xff]
    %v3185 = vld [vmem:[#allocation2 + $0x300] sm:$0xff]
    %v3186 = vld [vmem:[#allocation2 + $0x308] sm:$0xff]
    %v3187 = vld [vmem:[#allocation2 + $0x310] sm:$0xff]
    %v3188 = vld [vmem:[#allocation2 + $0x318] sm:$0xff]
    %v3189 = vld [vmem:[#allocation2 + $0x320] sm:$0xff]
    %v3190 = vld [vmem:[#allocation2 + $0x328] sm:$0xff]
    %v3191 = vld [vmem:[#allocation2 + $0x330] sm:$0xff]
    %v3192 = vld [vmem:[#allocation2 + $0x338] sm:$0xff]
    %v3193 = vld [vmem:[#allocation2 + $0x340] sm:$0xff]
    %v3194 = vld [vmem:[#allocation2 + $0x348] sm:$0xff]
    %v3195 = vld [vmem:[#allocation2 + $0x350] sm:$0xff]
    %v3196 = vld [vmem:[#allocation2 + $0x358] sm:$0xff]
    %v3197 = vld [vmem:[#allocation2 + $0x360] sm:$0xff]
    %v3198 = vld [vmem:[#allocation2 + $0x368] sm:$0xff]
    %v3199 = vld [vmem:[#allocation2 + $0x370] sm:$0xff]
    %v3200 = vld [vmem:[#allocation2 + $0x378] sm:$0xff]
    %v3201 = vld [vmem:[#allocation2 + $0x380] sm:$0xff]
    %v3202 = vld [vmem:[#allocation2 + $0x388] sm:$0xff]
    %v3203 = vld [vmem:[#allocation2 + $0x390] sm:$0xff]
    %v3204 = vld [vmem:[#allocation2 + $0x398] sm:$0xff]
    %v3205 = vld [vmem:[#allocation2 + $0x3a0] sm:$0xff]
    %v3206 = vld [vmem:[#allocation2 + $0x3a8] sm:$0xff]
    %v3207 = vld [vmem:[#allocation2 + $0x3b0] sm:$0xff]
    %v3208 = vld [vmem:[#allocation2 + $0x3b8] sm:$0xff]
    %v3209 = vld [vmem:[#allocation2 + $0x3c0] sm:$0xff]
    %v3210 = vld [vmem:[#allocation2 + $0x3c8] sm:$0xff]
    %v3211 = vld [vmem:[#allocation2 + $0x3d0] sm:$0xff]
    %v3212 = vld [vmem:[#allocation2 + $0x3d8] sm:$0xff]
    %v3213 = vld [vmem:[#allocation2 + $0x3e0] sm:$0xff]
    %v3214 = vld [vmem:[#allocation2 + $0x3e8] sm:$0xff]
    %v3215 = vld [vmem:[#allocation2 + $0x3f0] sm:$0xff]
    %v3216 = vld [vmem:[#allocation2 + $0x3f8] sm:$0xff]
    %v3217 = vld [vmem:[#allocation2 + $0x400] sm:$0xff]
    %v3218 = vld [vmem:[#allocation2 + $0x408] sm:$0xff]
    %v3219 = vld [vmem:[#allocation2 + $0x410] sm:$0xff]
    %v3220 = vld [vmem:[#allocation2 + $0x418] sm:$0xff]
    %v3221 = vld [vmem:[#allocation2 + $0x420] sm:$0xff]
    %v3222 = vld [vmem:[#allocation2 + $0x428] sm:$0xff]
    %v3223 = vld [vmem:[#allocation2 + $0x430] sm:$0xff]
    %v3224 = vld [vmem:[#allocation2 + $0x438] sm:$0xff]
    %v3225 = vld [vmem:[#allocation2 + $0x440] sm:$0xff]
    %v3226 = vld [vmem:[#allocation2 + $0x448] sm:$0xff]
    %v3227 = vld [vmem:[#allocation2 + $0x450] sm:$0xff]
    %v3228 = vld [vmem:[#allocation2 + $0x458] sm:$0xff]
    %v3229 = vld [vmem:[#allocation2 + $0x460] sm:$0xff]
    %v3230 = vld [vmem:[#allocation2 + $0x468] sm:$0xff]
    %v3231 = vld [vmem:[#allocation2 + $0x470] sm:$0xff]
    %v3232 = vld [vmem:[#allocation2 + $0x478] sm:$0xff]
    %v3233 = vld [vmem:[#allocation2 + $0x480] sm:$0xff]
    %v3234 = vld [vmem:[#allocation2 + $0x488] sm:$0xff]
    %v3235 = vld [vmem:[#allocation2 + $0x490] sm:$0xff]
    %v3236 = vld [vmem:[#allocation2 + $0x498] sm:$0xff]
    %v3237 = vld [vmem:[#allocation2 + $0x4a0] sm:$0xff]
    %v3238 = vld [vmem:[#allocation2 + $0x4a8] sm:$0xff]
    %v3239 = vld [vmem:[#allocation2 + $0x4b0] sm:$0xff]
    %v3240 = vld [vmem:[#allocation2 + $0x4b8] sm:$0xff]
    %v3241 = vld [vmem:[#allocation2 + $0x4c0] sm:$0xff]
    %v3242 = vld [vmem:[#allocation2 + $0x4c8] sm:$0xff]
    %v3243 = vld [vmem:[#allocation2 + $0x4d0] sm:$0xff]
    %v3244 = vld [vmem:[#allocation2 + $0x4d8] sm:$0xff]
    %v3245 = vld [vmem:[#allocation2 + $0x4e0] sm:$0xff]
    %v3246 = vld [vmem:[#allocation2 + $0x4e8] sm:$0xff]
    %v3247 = vld [vmem:[#allocation2 + $0x4f0] sm:$0xff]
    %v3248 = vld [vmem:[#allocation2 + $0x4f8] sm:$0xff]
    %v3249 = vld [vmem:[#allocation2 + $0x500] sm:$0xff]
    %v3250 = vld [vmem:[#allocation2 + $0x508] sm:$0xff]
    %v3251 = vld [vmem:[#allocation2 + $0x510] sm:$0xff]
    %v3252 = vld [vmem:[#allocation2 + $0x518] sm:$0xff]
    %v3253 = vld [vmem:[#allocation2 + $0x520] sm:$0xff]
    %v3254 = vld [vmem:[#allocation2 + $0x528] sm:$0xff]
    %v3255 = vld [vmem:[#allocation2 + $0x530] sm:$0xff]
    %v3256 = vld [vmem:[#allocation2 + $0x538] sm:$0xff]
    %v3257 = vld [vmem:[#allocation2 + $0x540] sm:$0xff]
    %v3258 = vld [vmem:[#allocation2 + $0x548] sm:$0xff]
    %v3259 = vld [vmem:[#allocation2 + $0x550] sm:$0xff]
    %v3260 = vld [vmem:[#allocation2 + $0x558] sm:$0xff]
    %v3261 = vld [vmem:[#allocation2 + $0x560] sm:$0xff]
    %v3262 = vld [vmem:[#allocation2 + $0x568] sm:$0xff]
    %v3263 = vld [vmem:[#allocation2 + $0x570] sm:$0xff]
    %v3264 = vld [vmem:[#allocation2 + $0x578] sm:$0xff]
    %v3265 = vld [vmem:[#allocation2 + $0x580] sm:$0xff]
    %v3266 = vld [vmem:[#allocation2 + $0x588] sm:$0xff]
    %v3267 = vld [vmem:[#allocation2 + $0x590] sm:$0xff]
    %v3268 = vld [vmem:[#allocation2 + $0x598] sm:$0xff]
    %vm3269 = vcmask 588800
    %v3271 = vsel %vm3269, %v3088, 0
    %3273 = vmatprep.subr.mxu0 0.0
    %3274 = vmatpush1.msra.mxu0 0.0
    %3275 = vmatprep.subr.mxu0 0.0
    %3276 = vmatpush1.msra.mxu0 0.0
    %3277 = vmatprep.subr.mxu0 0.0
    %3278 = vmatpush1.msra.mxu0 0.0
    %3279 = vmatprep.subr.mxu0 0.0
    %3280 = vmatpush1.msra.mxu0 0.0
    %3281 = vmatprep.subr.mxu0 0.0
    %3282 = vmatpush1.msra.mxu0 0.0
    %3283 = vmatprep.subr.mxu0 0.0
    %3284 = vmatpush1.msra.mxu0 0.0
    %3285 = vmatprep.subr.mxu0 0.0
    %3286 = vmatpush1.msra.mxu0 0.0
    %3287 = vmatprep.subr.mxu0 %v3250
    %3288 = vmatpush1.msra.mxu0 %v3249
    %3289 = vmatprep.subr.mxu0 %v3230
    %3290 = vmatpush1.msra.mxu0 %v3229
    %3291 = vmatprep.subr.mxu0 %v3210
    %3292 = vmatpush1.msra.mxu0 %v3209
    %3293 = vmatprep.subr.mxu0 %v3190
    %3294 = vmatpush1.msra.mxu0 %v3189
    %3295 = vmatprep.subr.mxu0 %v3170
    %3296 = vmatpush1.msra.mxu0 %v3169
    %3297 = vmatprep.subr.mxu0 %v3150
    %3298 = vmatpush1.msra.mxu0 %v3149
    %3299 = vmatprep.subr.mxu0 %v3130
    %3300 = vmatpush1.msra.mxu0 %v3129
    %3301 = vmatprep.subr.mxu0 %v3110
    %3302 = vmatpush1.msra.mxu0 %v3109
    %3303 = vmatprep.subr.mxu0 %v3090
    %3304 = vmatpush1.msra.mxu0 %v3089
    %3305 = vmatprep.subr.mxu0 0.0
    %3306 = vmatpush2.msra.mxu0 0.0
    %3307 = vmatprep.subr.mxu0 0.0
    %3308 = vmatpush2.msra.mxu0 0.0
    %3309 = vmatprep.subr.mxu0 0.0
    %3310 = vmatpush2.msra.mxu0 0.0
    %3311 = vmatprep.subr.mxu0 0.0
    %3312 = vmatpush2.msra.mxu0 0.0
    %3313 = vmatprep.subr.mxu0 0.0
    %3314 = vmatpush2.msra.mxu0 0.0
    %3315 = vmatprep.subr.mxu0 0.0
    %3316 = vmatpush2.msra.mxu0 0.0
    %3317 = vmatprep.subr.mxu0 0.0
    %3318 = vmatpush2.msra.mxu0 0.0
    %3319 = vmatprep.subr.mxu0 0.0
    %3320 = vmatpush2.msra.mxu0 0.0
    %3321 = vmatprep.subr.mxu0 0.0
    %3322 = vmatpush2.msra.mxu0 0.0
    %3323 = vmatprep.subr.mxu0 0.0
    %3324 = vmatpush2.msra.mxu0 0.0
    %3325 = vmatprep.subr.mxu0 0.0
    %3326 = vmatpush2.msra.mxu0 0.0
    %3327 = vmatprep.subr.mxu0 0.0
    %3328 = vmatpush2.msra.mxu0 0.0
    %3329 = vmatprep.subr.mxu0 0.0
    %3330 = vmatpush2.msra.mxu0 0.0
    %3331 = vmatprep.subr.mxu0 0.0
    %3332 = vmatpush2.msra.mxu0 0.0
    %3333 = vmatprep.subr.mxu0 0.0
    %3334 = vmatpush2.msra.mxu0 0.0
    %3335 = vmatprep.subr.mxu0 0.0
    %3336 = vmatpush2.msra.mxu0 0.0
    %3337 = vmatprep.mubr.f32.mxu0 0.0
    %3338 = vmatmul.mubr.f32.gmra.mxu0 %v3271
    %v3339 = vpop.f32.mrf.mxu0
    %v3340 = vadd.f32 0.0, %v3339
    %v3341 = vpop.f32.mrf.mxu0
    %v3342 = vadd.f32 0.0, %v3341
    %3343 = vdwg.mxu0
    %3344 = vmatprep.subr.mxu0 0.0
    %3345 = vmatpush1.msra.mxu0 0.0
    %3346 = vmatprep.subr.mxu0 0.0
    %3347 = vmatpush1.msra.mxu0 0.0
    %3348 = vmatprep.subr.mxu0 0.0
    %3349 = vmatpush1.msra.mxu0 0.0
    %3350 = vmatprep.subr.mxu0 0.0
    %3351 = vmatpush1.msra.mxu0 0.0
    %3352 = vmatprep.subr.mxu0 0.0
    %3353 = vmatpush1.msra.mxu0 0.0
    %3354 = vmatprep.subr.mxu0 0.0
    %3355 = vmatpush1.msra.mxu0 0.0
    %3356 = vmatprep.subr.mxu0 0.0
    %3357 = vmatpush1.msra.mxu0 0.0
    %3358 = vmatprep.subr.mxu0 %v3252
    %3359 = vmatpush1.msra.mxu0 %v3251
    %3360 = vmatprep.subr.mxu0 %v3232
    %3361 = vmatpush1.msra.mxu0 %v3231
    %3362 = vmatprep.subr.mxu0 %v3212
    %3363 = vmatpush1.msra.mxu0 %v3211
    %3364 = vmatprep.subr.mxu0 %v3192
    %3365 = vmatpush1.msra.mxu0 %v3191
    %3366 = vmatprep.subr.mxu0 %v3172
    %3367 = vmatpush1.msra.mxu0 %v3171
    %3368 = vmatprep.subr.mxu0 %v3152
    %3369 = vmatpush1.msra.mxu0 %v3151
    %3370 = vmatprep.subr.mxu0 %v3132
    %3371 = vmatpush1.msra.mxu0 %v3131
    %3372 = vmatprep.subr.mxu0 %v3112
    %3373 = vmatpush1.msra.mxu0 %v3111
    %3374 = vmatprep.subr.mxu0 %v3092
    %3375 = vmatpush1.msra.mxu0 %v3091
    %3376 = vmatprep.subr.mxu0 0.0
    %3377 = vmatpush2.msra.mxu0 0.0
    %3378 = vmatprep.subr.mxu0 0.0
    %3379 = vmatpush2.msra.mxu0 0.0
    %3380 = vmatprep.subr.mxu0 0.0
    %3381 = vmatpush2.msra.mxu0 0.0
    %3382 = vmatprep.subr.mxu0 0.0
    %3383 = vmatpush2.msra.mxu0 0.0
    %3384 = vmatprep.subr.mxu0 0.0
    %3385 = vmatpush2.msra.mxu0 0.0
    %3386 = vmatprep.subr.mxu0 0.0
    %3387 = vmatpush2.msra.mxu0 0.0
    %3388 = vmatprep.subr.mxu0 0.0
    %3389 = vmatpush2.msra.mxu0 0.0
    %3390 = vmatprep.subr.mxu0 0.0
    %3391 = vmatpush2.msra.mxu0 0.0
    %3392 = vmatprep.subr.mxu0 0.0
    %3393 = vmatpush2.msra.mxu0 0.0
    %3394 = vmatprep.subr.mxu0 0.0
    %3395 = vmatpush2.msra.mxu0 0.0
    %3396 = vmatprep.subr.mxu0 0.0
    %3397 = vmatpush2.msra.mxu0 0.0
    %3398 = vmatprep.subr.mxu0 0.0
    %3399 = vmatpush2.msra.mxu0 0.0
    %3400 = vmatprep.subr.mxu0 0.0
    %3401 = vmatpush2.msra.mxu0 0.0
    %3402 = vmatprep.subr.mxu0 0.0
    %3403 = vmatpush2.msra.mxu0 0.0
    %3404 = vmatprep.subr.mxu0 0.0
    %3405 = vmatpush2.msra.mxu0 0.0
    %3406 = vmatprep.subr.mxu0 0.0
    %3407 = vmatpush2.msra.mxu0 0.0
    %3408 = vmatprep.mubr.f32.mxu0 0.0
    %3409 = vmatmul.mubr.f32.gmra.mxu0 %v3271
    %v3410 = vpop.f32.mrf.mxu0
    %v3411 = vadd.f32 0.0, %v3410
    %v3412 = vpop.f32.mrf.mxu0
    %v3413 = vadd.f32 0.0, %v3412
    %3414 = vdwg.mxu0
    %3415 = vmatprep.subr.mxu0 0.0
    %3416 = vmatpush1.msra.mxu0 0.0
    %3417 = vmatprep.subr.mxu0 0.0
    %3418 = vmatpush1.msra.mxu0 0.0
    %3419 = vmatprep.subr.mxu0 0.0
    %3420 = vmatpush1.msra.mxu0 0.0
    %3421 = vmatprep.subr.mxu0 0.0
    %3422 = vmatpush1.msra.mxu0 0.0
    %3423 = vmatprep.subr.mxu0 0.0
    %3424 = vmatpush1.msra.mxu0 0.0
    %3425 = vmatprep.subr.mxu0 0.0
    %3426 = vmatpush1.msra.mxu0 0.0
    %3427 = vmatprep.subr.mxu0 0.0
    %3428 = vmatpush1.msra.mxu0 0.0
    %3429 = vmatprep.subr.mxu0 %v3254
    %3430 = vmatpush1.msra.mxu0 %v3253
    %3431 = vmatprep.subr.mxu0 %v3234
    %3432 = vmatpush1.msra.mxu0 %v3233
    %3433 = vmatprep.subr.mxu0 %v3214
    %3434 = vmatpush1.msra.mxu0 %v3213
    %3435 = vmatprep.subr.mxu0 %v3194
    %3436 = vmatpush1.msra.mxu0 %v3193
    %3437 = vmatprep.subr.mxu0 %v3174
    %3438 = vmatpush1.msra.mxu0 %v3173
    %3439 = vmatprep.subr.mxu0 %v3154
    %3440 = vmatpush1.msra.mxu0 %v3153
    %3441 = vmatprep.subr.mxu0 %v3134
    %3442 = vmatpush1.msra.mxu0 %v3133
    %3443 = vmatprep.subr.mxu0 %v3114
    %3444 = vmatpush1.msra.mxu0 %v3113
    %3445 = vmatprep.subr.mxu0 %v3094
    %3446 = vmatpush1.msra.mxu0 %v3093
    %3447 = vmatprep.subr.mxu0 0.0
    %3448 = vmatpush2.msra.mxu0 0.0
    %3449 = vmatprep.subr.mxu0 0.0
    %3450 = vmatpush2.msra.mxu0 0.0
    %3451 = vmatprep.subr.mxu0 0.0
    %3452 = vmatpush2.msra.mxu0 0.0
    %3453 = vmatprep.subr.mxu0 0.0
    %3454 = vmatpush2.msra.mxu0 0.0
    %3455 = vmatprep.subr.mxu0 0.0
    %3456 = vmatpush2.msra.mxu0 0.0
    %3457 = vmatprep.subr.mxu0 0.0
    %3458 = vmatpush2.msra.mxu0 0.0
    %3459 = vmatprep.subr.mxu0 0.0
    %3460 = vmatpush2.msra.mxu0 0.0
    %3461 = vmatprep.subr.mxu0 0.0
    %3462 = vmatpush2.msra.mxu0 0.0
    %3463 = vmatprep.subr.mxu0 0.0
    %3464 = vmatpush2.msra.mxu0 0.0
    %3465 = vmatprep.subr.mxu0 0.0
    %3466 = vmatpush2.msra.mxu0 0.0
    %3467 = vmatprep.subr.mxu0 0.0
    %3468 = vmatpush2.msra.mxu0 0.0
    %3469 = vmatprep.subr.mxu0 0.0
    %3470 = vmatpush2.msra.mxu0 0.0
    %3471 = vmatprep.subr.mxu0 0.0
    %3472 = vmatpush2.msra.mxu0 0.0
    %3473 = vmatprep.subr.mxu0 0.0
    %3474 = vmatpush2.msra.mxu0 0.0
    %3475 = vmatprep.subr.mxu0 0.0
    %3476 = vmatpush2.msra.mxu0 0.0
    %3477 = vmatprep.subr.mxu0 0.0
    %3478 = vmatpush2.msra.mxu0 0.0
    %3479 = vmatprep.mubr.f32.mxu0 0.0
    %3480 = vmatmul.mubr.f32.gmra.mxu0 %v3271
    %v3481 = vpop.f32.mrf.mxu0
    %v3482 = vadd.f32 0.0, %v3481
    %v3483 = vpop.f32.mrf.mxu0
    %v3484 = vadd.f32 0.0, %v3483
    %3485 = vdwg.mxu0
    %3486 = vmatprep.subr.mxu0 0.0
    %3487 = vmatpush1.msra.mxu0 0.0
    %3488 = vmatprep.subr.mxu0 0.0
    %3489 = vmatpush1.msra.mxu0 0.0
    %3490 = vmatprep.subr.mxu0 0.0
    %3491 = vmatpush1.msra.mxu0 0.0
    %3492 = vmatprep.subr.mxu0 0.0
    %3493 = vmatpush1.msra.mxu0 0.0
    %3494 = vmatprep.subr.mxu0 0.0
    %3495 = vmatpush1.msra.mxu0 0.0
    %3496 = vmatprep.subr.mxu0 0.0
    %3497 = vmatpush1.msra.mxu0 0.0
    %3498 = vmatprep.subr.mxu0 0.0
    %3499 = vmatpush1.msra.mxu0 0.0
    %3500 = vmatprep.subr.mxu0 %v3256
    %3501 = vmatpush1.msra.mxu0 %v3255
    %3502 = vmatprep.subr.mxu0 %v3236
    %3503 = vmatpush1.msra.mxu0 %v3235
    %3504 = vmatprep.subr.mxu0 %v3216
    %3505 = vmatpush1.msra.mxu0 %v3215
    %3506 = vmatprep.subr.mxu0 %v3196
    %3507 = vmatpush1.msra.mxu0 %v3195
    %3508 = vmatprep.subr.mxu0 %v3176
    %3509 = vmatpush1.msra.mxu0 %v3175
    %3510 = vmatprep.subr.mxu0 %v3156
    %3511 = vmatpush1.msra.mxu0 %v3155
    %3512 = vmatprep.subr.mxu0 %v3136
    %3513 = vmatpush1.msra.mxu0 %v3135
    %3514 = vmatprep.subr.mxu0 %v3116
    %3515 = vmatpush1.msra.mxu0 %v3115
    %3516 = vmatprep.subr.mxu0 %v3096
    %3517 = vmatpush1.msra.mxu0 %v3095
    %3518 = vmatprep.subr.mxu0 0.0
    %3519 = vmatpush2.msra.mxu0 0.0
    %3520 = vmatprep.subr.mxu0 0.0
    %3521 = vmatpush2.msra.mxu0 0.0
    %3522 = vmatprep.subr.mxu0 0.0
    %3523 = vmatpush2.msra.mxu0 0.0
    %3524 = vmatprep.subr.mxu0 0.0
    %3525 = vmatpush2.msra.mxu0 0.0
    %3526 = vmatprep.subr.mxu0 0.0
    %3527 = vmatpush2.msra.mxu0 0.0
    %3528 = vmatprep.subr.mxu0 0.0
    %3529 = vmatpush2.msra.mxu0 0.0
    %3530 = vmatprep.subr.mxu0 0.0
    %3531 = vmatpush2.msra.mxu0 0.0
    %3532 = vmatprep.subr.mxu0 0.0
    %3533 = vmatpush2.msra.mxu0 0.0
    %3534 = vmatprep.subr.mxu0 0.0
    %3535 = vmatpush2.msra.mxu0 0.0
    %3536 = vmatprep.subr.mxu0 0.0
    %3537 = vmatpush2.msra.mxu0 0.0
    %3538 = vmatprep.subr.mxu0 0.0
    %3539 = vmatpush2.msra.mxu0 0.0
    %3540 = vmatprep.subr.mxu0 0.0
    %3541 = vmatpush2.msra.mxu0 0.0
    %3542 = vmatprep.subr.mxu0 0.0
    %3543 = vmatpush2.msra.mxu0 0.0
    %3544 = vmatprep.subr.mxu0 0.0
    %3545 = vmatpush2.msra.mxu0 0.0
    %3546 = vmatprep.subr.mxu0 0.0
    %3547 = vmatpush2.msra.mxu0 0.0
    %3548 = vmatprep.subr.mxu0 0.0
    %3549 = vmatpush2.msra.mxu0 0.0
    %3550 = vmatprep.mubr.f32.mxu0 0.0
    %3551 = vmatmul.mubr.f32.gmra.mxu0 %v3271
    %v3552 = vpop.f32.mrf.mxu0
    %v3553 = vadd.f32 0.0, %v3552
    %v3554 = vpop.f32.mrf.mxu0
    %v3555 = vadd.f32 0.0, %v3554
    %3556 = vdwg.mxu0
    %3557 = vmatprep.subr.mxu0 0.0
    %3558 = vmatpush1.msra.mxu0 0.0
    %3559 = vmatprep.subr.mxu0 0.0
    %3560 = vmatpush1.msra.mxu0 0.0
    %3561 = vmatprep.subr.mxu0 0.0
    %3562 = vmatpush1.msra.mxu0 0.0
    %3563 = vmatprep.subr.mxu0 0.0
    %3564 = vmatpush1.msra.mxu0 0.0
    %3565 = vmatprep.subr.mxu0 0.0
    %3566 = vmatpush1.msra.mxu0 0.0
    %3567 = vmatprep.subr.mxu0 0.0
    %3568 = vmatpush1.msra.mxu0 0.0
    %3569 = vmatprep.subr.mxu0 0.0
    %3570 = vmatpush1.msra.mxu0 0.0
    %3571 = vmatprep.subr.mxu0 %v3258
    %3572 = vmatpush1.msra.mxu0 %v3257
    %3573 = vmatprep.subr.mxu0 %v3238
    %3574 = vmatpush1.msra.mxu0 %v3237
    %3575 = vmatprep.subr.mxu0 %v3218
    %3576 = vmatpush1.msra.mxu0 %v3217
    %3577 = vmatprep.subr.mxu0 %v3198
    %3578 = vmatpush1.msra.mxu0 %v3197
    %3579 = vmatprep.subr.mxu0 %v3178
    %3580 = vmatpush1.msra.mxu0 %v3177
    %3581 = vmatprep.subr.mxu0 %v3158
    %3582 = vmatpush1.msra.mxu0 %v3157
    %3583 = vmatprep.subr.mxu0 %v3138
    %3584 = vmatpush1.msra.mxu0 %v3137
    %3585 = vmatprep.subr.mxu0 %v3118
    %3586 = vmatpush1.msra.mxu0 %v3117
    %3587 = vmatprep.subr.mxu0 %v3098
    %3588 = vmatpush1.msra.mxu0 %v3097
    %3589 = vmatprep.subr.mxu0 0.0
    %3590 = vmatpush2.msra.mxu0 0.0
    %3591 = vmatprep.subr.mxu0 0.0
    %3592 = vmatpush2.msra.mxu0 0.0
    %3593 = vmatprep.subr.mxu0 0.0
    %3594 = vmatpush2.msra.mxu0 0.0
    %3595 = vmatprep.subr.mxu0 0.0
    %3596 = vmatpush2.msra.mxu0 0.0
    %3597 = vmatprep.subr.mxu0 0.0
    %3598 = vmatpush2.msra.mxu0 0.0
    %3599 = vmatprep.subr.mxu0 0.0
    %3600 = vmatpush2.msra.mxu0 0.0
    %3601 = vmatprep.subr.mxu0 0.0
    %3602 = vmatpush2.msra.mxu0 0.0
    %3603 = vmatprep.subr.mxu0 0.0
    %3604 = vmatpush2.msra.mxu0 0.0
    %3605 = vmatprep.subr.mxu0 0.0
    %3606 = vmatpush2.msra.mxu0 0.0
    %3607 = vmatprep.subr.mxu0 0.0
    %3608 = vmatpush2.msra.mxu0 0.0
    %3609 = vmatprep.subr.mxu0 0.0
    %3610 = vmatpush2.msra.mxu0 0.0
    %3611 = vmatprep.subr.mxu0 0.0
    %3612 = vmatpush2.msra.mxu0 0.0
    %3613 = vmatprep.subr.mxu0 0.0
    %3614 = vmatpush2.msra.mxu0 0.0
    %3615 = vmatprep.subr.mxu0 0.0
    %3616 = vmatpush2.msra.mxu0 0.0
    %3617 = vmatprep.subr.mxu0 0.0
    %3618 = vmatpush2.msra.mxu0 0.0
    %3619 = vmatprep.subr.mxu0 0.0
    %3620 = vmatpush2.msra.mxu0 0.0
    %3621 = vmatprep.mubr.f32.mxu0 0.0
    %3622 = vmatmul.mubr.f32.gmra.mxu0 %v3271
    %v3623 = vpop.f32.mrf.mxu0
    %v3624 = vadd.f32 0.0, %v3623
    %v3625 = vpop.f32.mrf.mxu0
    %v3626 = vadd.f32 0.0, %v3625
    %3627 = vdwg.mxu0
    %3628 = vmatprep.subr.mxu0 0.0
    %3629 = vmatpush1.msra.mxu0 0.0
    %3630 = vmatprep.subr.mxu0 0.0
    %3631 = vmatpush1.msra.mxu0 0.0
    %3632 = vmatprep.subr.mxu0 0.0
    %3633 = vmatpush1.msra.mxu0 0.0
    %3634 = vmatprep.subr.mxu0 0.0
    %3635 = vmatpush1.msra.mxu0 0.0
    %3636 = vmatprep.subr.mxu0 0.0
    %3637 = vmatpush1.msra.mxu0 0.0
    %3638 = vmatprep.subr.mxu0 0.0
    %3639 = vmatpush1.msra.mxu0 0.0
    %3640 = vmatprep.subr.mxu0 0.0
    %3641 = vmatpush1.msra.mxu0 0.0
    %3642 = vmatprep.subr.mxu0 %v3260
    %3643 = vmatpush1.msra.mxu0 %v3259
    %3644 = vmatprep.subr.mxu0 %v3240
    %3645 = vmatpush1.msra.mxu0 %v3239
    %3646 = vmatprep.subr.mxu0 %v3220
    %3647 = vmatpush1.msra.mxu0 %v3219
    %3648 = vmatprep.subr.mxu0 %v3200
    %3649 = vmatpush1.msra.mxu0 %v3199
    %3650 = vmatprep.subr.mxu0 %v3180
    %3651 = vmatpush1.msra.mxu0 %v3179
    %3652 = vmatprep.subr.mxu0 %v3160
    %3653 = vmatpush1.msra.mxu0 %v3159
    %3654 = vmatprep.subr.mxu0 %v3140
    %3655 = vmatpush1.msra.mxu0 %v3139
    %3656 = vmatprep.subr.mxu0 %v3120
    %3657 = vmatpush1.msra.mxu0 %v3119
    %3658 = vmatprep.subr.mxu0 %v3100
    %3659 = vmatpush1.msra.mxu0 %v3099
    %3660 = vmatprep.subr.mxu0 0.0
    %3661 = vmatpush2.msra.mxu0 0.0
    %3662 = vmatprep.subr.mxu0 0.0
    %3663 = vmatpush2.msra.mxu0 0.0
    %3664 = vmatprep.subr.mxu0 0.0
    %3665 = vmatpush2.msra.mxu0 0.0
    %3666 = vmatprep.subr.mxu0 0.0
    %3667 = vmatpush2.msra.mxu0 0.0
    %3668 = vmatprep.subr.mxu0 0.0
    %3669 = vmatpush2.msra.mxu0 0.0
    %3670 = vmatprep.subr.mxu0 0.0
    %3671 = vmatpush2.msra.mxu0 0.0
    %3672 = vmatprep.subr.mxu0 0.0
    %3673 = vmatpush2.msra.mxu0 0.0
    %3674 = vmatprep.subr.mxu0 0.0
    %3675 = vmatpush2.msra.mxu0 0.0
    %3676 = vmatprep.subr.mxu0 0.0
    %3677 = vmatpush2.msra.mxu0 0.0
    %3678 = vmatprep.subr.mxu0 0.0
    %3679 = vmatpush2.msra.mxu0 0.0
    %3680 = vmatprep.subr.mxu0 0.0
    %3681 = vmatpush2.msra.mxu0 0.0
    %3682 = vmatprep.subr.mxu0 0.0
    %3683 = vmatpush2.msra.mxu0 0.0
    %3684 = vmatprep.subr.mxu0 0.0
    %3685 = vmatpush2.msra.mxu0 0.0
    %3686 = vmatprep.subr.mxu0 0.0
    %3687 = vmatpush2.msra.mxu0 0.0
    %3688 = vmatprep.subr.mxu0 0.0
    %3689 = vmatpush2.msra.mxu0 0.0
    %3690 = vmatprep.subr.mxu0 0.0
    %3691 = vmatpush2.msra.mxu0 0.0
    %3692 = vmatprep.mubr.f32.mxu0 0.0
    %3693 = vmatmul.mubr.f32.gmra.mxu0 %v3271
    %v3694 = vpop.f32.mrf.mxu0
    %v3695 = vadd.f32 0.0, %v3694
    %v3696 = vpop.f32.mrf.mxu0
    %v3697 = vadd.f32 0.0, %v3696
    %3698 = vdwg.mxu0
    %3699 = vmatprep.subr.mxu0 0.0
    %3700 = vmatpush1.msra.mxu0 0.0
    %3701 = vmatprep.subr.mxu0 0.0
    %3702 = vmatpush1.msra.mxu0 0.0
    %3703 = vmatprep.subr.mxu0 0.0
    %3704 = vmatpush1.msra.mxu0 0.0
    %3705 = vmatprep.subr.mxu0 0.0
    %3706 = vmatpush1.msra.mxu0 0.0
    %3707 = vmatprep.subr.mxu0 0.0
    %3708 = vmatpush1.msra.mxu0 0.0
    %3709 = vmatprep.subr.mxu0 0.0
    %3710 = vmatpush1.msra.mxu0 0.0
    %3711 = vmatprep.subr.mxu0 0.0
    %3712 = vmatpush1.msra.mxu0 0.0
    %3713 = vmatprep.subr.mxu0 %v3262
    %3714 = vmatpush1.msra.mxu0 %v3261
    %3715 = vmatprep.subr.mxu0 %v3242
    %3716 = vmatpush1.msra.mxu0 %v3241
    %3717 = vmatprep.subr.mxu0 %v3222
    %3718 = vmatpush1.msra.mxu0 %v3221
    %3719 = vmatprep.subr.mxu0 %v3202
    %3720 = vmatpush1.msra.mxu0 %v3201
    %3721 = vmatprep.subr.mxu0 %v3182
    %3722 = vmatpush1.msra.mxu0 %v3181
    %3723 = vmatprep.subr.mxu0 %v3162
    %3724 = vmatpush1.msra.mxu0 %v3161
    %3725 = vmatprep.subr.mxu0 %v3142
    %3726 = vmatpush1.msra.mxu0 %v3141
    %3727 = vmatprep.subr.mxu0 %v3122
    %3728 = vmatpush1.msra.mxu0 %v3121
    %3729 = vmatprep.subr.mxu0 %v3102
    %3730 = vmatpush1.msra.mxu0 %v3101
    %3731 = vmatprep.subr.mxu0 0.0
    %3732 = vmatpush2.msra.mxu0 0.0
    %3733 = vmatprep.subr.mxu0 0.0
    %3734 = vmatpush2.msra.mxu0 0.0
    %3735 = vmatprep.subr.mxu0 0.0
    %3736 = vmatpush2.msra.mxu0 0.0
    %3737 = vmatprep.subr.mxu0 0.0
    %3738 = vmatpush2.msra.mxu0 0.0
    %3739 = vmatprep.subr.mxu0 0.0
    %3740 = vmatpush2.msra.mxu0 0.0
    %3741 = vmatprep.subr.mxu0 0.0
    %3742 = vmatpush2.msra.mxu0 0.0
    %3743 = vmatprep.subr.mxu0 0.0
    %3744 = vmatpush2.msra.mxu0 0.0
    %3745 = vmatprep.subr.mxu0 0.0
    %3746 = vmatpush2.msra.mxu0 0.0
    %3747 = vmatprep.subr.mxu0 0.0
    %3748 = vmatpush2.msra.mxu0 0.0
    %3749 = vmatprep.subr.mxu0 0.0
    %3750 = vmatpush2.msra.mxu0 0.0
    %3751 = vmatprep.subr.mxu0 0.0
    %3752 = vmatpush2.msra.mxu0 0.0
    %3753 = vmatprep.subr.mxu0 0.0
    %3754 = vmatpush2.msra.mxu0 0.0
    %3755 = vmatprep.subr.mxu0 0.0
    %3756 = vmatpush2.msra.mxu0 0.0
    %3757 = vmatprep.subr.mxu0 0.0
    %3758 = vmatpush2.msra.mxu0 0.0
    %3759 = vmatprep.subr.mxu0 0.0
    %3760 = vmatpush2.msra.mxu0 0.0
    %3761 = vmatprep.subr.mxu0 0.0
    %3762 = vmatpush2.msra.mxu0 0.0
    %3763 = vmatprep.mubr.f32.mxu0 0.0
    %3764 = vmatmul.mubr.f32.gmra.mxu0 %v3271
    %v3765 = vpop.f32.mrf.mxu0
    %v3766 = vadd.f32 0.0, %v3765
    %v3767 = vpop.f32.mrf.mxu0
    %v3768 = vadd.f32 0.0, %v3767
    %3769 = vdwg.mxu0
    %3770 = vmatprep.subr.mxu0 0.0
    %3771 = vmatpush1.msra.mxu0 0.0
    %3772 = vmatprep.subr.mxu0 0.0
    %3773 = vmatpush1.msra.mxu0 0.0
    %3774 = vmatprep.subr.mxu0 0.0
    %3775 = vmatpush1.msra.mxu0 0.0
    %3776 = vmatprep.subr.mxu0 0.0
    %3777 = vmatpush1.msra.mxu0 0.0
    %3778 = vmatprep.subr.mxu0 0.0
    %3779 = vmatpush1.msra.mxu0 0.0
    %3780 = vmatprep.subr.mxu0 0.0
    %3781 = vmatpush1.msra.mxu0 0.0
    %3782 = vmatprep.subr.mxu0 0.0
    %3783 = vmatpush1.msra.mxu0 0.0
    %3784 = vmatprep.subr.mxu0 %v3264
    %3785 = vmatpush1.msra.mxu0 %v3263
    %3786 = vmatprep.subr.mxu0 %v3244
    %3787 = vmatpush1.msra.mxu0 %v3243
    %3788 = vmatprep.subr.mxu0 %v3224
    %3789 = vmatpush1.msra.mxu0 %v3223
    %3790 = vmatprep.subr.mxu0 %v3204
    %3791 = vmatpush1.msra.mxu0 %v3203
    %3792 = vmatprep.subr.mxu0 %v3184
    %3793 = vmatpush1.msra.mxu0 %v3183
    %3794 = vmatprep.subr.mxu0 %v3164
    %3795 = vmatpush1.msra.mxu0 %v3163
    %3796 = vmatprep.subr.mxu0 %v3144
    %3797 = vmatpush1.msra.mxu0 %v3143
    %3798 = vmatprep.subr.mxu0 %v3124
    %3799 = vmatpush1.msra.mxu0 %v3123
    %3800 = vmatprep.subr.mxu0 %v3104
    %3801 = vmatpush1.msra.mxu0 %v3103
    %3802 = vmatprep.subr.mxu0 0.0
    %3803 = vmatpush2.msra.mxu0 0.0
    %3804 = vmatprep.subr.mxu0 0.0
    %3805 = vmatpush2.msra.mxu0 0.0
    %3806 = vmatprep.subr.mxu0 0.0
    %3807 = vmatpush2.msra.mxu0 0.0
    %3808 = vmatprep.subr.mxu0 0.0
    %3809 = vmatpush2.msra.mxu0 0.0
    %3810 = vmatprep.subr.mxu0 0.0
    %3811 = vmatpush2.msra.mxu0 0.0
    %3812 = vmatprep.subr.mxu0 0.0
    %3813 = vmatpush2.msra.mxu0 0.0
    %3814 = vmatprep.subr.mxu0 0.0
    %3815 = vmatpush2.msra.mxu0 0.0
    %3816 = vmatprep.subr.mxu0 0.0
    %3817 = vmatpush2.msra.mxu0 0.0
    %3818 = vmatprep.subr.mxu0 0.0
    %3819 = vmatpush2.msra.mxu0 0.0
    %3820 = vmatprep.subr.mxu0 0.0
    %3821 = vmatpush2.msra.mxu0 0.0
    %3822 = vmatprep.subr.mxu0 0.0
    %3823 = vmatpush2.msra.mxu0 0.0
    %3824 = vmatprep.subr.mxu0 0.0
    %3825 = vmatpush2.msra.mxu0 0.0
    %3826 = vmatprep.subr.mxu0 0.0
    %3827 = vmatpush2.msra.mxu0 0.0
    %3828 = vmatprep.subr.mxu0 0.0
    %3829 = vmatpush2.msra.mxu0 0.0
    %3830 = vmatprep.subr.mxu0 0.0
    %3831 = vmatpush2.msra.mxu0 0.0
    %3832 = vmatprep.subr.mxu0 0.0
    %3833 = vmatpush2.msra.mxu0 0.0
    %3834 = vmatprep.mubr.f32.mxu0 0.0
    %3835 = vmatmul.mubr.f32.gmra.mxu0 %v3271
    %v3836 = vpop.f32.mrf.mxu0
    %v3837 = vadd.f32 0.0, %v3836
    %v3838 = vpop.f32.mrf.mxu0
    %v3839 = vadd.f32 0.0, %v3838
    %3840 = vdwg.mxu0
    %3841 = vmatprep.subr.mxu0 0.0
    %3842 = vmatpush1.msra.mxu0 0.0
    %3843 = vmatprep.subr.mxu0 0.0
    %3844 = vmatpush1.msra.mxu0 0.0
    %3845 = vmatprep.subr.mxu0 0.0
    %3846 = vmatpush1.msra.mxu0 0.0
    %3847 = vmatprep.subr.mxu0 0.0
    %3848 = vmatpush1.msra.mxu0 0.0
    %3849 = vmatprep.subr.mxu0 0.0
    %3850 = vmatpush1.msra.mxu0 0.0
    %3851 = vmatprep.subr.mxu0 0.0
    %3852 = vmatpush1.msra.mxu0 0.0
    %3853 = vmatprep.subr.mxu0 0.0
    %3854 = vmatpush1.msra.mxu0 0.0
    %3855 = vmatprep.subr.mxu0 %v3266
    %3856 = vmatpush1.msra.mxu0 %v3265
    %3857 = vmatprep.subr.mxu0 %v3246
    %3858 = vmatpush1.msra.mxu0 %v3245
    %3859 = vmatprep.subr.mxu0 %v3226
    %3860 = vmatpush1.msra.mxu0 %v3225
    %3861 = vmatprep.subr.mxu0 %v3206
    %3862 = vmatpush1.msra.mxu0 %v3205
    %3863 = vmatprep.subr.mxu0 %v3186
    %3864 = vmatpush1.msra.mxu0 %v3185
    %3865 = vmatprep.subr.mxu0 %v3166
    %3866 = vmatpush1.msra.mxu0 %v3165
    %3867 = vmatprep.subr.mxu0 %v3146
    %3868 = vmatpush1.msra.mxu0 %v3145
    %3869 = vmatprep.subr.mxu0 %v3126
    %3870 = vmatpush1.msra.mxu0 %v3125
    %3871 = vmatprep.subr.mxu0 %v3106
    %3872 = vmatpush1.msra.mxu0 %v3105
    %3873 = vmatprep.subr.mxu0 0.0
    %3874 = vmatpush2.msra.mxu0 0.0
    %3875 = vmatprep.subr.mxu0 0.0
    %3876 = vmatpush2.msra.mxu0 0.0
    %3877 = vmatprep.subr.mxu0 0.0
    %3878 = vmatpush2.msra.mxu0 0.0
    %3879 = vmatprep.subr.mxu0 0.0
    %3880 = vmatpush2.msra.mxu0 0.0
    %3881 = vmatprep.subr.mxu0 0.0
    %3882 = vmatpush2.msra.mxu0 0.0
    %3883 = vmatprep.subr.mxu0 0.0
    %3884 = vmatpush2.msra.mxu0 0.0
    %3885 = vmatprep.subr.mxu0 0.0
    %3886 = vmatpush2.msra.mxu0 0.0
    %3887 = vmatprep.subr.mxu0 0.0
    %3888 = vmatpush2.msra.mxu0 0.0
    %3889 = vmatprep.subr.mxu0 0.0
    %3890 = vmatpush2.msra.mxu0 0.0
    %3891 = vmatprep.subr.mxu0 0.0
    %3892 = vmatpush2.msra.mxu0 0.0
    %3893 = vmatprep.subr.mxu0 0.0
    %3894 = vmatpush2.msra.mxu0 0.0
    %3895 = vmatprep.subr.mxu0 0.0
    %3896 = vmatpush2.msra.mxu0 0.0
    %3897 = vmatprep.subr.mxu0 0.0
    %3898 = vmatpush2.msra.mxu0 0.0
    %3899 = vmatprep.subr.mxu0 0.0
    %3900 = vmatpush2.msra.mxu0 0.0
    %3901 = vmatprep.subr.mxu0 0.0
    %3902 = vmatpush2.msra.mxu0 0.0
    %3903 = vmatprep.subr.mxu0 0.0
    %3904 = vmatpush2.msra.mxu0 0.0
    %3905 = vmatprep.mubr.f32.mxu0 0.0
    %3906 = vmatmul.mubr.f32.gmra.mxu0 %v3271
    %v3907 = vpop.f32.mrf.mxu0
    %v3908 = vadd.f32 0.0, %v3907
    %v3909 = vpop.f32.mrf.mxu0
    %v3910 = vadd.f32 0.0, %v3909
    %3911 = vdwg.mxu0
    %3912 = vmatprep.subr.mxu0 0.0
    %3913 = vmatpush1.msra.mxu0 0.0
    %3914 = vmatprep.subr.mxu0 0.0
    %3915 = vmatpush1.msra.mxu0 0.0
    %3916 = vmatprep.subr.mxu0 0.0
    %3917 = vmatpush1.msra.mxu0 0.0
    %3918 = vmatprep.subr.mxu0 0.0
    %3919 = vmatpush1.msra.mxu0 0.0
    %3920 = vmatprep.subr.mxu0 0.0
    %3921 = vmatpush1.msra.mxu0 0.0
    %3922 = vmatprep.subr.mxu0 0.0
    %3923 = vmatpush1.msra.mxu0 0.0
    %3924 = vmatprep.subr.mxu0 0.0
    %3925 = vmatpush1.msra.mxu0 0.0
    %3926 = vmatprep.subr.mxu0 %v3268
    %3927 = vmatpush1.msra.mxu0 %v3267
    %3928 = vmatprep.subr.mxu0 %v3248
    %3929 = vmatpush1.msra.mxu0 %v3247
    %3930 = vmatprep.subr.mxu0 %v3228
    %3931 = vmatpush1.msra.mxu0 %v3227
    %3932 = vmatprep.subr.mxu0 %v3208
    %3933 = vmatpush1.msra.mxu0 %v3207
    %3934 = vmatprep.subr.mxu0 %v3188
    %3935 = vmatpush1.msra.mxu0 %v3187
    %3936 = vmatprep.subr.mxu0 %v3168
    %3937 = vmatpush1.msra.mxu0 %v3167
    %3938 = vmatprep.subr.mxu0 %v3148
    %3939 = vmatpush1.msra.mxu0 %v3147
    %3940 = vmatprep.subr.mxu0 %v3128
    %3941 = vmatpush1.msra.mxu0 %v3127
    %3942 = vmatprep.subr.mxu0 %v3108
    %3943 = vmatpush1.msra.mxu0 %v3107
    %3944 = vmatprep.subr.mxu0 0.0
    %3945 = vmatpush2.msra.mxu0 0.0
    %3946 = vmatprep.subr.mxu0 0.0
    %3947 = vmatpush2.msra.mxu0 0.0
    %3948 = vmatprep.subr.mxu0 0.0
    %3949 = vmatpush2.msra.mxu0 0.0
    %3950 = vmatprep.subr.mxu0 0.0
    %3951 = vmatpush2.msra.mxu0 0.0
    %3952 = vmatprep.subr.mxu0 0.0
    %3953 = vmatpush2.msra.mxu0 0.0
    %3954 = vmatprep.subr.mxu0 0.0
    %3955 = vmatpush2.msra.mxu0 0.0
    %3956 = vmatprep.subr.mxu0 0.0
    %3957 = vmatpush2.msra.mxu0 0.0
    %3958 = vmatprep.subr.mxu0 0.0
    %3959 = vmatpush2.msra.mxu0 0.0
    %3960 = vmatprep.subr.mxu0 0.0
    %3961 = vmatpush2.msra.mxu0 0.0
    %3962 = vmatprep.subr.mxu0 0.0
    %3963 = vmatpush2.msra.mxu0 0.0
    %3964 = vmatprep.subr.mxu0 0.0
    %3965 = vmatpush2.msra.mxu0 0.0
    %3966 = vmatprep.subr.mxu0 0.0
    %3967 = vmatpush2.msra.mxu0 0.0
    %3968 = vmatprep.subr.mxu0 0.0
    %3969 = vmatpush2.msra.mxu0 0.0
    %3970 = vmatprep.subr.mxu0 0.0
    %3971 = vmatpush2.msra.mxu0 0.0
    %3972 = vmatprep.subr.mxu0 0.0
    %3973 = vmatpush2.msra.mxu0 0.0
    %3974 = vmatprep.subr.mxu0 0.0
    %3975 = vmatpush2.msra.mxu0 0.0
    %3976 = vmatprep.mubr.f32.mxu0 0.0
    %3977 = vmatmul.mubr.f32.gmra.mxu0 %v3271
    %v3978 = vpop.f32.mrf.mxu0
    %v3979 = vadd.f32 0.0, %v3978
    %v3980 = vpop.f32.mrf.mxu0
    %v3981 = vadd.f32 0.0, %v3980
    %3982 = vdwg.mxu0
    %vm3983 = vcmp.ge.f32.partialorder %v3340, 0.0
    %vm3984 = vcmp.ge.f32.partialorder %v3342, 0.0
    %vm3985 = vcmp.ge.f32.partialorder %v3411, 0.0
    %vm3986 = vcmp.ge.f32.partialorder %v3413, 0.0
    %vm3987 = vcmp.ge.f32.partialorder %v3482, 0.0
    %vm3988 = vcmp.ge.f32.partialorder %v3484, 0.0
    %vm3989 = vcmp.ge.f32.partialorder %v3553, 0.0
    %vm3990 = vcmp.ge.f32.partialorder %v3555, 0.0
    %vm3991 = vcmp.ge.f32.partialorder %v3624, 0.0
    %vm3992 = vcmp.ge.f32.partialorder %v3626, 0.0
    %vm3993 = vcmp.ge.f32.partialorder %v3695, 0.0
    %vm3994 = vcmp.ge.f32.partialorder %v3697, 0.0
    %vm3995 = vcmp.ge.f32.partialorder %v3766, 0.0
    %vm3996 = vcmp.ge.f32.partialorder %v3768, 0.0
    %vm3997 = vcmp.ge.f32.partialorder %v3837, 0.0
    %vm3998 = vcmp.ge.f32.partialorder %v3839, 0.0
    %vm3999 = vcmp.ge.f32.partialorder %v3908, 0.0
    %vm4000 = vcmp.ge.f32.partialorder %v3910, 0.0
    %vm4001 = vcmp.ge.f32.partialorder %v3979, 0.0
    %vm4002 = vcmp.ge.f32.partialorder %v3981, 0.0
    %v4003 = vstv %s39
    %v4004 = vmul.f32 %v4003, %v3340
    %v4005 = vmul.f32 %v4003, %v3342
    %v4006 = vmul.f32 %v4003, %v3411
    %v4007 = vmul.f32 %v4003, %v3413
    %v4008 = vmul.f32 %v4003, %v3482
    %v4009 = vmul.f32 %v4003, %v3484
    %v4010 = vmul.f32 %v4003, %v3553
    %v4011 = vmul.f32 %v4003, %v3555
    %v4012 = vmul.f32 %v4003, %v3624
    %v4013 = vmul.f32 %v4003, %v3626
    %v4014 = vmul.f32 %v4003, %v3695
    %v4015 = vmul.f32 %v4003, %v3697
    %v4016 = vmul.f32 %v4003, %v3766
    %v4017 = vmul.f32 %v4003, %v3768
    %v4018 = vmul.f32 %v4003, %v3837
    %v4019 = vmul.f32 %v4003, %v3839
    %v4020 = vmul.f32 %v4003, %v3908
    %v4021 = vmul.f32 %v4003, %v3910
    %v4022 = vmul.f32 %v4003, %v3979
    %v4023 = vmul.f32 %v4003, %v3981
    %v4024 = vsel %vm3983, %v3340, %v4004
    %v4025 = vsel %vm3984, %v3342, %v4005
    %v4026 = vsel %vm3985, %v3411, %v4006
    %v4027 = vsel %vm3986, %v3413, %v4007
    %v4028 = vsel %vm3987, %v3482, %v4008
    %v4029 = vsel %vm3988, %v3484, %v4009
    %v4030 = vsel %vm3989, %v3553, %v4010
    %v4031 = vsel %vm3990, %v3555, %v4011
    %v4032 = vsel %vm3991, %v3624, %v4012
    %v4033 = vsel %vm3992, %v3626, %v4013
    %v4034 = vsel %vm3993, %v3695, %v4014
    %v4035 = vsel %vm3994, %v3697, %v4015
    %v4036 = vsel %vm3995, %v3766, %v4016
    %v4037 = vsel %vm3996, %v3768, %v4017
    %v4038 = vsel %vm3997, %v3837, %v4018
    %v4039 = vsel %vm3998, %v3839, %v4019
    %v4040 = vsel %vm3999, %v3908, %v4020
    %v4041 = vsel %vm4000, %v3910, %v4021
    %v4042 = vsel %vm4001, %v3979, %v4022
    %v4043 = vsel %vm4002, %v3981, %v4023
    %v4044 = vld [vmem:[#allocation5] ss:$2 sm:$0xff]
    %s4045 = scalar_lea.vmem [#allocation5], 16
    %v4046 = vld [vmem:[%s4045] ss:$2 sm:$0xff]
    %s4047 = scalar_lea.vmem [#allocation5], 32
    %v4048 = vld [vmem:[%s4047] ss:$2 sm:$0xf]
    %s4049 = scalar_lea.vmem [#allocation5], 1
    %v4050 = vld [vmem:[%s4049] ss:$2 sm:$0xff]
    %s4051 = scalar_lea.vmem [#allocation5], 17
    %v4052 = vld [vmem:[%s4051] ss:$2 sm:$0xff]
    %s4053 = scalar_lea.vmem [#allocation5], 33
    %v4054 = vld [vmem:[%s4053] ss:$2 sm:$0xf]
    %vm4055 = vcmp.eq.s32.totalorder %v4044, 0
    %vm4056 = vcmp.eq.s32.totalorder %v4046, 0
    %vm4057 = vcmp.eq.s32.totalorder %v4048, 0
    %vm4058 = vcmp.eq.s32.totalorder %v4044, 31
    %vm4059 = vcmp.eq.s32.totalorder %v4046, 31
    %vm4060 = vcmp.eq.s32.totalorder %v4048, 31
    %vm4061 = vcmp.eq.s32.totalorder %v4050, 0
    %vm4062 = vcmp.eq.s32.totalorder %v4052, 0
    %vm4063 = vcmp.eq.s32.totalorder %v4054, 0
    %4064 = vrot.lane.b32.xlu0 %v4024, 1
    %v4065 = vpop.permute.xlu0 %4064
    %4066 = vrot.lane.b32.xlu0 %v4025, 1
    %v4067 = vpop.permute.xlu0 %4066
    %4068 = vrot.lane.b32.xlu0 %v4026, 1
    %v4069 = vpop.permute.xlu0 %4068
    %4070 = vrot.lane.b32.xlu0 %v4027, 1
    %v4071 = vpop.permute.xlu0 %4070
    %4072 = vrot.lane.b32.xlu0 %v4028, 1
    %v4073 = vpop.permute.xlu0 %4072
    %4074 = vrot.lane.b32.xlu0 %v4029, 1
    %v4075 = vpop.permute.xlu0 %4074
    %4076 = vrot.lane.b32.xlu0 %v4030, 1
    %v4077 = vpop.permute.xlu0 %4076
    %4078 = vrot.lane.b32.xlu0 %v4031, 1
    %v4079 = vpop.permute.xlu0 %4078
    %4080 = vrot.lane.b32.xlu0 %v4032, 1
    %v4081 = vpop.permute.xlu0 %4080
    %4082 = vrot.lane.b32.xlu0 %v4033, 1
    %v4083 = vpop.permute.xlu0 %4082
    %4084 = vrot.lane.b32.xlu0 %v4034, 1
    %v4085 = vpop.permute.xlu0 %4084
    %4086 = vrot.lane.b32.xlu0 %v4035, 1
    %v4087 = vpop.permute.xlu0 %4086
    %4088 = vrot.lane.b32.xlu0 %v4036, 1
    %v4089 = vpop.permute.xlu0 %4088
    %4090 = vrot.lane.b32.xlu0 %v4037, 1
    %v4091 = vpop.permute.xlu0 %4090
    %4092 = vrot.lane.b32.xlu0 %v4038, 1
    %v4093 = vpop.permute.xlu0 %4092
    %4094 = vrot.lane.b32.xlu0 %v4039, 1
    %v4095 = vpop.permute.xlu0 %4094
    %4096 = vrot.lane.b32.xlu0 %v4040, 1
    %v4097 = vpop.permute.xlu0 %4096
    %4098 = vrot.lane.b32.xlu0 %v4041, 1
    %v4099 = vpop.permute.xlu0 %4098
    %4100 = vrot.lane.b32.xlu0 %v4042, 1
    %v4101 = vpop.permute.xlu0 %4100
    %4102 = vrot.lane.b32.xlu0 %v4043, 1
    %v4103 = vpop.permute.xlu0 %4102
    %vm4104 = vcmp.lt.s32.totalorder %v2479, 1
    %v4105 = vsel %vm4104, %v4101, %v4103
    %v4106 = vsel %vm4104, %v4099, %v4101
    %v4107 = vsel %vm4104, %v4097, %v4099
    %v4108 = vsel %vm4104, %v4095, %v4097
    %v4109 = vsel %vm4104, %v4093, %v4095
    %v4110 = vsel %vm4104, %v4091, %v4093
    %v4111 = vsel %vm4104, %v4089, %v4091
    %v4112 = vsel %vm4104, %v4087, %v4089
    %v4113 = vsel %vm4104, %v4085, %v4087
    %v4114 = vsel %vm4104, %v4083, %v4085
    %v4115 = vsel %vm4104, %v4081, %v4083
    %v4116 = vsel %vm4104, %v4079, %v4081
    %v4117 = vsel %vm4104, %v4077, %v4079
    %v4118 = vsel %vm4104, %v4075, %v4077
    %v4119 = vsel %vm4104, %v4073, %v4075
    %v4120 = vsel %vm4104, %v4071, %v4073
    %v4121 = vsel %vm4104, %v4069, %v4071
    %v4122 = vsel %vm4104, %v4067, %v4069
    %v4123 = vsel %vm4104, %v4065, %v4067
    %v4124 = vsel %vm4104, %v4103, %v4065
    %v4125 = vsel %vm4061, 1, 0
    %v4126 = vsel %vm4062, 1, 0
    %v4127 = vsel %vm4063, 1, 0
    %v4128 = vlaneseq
    %v4129 = vshrl.u32 %v4128, 7
    %v4130 = vsub.s32 0, %v4129
    %v4131 = vrot.slane %v4125, %v4130
    %v4132 = vlaneseq
    %v4133 = vshrl.u32 %v4132, 7
    %v4134 = vsub.s32 1, %v4133
    %v4135 = vrot.slane %v4125, %v4134
    %v4136 = vlaneseq
    %v4137 = vshrl.u32 %v4136, 7
    %v4138 = vsub.s32 2, %v4137
    %v4139 = vrot.slane %v4125, %v4138
    %v4140 = vlaneseq
    %v4141 = vshrl.u32 %v4140, 7
    %v4142 = vsub.s32 3, %v4141
    %v4143 = vrot.slane %v4125, %v4142
    %v4144 = vlaneseq
    %v4145 = vshrl.u32 %v4144, 7
    %v4146 = vsub.s32 4, %v4145
    %v4147 = vrot.slane %v4125, %v4146
    %v4148 = vlaneseq
    %v4149 = vshrl.u32 %v4148, 7
    %v4150 = vsub.s32 5, %v4149
    %v4151 = vrot.slane %v4125, %v4150
    %v4152 = vlaneseq
    %v4153 = vshrl.u32 %v4152, 7
    %v4154 = vsub.s32 6, %v4153
    %v4155 = vrot.slane %v4125, %v4154
    %v4156 = vlaneseq
    %v4157 = vshrl.u32 %v4156, 7
    %v4158 = vsub.s32 7, %v4157
    %v4159 = vrot.slane %v4125, %v4158
    %v4160 = vlaneseq
    %v4161 = vshrl.u32 %v4160, 7
    %v4162 = vsub.s32 0, %v4161
    %v4163 = vrot.slane %v4126, %v4162
    %v4164 = vlaneseq
    %v4165 = vshrl.u32 %v4164, 7
    %v4166 = vsub.s32 1, %v4165
    %v4167 = vrot.slane %v4126, %v4166
    %v4168 = vlaneseq
    %v4169 = vshrl.u32 %v4168, 7
    %v4170 = vsub.s32 2, %v4169
    %v4171 = vrot.slane %v4126, %v4170
    %v4172 = vlaneseq
    %v4173 = vshrl.u32 %v4172, 7
    %v4174 = vsub.s32 3, %v4173
    %v4175 = vrot.slane %v4126, %v4174
    %v4176 = vlaneseq
    %v4177 = vshrl.u32 %v4176, 7
    %v4178 = vsub.s32 4, %v4177
    %v4179 = vrot.slane %v4126, %v4178
    %v4180 = vlaneseq
    %v4181 = vshrl.u32 %v4180, 7
    %v4182 = vsub.s32 5, %v4181
    %v4183 = vrot.slane %v4126, %v4182
    %v4184 = vlaneseq
    %v4185 = vshrl.u32 %v4184, 7
    %v4186 = vsub.s32 6, %v4185
    %v4187 = vrot.slane %v4126, %v4186
    %v4188 = vlaneseq
    %v4189 = vshrl.u32 %v4188, 7
    %v4190 = vsub.s32 7, %v4189
    %v4191 = vrot.slane %v4126, %v4190
    %v4192 = vlaneseq
    %v4193 = vshrl.u32 %v4192, 7
    %v4194 = vsub.s32 0, %v4193
    %v4195 = vrot.slane %v4127, %v4194
    %v4196 = vlaneseq
    %v4197 = vshrl.u32 %v4196, 7
    %v4198 = vsub.s32 1, %v4197
    %v4199 = vrot.slane %v4127, %v4198
    %v4200 = vlaneseq
    %v4201 = vshrl.u32 %v4200, 7
    %v4202 = vsub.s32 2, %v4201
    %v4203 = vrot.slane %v4127, %v4202
    %v4204 = vlaneseq
    %v4205 = vshrl.u32 %v4204, 7
    %v4206 = vsub.s32 3, %v4205
    %v4207 = vrot.slane %v4127, %v4206
    %vm4208 = vcmp.eq.s32.totalorder %v4131, 1
    %vm4209 = vcmp.eq.s32.totalorder %v4135, 1
    %vm4210 = vcmp.eq.s32.totalorder %v4139, 1
    %vm4211 = vcmp.eq.s32.totalorder %v4143, 1
    %vm4212 = vcmp.eq.s32.totalorder %v4147, 1
    %vm4213 = vcmp.eq.s32.totalorder %v4151, 1
    %vm4214 = vcmp.eq.s32.totalorder %v4155, 1
    %vm4215 = vcmp.eq.s32.totalorder %v4159, 1
    %vm4216 = vcmp.eq.s32.totalorder %v4163, 1
    %vm4217 = vcmp.eq.s32.totalorder %v4167, 1
    %vm4218 = vcmp.eq.s32.totalorder %v4171, 1
    %vm4219 = vcmp.eq.s32.totalorder %v4175, 1
    %vm4220 = vcmp.eq.s32.totalorder %v4179, 1
    %vm4221 = vcmp.eq.s32.totalorder %v4183, 1
    %vm4222 = vcmp.eq.s32.totalorder %v4187, 1
    %vm4223 = vcmp.eq.s32.totalorder %v4191, 1
    %vm4224 = vcmp.eq.s32.totalorder %v4195, 1
    %vm4225 = vcmp.eq.s32.totalorder %v4199, 1
    %vm4226 = vcmp.eq.s32.totalorder %v4203, 1
    %vm4227 = vcmp.eq.s32.totalorder %v4207, 1
    %v4228 = vsel %vm4208, %v4024, %v4124
    %v4229 = vsel %vm4209, %v4025, %v4123
    %v4230 = vsel %vm4210, %v4026, %v4122
    %v4231 = vsel %vm4211, %v4027, %v4121
    %v4232 = vsel %vm4212, %v4028, %v4120
    %v4233 = vsel %vm4213, %v4029, %v4119
    %v4234 = vsel %vm4214, %v4030, %v4118
    %v4235 = vsel %vm4215, %v4031, %v4117
    %v4236 = vsel %vm4216, %v4032, %v4116
    %v4237 = vsel %vm4217, %v4033, %v4115
    %v4238 = vsel %vm4218, %v4034, %v4114
    %v4239 = vsel %vm4219, %v4035, %v4113
    %v4240 = vsel %vm4220, %v4036, %v4112
    %v4241 = vsel %vm4221, %v4037, %v4111
    %v4242 = vsel %vm4222, %v4038, %v4110
    %v4243 = vsel %vm4223, %v4039, %v4109
    %v4244 = vsel %vm4224, %v4040, %v4108
    %v4245 = vsel %vm4225, %v4041, %v4107
    %v4246 = vsel %vm4226, %v4042, %v4106
    %v4247 = vsel %vm4227, %v4043, %v4105
    %4248 = vst [vmem:[#allocation2 + $0x1e0] sm:$0xff] %v4228
    %4249 = vst [vmem:[#allocation2 + $0x1e8] sm:$0xff] %v4229
    %4250 = vst [vmem:[#allocation2 + $0x1f0] sm:$0xff] %v4230
    %4251 = vst [vmem:[#allocation2 + $0x1f8] sm:$0xff] %v4231
    %4252 = vst [vmem:[#allocation2 + $0x200] sm:$0xff] %v4232
    %4253 = vst [vmem:[#allocation2 + $0x208] sm:$0xff] %v4233
    %4254 = vst [vmem:[#allocation2 + $0x210] sm:$0xff] %v4234
    %4255 = vst [vmem:[#allocation2 + $0x218] sm:$0xff] %v4235
    %4256 = vst [vmem:[#allocation2 + $0x220] sm:$0xff] %v4236
    %4257 = vst [vmem:[#allocation2 + $0x228] sm:$0xff] %v4237
    %4258 = vst [vmem:[#allocation2 + $0x230] sm:$0xff] %v4238
    %4259 = vst [vmem:[#allocation2 + $0x238] sm:$0xff] %v4239
    %4260 = vst [vmem:[#allocation2 + $0x240] sm:$0xff] %v4240
    %4261 = vst [vmem:[#allocation2 + $0x248] sm:$0xff] %v4241
    %4262 = vst [vmem:[#allocation2 + $0x250] sm:$0xff] %v4242
    %4263 = vst [vmem:[#allocation2 + $0x258] sm:$0xff] %v4243
    %4264 = vst [vmem:[#allocation2 + $0x260] sm:$0xff] %v4244
    %4265 = vst [vmem:[#allocation2 + $0x268] sm:$0xff] %v4245
    %4266 = vst [vmem:[#allocation2 + $0x270] sm:$0xff] %v4246
    %4267 = vst [vmem:[#allocation2 + $0x278] sm:$0xff] %v4247
    %4268 = vrot.lane.b32.xlu0 %v4228, 34
    %v4269 = vpop.permute.xlu0 %4268
    %4270 = vrot.lane.b32.xlu0 %v4229, 34
    %v4271 = vpop.permute.xlu0 %4270
    %4272 = vrot.lane.b32.xlu0 %v4230, 34
    %v4273 = vpop.permute.xlu0 %4272
    %4274 = vrot.lane.b32.xlu0 %v4231, 34
    %v4275 = vpop.permute.xlu0 %4274
    %4276 = vrot.lane.b32.xlu0 %v4232, 34
    %v4277 = vpop.permute.xlu0 %4276
    %4278 = vrot.lane.b32.xlu0 %v4233, 34
    %v4279 = vpop.permute.xlu0 %4278
    %4280 = vrot.lane.b32.xlu0 %v4234, 34
    %v4281 = vpop.permute.xlu0 %4280
    %4282 = vrot.lane.b32.xlu0 %v4235, 34
    %v4283 = vpop.permute.xlu0 %4282
    %4284 = vrot.lane.b32.xlu0 %v4236, 34
    %v4285 = vpop.permute.xlu0 %4284
    %4286 = vrot.lane.b32.xlu0 %v4237, 34
    %v4287 = vpop.permute.xlu0 %4286
    %4288 = vrot.lane.b32.xlu0 %v4238, 34
    %v4289 = vpop.permute.xlu0 %4288
    %4290 = vrot.lane.b32.xlu0 %v4239, 34
    %v4291 = vpop.permute.xlu0 %4290
    %4292 = vrot.lane.b32.xlu0 %v4240, 34
    %v4293 = vpop.permute.xlu0 %4292
    %4294 = vrot.lane.b32.xlu0 %v4241, 34
    %v4295 = vpop.permute.xlu0 %4294
    %4296 = vrot.lane.b32.xlu0 %v4242, 34
    %v4297 = vpop.permute.xlu0 %4296
    %4298 = vrot.lane.b32.xlu0 %v4243, 34
    %v4299 = vpop.permute.xlu0 %4298
    %4300 = vrot.lane.b32.xlu0 %v4244, 34
    %v4301 = vpop.permute.xlu0 %4300
    %4302 = vrot.lane.b32.xlu0 %v4245, 34
    %v4303 = vpop.permute.xlu0 %4302
    %4304 = vrot.lane.b32.xlu0 %v4246, 34
    %v4305 = vpop.permute.xlu0 %4304
    %4306 = vrot.lane.b32.xlu0 %v4247, 34
    %v4307 = vpop.permute.xlu0 %4306
    %vm4308 = vcmp.lt.s32.totalorder %v2479, 34
    %v4309 = vsel %vm4308, %v4305, %v4307
    %v4310 = vsel %vm4308, %v4303, %v4305
    %v4311 = vsel %vm4308, %v4301, %v4303
    %v4312 = vsel %vm4308, %v4299, %v4301
    %v4313 = vsel %vm4308, %v4297, %v4299
    %v4314 = vsel %vm4308, %v4295, %v4297
    %v4315 = vsel %vm4308, %v4293, %v4295
    %v4316 = vsel %vm4308, %v4291, %v4293
    %v4317 = vsel %vm4308, %v4289, %v4291
    %v4318 = vsel %vm4308, %v4287, %v4289
    %v4319 = vsel %vm4308, %v4285, %v4287
    %v4320 = vsel %vm4308, %v4283, %v4285
    %v4321 = vsel %vm4308, %v4281, %v4283
    %v4322 = vsel %vm4308, %v4279, %v4281
    %v4323 = vsel %vm4308, %v4277, %v4279
    %v4324 = vsel %vm4308, %v4275, %v4277
    %v4325 = vsel %vm4308, %v4273, %v4275
    %v4326 = vsel %vm4308, %v4271, %v4273
    %v4327 = vsel %vm4308, %v4269, %v4271
    %v4328 = vsel %vm4308, %v4307, %v4269
    %v4329 = vsel %vm4055, 1, 0
    %v4330 = vsel %vm4056, 1, 0
    %v4331 = vsel %vm4057, 1, 0
    %v4332 = vlaneseq
    %v4333 = vshrl.u32 %v4332, 7
    %v4334 = vsub.s32 0, %v4333
    %v4335 = vrot.slane %v4329, %v4334
    %v4336 = vlaneseq
    %v4337 = vshrl.u32 %v4336, 7
    %v4338 = vsub.s32 1, %v4337
    %v4339 = vrot.slane %v4329, %v4338
    %v4340 = vlaneseq
    %v4341 = vshrl.u32 %v4340, 7
    %v4342 = vsub.s32 2, %v4341
    %v4343 = vrot.slane %v4329, %v4342
    %v4344 = vlaneseq
    %v4345 = vshrl.u32 %v4344, 7
    %v4346 = vsub.s32 3, %v4345
    %v4347 = vrot.slane %v4329, %v4346
    %v4348 = vlaneseq
    %v4349 = vshrl.u32 %v4348, 7
    %v4350 = vsub.s32 4, %v4349
    %v4351 = vrot.slane %v4329, %v4350
    %v4352 = vlaneseq
    %v4353 = vshrl.u32 %v4352, 7
    %v4354 = vsub.s32 5, %v4353
    %v4355 = vrot.slane %v4329, %v4354
    %v4356 = vlaneseq
    %v4357 = vshrl.u32 %v4356, 7
    %v4358 = vsub.s32 6, %v4357
    %v4359 = vrot.slane %v4329, %v4358
    %v4360 = vlaneseq
    %v4361 = vshrl.u32 %v4360, 7
    %v4362 = vsub.s32 7, %v4361
    %v4363 = vrot.slane %v4329, %v4362
    %v4364 = vlaneseq
    %v4365 = vshrl.u32 %v4364, 7
    %v4366 = vsub.s32 0, %v4365
    %v4367 = vrot.slane %v4330, %v4366
    %v4368 = vlaneseq
    %v4369 = vshrl.u32 %v4368, 7
    %v4370 = vsub.s32 1, %v4369
    %v4371 = vrot.slane %v4330, %v4370
    %v4372 = vlaneseq
    %v4373 = vshrl.u32 %v4372, 7
    %v4374 = vsub.s32 2, %v4373
    %v4375 = vrot.slane %v4330, %v4374
    %v4376 = vlaneseq
    %v4377 = vshrl.u32 %v4376, 7
    %v4378 = vsub.s32 3, %v4377
    %v4379 = vrot.slane %v4330, %v4378
    %v4380 = vlaneseq
    %v4381 = vshrl.u32 %v4380, 7
    %v4382 = vsub.s32 4, %v4381
    %v4383 = vrot.slane %v4330, %v4382
    %v4384 = vlaneseq
    %v4385 = vshrl.u32 %v4384, 7
    %v4386 = vsub.s32 5, %v4385
    %v4387 = vrot.slane %v4330, %v4386
    %v4388 = vlaneseq
    %v4389 = vshrl.u32 %v4388, 7
    %v4390 = vsub.s32 6, %v4389
    %v4391 = vrot.slane %v4330, %v4390
    %v4392 = vlaneseq
    %v4393 = vshrl.u32 %v4392, 7
    %v4394 = vsub.s32 7, %v4393
    %v4395 = vrot.slane %v4330, %v4394
    %v4396 = vlaneseq
    %v4397 = vshrl.u32 %v4396, 7
    %v4398 = vsub.s32 0, %v4397
    %v4399 = vrot.slane %v4331, %v4398
    %v4400 = vlaneseq
    %v4401 = vshrl.u32 %v4400, 7
    %v4402 = vsub.s32 1, %v4401
    %v4403 = vrot.slane %v4331, %v4402
    %v4404 = vlaneseq
    %v4405 = vshrl.u32 %v4404, 7
    %v4406 = vsub.s32 2, %v4405
    %v4407 = vrot.slane %v4331, %v4406
    %v4408 = vlaneseq
    %v4409 = vshrl.u32 %v4408, 7
    %v4410 = vsub.s32 3, %v4409
    %v4411 = vrot.slane %v4331, %v4410
    %vm4412 = vcmp.eq.s32.totalorder %v4335, 1
    %vm4413 = vcmp.eq.s32.totalorder %v4339, 1
    %vm4414 = vcmp.eq.s32.totalorder %v4343, 1
    %vm4415 = vcmp.eq.s32.totalorder %v4347, 1
    %vm4416 = vcmp.eq.s32.totalorder %v4351, 1
    %vm4417 = vcmp.eq.s32.totalorder %v4355, 1
    %vm4418 = vcmp.eq.s32.totalorder %v4359, 1
    %vm4419 = vcmp.eq.s32.totalorder %v4363, 1
    %vm4420 = vcmp.eq.s32.totalorder %v4367, 1
    %vm4421 = vcmp.eq.s32.totalorder %v4371, 1
    %vm4422 = vcmp.eq.s32.totalorder %v4375, 1
    %vm4423 = vcmp.eq.s32.totalorder %v4379, 1
    %vm4424 = vcmp.eq.s32.totalorder %v4383, 1
    %vm4425 = vcmp.eq.s32.totalorder %v4387, 1
    %vm4426 = vcmp.eq.s32.totalorder %v4391, 1
    %vm4427 = vcmp.eq.s32.totalorder %v4395, 1
    %vm4428 = vcmp.eq.s32.totalorder %v4399, 1
    %vm4429 = vcmp.eq.s32.totalorder %v4403, 1
    %vm4430 = vcmp.eq.s32.totalorder %v4407, 1
    %vm4431 = vcmp.eq.s32.totalorder %v4411, 1
    %v4432 = vsel %vm4412, %v4228, %v4328
    %v4433 = vsel %vm4413, %v4229, %v4327
    %v4434 = vsel %vm4414, %v4230, %v4326
    %v4435 = vsel %vm4415, %v4231, %v4325
    %v4436 = vsel %vm4416, %v4232, %v4324
    %v4437 = vsel %vm4417, %v4233, %v4323
    %v4438 = vsel %vm4418, %v4234, %v4322
    %v4439 = vsel %vm4419, %v4235, %v4321
    %v4440 = vsel %vm4420, %v4236, %v4320
    %v4441 = vsel %vm4421, %v4237, %v4319
    %v4442 = vsel %vm4422, %v4238, %v4318
    %v4443 = vsel %vm4423, %v4239, %v4317
    %v4444 = vsel %vm4424, %v4240, %v4316
    %v4445 = vsel %vm4425, %v4241, %v4315
    %v4446 = vsel %vm4426, %v4242, %v4314
    %v4447 = vsel %vm4427, %v4243, %v4313
    %v4448 = vsel %vm4428, %v4244, %v4312
    %v4449 = vsel %vm4429, %v4245, %v4311
    %v4450 = vsel %vm4430, %v4246, %v4310
    %v4451 = vsel %vm4431, %v4247, %v4309
    %4452 = vst [vmem:[#allocation2] sm:$0xff] %v4432
    %4453 = vst [vmem:[#allocation2 + $0x8] sm:$0xff] %v4433
    %4454 = vst [vmem:[#allocation2 + $0x10] sm:$0xff] %v4434
    %4455 = vst [vmem:[#allocation2 + $0x18] sm:$0xff] %v4435
    %4456 = vst [vmem:[#allocation2 + $0x20] sm:$0xff] %v4436
    %4457 = vst [vmem:[#allocation2 + $0x28] sm:$0xff] %v4437
    %4458 = vst [vmem:[#allocation2 + $0x30] sm:$0xff] %v4438
    %4459 = vst [vmem:[#allocation2 + $0x38] sm:$0xff] %v4439
    %4460 = vst [vmem:[#allocation2 + $0x40] sm:$0xff] %v4440
    %4461 = vst [vmem:[#allocation2 + $0x48] sm:$0xff] %v4441
    %4462 = vst [vmem:[#allocation2 + $0x50] sm:$0xff] %v4442
    %4463 = vst [vmem:[#allocation2 + $0x58] sm:$0xff] %v4443
    %4464 = vst [vmem:[#allocation2 + $0x60] sm:$0xff] %v4444
    %4465 = vst [vmem:[#allocation2 + $0x68] sm:$0xff] %v4445
    %4466 = vst [vmem:[#allocation2 + $0x70] sm:$0xff] %v4446
    %4467 = vst [vmem:[#allocation2 + $0x78] sm:$0xff] %v4447
    %4468 = vst [vmem:[#allocation2 + $0x80] sm:$0xff] %v4448
    %4469 = vst [vmem:[#allocation2 + $0x88] sm:$0xff] %v4449
    %4470 = vst [vmem:[#allocation2 + $0x90] sm:$0xff] %v4450
    %4471 = vst [vmem:[#allocation2 + $0x98] sm:$0xff] %v4451
    %4472 = vrot.lane.b32.xlu0 %v4228, 94
    %v4473 = vpop.permute.xlu0 %4472
    %4474 = vrot.lane.b32.xlu0 %v4229, 94
    %v4475 = vpop.permute.xlu0 %4474
    %4476 = vrot.lane.b32.xlu0 %v4230, 94
    %v4477 = vpop.permute.xlu0 %4476
    %4478 = vrot.lane.b32.xlu0 %v4231, 94
    %v4479 = vpop.permute.xlu0 %4478
    %4480 = vrot.lane.b32.xlu0 %v4232, 94
    %v4481 = vpop.permute.xlu0 %4480
    %4482 = vrot.lane.b32.xlu0 %v4233, 94
    %v4483 = vpop.permute.xlu0 %4482
    %4484 = vrot.lane.b32.xlu0 %v4234, 94
    %v4485 = vpop.permute.xlu0 %4484
    %4486 = vrot.lane.b32.xlu0 %v4235, 94
    %v4487 = vpop.permute.xlu0 %4486
    %4488 = vrot.lane.b32.xlu0 %v4236, 94
    %v4489 = vpop.permute.xlu0 %4488
    %4490 = vrot.lane.b32.xlu0 %v4237, 94
    %v4491 = vpop.permute.xlu0 %4490
    %4492 = vrot.lane.b32.xlu0 %v4238, 94
    %v4493 = vpop.permute.xlu0 %4492
    %4494 = vrot.lane.b32.xlu0 %v4239, 94
    %v4495 = vpop.permute.xlu0 %4494
    %4496 = vrot.lane.b32.xlu0 %v4240, 94
    %v4497 = vpop.permute.xlu0 %4496
    %4498 = vrot.lane.b32.xlu0 %v4241, 94
    %v4499 = vpop.permute.xlu0 %4498
    %4500 = vrot.lane.b32.xlu0 %v4242, 94
    %v4501 = vpop.permute.xlu0 %4500
    %4502 = vrot.lane.b32.xlu0 %v4243, 94
    %v4503 = vpop.permute.xlu0 %4502
    %4504 = vrot.lane.b32.xlu0 %v4244, 94
    %v4505 = vpop.permute.xlu0 %4504
    %4506 = vrot.lane.b32.xlu0 %v4245, 94
    %v4507 = vpop.permute.xlu0 %4506
    %4508 = vrot.lane.b32.xlu0 %v4246, 94
    %v4509 = vpop.permute.xlu0 %4508
    %4510 = vrot.lane.b32.xlu0 %v4247, 94
    %v4511 = vpop.permute.xlu0 %4510
    %v4512 = vsel %vm2642, %v4509, %v4511
    %v4513 = vsel %vm2642, %v4507, %v4509
    %v4514 = vsel %vm2642, %v4505, %v4507
    %v4515 = vsel %vm2642, %v4503, %v4505
    %v4516 = vsel %vm2642, %v4501, %v4503
    %v4517 = vsel %vm2642, %v4499, %v4501
    %v4518 = vsel %vm2642, %v4497, %v4499
    %v4519 = vsel %vm2642, %v4495, %v4497
    %v4520 = vsel %vm2642, %v4493, %v4495
    %v4521 = vsel %vm2642, %v4491, %v4493
    %v4522 = vsel %vm2642, %v4489, %v4491
    %v4523 = vsel %vm2642, %v4487, %v4489
    %v4524 = vsel %vm2642, %v4485, %v4487
    %v4525 = vsel %vm2642, %v4483, %v4485
    %v4526 = vsel %vm2642, %v4481, %v4483
    %v4527 = vsel %vm2642, %v4479, %v4481
    %v4528 = vsel %vm2642, %v4477, %v4479
    %v4529 = vsel %vm2642, %v4475, %v4477
    %v4530 = vsel %vm2642, %v4473, %v4475
    %v4531 = vsel %vm2642, %v4511, %v4473
    %v4532 = vsel %vm4058, 1, 0
    %v4533 = vsel %vm4059, 1, 0
    %v4534 = vsel %vm4060, 1, 0
    %v4535 = vlaneseq
    %v4536 = vshrl.u32 %v4535, 7
    %v4537 = vsub.s32 0, %v4536
    %v4538 = vrot.slane %v4532, %v4537
    %v4539 = vlaneseq
    %v4540 = vshrl.u32 %v4539, 7
    %v4541 = vsub.s32 1, %v4540
    %v4542 = vrot.slane %v4532, %v4541
    %v4543 = vlaneseq
    %v4544 = vshrl.u32 %v4543, 7
    %v4545 = vsub.s32 2, %v4544
    %v4546 = vrot.slane %v4532, %v4545
    %v4547 = vlaneseq
    %v4548 = vshrl.u32 %v4547, 7
    %v4549 = vsub.s32 3, %v4548
    %v4550 = vrot.slane %v4532, %v4549
    %v4551 = vlaneseq
    %v4552 = vshrl.u32 %v4551, 7
    %v4553 = vsub.s32 4, %v4552
    %v4554 = vrot.slane %v4532, %v4553
    %v4555 = vlaneseq
    %v4556 = vshrl.u32 %v4555, 7
    %v4557 = vsub.s32 5, %v4556
    %v4558 = vrot.slane %v4532, %v4557
    %v4559 = vlaneseq
    %v4560 = vshrl.u32 %v4559, 7
    %v4561 = vsub.s32 6, %v4560
    %v4562 = vrot.slane %v4532, %v4561
    %v4563 = vlaneseq
    %v4564 = vshrl.u32 %v4563, 7
    %v4565 = vsub.s32 7, %v4564
    %v4566 = vrot.slane %v4532, %v4565
    %v4567 = vlaneseq
    %v4568 = vshrl.u32 %v4567, 7
    %v4569 = vsub.s32 0, %v4568
    %v4570 = vrot.slane %v4533, %v4569
    %v4571 = vlaneseq
    %v4572 = vshrl.u32 %v4571, 7
    %v4573 = vsub.s32 1, %v4572
    %v4574 = vrot.slane %v4533, %v4573
    %v4575 = vlaneseq
    %v4576 = vshrl.u32 %v4575, 7
    %v4577 = vsub.s32 2, %v4576
    %v4578 = vrot.slane %v4533, %v4577
    %v4579 = vlaneseq
    %v4580 = vshrl.u32 %v4579, 7
    %v4581 = vsub.s32 3, %v4580
    %v4582 = vrot.slane %v4533, %v4581
    %v4583 = vlaneseq
    %v4584 = vshrl.u32 %v4583, 7
    %v4585 = vsub.s32 4, %v4584
    %v4586 = vrot.slane %v4533, %v4585
    %v4587 = vlaneseq
    %v4588 = vshrl.u32 %v4587, 7
    %v4589 = vsub.s32 5, %v4588
    %v4590 = vrot.slane %v4533, %v4589
    %v4591 = vlaneseq
    %v4592 = vshrl.u32 %v4591, 7
    %v4593 = vsub.s32 6, %v4592
    %v4594 = vrot.slane %v4533, %v4593
    %v4595 = vlaneseq
    %v4596 = vshrl.u32 %v4595, 7
    %v4597 = vsub.s32 7, %v4596
    %v4598 = vrot.slane %v4533, %v4597
    %v4599 = vlaneseq
    %v4600 = vshrl.u32 %v4599, 7
    %v4601 = vsub.s32 0, %v4600
    %v4602 = vrot.slane %v4534, %v4601
    %v4603 = vlaneseq
    %v4604 = vshrl.u32 %v4603, 7
    %v4605 = vsub.s32 1, %v4604
    %v4606 = vrot.slane %v4534, %v4605
    %v4607 = vlaneseq
    %v4608 = vshrl.u32 %v4607, 7
    %v4609 = vsub.s32 2, %v4608
    %v4610 = vrot.slane %v4534, %v4609
    %v4611 = vlaneseq
    %v4612 = vshrl.u32 %v4611, 7
    %v4613 = vsub.s32 3, %v4612
    %v4614 = vrot.slane %v4534, %v4613
    %vm4615 = vcmp.eq.s32.totalorder %v4538, 1
    %vm4616 = vcmp.eq.s32.totalorder %v4542, 1
    %vm4617 = vcmp.eq.s32.totalorder %v4546, 1
    %vm4618 = vcmp.eq.s32.totalorder %v4550, 1
    %vm4619 = vcmp.eq.s32.totalorder %v4554, 1
    %vm4620 = vcmp.eq.s32.totalorder %v4558, 1
    %vm4621 = vcmp.eq.s32.totalorder %v4562, 1
    %vm4622 = vcmp.eq.s32.totalorder %v4566, 1
    %vm4623 = vcmp.eq.s32.totalorder %v4570, 1
    %vm4624 = vcmp.eq.s32.totalorder %v4574, 1
    %vm4625 = vcmp.eq.s32.totalorder %v4578, 1
    %vm4626 = vcmp.eq.s32.totalorder %v4582, 1
    %vm4627 = vcmp.eq.s32.totalorder %v4586, 1
    %vm4628 = vcmp.eq.s32.totalorder %v4590, 1
    %vm4629 = vcmp.eq.s32.totalorder %v4594, 1
    %vm4630 = vcmp.eq.s32.totalorder %v4598, 1
    %vm4631 = vcmp.eq.s32.totalorder %v4602, 1
    %vm4632 = vcmp.eq.s32.totalorder %v4606, 1
    %vm4633 = vcmp.eq.s32.totalorder %v4610, 1
    %vm4634 = vcmp.eq.s32.totalorder %v4614, 1
    %v4635 = vsel %vm4615, %v4228, %v4530
    %v4636 = vsel %vm4616, %v4229, %v4529
    %v4637 = vsel %vm4617, %v4230, %v4528
    %v4638 = vsel %vm4618, %v4231, %v4527
    %v4639 = vsel %vm4619, %v4232, %v4526
    %v4640 = vsel %vm4620, %v4233, %v4525
    %v4641 = vsel %vm4621, %v4234, %v4524
    %v4642 = vsel %vm4622, %v4235, %v4523
    %v4643 = vsel %vm4623, %v4236, %v4522
    %v4644 = vsel %vm4624, %v4237, %v4521
    %v4645 = vsel %vm4625, %v4238, %v4520
    %v4646 = vsel %vm4626, %v4239, %v4519
    %v4647 = vsel %vm4627, %v4240, %v4518
    %v4648 = vsel %vm4628, %v4241, %v4517
    %v4649 = vsel %vm4629, %v4242, %v4516
    %v4650 = vsel %vm4630, %v4243, %v4515
    %v4651 = vsel %vm4631, %v4244, %v4514
    %v4652 = vsel %vm4632, %v4245, %v4513
    %v4653 = vsel %vm4633, %v4246, %v4512
    %v4654 = vsel %vm4634, %v4247, %v4531
    %4655 = vst [vmem:[#allocation2 + $0x3c0] sm:$0xff] %v4635
    %4656 = vst [vmem:[#allocation2 + $0x3c8] sm:$0xff] %v4636
    %4657 = vst [vmem:[#allocation2 + $0x3d0] sm:$0xff] %v4637
    %4658 = vst [vmem:[#allocation2 + $0x3d8] sm:$0xff] %v4638
    %4659 = vst [vmem:[#allocation2 + $0x3e0] sm:$0xff] %v4639
    %4660 = vst [vmem:[#allocation2 + $0x3e8] sm:$0xff] %v4640
    %4661 = vst [vmem:[#allocation2 + $0x3f0] sm:$0xff] %v4641
    %4662 = vst [vmem:[#allocation2 + $0x3f8] sm:$0xff] %v4642
    %4663 = vst [vmem:[#allocation2 + $0x400] sm:$0xff] %v4643
    %4664 = vst [vmem:[#allocation2 + $0x408] sm:$0xff] %v4644
    %4665 = vst [vmem:[#allocation2 + $0x410] sm:$0xff] %v4645
    %4666 = vst [vmem:[#allocation2 + $0x418] sm:$0xff] %v4646
    %4667 = vst [vmem:[#allocation2 + $0x420] sm:$0xff] %v4647
    %4668 = vst [vmem:[#allocation2 + $0x428] sm:$0xff] %v4648
    %4669 = vst [vmem:[#allocation2 + $0x430] sm:$0xff] %v4649
    %4670 = vst [vmem:[#allocation2 + $0x438] sm:$0xff] %v4650
    %4671 = vst [vmem:[#allocation2 + $0x440] sm:$0xff] %v4651
    %4672 = vst [vmem:[#allocation2 + $0x448] sm:$0xff] %v4652
    %4673 = vst [vmem:[#allocation2 + $0x450] sm:$0xff] %v4653
    %4674 = vst [vmem:[#allocation2 + $0x458] sm:$0xff] %v4654
    %4675 = vst [vmem:[#allocation2 + $0x280] sm:$0xff] %v4024
    %4676 = vst [vmem:[#allocation2 + $0x288] sm:$0xff] %v4025
    %4677 = vst [vmem:[#allocation2 + $0x290] sm:$0xff] %v4026
    %4678 = vst [vmem:[#allocation2 + $0x298] sm:$0xff] %v4027
    %4679 = vst [vmem:[#allocation2 + $0x2a0] sm:$0xff] %v4028
    %4680 = vst [vmem:[#allocation2 + $0x2a8] sm:$0xff] %v4029
    %4681 = vst [vmem:[#allocation2 + $0x2b0] sm:$0xff] %v4030
    %4682 = vst [vmem:[#allocation2 + $0x2b8] sm:$0xff] %v4031
    %4683 = vst [vmem:[#allocation2 + $0x2c0] sm:$0xff] %v4032
    %4684 = vst [vmem:[#allocation2 + $0x2c8] sm:$0xff] %v4033
    %4685 = vst [vmem:[#allocation2 + $0x2d0] sm:$0xff] %v4034
    %4686 = vst [vmem:[#allocation2 + $0x2d8] sm:$0xff] %v4035
    %4687 = vst [vmem:[#allocation2 + $0x2e0] sm:$0xff] %v4036
    %4688 = vst [vmem:[#allocation2 + $0x2e8] sm:$0xff] %v4037
    %4689 = vst [vmem:[#allocation2 + $0x2f0] sm:$0xff] %v4038
    %4690 = vst [vmem:[#allocation2 + $0x2f8] sm:$0xff] %v4039
    %4691 = vst [vmem:[#allocation2 + $0x300] sm:$0xff] %v4040
    %4692 = vst [vmem:[#allocation2 + $0x308] sm:$0xff] %v4041
    %4693 = vst [vmem:[#allocation2 + $0x310] sm:$0xff] %v4042
    %4694 = vst [vmem:[#allocation2 + $0x318] sm:$0xff] %v4043
    %4695 = vrot.lane.b32.xlu0 %v4024, 34
    %v4696 = vpop.permute.xlu0 %4695
    %4697 = vrot.lane.b32.xlu0 %v4025, 34
    %v4698 = vpop.permute.xlu0 %4697
    %4699 = vrot.lane.b32.xlu0 %v4026, 34
    %v4700 = vpop.permute.xlu0 %4699
    %4701 = vrot.lane.b32.xlu0 %v4027, 34
    %v4702 = vpop.permute.xlu0 %4701
    %4703 = vrot.lane.b32.xlu0 %v4028, 34
    %v4704 = vpop.permute.xlu0 %4703
    %4705 = vrot.lane.b32.xlu0 %v4029, 34
    %v4706 = vpop.permute.xlu0 %4705
    %4707 = vrot.lane.b32.xlu0 %v4030, 34
    %v4708 = vpop.permute.xlu0 %4707
    %4709 = vrot.lane.b32.xlu0 %v4031, 34
    %v4710 = vpop.permute.xlu0 %4709
    %4711 = vrot.lane.b32.xlu0 %v4032, 34
    %v4712 = vpop.permute.xlu0 %4711
    %4713 = vrot.lane.b32.xlu0 %v4033, 34
    %v4714 = vpop.permute.xlu0 %4713
    %4715 = vrot.lane.b32.xlu0 %v4034, 34
    %v4716 = vpop.permute.xlu0 %4715
    %4717 = vrot.lane.b32.xlu0 %v4035, 34
    %v4718 = vpop.permute.xlu0 %4717
    %4719 = vrot.lane.b32.xlu0 %v4036, 34
    %v4720 = vpop.permute.xlu0 %4719
    %4721 = vrot.lane.b32.xlu0 %v4037, 34
    %v4722 = vpop.permute.xlu0 %4721
    %4723 = vrot.lane.b32.xlu0 %v4038, 34
    %v4724 = vpop.permute.xlu0 %4723
    %4725 = vrot.lane.b32.xlu0 %v4039, 34
    %v4726 = vpop.permute.xlu0 %4725
    %4727 = vrot.lane.b32.xlu0 %v4040, 34
    %v4728 = vpop.permute.xlu0 %4727
    %4729 = vrot.lane.b32.xlu0 %v4041, 34
    %v4730 = vpop.permute.xlu0 %4729
    %4731 = vrot.lane.b32.xlu0 %v4042, 34
    %v4732 = vpop.permute.xlu0 %4731
    %4733 = vrot.lane.b32.xlu0 %v4043, 34
    %v4734 = vpop.permute.xlu0 %4733
    %v4735 = vsel %vm4308, %v4732, %v4734
    %v4736 = vsel %vm4308, %v4730, %v4732
    %v4737 = vsel %vm4308, %v4728, %v4730
    %v4738 = vsel %vm4308, %v4726, %v4728
    %v4739 = vsel %vm4308, %v4724, %v4726
    %v4740 = vsel %vm4308, %v4722, %v4724
    %v4741 = vsel %vm4308, %v4720, %v4722
    %v4742 = vsel %vm4308, %v4718, %v4720
    %v4743 = vsel %vm4308, %v4716, %v4718
    %v4744 = vsel %vm4308, %v4714, %v4716
    %v4745 = vsel %vm4308, %v4712, %v4714
    %v4746 = vsel %vm4308, %v4710, %v4712
    %v4747 = vsel %vm4308, %v4708, %v4710
    %v4748 = vsel %vm4308, %v4706, %v4708
    %v4749 = vsel %vm4308, %v4704, %v4706
    %v4750 = vsel %vm4308, %v4702, %v4704
    %v4751 = vsel %vm4308, %v4700, %v4702
    %v4752 = vsel %vm4308, %v4698, %v4700
    %v4753 = vsel %vm4308, %v4696, %v4698
    %v4754 = vsel %vm4308, %v4734, %v4696
    %v4755 = vsel %vm4412, %v4024, %v4754
    %v4756 = vsel %vm4413, %v4025, %v4753
    %v4757 = vsel %vm4414, %v4026, %v4752
    %v4758 = vsel %vm4415, %v4027, %v4751
    %v4759 = vsel %vm4416, %v4028, %v4750
    %v4760 = vsel %vm4417, %v4029, %v4749
    %v4761 = vsel %vm4418, %v4030, %v4748
    %v4762 = vsel %vm4419, %v4031, %v4747
    %v4763 = vsel %vm4420, %v4032, %v4746
    %v4764 = vsel %vm4421, %v4033, %v4745
    %v4765 = vsel %vm4422, %v4034, %v4744
    %v4766 = vsel %vm4423, %v4035, %v4743
    %v4767 = vsel %vm4424, %v4036, %v4742
    %v4768 = vsel %vm4425, %v4037, %v4741
    %v4769 = vsel %vm4426, %v4038, %v4740
    %v4770 = vsel %vm4427, %v4039, %v4739
    %v4771 = vsel %vm4428, %v4040, %v4738
    %v4772 = vsel %vm4429, %v4041, %v4737
    %v4773 = vsel %vm4430, %v4042, %v4736
    %v4774 = vsel %vm4431, %v4043, %v4735
    %4775 = vst [vmem:[#allocation2 + $0xa0] sm:$0xff] %v4755
    %4776 = vst [vmem:[#allocation2 + $0xa8] sm:$0xff] %v4756
    %4777 = vst [vmem:[#allocation2 + $0xb0] sm:$0xff] %v4757
    %4778 = vst [vmem:[#allocation2 + $0xb8] sm:$0xff] %v4758
    %4779 = vst [vmem:[#allocation2 + $0xc0] sm:$0xff] %v4759
    %4780 = vst [vmem:[#allocation2 + $0xc8] sm:$0xff] %v4760
    %4781 = vst [vmem:[#allocation2 + $0xd0] sm:$0xff] %v4761
    %4782 = vst [vmem:[#allocation2 + $0xd8] sm:$0xff] %v4762
    %4783 = vst [vmem:[#allocation2 + $0xe0] sm:$0xff] %v4763
    %4784 = vst [vmem:[#allocation2 + $0xe8] sm:$0xff] %v4764
    %4785 = vst [vmem:[#allocation2 + $0xf0] sm:$0xff] %v4765
    %4786 = vst [vmem:[#allocation2 + $0xf8] sm:$0xff] %v4766
    %4787 = vst [vmem:[#allocation2 + $0x100] sm:$0xff] %v4767
    %4788 = vst [vmem:[#allocation2 + $0x108] sm:$0xff] %v4768
    %4789 = vst [vmem:[#allocation2 + $0x110] sm:$0xff] %v4769
    %4790 = vst [vmem:[#allocation2 + $0x118] sm:$0xff] %v4770
    %4791 = vst [vmem:[#allocation2 + $0x120] sm:$0xff] %v4771
    %4792 = vst [vmem:[#allocation2 + $0x128] sm:$0xff] %v4772
    %4793 = vst [vmem:[#allocation2 + $0x130] sm:$0xff] %v4773
    %4794 = vst [vmem:[#allocation2 + $0x138] sm:$0xff] %v4774
    %4795 = vrot.lane.b32.xlu0 %v4024, 94
    %v4796 = vpop.permute.xlu0 %4795
    %4797 = vrot.lane.b32.xlu0 %v4025, 94
    %v4798 = vpop.permute.xlu0 %4797
    %4799 = vrot.lane.b32.xlu0 %v4026, 94
    %v4800 = vpop.permute.xlu0 %4799
    %4801 = vrot.lane.b32.xlu0 %v4027, 94
    %v4802 = vpop.permute.xlu0 %4801
    %4803 = vrot.lane.b32.xlu0 %v4028, 94
    %v4804 = vpop.permute.xlu0 %4803
    %4805 = vrot.lane.b32.xlu0 %v4029, 94
    %v4806 = vpop.permute.xlu0 %4805
    %4807 = vrot.lane.b32.xlu0 %v4030, 94
    %v4808 = vpop.permute.xlu0 %4807
    %4809 = vrot.lane.b32.xlu0 %v4031, 94
    %v4810 = vpop.permute.xlu0 %4809
    %4811 = vrot.lane.b32.xlu0 %v4032, 94
    %v4812 = vpop.permute.xlu0 %4811
    %4813 = vrot.lane.b32.xlu0 %v4033, 94
    %v4814 = vpop.permute.xlu0 %4813
    %4815 = vrot.lane.b32.xlu0 %v4034, 94
    %v4816 = vpop.permute.xlu0 %4815
    %4817 = vrot.lane.b32.xlu0 %v4035, 94
    %v4818 = vpop.permute.xlu0 %4817
    %4819 = vrot.lane.b32.xlu0 %v4036, 94
    %v4820 = vpop.permute.xlu0 %4819
    %4821 = vrot.lane.b32.xlu0 %v4037, 94
    %v4822 = vpop.permute.xlu0 %4821
    %4823 = vrot.lane.b32.xlu0 %v4038, 94
    %v4824 = vpop.permute.xlu0 %4823
    %4825 = vrot.lane.b32.xlu0 %v4039, 94
    %v4826 = vpop.permute.xlu0 %4825
    %4827 = vrot.lane.b32.xlu0 %v4040, 94
    %v4828 = vpop.permute.xlu0 %4827
    %4829 = vrot.lane.b32.xlu0 %v4041, 94
    %v4830 = vpop.permute.xlu0 %4829
    %4831 = vrot.lane.b32.xlu0 %v4042, 94
    %v4832 = vpop.permute.xlu0 %4831
    %4833 = vrot.lane.b32.xlu0 %v4043, 94
    %v4834 = vpop.permute.xlu0 %4833
    %v4835 = vsel %vm2642, %v4832, %v4834
    %v4836 = vsel %vm2642, %v4830, %v4832
    %v4837 = vsel %vm2642, %v4828, %v4830
    %v4838 = vsel %vm2642, %v4826, %v4828
    %v4839 = vsel %vm2642, %v4824, %v4826
    %v4840 = vsel %vm2642, %v4822, %v4824
    %v4841 = vsel %vm2642, %v4820, %v4822
    %v4842 = vsel %vm2642, %v4818, %v4820
    %v4843 = vsel %vm2642, %v4816, %v4818
    %v4844 = vsel %vm2642, %v4814, %v4816
    %v4845 = vsel %vm2642, %v4812, %v4814
    %v4846 = vsel %vm2642, %v4810, %v4812
    %v4847 = vsel %vm2642, %v4808, %v4810
    %v4848 = vsel %vm2642, %v4806, %v4808
    %v4849 = vsel %vm2642, %v4804, %v4806
    %v4850 = vsel %vm2642, %v4802, %v4804
    %v4851 = vsel %vm2642, %v4800, %v4802
    %v4852 = vsel %vm2642, %v4798, %v4800
    %v4853 = vsel %vm2642, %v4796, %v4798
    %v4854 = vsel %vm2642, %v4834, %v4796
    %v4855 = vsel %vm4615, %v4024, %v4853
    %v4856 = vsel %vm4616, %v4025, %v4852
    %v4857 = vsel %vm4617, %v4026, %v4851
    %v4858 = vsel %vm4618, %v4027, %v4850
    %v4859 = vsel %vm4619, %v4028, %v4849
    %v4860 = vsel %vm4620, %v4029, %v4848
    %v4861 = vsel %vm4621, %v4030, %v4847
    %v4862 = vsel %vm4622, %v4031, %v4846
    %v4863 = vsel %vm4623, %v4032, %v4845
    %v4864 = vsel %vm4624, %v4033, %v4844
    %v4865 = vsel %vm4625, %v4034, %v4843
    %v4866 = vsel %vm4626, %v4035, %v4842
    %v4867 = vsel %vm4627, %v4036, %v4841
    %v4868 = vsel %vm4628, %v4037, %v4840
    %v4869 = vsel %vm4629, %v4038, %v4839
    %v4870 = vsel %vm4630, %v4039, %v4838
    %v4871 = vsel %vm4631, %v4040, %v4837
    %v4872 = vsel %vm4632, %v4041, %v4836
    %v4873 = vsel %vm4633, %v4042, %v4835
    %v4874 = vsel %vm4634, %v4043, %v4854
    %4875 = vst [vmem:[#allocation2 + $0x460] sm:$0xff] %v4855
    %4876 = vst [vmem:[#allocation2 + $0x468] sm:$0xff] %v4856
    %4877 = vst [vmem:[#allocation2 + $0x470] sm:$0xff] %v4857
    %4878 = vst [vmem:[#allocation2 + $0x478] sm:$0xff] %v4858
    %4879 = vst [vmem:[#allocation2 + $0x480] sm:$0xff] %v4859
    %4880 = vst [vmem:[#allocation2 + $0x488] sm:$0xff] %v4860
    %4881 = vst [vmem:[#allocation2 + $0x490] sm:$0xff] %v4861
    %4882 = vst [vmem:[#allocation2 + $0x498] sm:$0xff] %v4862
    %4883 = vst [vmem:[#allocation2 + $0x4a0] sm:$0xff] %v4863
    %4884 = vst [vmem:[#allocation2 + $0x4a8] sm:$0xff] %v4864
    %4885 = vst [vmem:[#allocation2 + $0x4b0] sm:$0xff] %v4865
    %4886 = vst [vmem:[#allocation2 + $0x4b8] sm:$0xff] %v4866
    %4887 = vst [vmem:[#allocation2 + $0x4c0] sm:$0xff] %v4867
    %4888 = vst [vmem:[#allocation2 + $0x4c8] sm:$0xff] %v4868
    %4889 = vst [vmem:[#allocation2 + $0x4d0] sm:$0xff] %v4869
    %4890 = vst [vmem:[#allocation2 + $0x4d8] sm:$0xff] %v4870
    %4891 = vst [vmem:[#allocation2 + $0x4e0] sm:$0xff] %v4871
    %4892 = vst [vmem:[#allocation2 + $0x4e8] sm:$0xff] %v4872
    %4893 = vst [vmem:[#allocation2 + $0x4f0] sm:$0xff] %v4873
    %4894 = vst [vmem:[#allocation2 + $0x4f8] sm:$0xff] %v4874
    %vm4895 = vcmp.eq.s32.totalorder %v4050, 31
    %vm4896 = vcmp.eq.s32.totalorder %v4052, 31
    %vm4897 = vcmp.eq.s32.totalorder %v4054, 31
    %4898 = vrot.lane.b32.xlu0 %v4024, 127
    %v4899 = vpop.permute.xlu0 %4898
    %4900 = vrot.lane.b32.xlu0 %v4025, 127
    %v4901 = vpop.permute.xlu0 %4900
    %4902 = vrot.lane.b32.xlu0 %v4026, 127
    %v4903 = vpop.permute.xlu0 %4902
    %4904 = vrot.lane.b32.xlu0 %v4027, 127
    %v4905 = vpop.permute.xlu0 %4904
    %4906 = vrot.lane.b32.xlu0 %v4028, 127
    %v4907 = vpop.permute.xlu0 %4906
    %4908 = vrot.lane.b32.xlu0 %v4029, 127
    %v4909 = vpop.permute.xlu0 %4908
    %4910 = vrot.lane.b32.xlu0 %v4030, 127
    %v4911 = vpop.permute.xlu0 %4910
    %4912 = vrot.lane.b32.xlu0 %v4031, 127
    %v4913 = vpop.permute.xlu0 %4912
    %4914 = vrot.lane.b32.xlu0 %v4032, 127
    %v4915 = vpop.permute.xlu0 %4914
    %4916 = vrot.lane.b32.xlu0 %v4033, 127
    %v4917 = vpop.permute.xlu0 %4916
    %4918 = vrot.lane.b32.xlu0 %v4034, 127
    %v4919 = vpop.permute.xlu0 %4918
    %4920 = vrot.lane.b32.xlu0 %v4035, 127
    %v4921 = vpop.permute.xlu0 %4920
    %4922 = vrot.lane.b32.xlu0 %v4036, 127
    %v4923 = vpop.permute.xlu0 %4922
    %4924 = vrot.lane.b32.xlu0 %v4037, 127
    %v4925 = vpop.permute.xlu0 %4924
    %4926 = vrot.lane.b32.xlu0 %v4038, 127
    %v4927 = vpop.permute.xlu0 %4926
    %4928 = vrot.lane.b32.xlu0 %v4039, 127
    %v4929 = vpop.permute.xlu0 %4928
    %4930 = vrot.lane.b32.xlu0 %v4040, 127
    %v4931 = vpop.permute.xlu0 %4930
    %4932 = vrot.lane.b32.xlu0 %v4041, 127
    %v4933 = vpop.permute.xlu0 %4932
    %4934 = vrot.lane.b32.xlu0 %v4042, 127
    %v4935 = vpop.permute.xlu0 %4934
    %4936 = vrot.lane.b32.xlu0 %v4043, 127
    %v4937 = vpop.permute.xlu0 %4936
    %v4938 = vsel %vm2480, %v4935, %v4937
    %v4939 = vsel %vm2480, %v4933, %v4935
    %v4940 = vsel %vm2480, %v4931, %v4933
    %v4941 = vsel %vm2480, %v4929, %v4931
    %v4942 = vsel %vm2480, %v4927, %v4929
    %v4943 = vsel %vm2480, %v4925, %v4927
    %v4944 = vsel %vm2480, %v4923, %v4925
    %v4945 = vsel %vm2480, %v4921, %v4923
    %v4946 = vsel %vm2480, %v4919, %v4921
    %v4947 = vsel %vm2480, %v4917, %v4919
    %v4948 = vsel %vm2480, %v4915, %v4917
    %v4949 = vsel %vm2480, %v4913, %v4915
    %v4950 = vsel %vm2480, %v4911, %v4913
    %v4951 = vsel %vm2480, %v4909, %v4911
    %v4952 = vsel %vm2480, %v4907, %v4909
    %v4953 = vsel %vm2480, %v4905, %v4907
    %v4954 = vsel %vm2480, %v4903, %v4905
    %v4955 = vsel %vm2480, %v4901, %v4903
    %v4956 = vsel %vm2480, %v4899, %v4901
    %v4957 = vsel %vm2480, %v4937, %v4899
    %v4958 = vsel %vm4895, 1, 0
    %v4959 = vsel %vm4896, 1, 0
    %v4960 = vsel %vm4897, 1, 0
    %v4961 = vlaneseq
    %v4962 = vshrl.u32 %v4961, 7
    %v4963 = vsub.s32 0, %v4962
    %v4964 = vrot.slane %v4958, %v4963
    %v4965 = vlaneseq
    %v4966 = vshrl.u32 %v4965, 7
    %v4967 = vsub.s32 1, %v4966
    %v4968 = vrot.slane %v4958, %v4967
    %v4969 = vlaneseq
    %v4970 = vshrl.u32 %v4969, 7
    %v4971 = vsub.s32 2, %v4970
    %v4972 = vrot.slane %v4958, %v4971
    %v4973 = vlaneseq
    %v4974 = vshrl.u32 %v4973, 7
    %v4975 = vsub.s32 3, %v4974
    %v4976 = vrot.slane %v4958, %v4975
    %v4977 = vlaneseq
    %v4978 = vshrl.u32 %v4977, 7
    %v4979 = vsub.s32 4, %v4978
    %v4980 = vrot.slane %v4958, %v4979
    %v4981 = vlaneseq
    %v4982 = vshrl.u32 %v4981, 7
    %v4983 = vsub.s32 5, %v4982
    %v4984 = vrot.slane %v4958, %v4983
    %v4985 = vlaneseq
    %v4986 = vshrl.u32 %v4985, 7
    %v4987 = vsub.s32 6, %v4986
    %v4988 = vrot.slane %v4958, %v4987
    %v4989 = vlaneseq
    %v4990 = vshrl.u32 %v4989, 7
    %v4991 = vsub.s32 7, %v4990
    %v4992 = vrot.slane %v4958, %v4991
    %v4993 = vlaneseq
    %v4994 = vshrl.u32 %v4993, 7
    %v4995 = vsub.s32 0, %v4994
    %v4996 = vrot.slane %v4959, %v4995
    %v4997 = vlaneseq
    %v4998 = vshrl.u32 %v4997, 7
    %v4999 = vsub.s32 1, %v4998
    %v5000 = vrot.slane %v4959, %v4999
    %v5001 = vlaneseq
    %v5002 = vshrl.u32 %v5001, 7
    %v5003 = vsub.s32 2, %v5002
    %v5004 = vrot.slane %v4959, %v5003
    %v5005 = vlaneseq
    %v5006 = vshrl.u32 %v5005, 7
    %v5007 = vsub.s32 3, %v5006
    %v5008 = vrot.slane %v4959, %v5007
    %v5009 = vlaneseq
    %v5010 = vshrl.u32 %v5009, 7
    %v5011 = vsub.s32 4, %v5010
    %v5012 = vrot.slane %v4959, %v5011
    %v5013 = vlaneseq
    %v5014 = vshrl.u32 %v5013, 7
    %v5015 = vsub.s32 5, %v5014
    %v5016 = vrot.slane %v4959, %v5015
    %v5017 = vlaneseq
    %v5018 = vshrl.u32 %v5017, 7
    %v5019 = vsub.s32 6, %v5018
    %v5020 = vrot.slane %v4959, %v5019
    %v5021 = vlaneseq
    %v5022 = vshrl.u32 %v5021, 7
    %v5023 = vsub.s32 7, %v5022
    %v5024 = vrot.slane %v4959, %v5023
    %v5025 = vlaneseq
    %v5026 = vshrl.u32 %v5025, 7
    %v5027 = vsub.s32 0, %v5026
    %v5028 = vrot.slane %v4960, %v5027
    %v5029 = vlaneseq
    %v5030 = vshrl.u32 %v5029, 7
    %v5031 = vsub.s32 1, %v5030
    %v5032 = vrot.slane %v4960, %v5031
    %v5033 = vlaneseq
    %v5034 = vshrl.u32 %v5033, 7
    %v5035 = vsub.s32 2, %v5034
    %v5036 = vrot.slane %v4960, %v5035
    %v5037 = vlaneseq
    %v5038 = vshrl.u32 %v5037, 7
    %v5039 = vsub.s32 3, %v5038
    %v5040 = vrot.slane %v4960, %v5039
    %vm5041 = vcmp.eq.s32.totalorder %v4964, 1
    %vm5042 = vcmp.eq.s32.totalorder %v4968, 1
    %vm5043 = vcmp.eq.s32.totalorder %v4972, 1
    %vm5044 = vcmp.eq.s32.totalorder %v4976, 1
    %vm5045 = vcmp.eq.s32.totalorder %v4980, 1
    %vm5046 = vcmp.eq.s32.totalorder %v4984, 1
    %vm5047 = vcmp.eq.s32.totalorder %v4988, 1
    %vm5048 = vcmp.eq.s32.totalorder %v4992, 1
    %vm5049 = vcmp.eq.s32.totalorder %v4996, 1
    %vm5050 = vcmp.eq.s32.totalorder %v5000, 1
    %vm5051 = vcmp.eq.s32.totalorder %v5004, 1
    %vm5052 = vcmp.eq.s32.totalorder %v5008, 1
    %vm5053 = vcmp.eq.s32.totalorder %v5012, 1
    %vm5054 = vcmp.eq.s32.totalorder %v5016, 1
    %vm5055 = vcmp.eq.s32.totalorder %v5020, 1
    %vm5056 = vcmp.eq.s32.totalorder %v5024, 1
    %vm5057 = vcmp.eq.s32.totalorder %v5028, 1
    %vm5058 = vcmp.eq.s32.totalorder %v5032, 1
    %vm5059 = vcmp.eq.s32.totalorder %v5036, 1
    %vm5060 = vcmp.eq.s32.totalorder %v5040, 1
    %v5061 = vsel %vm5041, %v4024, %v4956
    %v5062 = vsel %vm5042, %v4025, %v4955
    %v5063 = vsel %vm5043, %v4026, %v4954
    %v5064 = vsel %vm5044, %v4027, %v4953
    %v5065 = vsel %vm5045, %v4028, %v4952
    %v5066 = vsel %vm5046, %v4029, %v4951
    %v5067 = vsel %vm5047, %v4030, %v4950
    %v5068 = vsel %vm5048, %v4031, %v4949
    %v5069 = vsel %vm5049, %v4032, %v4948
    %v5070 = vsel %vm5050, %v4033, %v4947
    %v5071 = vsel %vm5051, %v4034, %v4946
    %v5072 = vsel %vm5052, %v4035, %v4945
    %v5073 = vsel %vm5053, %v4036, %v4944
    %v5074 = vsel %vm5054, %v4037, %v4943
    %v5075 = vsel %vm5055, %v4038, %v4942
    %v5076 = vsel %vm5056, %v4039, %v4941
    %v5077 = vsel %vm5057, %v4040, %v4940
    %v5078 = vsel %vm5058, %v4041, %v4939
    %v5079 = vsel %vm5059, %v4042, %v4938
    %v5080 = vsel %vm5060, %v4043, %v4957
    %5081 = vst [vmem:[#allocation2 + $0x320] sm:$0xff] %v5061
    %5082 = vst [vmem:[#allocation2 + $0x328] sm:$0xff] %v5062
    %5083 = vst [vmem:[#allocation2 + $0x330] sm:$0xff] %v5063
    %5084 = vst [vmem:[#allocation2 + $0x338] sm:$0xff] %v5064
    %5085 = vst [vmem:[#allocation2 + $0x340] sm:$0xff] %v5065
    %5086 = vst [vmem:[#allocation2 + $0x348] sm:$0xff] %v5066
    %5087 = vst [vmem:[#allocation2 + $0x350] sm:$0xff] %v5067
    %5088 = vst [vmem:[#allocation2 + $0x358] sm:$0xff] %v5068
    %5089 = vst [vmem:[#allocation2 + $0x360] sm:$0xff] %v5069
    %5090 = vst [vmem:[#allocation2 + $0x368] sm:$0xff] %v5070
    %5091 = vst [vmem:[#allocation2 + $0x370] sm:$0xff] %v5071
    %5092 = vst [vmem:[#allocation2 + $0x378] sm:$0xff] %v5072
    %5093 = vst [vmem:[#allocation2 + $0x380] sm:$0xff] %v5073
    %5094 = vst [vmem:[#allocation2 + $0x388] sm:$0xff] %v5074
    %5095 = vst [vmem:[#allocation2 + $0x390] sm:$0xff] %v5075
    %5096 = vst [vmem:[#allocation2 + $0x398] sm:$0xff] %v5076
    %5097 = vst [vmem:[#allocation2 + $0x3a0] sm:$0xff] %v5077
    %5098 = vst [vmem:[#allocation2 + $0x3a8] sm:$0xff] %v5078
    %5099 = vst [vmem:[#allocation2 + $0x3b0] sm:$0xff] %v5079
    %5100 = vst [vmem:[#allocation2 + $0x3b8] sm:$0xff] %v5080
    %5101 = vrot.lane.b32.xlu0 %v5061, 34
    %v5102 = vpop.permute.xlu0 %5101
    %5103 = vrot.lane.b32.xlu0 %v5062, 34
    %v5104 = vpop.permute.xlu0 %5103
    %5105 = vrot.lane.b32.xlu0 %v5063, 34
    %v5106 = vpop.permute.xlu0 %5105
    %5107 = vrot.lane.b32.xlu0 %v5064, 34
    %v5108 = vpop.permute.xlu0 %5107
    %5109 = vrot.lane.b32.xlu0 %v5065, 34
    %v5110 = vpop.permute.xlu0 %5109
    %5111 = vrot.lane.b32.xlu0 %v5066, 34
    %v5112 = vpop.permute.xlu0 %5111
    %5113 = vrot.lane.b32.xlu0 %v5067, 34
    %v5114 = vpop.permute.xlu0 %5113
    %5115 = vrot.lane.b32.xlu0 %v5068, 34
    %v5116 = vpop.permute.xlu0 %5115
    %5117 = vrot.lane.b32.xlu0 %v5069, 34
    %v5118 = vpop.permute.xlu0 %5117
    %5119 = vrot.lane.b32.xlu0 %v5070, 34
    %v5120 = vpop.permute.xlu0 %5119
    %5121 = vrot.lane.b32.xlu0 %v5071, 34
    %v5122 = vpop.permute.xlu0 %5121
    %5123 = vrot.lane.b32.xlu0 %v5072, 34
    %v5124 = vpop.permute.xlu0 %5123
    %5125 = vrot.lane.b32.xlu0 %v5073, 34
    %v5126 = vpop.permute.xlu0 %5125
    %5127 = vrot.lane.b32.xlu0 %v5074, 34
    %v5128 = vpop.permute.xlu0 %5127
    %5129 = vrot.lane.b32.xlu0 %v5075, 34
    %v5130 = vpop.permute.xlu0 %5129
    %5131 = vrot.lane.b32.xlu0 %v5076, 34
    %v5132 = vpop.permute.xlu0 %5131
    %5133 = vrot.lane.b32.xlu0 %v5077, 34
    %v5134 = vpop.permute.xlu0 %5133
    %5135 = vrot.lane.b32.xlu0 %v5078, 34
    %v5136 = vpop.permute.xlu0 %5135
    %5137 = vrot.lane.b32.xlu0 %v5079, 34
    %v5138 = vpop.permute.xlu0 %5137
    %5139 = vrot.lane.b32.xlu0 %v5080, 34
    %v5140 = vpop.permute.xlu0 %5139
    %v5141 = vsel %vm4308, %v5138, %v5140
    %v5142 = vsel %vm4308, %v5136, %v5138
    %v5143 = vsel %vm4308, %v5134, %v5136
    %v5144 = vsel %vm4308, %v5132, %v5134
    %v5145 = vsel %vm4308, %v5130, %v5132
    %v5146 = vsel %vm4308, %v5128, %v5130
    %v5147 = vsel %vm4308, %v5126, %v5128
    %v5148 = vsel %vm4308, %v5124, %v5126
    %v5149 = vsel %vm4308, %v5122, %v5124
    %v5150 = vsel %vm4308, %v5120, %v5122
    %v5151 = vsel %vm4308, %v5118, %v5120
    %v5152 = vsel %vm4308, %v5116, %v5118
    %v5153 = vsel %vm4308, %v5114, %v5116
    %v5154 = vsel %vm4308, %v5112, %v5114
    %v5155 = vsel %vm4308, %v5110, %v5112
    %v5156 = vsel %vm4308, %v5108, %v5110
    %v5157 = vsel %vm4308, %v5106, %v5108
    %v5158 = vsel %vm4308, %v5104, %v5106
    %v5159 = vsel %vm4308, %v5102, %v5104
    %v5160 = vsel %vm4308, %v5140, %v5102
    %v5161 = vsel %vm4412, %v5061, %v5160
    %v5162 = vsel %vm4413, %v5062, %v5159
    %v5163 = vsel %vm4414, %v5063, %v5158
    %v5164 = vsel %vm4415, %v5064, %v5157
    %v5165 = vsel %vm4416, %v5065, %v5156
    %v5166 = vsel %vm4417, %v5066, %v5155
    %v5167 = vsel %vm4418, %v5067, %v5154
    %v5168 = vsel %vm4419, %v5068, %v5153
    %v5169 = vsel %vm4420, %v5069, %v5152
    %v5170 = vsel %vm4421, %v5070, %v5151
    %v5171 = vsel %vm4422, %v5071, %v5150
    %v5172 = vsel %vm4423, %v5072, %v5149
    %v5173 = vsel %vm4424, %v5073, %v5148
    %v5174 = vsel %vm4425, %v5074, %v5147
    %v5175 = vsel %vm4426, %v5075, %v5146
    %v5176 = vsel %vm4427, %v5076, %v5145
    %v5177 = vsel %vm4428, %v5077, %v5144
    %v5178 = vsel %vm4429, %v5078, %v5143
    %v5179 = vsel %vm4430, %v5079, %v5142
    %v5180 = vsel %vm4431, %v5080, %v5141
    %5181 = vst [vmem:[#allocation2 + $0x140] sm:$0xff] %v5161
    %5182 = vst [vmem:[#allocation2 + $0x148] sm:$0xff] %v5162
    %5183 = vst [vmem:[#allocation2 + $0x150] sm:$0xff] %v5163
    %5184 = vst [vmem:[#allocation2 + $0x158] sm:$0xff] %v5164
    %5185 = vst [vmem:[#allocation2 + $0x160] sm:$0xff] %v5165
    %5186 = vst [vmem:[#allocation2 + $0x168] sm:$0xff] %v5166
    %5187 = vst [vmem:[#allocation2 + $0x170] sm:$0xff] %v5167
    %5188 = vst [vmem:[#allocation2 + $0x178] sm:$0xff] %v5168
    %5189 = vst [vmem:[#allocation2 + $0x180] sm:$0xff] %v5169
    %5190 = vst [vmem:[#allocation2 + $0x188] sm:$0xff] %v5170
    %5191 = vst [vmem:[#allocation2 + $0x190] sm:$0xff] %v5171
    %5192 = vst [vmem:[#allocation2 + $0x198] sm:$0xff] %v5172
    %5193 = vst [vmem:[#allocation2 + $0x1a0] sm:$0xff] %v5173
    %5194 = vst [vmem:[#allocation2 + $0x1a8] sm:$0xff] %v5174
    %5195 = vst [vmem:[#allocation2 + $0x1b0] sm:$0xff] %v5175
    %5196 = vst [vmem:[#allocation2 + $0x1b8] sm:$0xff] %v5176
    %5197 = vst [vmem:[#allocation2 + $0x1c0] sm:$0xff] %v5177
    %5198 = vst [vmem:[#allocation2 + $0x1c8] sm:$0xff] %v5178
    %5199 = vst [vmem:[#allocation2 + $0x1d0] sm:$0xff] %v5179
    %5200 = vst [vmem:[#allocation2 + $0x1d8] sm:$0xff] %v5180
    %5201 = vrot.lane.b32.xlu0 %v5061, 94
    %v5202 = vpop.permute.xlu0 %5201
    %5203 = vrot.lane.b32.xlu0 %v5062, 94
    %v5204 = vpop.permute.xlu0 %5203
    %5205 = vrot.lane.b32.xlu0 %v5063, 94
    %v5206 = vpop.permute.xlu0 %5205
    %5207 = vrot.lane.b32.xlu0 %v5064, 94
    %v5208 = vpop.permute.xlu0 %5207
    %5209 = vrot.lane.b32.xlu0 %v5065, 94
    %v5210 = vpop.permute.xlu0 %5209
    %5211 = vrot.lane.b32.xlu0 %v5066, 94
    %v5212 = vpop.permute.xlu0 %5211
    %5213 = vrot.lane.b32.xlu0 %v5067, 94
    %v5214 = vpop.permute.xlu0 %5213
    %5215 = vrot.lane.b32.xlu0 %v5068, 94
    %v5216 = vpop.permute.xlu0 %5215
    %5217 = vrot.lane.b32.xlu0 %v5069, 94
    %v5218 = vpop.permute.xlu0 %5217
    %5219 = vrot.lane.b32.xlu0 %v5070, 94
    %v5220 = vpop.permute.xlu0 %5219
    %5221 = vrot.lane.b32.xlu0 %v5071, 94
    %v5222 = vpop.permute.xlu0 %5221
    %5223 = vrot.lane.b32.xlu0 %v5072, 94
    %v5224 = vpop.permute.xlu0 %5223
    %5225 = vrot.lane.b32.xlu0 %v5073, 94
    %v5226 = vpop.permute.xlu0 %5225
    %5227 = vrot.lane.b32.xlu0 %v5074, 94
    %v5228 = vpop.permute.xlu0 %5227
    %5229 = vrot.lane.b32.xlu0 %v5075, 94
    %v5230 = vpop.permute.xlu0 %5229
    %5231 = vrot.lane.b32.xlu0 %v5076, 94
    %v5232 = vpop.permute.xlu0 %5231
    %5233 = vrot.lane.b32.xlu0 %v5077, 94
    %v5234 = vpop.permute.xlu0 %5233
    %5235 = vrot.lane.b32.xlu0 %v5078, 94
    %v5236 = vpop.permute.xlu0 %5235
    %5237 = vrot.lane.b32.xlu0 %v5079, 94
    %v5238 = vpop.permute.xlu0 %5237
    %5239 = vrot.lane.b32.xlu0 %v5080, 94
    %v5240 = vpop.permute.xlu0 %5239
    %v5241 = vsel %vm2642, %v5238, %v5240
    %v5242 = vsel %vm2642, %v5236, %v5238
    %v5243 = vsel %vm2642, %v5234, %v5236
    %v5244 = vsel %vm2642, %v5232, %v5234
    %v5245 = vsel %vm2642, %v5230, %v5232
    %v5246 = vsel %vm2642, %v5228, %v5230
    %v5247 = vsel %vm2642, %v5226, %v5228
    %v5248 = vsel %vm2642, %v5224, %v5226
    %v5249 = vsel %vm2642, %v5222, %v5224
    %v5250 = vsel %vm2642, %v5220, %v5222
    %v5251 = vsel %vm2642, %v5218, %v5220
    %v5252 = vsel %vm2642, %v5216, %v5218
    %v5253 = vsel %vm2642, %v5214, %v5216
    %v5254 = vsel %vm2642, %v5212, %v5214
    %v5255 = vsel %vm2642, %v5210, %v5212
    %v5256 = vsel %vm2642, %v5208, %v5210
    %v5257 = vsel %vm2642, %v5206, %v5208
    %v5258 = vsel %vm2642, %v5204, %v5206
    %v5259 = vsel %vm2642, %v5202, %v5204
    %v5260 = vsel %vm2642, %v5240, %v5202
    %v5261 = vsel %vm4615, %v5061, %v5259
    %v5262 = vsel %vm4616, %v5062, %v5258
    %v5263 = vsel %vm4617, %v5063, %v5257
    %v5264 = vsel %vm4618, %v5064, %v5256
    %v5265 = vsel %vm4619, %v5065, %v5255
    %v5266 = vsel %vm4620, %v5066, %v5254
    %v5267 = vsel %vm4621, %v5067, %v5253
    %v5268 = vsel %vm4622, %v5068, %v5252
    %v5269 = vsel %vm4623, %v5069, %v5251
    %v5270 = vsel %vm4624, %v5070, %v5250
    %v5271 = vsel %vm4625, %v5071, %v5249
    %v5272 = vsel %vm4626, %v5072, %v5248
    %v5273 = vsel %vm4627, %v5073, %v5247
    %v5274 = vsel %vm4628, %v5074, %v5246
    %v5275 = vsel %vm4629, %v5075, %v5245
    %v5276 = vsel %vm4630, %v5076, %v5244
    %v5277 = vsel %vm4631, %v5077, %v5243
    %v5278 = vsel %vm4632, %v5078, %v5242
    %v5279 = vsel %vm4633, %v5079, %v5241
    %v5280 = vsel %vm4634, %v5080, %v5260
    %5281 = vst [vmem:[#allocation2 + $0x500] sm:$0xff] %v5261
    %5282 = vst [vmem:[#allocation2 + $0x508] sm:$0xff] %v5262
    %5283 = vst [vmem:[#allocation2 + $0x510] sm:$0xff] %v5263
    %5284 = vst [vmem:[#allocation2 + $0x518] sm:$0xff] %v5264
    %5285 = vst [vmem:[#allocation2 + $0x520] sm:$0xff] %v5265
    %5286 = vst [vmem:[#allocation2 + $0x528] sm:$0xff] %v5266
    %5287 = vst [vmem:[#allocation2 + $0x530] sm:$0xff] %v5267
    %5288 = vst [vmem:[#allocation2 + $0x538] sm:$0xff] %v5268
    %5289 = vst [vmem:[#allocation2 + $0x540] sm:$0xff] %v5269
    %5290 = vst [vmem:[#allocation2 + $0x548] sm:$0xff] %v5270
    %5291 = vst [vmem:[#allocation2 + $0x550] sm:$0xff] %v5271
    %5292 = vst [vmem:[#allocation2 + $0x558] sm:$0xff] %v5272
    %5293 = vst [vmem:[#allocation2 + $0x560] sm:$0xff] %v5273
    %5294 = vst [vmem:[#allocation2 + $0x568] sm:$0xff] %v5274
    %5295 = vst [vmem:[#allocation2 + $0x570] sm:$0xff] %v5275
    %5296 = vst [vmem:[#allocation2 + $0x578] sm:$0xff] %v5276
    %5297 = vst [vmem:[#allocation2 + $0x580] sm:$0xff] %v5277
    %5298 = vst [vmem:[#allocation2 + $0x588] sm:$0xff] %v5278
    %5299 = vst [vmem:[#allocation2 + $0x590] sm:$0xff] %v5279
    %5300 = vst [vmem:[#allocation2 + $0x598] sm:$0xff] %v5280
    %v5301 = vld [vmem:[%s4] sm:$0xff]
    %v5302 = vld [vmem:[#allocation2] sm:$0xff]
    %v5303 = vld [vmem:[#allocation2 + $0x8] sm:$0xff]
    %v5304 = vld [vmem:[#allocation2 + $0x10] sm:$0xff]
    %v5305 = vld [vmem:[#allocation2 + $0x18] sm:$0xff]
    %v5306 = vld [vmem:[#allocation2 + $0x20] sm:$0xff]
    %v5307 = vld [vmem:[#allocation2 + $0x28] sm:$0xff]
    %v5308 = vld [vmem:[#allocation2 + $0x30] sm:$0xff]
    %v5309 = vld [vmem:[#allocation2 + $0x38] sm:$0xff]
    %v5310 = vld [vmem:[#allocation2 + $0x40] sm:$0xff]
    %v5311 = vld [vmem:[#allocation2 + $0x48] sm:$0xff]
    %v5312 = vld [vmem:[#allocation2 + $0x50] sm:$0xff]
    %v5313 = vld [vmem:[#allocation2 + $0x58] sm:$0xff]
    %v5314 = vld [vmem:[#allocation2 + $0x60] sm:$0xff]
    %v5315 = vld [vmem:[#allocation2 + $0x68] sm:$0xff]
    %v5316 = vld [vmem:[#allocation2 + $0x70] sm:$0xff]
    %v5317 = vld [vmem:[#allocation2 + $0x78] sm:$0xff]
    %v5318 = vld [vmem:[#allocation2 + $0x80] sm:$0xff]
    %v5319 = vld [vmem:[#allocation2 + $0x88] sm:$0xff]
    %v5320 = vld [vmem:[#allocation2 + $0x90] sm:$0xff]
    %v5321 = vld [vmem:[#allocation2 + $0x98] sm:$0xff]
    %v5322 = vld [vmem:[#allocation2 + $0xa0] sm:$0xff]
    %v5323 = vld [vmem:[#allocation2 + $0xa8] sm:$0xff]
    %v5324 = vld [vmem:[#allocation2 + $0xb0] sm:$0xff]
    %v5325 = vld [vmem:[#allocation2 + $0xb8] sm:$0xff]
    %v5326 = vld [vmem:[#allocation2 + $0xc0] sm:$0xff]
    %v5327 = vld [vmem:[#allocation2 + $0xc8] sm:$0xff]
    %v5328 = vld [vmem:[#allocation2 + $0xd0] sm:$0xff]
    %v5329 = vld [vmem:[#allocation2 + $0xd8] sm:$0xff]
    %v5330 = vld [vmem:[#allocation2 + $0xe0] sm:$0xff]
    %v5331 = vld [vmem:[#allocation2 + $0xe8] sm:$0xff]
    %v5332 = vld [vmem:[#allocation2 + $0xf0] sm:$0xff]
    %v5333 = vld [vmem:[#allocation2 + $0xf8] sm:$0xff]
    %v5334 = vld [vmem:[#allocation2 + $0x100] sm:$0xff]
    %v5335 = vld [vmem:[#allocation2 + $0x108] sm:$0xff]
    %v5336 = vld [vmem:[#allocation2 + $0x110] sm:$0xff]
    %v5337 = vld [vmem:[#allocation2 + $0x118] sm:$0xff]
    %v5338 = vld [vmem:[#allocation2 + $0x120] sm:$0xff]
    %v5339 = vld [vmem:[#allocation2 + $0x128] sm:$0xff]
    %v5340 = vld [vmem:[#allocation2 + $0x130] sm:$0xff]
    %v5341 = vld [vmem:[#allocation2 + $0x138] sm:$0xff]
    %v5342 = vld [vmem:[#allocation2 + $0x140] sm:$0xff]
    %v5343 = vld [vmem:[#allocation2 + $0x148] sm:$0xff]
    %v5344 = vld [vmem:[#allocation2 + $0x150] sm:$0xff]
    %v5345 = vld [vmem:[#allocation2 + $0x158] sm:$0xff]
    %v5346 = vld [vmem:[#allocation2 + $0x160] sm:$0xff]
    %v5347 = vld [vmem:[#allocation2 + $0x168] sm:$0xff]
    %v5348 = vld [vmem:[#allocation2 + $0x170] sm:$0xff]
    %v5349 = vld [vmem:[#allocation2 + $0x178] sm:$0xff]
    %v5350 = vld [vmem:[#allocation2 + $0x180] sm:$0xff]
    %v5351 = vld [vmem:[#allocation2 + $0x188] sm:$0xff]
    %v5352 = vld [vmem:[#allocation2 + $0x190] sm:$0xff]
    %v5353 = vld [vmem:[#allocation2 + $0x198] sm:$0xff]
    %v5354 = vld [vmem:[#allocation2 + $0x1a0] sm:$0xff]
    %v5355 = vld [vmem:[#allocation2 + $0x1a8] sm:$0xff]
    %v5356 = vld [vmem:[#allocation2 + $0x1b0] sm:$0xff]
    %v5357 = vld [vmem:[#allocation2 + $0x1b8] sm:$0xff]
    %v5358 = vld [vmem:[#allocation2 + $0x1c0] sm:$0xff]
    %v5359 = vld [vmem:[#allocation2 + $0x1c8] sm:$0xff]
    %v5360 = vld [vmem:[#allocation2 + $0x1d0] sm:$0xff]
    %v5361 = vld [vmem:[#allocation2 + $0x1d8] sm:$0xff]
    %v5362 = vld [vmem:[#allocation2 + $0x1e0] sm:$0xff]
    %v5363 = vld [vmem:[#allocation2 + $0x1e8] sm:$0xff]
    %v5364 = vld [vmem:[#allocation2 + $0x1f0] sm:$0xff]
    %v5365 = vld [vmem:[#allocation2 + $0x1f8] sm:$0xff]
    %v5366 = vld [vmem:[#allocation2 + $0x200] sm:$0xff]
    %v5367 = vld [vmem:[#allocation2 + $0x208] sm:$0xff]
    %v5368 = vld [vmem:[#allocation2 + $0x210] sm:$0xff]
    %v5369 = vld [vmem:[#allocation2 + $0x218] sm:$0xff]
    %v5370 = vld [vmem:[#allocation2 + $0x220] sm:$0xff]
    %v5371 = vld [vmem:[#allocation2 + $0x228] sm:$0xff]
    %v5372 = vld [vmem:[#allocation2 + $0x230] sm:$0xff]
    %v5373 = vld [vmem:[#allocation2 + $0x238] sm:$0xff]
    %v5374 = vld [vmem:[#allocation2 + $0x240] sm:$0xff]
    %v5375 = vld [vmem:[#allocation2 + $0x248] sm:$0xff]
    %v5376 = vld [vmem:[#allocation2 + $0x250] sm:$0xff]
    %v5377 = vld [vmem:[#allocation2 + $0x258] sm:$0xff]
    %v5378 = vld [vmem:[#allocation2 + $0x260] sm:$0xff]
    %v5379 = vld [vmem:[#allocation2 + $0x268] sm:$0xff]
    %v5380 = vld [vmem:[#allocation2 + $0x270] sm:$0xff]
    %v5381 = vld [vmem:[#allocation2 + $0x278] sm:$0xff]
    %v5382 = vld [vmem:[#allocation2 + $0x280] sm:$0xff]
    %v5383 = vld [vmem:[#allocation2 + $0x288] sm:$0xff]
    %v5384 = vld [vmem:[#allocation2 + $0x290] sm:$0xff]
    %v5385 = vld [vmem:[#allocation2 + $0x298] sm:$0xff]
    %v5386 = vld [vmem:[#allocation2 + $0x2a0] sm:$0xff]
    %v5387 = vld [vmem:[#allocation2 + $0x2a8] sm:$0xff]
    %v5388 = vld [vmem:[#allocation2 + $0x2b0] sm:$0xff]
    %v5389 = vld [vmem:[#allocation2 + $0x2b8] sm:$0xff]
    %v5390 = vld [vmem:[#allocation2 + $0x2c0] sm:$0xff]
    %v5391 = vld [vmem:[#allocation2 + $0x2c8] sm:$0xff]
    %v5392 = vld [vmem:[#allocation2 + $0x2d0] sm:$0xff]
    %v5393 = vld [vmem:[#allocation2 + $0x2d8] sm:$0xff]
    %v5394 = vld [vmem:[#allocation2 + $0x2e0] sm:$0xff]
    %v5395 = vld [vmem:[#allocation2 + $0x2e8] sm:$0xff]
    %v5396 = vld [vmem:[#allocation2 + $0x2f0] sm:$0xff]
    %v5397 = vld [vmem:[#allocation2 + $0x2f8] sm:$0xff]
    %v5398 = vld [vmem:[#allocation2 + $0x300] sm:$0xff]
    %v5399 = vld [vmem:[#allocation2 + $0x308] sm:$0xff]
    %v5400 = vld [vmem:[#allocation2 + $0x310] sm:$0xff]
    %v5401 = vld [vmem:[#allocation2 + $0x318] sm:$0xff]
    %v5402 = vld [vmem:[#allocation2 + $0x320] sm:$0xff]
    %v5403 = vld [vmem:[#allocation2 + $0x328] sm:$0xff]
    %v5404 = vld [vmem:[#allocation2 + $0x330] sm:$0xff]
    %v5405 = vld [vmem:[#allocation2 + $0x338] sm:$0xff]
    %v5406 = vld [vmem:[#allocation2 + $0x340] sm:$0xff]
    %v5407 = vld [vmem:[#allocation2 + $0x348] sm:$0xff]
    %v5408 = vld [vmem:[#allocation2 + $0x350] sm:$0xff]
    %v5409 = vld [vmem:[#allocation2 + $0x358] sm:$0xff]
    %v5410 = vld [vmem:[#allocation2 + $0x360] sm:$0xff]
    %v5411 = vld [vmem:[#allocation2 + $0x368] sm:$0xff]
    %v5412 = vld [vmem:[#allocation2 + $0x370] sm:$0xff]
    %v5413 = vld [vmem:[#allocation2 + $0x378] sm:$0xff]
    %v5414 = vld [vmem:[#allocation2 + $0x380] sm:$0xff]
    %v5415 = vld [vmem:[#allocation2 + $0x388] sm:$0xff]
    %v5416 = vld [vmem:[#allocation2 + $0x390] sm:$0xff]
    %v5417 = vld [vmem:[#allocation2 + $0x398] sm:$0xff]
    %v5418 = vld [vmem:[#allocation2 + $0x3a0] sm:$0xff]
    %v5419 = vld [vmem:[#allocation2 + $0x3a8] sm:$0xff]
    %v5420 = vld [vmem:[#allocation2 + $0x3b0] sm:$0xff]
    %v5421 = vld [vmem:[#allocation2 + $0x3b8] sm:$0xff]
    %v5422 = vld [vmem:[#allocation2 + $0x3c0] sm:$0xff]
    %v5423 = vld [vmem:[#allocation2 + $0x3c8] sm:$0xff]
    %v5424 = vld [vmem:[#allocation2 + $0x3d0] sm:$0xff]
    %v5425 = vld [vmem:[#allocation2 + $0x3d8] sm:$0xff]
    %v5426 = vld [vmem:[#allocation2 + $0x3e0] sm:$0xff]
    %v5427 = vld [vmem:[#allocation2 + $0x3e8] sm:$0xff]
    %v5428 = vld [vmem:[#allocation2 + $0x3f0] sm:$0xff]
    %v5429 = vld [vmem:[#allocation2 + $0x3f8] sm:$0xff]
    %v5430 = vld [vmem:[#allocation2 + $0x400] sm:$0xff]
    %v5431 = vld [vmem:[#allocation2 + $0x408] sm:$0xff]
    %v5432 = vld [vmem:[#allocation2 + $0x410] sm:$0xff]
    %v5433 = vld [vmem:[#allocation2 + $0x418] sm:$0xff]
    %v5434 = vld [vmem:[#allocation2 + $0x420] sm:$0xff]
    %v5435 = vld [vmem:[#allocation2 + $0x428] sm:$0xff]
    %v5436 = vld [vmem:[#allocation2 + $0x430] sm:$0xff]
    %v5437 = vld [vmem:[#allocation2 + $0x438] sm:$0xff]
    %v5438 = vld [vmem:[#allocation2 + $0x440] sm:$0xff]
    %v5439 = vld [vmem:[#allocation2 + $0x448] sm:$0xff]
    %v5440 = vld [vmem:[#allocation2 + $0x450] sm:$0xff]
    %v5441 = vld [vmem:[#allocation2 + $0x458] sm:$0xff]
    %v5442 = vld [vmem:[#allocation2 + $0x460] sm:$0xff]
    %v5443 = vld [vmem:[#allocation2 + $0x468] sm:$0xff]
    %v5444 = vld [vmem:[#allocation2 + $0x470] sm:$0xff]
    %v5445 = vld [vmem:[#allocation2 + $0x478] sm:$0xff]
    %v5446 = vld [vmem:[#allocation2 + $0x480] sm:$0xff]
    %v5447 = vld [vmem:[#allocation2 + $0x488] sm:$0xff]
    %v5448 = vld [vmem:[#allocation2 + $0x490] sm:$0xff]
    %v5449 = vld [vmem:[#allocation2 + $0x498] sm:$0xff]
    %v5450 = vld [vmem:[#allocation2 + $0x4a0] sm:$0xff]
    %v5451 = vld [vmem:[#allocation2 + $0x4a8] sm:$0xff]
    %v5452 = vld [vmem:[#allocation2 + $0x4b0] sm:$0xff]
    %v5453 = vld [vmem:[#allocation2 + $0x4b8] sm:$0xff]
    %v5454 = vld [vmem:[#allocation2 + $0x4c0] sm:$0xff]
    %v5455 = vld [vmem:[#allocation2 + $0x4c8] sm:$0xff]
    %v5456 = vld [vmem:[#allocation2 + $0x4d0] sm:$0xff]
    %v5457 = vld [vmem:[#allocation2 + $0x4d8] sm:$0xff]
    %v5458 = vld [vmem:[#allocation2 + $0x4e0] sm:$0xff]
    %v5459 = vld [vmem:[#allocation2 + $0x4e8] sm:$0xff]
    %v5460 = vld [vmem:[#allocation2 + $0x4f0] sm:$0xff]
    %v5461 = vld [vmem:[#allocation2 + $0x4f8] sm:$0xff]
    %v5462 = vld [vmem:[#allocation2 + $0x500] sm:$0xff]
    %v5463 = vld [vmem:[#allocation2 + $0x508] sm:$0xff]
    %v5464 = vld [vmem:[#allocation2 + $0x510] sm:$0xff]
    %v5465 = vld [vmem:[#allocation2 + $0x518] sm:$0xff]
    %v5466 = vld [vmem:[#allocation2 + $0x520] sm:$0xff]
    %v5467 = vld [vmem:[#allocation2 + $0x528] sm:$0xff]
    %v5468 = vld [vmem:[#allocation2 + $0x530] sm:$0xff]
    %v5469 = vld [vmem:[#allocation2 + $0x538] sm:$0xff]
    %v5470 = vld [vmem:[#allocation2 + $0x540] sm:$0xff]
    %v5471 = vld [vmem:[#allocation2 + $0x548] sm:$0xff]
    %v5472 = vld [vmem:[#allocation2 + $0x550] sm:$0xff]
    %v5473 = vld [vmem:[#allocation2 + $0x558] sm:$0xff]
    %v5474 = vld [vmem:[#allocation2 + $0x560] sm:$0xff]
    %v5475 = vld [vmem:[#allocation2 + $0x568] sm:$0xff]
    %v5476 = vld [vmem:[#allocation2 + $0x570] sm:$0xff]
    %v5477 = vld [vmem:[#allocation2 + $0x578] sm:$0xff]
    %v5478 = vld [vmem:[#allocation2 + $0x580] sm:$0xff]
    %v5479 = vld [vmem:[#allocation2 + $0x588] sm:$0xff]
    %v5480 = vld [vmem:[#allocation2 + $0x590] sm:$0xff]
    %v5481 = vld [vmem:[#allocation2 + $0x598] sm:$0xff]
    %v5483 = vsel %vm3269, %v5301, 0
    %5485 = vmatprep.subr.mxu0 0.0
    %5486 = vmatpush1.msra.mxu0 0.0
    %5487 = vmatprep.subr.mxu0 0.0
    %5488 = vmatpush1.msra.mxu0 0.0
    %5489 = vmatprep.subr.mxu0 0.0
    %5490 = vmatpush1.msra.mxu0 0.0
    %5491 = vmatprep.subr.mxu0 0.0
    %5492 = vmatpush1.msra.mxu0 0.0
    %5493 = vmatprep.subr.mxu0 0.0
    %5494 = vmatpush1.msra.mxu0 0.0
    %5495 = vmatprep.subr.mxu0 0.0
    %5496 = vmatpush1.msra.mxu0 0.0
    %5497 = vmatprep.subr.mxu0 0.0
    %5498 = vmatpush1.msra.mxu0 0.0
    %5499 = vmatprep.subr.mxu0 %v5463
    %5500 = vmatpush1.msra.mxu0 %v5462
    %5501 = vmatprep.subr.mxu0 %v5443
    %5502 = vmatpush1.msra.mxu0 %v5442
    %5503 = vmatprep.subr.mxu0 %v5423
    %5504 = vmatpush1.msra.mxu0 %v5422
    %5505 = vmatprep.subr.mxu0 %v5403
    %5506 = vmatpush1.msra.mxu0 %v5402
    %5507 = vmatprep.subr.mxu0 %v5383
    %5508 = vmatpush1.msra.mxu0 %v5382
    %5509 = vmatprep.subr.mxu0 %v5363
    %5510 = vmatpush1.msra.mxu0 %v5362
    %5511 = vmatprep.subr.mxu0 %v5343
    %5512 = vmatpush1.msra.mxu0 %v5342
    %5513 = vmatprep.subr.mxu0 %v5323
    %5514 = vmatpush1.msra.mxu0 %v5322
    %5515 = vmatprep.subr.mxu0 %v5303
    %5516 = vmatpush1.msra.mxu0 %v5302
    %5517 = vmatprep.subr.mxu0 0.0
    %5518 = vmatpush2.msra.mxu0 0.0
    %5519 = vmatprep.subr.mxu0 0.0
    %5520 = vmatpush2.msra.mxu0 0.0
    %5521 = vmatprep.subr.mxu0 0.0
    %5522 = vmatpush2.msra.mxu0 0.0
    %5523 = vmatprep.subr.mxu0 0.0
    %5524 = vmatpush2.msra.mxu0 0.0
    %5525 = vmatprep.subr.mxu0 0.0
    %5526 = vmatpush2.msra.mxu0 0.0
    %5527 = vmatprep.subr.mxu0 0.0
    %5528 = vmatpush2.msra.mxu0 0.0
    %5529 = vmatprep.subr.mxu0 0.0
    %5530 = vmatpush2.msra.mxu0 0.0
    %5531 = vmatprep.subr.mxu0 0.0
    %5532 = vmatpush2.msra.mxu0 0.0
    %5533 = vmatprep.subr.mxu0 0.0
    %5534 = vmatpush2.msra.mxu0 0.0
    %5535 = vmatprep.subr.mxu0 0.0
    %5536 = vmatpush2.msra.mxu0 0.0
    %5537 = vmatprep.subr.mxu0 0.0
    %5538 = vmatpush2.msra.mxu0 0.0
    %5539 = vmatprep.subr.mxu0 0.0
    %5540 = vmatpush2.msra.mxu0 0.0
    %5541 = vmatprep.subr.mxu0 0.0
    %5542 = vmatpush2.msra.mxu0 0.0
    %5543 = vmatprep.subr.mxu0 0.0
    %5544 = vmatpush2.msra.mxu0 0.0
    %5545 = vmatprep.subr.mxu0 0.0
    %5546 = vmatpush2.msra.mxu0 0.0
    %5547 = vmatprep.subr.mxu0 0.0
    %5548 = vmatpush2.msra.mxu0 0.0
    %5549 = vmatprep.mubr.f32.mxu0 0.0
    %5550 = vmatmul.mubr.f32.gmra.mxu0 %v5483
    %v5551 = vpop.f32.mrf.mxu0
    %v5552 = vadd.f32 0.0, %v5551
    %v5553 = vpop.f32.mrf.mxu0
    %v5554 = vadd.f32 0.0, %v5553
    %5555 = vdwg.mxu0
    %5556 = vmatprep.subr.mxu0 0.0
    %5557 = vmatpush1.msra.mxu0 0.0
    %5558 = vmatprep.subr.mxu0 0.0
    %5559 = vmatpush1.msra.mxu0 0.0
    %5560 = vmatprep.subr.mxu0 0.0
    %5561 = vmatpush1.msra.mxu0 0.0
    %5562 = vmatprep.subr.mxu0 0.0
    %5563 = vmatpush1.msra.mxu0 0.0
    %5564 = vmatprep.subr.mxu0 0.0
    %5565 = vmatpush1.msra.mxu0 0.0
    %5566 = vmatprep.subr.mxu0 0.0
    %5567 = vmatpush1.msra.mxu0 0.0
    %5568 = vmatprep.subr.mxu0 0.0
    %5569 = vmatpush1.msra.mxu0 0.0
    %5570 = vmatprep.subr.mxu0 %v5465
    %5571 = vmatpush1.msra.mxu0 %v5464
    %5572 = vmatprep.subr.mxu0 %v5445
    %5573 = vmatpush1.msra.mxu0 %v5444
    %5574 = vmatprep.subr.mxu0 %v5425
    %5575 = vmatpush1.msra.mxu0 %v5424
    %5576 = vmatprep.subr.mxu0 %v5405
    %5577 = vmatpush1.msra.mxu0 %v5404
    %5578 = vmatprep.subr.mxu0 %v5385
    %5579 = vmatpush1.msra.mxu0 %v5384
    %5580 = vmatprep.subr.mxu0 %v5365
    %5581 = vmatpush1.msra.mxu0 %v5364
    %5582 = vmatprep.subr.mxu0 %v5345
    %5583 = vmatpush1.msra.mxu0 %v5344
    %5584 = vmatprep.subr.mxu0 %v5325
    %5585 = vmatpush1.msra.mxu0 %v5324
    %5586 = vmatprep.subr.mxu0 %v5305
    %5587 = vmatpush1.msra.mxu0 %v5304
    %5588 = vmatprep.subr.mxu0 0.0
    %5589 = vmatpush2.msra.mxu0 0.0
    %5590 = vmatprep.subr.mxu0 0.0
    %5591 = vmatpush2.msra.mxu0 0.0
    %5592 = vmatprep.subr.mxu0 0.0
    %5593 = vmatpush2.msra.mxu0 0.0
    %5594 = vmatprep.subr.mxu0 0.0
    %5595 = vmatpush2.msra.mxu0 0.0
    %5596 = vmatprep.subr.mxu0 0.0
    %5597 = vmatpush2.msra.mxu0 0.0
    %5598 = vmatprep.subr.mxu0 0.0
    %5599 = vmatpush2.msra.mxu0 0.0
    %5600 = vmatprep.subr.mxu0 0.0
    %5601 = vmatpush2.msra.mxu0 0.0
    %5602 = vmatprep.subr.mxu0 0.0
    %5603 = vmatpush2.msra.mxu0 0.0
    %5604 = vmatprep.subr.mxu0 0.0
    %5605 = vmatpush2.msra.mxu0 0.0
    %5606 = vmatprep.subr.mxu0 0.0
    %5607 = vmatpush2.msra.mxu0 0.0
    %5608 = vmatprep.subr.mxu0 0.0
    %5609 = vmatpush2.msra.mxu0 0.0
    %5610 = vmatprep.subr.mxu0 0.0
    %5611 = vmatpush2.msra.mxu0 0.0
    %5612 = vmatprep.subr.mxu0 0.0
    %5613 = vmatpush2.msra.mxu0 0.0
    %5614 = vmatprep.subr.mxu0 0.0
    %5615 = vmatpush2.msra.mxu0 0.0
    %5616 = vmatprep.subr.mxu0 0.0
    %5617 = vmatpush2.msra.mxu0 0.0
    %5618 = vmatprep.subr.mxu0 0.0
    %5619 = vmatpush2.msra.mxu0 0.0
    %5620 = vmatprep.mubr.f32.mxu0 0.0
    %5621 = vmatmul.mubr.f32.gmra.mxu0 %v5483
    %v5622 = vpop.f32.mrf.mxu0
    %v5623 = vadd.f32 0.0, %v5622
    %v5624 = vpop.f32.mrf.mxu0
    %v5625 = vadd.f32 0.0, %v5624
    %5626 = vdwg.mxu0
    %5627 = vmatprep.subr.mxu0 0.0
    %5628 = vmatpush1.msra.mxu0 0.0
    %5629 = vmatprep.subr.mxu0 0.0
    %5630 = vmatpush1.msra.mxu0 0.0
    %5631 = vmatprep.subr.mxu0 0.0
    %5632 = vmatpush1.msra.mxu0 0.0
    %5633 = vmatprep.subr.mxu0 0.0
    %5634 = vmatpush1.msra.mxu0 0.0
    %5635 = vmatprep.subr.mxu0 0.0
    %5636 = vmatpush1.msra.mxu0 0.0
    %5637 = vmatprep.subr.mxu0 0.0
    %5638 = vmatpush1.msra.mxu0 0.0
    %5639 = vmatprep.subr.mxu0 0.0
    %5640 = vmatpush1.msra.mxu0 0.0
    %5641 = vmatprep.subr.mxu0 %v5467
    %5642 = vmatpush1.msra.mxu0 %v5466
    %5643 = vmatprep.subr.mxu0 %v5447
    %5644 = vmatpush1.msra.mxu0 %v5446
    %5645 = vmatprep.subr.mxu0 %v5427
    %5646 = vmatpush1.msra.mxu0 %v5426
    %5647 = vmatprep.subr.mxu0 %v5407
    %5648 = vmatpush1.msra.mxu0 %v5406
    %5649 = vmatprep.subr.mxu0 %v5387
    %5650 = vmatpush1.msra.mxu0 %v5386
    %5651 = vmatprep.subr.mxu0 %v5367
    %5652 = vmatpush1.msra.mxu0 %v5366
    %5653 = vmatprep.subr.mxu0 %v5347
    %5654 = vmatpush1.msra.mxu0 %v5346
    %5655 = vmatprep.subr.mxu0 %v5327
    %5656 = vmatpush1.msra.mxu0 %v5326
    %5657 = vmatprep.subr.mxu0 %v5307
    %5658 = vmatpush1.msra.mxu0 %v5306
    %5659 = vmatprep.subr.mxu0 0.0
    %5660 = vmatpush2.msra.mxu0 0.0
    %5661 = vmatprep.subr.mxu0 0.0
    %5662 = vmatpush2.msra.mxu0 0.0
    %5663 = vmatprep.subr.mxu0 0.0
    %5664 = vmatpush2.msra.mxu0 0.0
    %5665 = vmatprep.subr.mxu0 0.0
    %5666 = vmatpush2.msra.mxu0 0.0
    %5667 = vmatprep.subr.mxu0 0.0
    %5668 = vmatpush2.msra.mxu0 0.0
    %5669 = vmatprep.subr.mxu0 0.0
    %5670 = vmatpush2.msra.mxu0 0.0
    %5671 = vmatprep.subr.mxu0 0.0
    %5672 = vmatpush2.msra.mxu0 0.0
    %5673 = vmatprep.subr.mxu0 0.0
    %5674 = vmatpush2.msra.mxu0 0.0
    %5675 = vmatprep.subr.mxu0 0.0
    %5676 = vmatpush2.msra.mxu0 0.0
    %5677 = vmatprep.subr.mxu0 0.0
    %5678 = vmatpush2.msra.mxu0 0.0
    %5679 = vmatprep.subr.mxu0 0.0
    %5680 = vmatpush2.msra.mxu0 0.0
    %5681 = vmatprep.subr.mxu0 0.0
    %5682 = vmatpush2.msra.mxu0 0.0
    %5683 = vmatprep.subr.mxu0 0.0
    %5684 = vmatpush2.msra.mxu0 0.0
    %5685 = vmatprep.subr.mxu0 0.0
    %5686 = vmatpush2.msra.mxu0 0.0
    %5687 = vmatprep.subr.mxu0 0.0
    %5688 = vmatpush2.msra.mxu0 0.0
    %5689 = vmatprep.subr.mxu0 0.0
    %5690 = vmatpush2.msra.mxu0 0.0
    %5691 = vmatprep.mubr.f32.mxu0 0.0
    %5692 = vmatmul.mubr.f32.gmra.mxu0 %v5483
    %v5693 = vpop.f32.mrf.mxu0
    %v5694 = vadd.f32 0.0, %v5693
    %v5695 = vpop.f32.mrf.mxu0
    %v5696 = vadd.f32 0.0, %v5695
    %5697 = vdwg.mxu0
    %5698 = vmatprep.subr.mxu0 0.0
    %5699 = vmatpush1.msra.mxu0 0.0
    %5700 = vmatprep.subr.mxu0 0.0
    %5701 = vmatpush1.msra.mxu0 0.0
    %5702 = vmatprep.subr.mxu0 0.0
    %5703 = vmatpush1.msra.mxu0 0.0
    %5704 = vmatprep.subr.mxu0 0.0
    %5705 = vmatpush1.msra.mxu0 0.0
    %5706 = vmatprep.subr.mxu0 0.0
    %5707 = vmatpush1.msra.mxu0 0.0
    %5708 = vmatprep.subr.mxu0 0.0
    %5709 = vmatpush1.msra.mxu0 0.0
    %5710 = vmatprep.subr.mxu0 0.0
    %5711 = vmatpush1.msra.mxu0 0.0
    %5712 = vmatprep.subr.mxu0 %v5469
    %5713 = vmatpush1.msra.mxu0 %v5468
    %5714 = vmatprep.subr.mxu0 %v5449
    %5715 = vmatpush1.msra.mxu0 %v5448
    %5716 = vmatprep.subr.mxu0 %v5429
    %5717 = vmatpush1.msra.mxu0 %v5428
    %5718 = vmatprep.subr.mxu0 %v5409
    %5719 = vmatpush1.msra.mxu0 %v5408
    %5720 = vmatprep.subr.mxu0 %v5389
    %5721 = vmatpush1.msra.mxu0 %v5388
    %5722 = vmatprep.subr.mxu0 %v5369
    %5723 = vmatpush1.msra.mxu0 %v5368
    %5724 = vmatprep.subr.mxu0 %v5349
    %5725 = vmatpush1.msra.mxu0 %v5348
    %5726 = vmatprep.subr.mxu0 %v5329
    %5727 = vmatpush1.msra.mxu0 %v5328
    %5728 = vmatprep.subr.mxu0 %v5309
    %5729 = vmatpush1.msra.mxu0 %v5308
    %5730 = vmatprep.subr.mxu0 0.0
    %5731 = vmatpush2.msra.mxu0 0.0
    %5732 = vmatprep.subr.mxu0 0.0
    %5733 = vmatpush2.msra.mxu0 0.0
    %5734 = vmatprep.subr.mxu0 0.0
    %5735 = vmatpush2.msra.mxu0 0.0
    %5736 = vmatprep.subr.mxu0 0.0
    %5737 = vmatpush2.msra.mxu0 0.0
    %5738 = vmatprep.subr.mxu0 0.0
    %5739 = vmatpush2.msra.mxu0 0.0
    %5740 = vmatprep.subr.mxu0 0.0
    %5741 = vmatpush2.msra.mxu0 0.0
    %5742 = vmatprep.subr.mxu0 0.0
    %5743 = vmatpush2.msra.mxu0 0.0
    %5744 = vmatprep.subr.mxu0 0.0
    %5745 = vmatpush2.msra.mxu0 0.0
    %5746 = vmatprep.subr.mxu0 0.0
    %5747 = vmatpush2.msra.mxu0 0.0
    %5748 = vmatprep.subr.mxu0 0.0
    %5749 = vmatpush2.msra.mxu0 0.0
    %5750 = vmatprep.subr.mxu0 0.0
    %5751 = vmatpush2.msra.mxu0 0.0
    %5752 = vmatprep.subr.mxu0 0.0
    %5753 = vmatpush2.msra.mxu0 0.0
    %5754 = vmatprep.subr.mxu0 0.0
    %5755 = vmatpush2.msra.mxu0 0.0
    %5756 = vmatprep.subr.mxu0 0.0
    %5757 = vmatpush2.msra.mxu0 0.0
    %5758 = vmatprep.subr.mxu0 0.0
    %5759 = vmatpush2.msra.mxu0 0.0
    %5760 = vmatprep.subr.mxu0 0.0
    %5761 = vmatpush2.msra.mxu0 0.0
    %5762 = vmatprep.mubr.f32.mxu0 0.0
    %5763 = vmatmul.mubr.f32.gmra.mxu0 %v5483
    %v5764 = vpop.f32.mrf.mxu0
    %v5765 = vadd.f32 0.0, %v5764
    %v5766 = vpop.f32.mrf.mxu0
    %v5767 = vadd.f32 0.0, %v5766
    %5768 = vdwg.mxu0
    %5769 = vmatprep.subr.mxu0 0.0
    %5770 = vmatpush1.msra.mxu0 0.0
    %5771 = vmatprep.subr.mxu0 0.0
    %5772 = vmatpush1.msra.mxu0 0.0
    %5773 = vmatprep.subr.mxu0 0.0
    %5774 = vmatpush1.msra.mxu0 0.0
    %5775 = vmatprep.subr.mxu0 0.0
    %5776 = vmatpush1.msra.mxu0 0.0
    %5777 = vmatprep.subr.mxu0 0.0
    %5778 = vmatpush1.msra.mxu0 0.0
    %5779 = vmatprep.subr.mxu0 0.0
    %5780 = vmatpush1.msra.mxu0 0.0
    %5781 = vmatprep.subr.mxu0 0.0
    %5782 = vmatpush1.msra.mxu0 0.0
    %5783 = vmatprep.subr.mxu0 %v5471
    %5784 = vmatpush1.msra.mxu0 %v5470
    %5785 = vmatprep.subr.mxu0 %v5451
    %5786 = vmatpush1.msra.mxu0 %v5450
    %5787 = vmatprep.subr.mxu0 %v5431
    %5788 = vmatpush1.msra.mxu0 %v5430
    %5789 = vmatprep.subr.mxu0 %v5411
    %5790 = vmatpush1.msra.mxu0 %v5410
    %5791 = vmatprep.subr.mxu0 %v5391
    %5792 = vmatpush1.msra.mxu0 %v5390
    %5793 = vmatprep.subr.mxu0 %v5371
    %5794 = vmatpush1.msra.mxu0 %v5370
    %5795 = vmatprep.subr.mxu0 %v5351
    %5796 = vmatpush1.msra.mxu0 %v5350
    %5797 = vmatprep.subr.mxu0 %v5331
    %5798 = vmatpush1.msra.mxu0 %v5330
    %5799 = vmatprep.subr.mxu0 %v5311
    %5800 = vmatpush1.msra.mxu0 %v5310
    %5801 = vmatprep.subr.mxu0 0.0
    %5802 = vmatpush2.msra.mxu0 0.0
    %5803 = vmatprep.subr.mxu0 0.0
    %5804 = vmatpush2.msra.mxu0 0.0
    %5805 = vmatprep.subr.mxu0 0.0
    %5806 = vmatpush2.msra.mxu0 0.0
    %5807 = vmatprep.subr.mxu0 0.0
    %5808 = vmatpush2.msra.mxu0 0.0
    %5809 = vmatprep.subr.mxu0 0.0
    %5810 = vmatpush2.msra.mxu0 0.0
    %5811 = vmatprep.subr.mxu0 0.0
    %5812 = vmatpush2.msra.mxu0 0.0
    %5813 = vmatprep.subr.mxu0 0.0
    %5814 = vmatpush2.msra.mxu0 0.0
    %5815 = vmatprep.subr.mxu0 0.0
    %5816 = vmatpush2.msra.mxu0 0.0
    %5817 = vmatprep.subr.mxu0 0.0
    %5818 = vmatpush2.msra.mxu0 0.0
    %5819 = vmatprep.subr.mxu0 0.0
    %5820 = vmatpush2.msra.mxu0 0.0
    %5821 = vmatprep.subr.mxu0 0.0
    %5822 = vmatpush2.msra.mxu0 0.0
    %5823 = vmatprep.subr.mxu0 0.0
    %5824 = vmatpush2.msra.mxu0 0.0
    %5825 = vmatprep.subr.mxu0 0.0
    %5826 = vmatpush2.msra.mxu0 0.0
    %5827 = vmatprep.subr.mxu0 0.0
    %5828 = vmatpush2.msra.mxu0 0.0
    %5829 = vmatprep.subr.mxu0 0.0
    %5830 = vmatpush2.msra.mxu0 0.0
    %5831 = vmatprep.subr.mxu0 0.0
    %5832 = vmatpush2.msra.mxu0 0.0
    %5833 = vmatprep.mubr.f32.mxu0 0.0
    %5834 = vmatmul.mubr.f32.gmra.mxu0 %v5483
    %v5835 = vpop.f32.mrf.mxu0
    %v5836 = vadd.f32 0.0, %v5835
    %v5837 = vpop.f32.mrf.mxu0
    %v5838 = vadd.f32 0.0, %v5837
    %5839 = vdwg.mxu0
    %5840 = vmatprep.subr.mxu0 0.0
    %5841 = vmatpush1.msra.mxu0 0.0
    %5842 = vmatprep.subr.mxu0 0.0
    %5843 = vmatpush1.msra.mxu0 0.0
    %5844 = vmatprep.subr.mxu0 0.0
    %5845 = vmatpush1.msra.mxu0 0.0
    %5846 = vmatprep.subr.mxu0 0.0
    %5847 = vmatpush1.msra.mxu0 0.0
    %5848 = vmatprep.subr.mxu0 0.0
    %5849 = vmatpush1.msra.mxu0 0.0
    %5850 = vmatprep.subr.mxu0 0.0
    %5851 = vmatpush1.msra.mxu0 0.0
    %5852 = vmatprep.subr.mxu0 0.0
    %5853 = vmatpush1.msra.mxu0 0.0
    %5854 = vmatprep.subr.mxu0 %v5473
    %5855 = vmatpush1.msra.mxu0 %v5472
    %5856 = vmatprep.subr.mxu0 %v5453
    %5857 = vmatpush1.msra.mxu0 %v5452
    %5858 = vmatprep.subr.mxu0 %v5433
    %5859 = vmatpush1.msra.mxu0 %v5432
    %5860 = vmatprep.subr.mxu0 %v5413
    %5861 = vmatpush1.msra.mxu0 %v5412
    %5862 = vmatprep.subr.mxu0 %v5393
    %5863 = vmatpush1.msra.mxu0 %v5392
    %5864 = vmatprep.subr.mxu0 %v5373
    %5865 = vmatpush1.msra.mxu0 %v5372
    %5866 = vmatprep.subr.mxu0 %v5353
    %5867 = vmatpush1.msra.mxu0 %v5352
    %5868 = vmatprep.subr.mxu0 %v5333
    %5869 = vmatpush1.msra.mxu0 %v5332
    %5870 = vmatprep.subr.mxu0 %v5313
    %5871 = vmatpush1.msra.mxu0 %v5312
    %5872 = vmatprep.subr.mxu0 0.0
    %5873 = vmatpush2.msra.mxu0 0.0
    %5874 = vmatprep.subr.mxu0 0.0
    %5875 = vmatpush2.msra.mxu0 0.0
    %5876 = vmatprep.subr.mxu0 0.0
    %5877 = vmatpush2.msra.mxu0 0.0
    %5878 = vmatprep.subr.mxu0 0.0
    %5879 = vmatpush2.msra.mxu0 0.0
    %5880 = vmatprep.subr.mxu0 0.0
    %5881 = vmatpush2.msra.mxu0 0.0
    %5882 = vmatprep.subr.mxu0 0.0
    %5883 = vmatpush2.msra.mxu0 0.0
    %5884 = vmatprep.subr.mxu0 0.0
    %5885 = vmatpush2.msra.mxu0 0.0
    %5886 = vmatprep.subr.mxu0 0.0
    %5887 = vmatpush2.msra.mxu0 0.0
    %5888 = vmatprep.subr.mxu0 0.0
    %5889 = vmatpush2.msra.mxu0 0.0
    %5890 = vmatprep.subr.mxu0 0.0
    %5891 = vmatpush2.msra.mxu0 0.0
    %5892 = vmatprep.subr.mxu0 0.0
    %5893 = vmatpush2.msra.mxu0 0.0
    %5894 = vmatprep.subr.mxu0 0.0
    %5895 = vmatpush2.msra.mxu0 0.0
    %5896 = vmatprep.subr.mxu0 0.0
    %5897 = vmatpush2.msra.mxu0 0.0
    %5898 = vmatprep.subr.mxu0 0.0
    %5899 = vmatpush2.msra.mxu0 0.0
    %5900 = vmatprep.subr.mxu0 0.0
    %5901 = vmatpush2.msra.mxu0 0.0
    %5902 = vmatprep.subr.mxu0 0.0
    %5903 = vmatpush2.msra.mxu0 0.0
    %5904 = vmatprep.mubr.f32.mxu0 0.0
    %5905 = vmatmul.mubr.f32.gmra.mxu0 %v5483
    %v5906 = vpop.f32.mrf.mxu0
    %v5907 = vadd.f32 0.0, %v5906
    %v5908 = vpop.f32.mrf.mxu0
    %v5909 = vadd.f32 0.0, %v5908
    %5910 = vdwg.mxu0
    %5911 = vmatprep.subr.mxu0 0.0
    %5912 = vmatpush1.msra.mxu0 0.0
    %5913 = vmatprep.subr.mxu0 0.0
    %5914 = vmatpush1.msra.mxu0 0.0
    %5915 = vmatprep.subr.mxu0 0.0
    %5916 = vmatpush1.msra.mxu0 0.0
    %5917 = vmatprep.subr.mxu0 0.0
    %5918 = vmatpush1.msra.mxu0 0.0
    %5919 = vmatprep.subr.mxu0 0.0
    %5920 = vmatpush1.msra.mxu0 0.0
    %5921 = vmatprep.subr.mxu0 0.0
    %5922 = vmatpush1.msra.mxu0 0.0
    %5923 = vmatprep.subr.mxu0 0.0
    %5924 = vmatpush1.msra.mxu0 0.0
    %5925 = vmatprep.subr.mxu0 %v5475
    %5926 = vmatpush1.msra.mxu0 %v5474
    %5927 = vmatprep.subr.mxu0 %v5455
    %5928 = vmatpush1.msra.mxu0 %v5454
    %5929 = vmatprep.subr.mxu0 %v5435
    %5930 = vmatpush1.msra.mxu0 %v5434
    %5931 = vmatprep.subr.mxu0 %v5415
    %5932 = vmatpush1.msra.mxu0 %v5414
    %5933 = vmatprep.subr.mxu0 %v5395
    %5934 = vmatpush1.msra.mxu0 %v5394
    %5935 = vmatprep.subr.mxu0 %v5375
    %5936 = vmatpush1.msra.mxu0 %v5374
    %5937 = vmatprep.subr.mxu0 %v5355
    %5938 = vmatpush1.msra.mxu0 %v5354
    %5939 = vmatprep.subr.mxu0 %v5335
    %5940 = vmatpush1.msra.mxu0 %v5334
    %5941 = vmatprep.subr.mxu0 %v5315
    %5942 = vmatpush1.msra.mxu0 %v5314
    %5943 = vmatprep.subr.mxu0 0.0
    %5944 = vmatpush2.msra.mxu0 0.0
    %5945 = vmatprep.subr.mxu0 0.0
    %5946 = vmatpush2.msra.mxu0 0.0
    %5947 = vmatprep.subr.mxu0 0.0
    %5948 = vmatpush2.msra.mxu0 0.0
    %5949 = vmatprep.subr.mxu0 0.0
    %5950 = vmatpush2.msra.mxu0 0.0
    %5951 = vmatprep.subr.mxu0 0.0
    %5952 = vmatpush2.msra.mxu0 0.0
    %5953 = vmatprep.subr.mxu0 0.0
    %5954 = vmatpush2.msra.mxu0 0.0
    %5955 = vmatprep.subr.mxu0 0.0
    %5956 = vmatpush2.msra.mxu0 0.0
    %5957 = vmatprep.subr.mxu0 0.0
    %5958 = vmatpush2.msra.mxu0 0.0
    %5959 = vmatprep.subr.mxu0 0.0
    %5960 = vmatpush2.msra.mxu0 0.0
    %5961 = vmatprep.subr.mxu0 0.0
    %5962 = vmatpush2.msra.mxu0 0.0
    %5963 = vmatprep.subr.mxu0 0.0
    %5964 = vmatpush2.msra.mxu0 0.0
    %5965 = vmatprep.subr.mxu0 0.0
    %5966 = vmatpush2.msra.mxu0 0.0
    %5967 = vmatprep.subr.mxu0 0.0
    %5968 = vmatpush2.msra.mxu0 0.0
    %5969 = vmatprep.subr.mxu0 0.0
    %5970 = vmatpush2.msra.mxu0 0.0
    %5971 = vmatprep.subr.mxu0 0.0
    %5972 = vmatpush2.msra.mxu0 0.0
    %5973 = vmatprep.subr.mxu0 0.0
    %5974 = vmatpush2.msra.mxu0 0.0
    %5975 = vmatprep.mubr.f32.mxu0 0.0
    %5976 = vmatmul.mubr.f32.gmra.mxu0 %v5483
    %v5977 = vpop.f32.mrf.mxu0
    %v5978 = vadd.f32 0.0, %v5977
    %v5979 = vpop.f32.mrf.mxu0
    %v5980 = vadd.f32 0.0, %v5979
    %5981 = vdwg.mxu0
    %5982 = vmatprep.subr.mxu0 0.0
    %5983 = vmatpush1.msra.mxu0 0.0
    %5984 = vmatprep.subr.mxu0 0.0
    %5985 = vmatpush1.msra.mxu0 0.0
    %5986 = vmatprep.subr.mxu0 0.0
    %5987 = vmatpush1.msra.mxu0 0.0
    %5988 = vmatprep.subr.mxu0 0.0
    %5989 = vmatpush1.msra.mxu0 0.0
    %5990 = vmatprep.subr.mxu0 0.0
    %5991 = vmatpush1.msra.mxu0 0.0
    %5992 = vmatprep.subr.mxu0 0.0
    %5993 = vmatpush1.msra.mxu0 0.0
    %5994 = vmatprep.subr.mxu0 0.0
    %5995 = vmatpush1.msra.mxu0 0.0
    %5996 = vmatprep.subr.mxu0 %v5477
    %5997 = vmatpush1.msra.mxu0 %v5476
    %5998 = vmatprep.subr.mxu0 %v5457
    %5999 = vmatpush1.msra.mxu0 %v5456
    %6000 = vmatprep.subr.mxu0 %v5437
    %6001 = vmatpush1.msra.mxu0 %v5436
    %6002 = vmatprep.subr.mxu0 %v5417
    %6003 = vmatpush1.msra.mxu0 %v5416
    %6004 = vmatprep.subr.mxu0 %v5397
    %6005 = vmatpush1.msra.mxu0 %v5396
    %6006 = vmatprep.subr.mxu0 %v5377
    %6007 = vmatpush1.msra.mxu0 %v5376
    %6008 = vmatprep.subr.mxu0 %v5357
    %6009 = vmatpush1.msra.mxu0 %v5356
    %6010 = vmatprep.subr.mxu0 %v5337
    %6011 = vmatpush1.msra.mxu0 %v5336
    %6012 = vmatprep.subr.mxu0 %v5317
    %6013 = vmatpush1.msra.mxu0 %v5316
    %6014 = vmatprep.subr.mxu0 0.0
    %6015 = vmatpush2.msra.mxu0 0.0
    %6016 = vmatprep.subr.mxu0 0.0
    %6017 = vmatpush2.msra.mxu0 0.0
    %6018 = vmatprep.subr.mxu0 0.0
    %6019 = vmatpush2.msra.mxu0 0.0
    %6020 = vmatprep.subr.mxu0 0.0
    %6021 = vmatpush2.msra.mxu0 0.0
    %6022 = vmatprep.subr.mxu0 0.0
    %6023 = vmatpush2.msra.mxu0 0.0
    %6024 = vmatprep.subr.mxu0 0.0
    %6025 = vmatpush2.msra.mxu0 0.0
    %6026 = vmatprep.subr.mxu0 0.0
    %6027 = vmatpush2.msra.mxu0 0.0
    %6028 = vmatprep.subr.mxu0 0.0
    %6029 = vmatpush2.msra.mxu0 0.0
    %6030 = vmatprep.subr.mxu0 0.0
    %6031 = vmatpush2.msra.mxu0 0.0
    %6032 = vmatprep.subr.mxu0 0.0
    %6033 = vmatpush2.msra.mxu0 0.0
    %6034 = vmatprep.subr.mxu0 0.0
    %6035 = vmatpush2.msra.mxu0 0.0
    %6036 = vmatprep.subr.mxu0 0.0
    %6037 = vmatpush2.msra.mxu0 0.0
    %6038 = vmatprep.subr.mxu0 0.0
    %6039 = vmatpush2.msra.mxu0 0.0
    %6040 = vmatprep.subr.mxu0 0.0
    %6041 = vmatpush2.msra.mxu0 0.0
    %6042 = vmatprep.subr.mxu0 0.0
    %6043 = vmatpush2.msra.mxu0 0.0
    %6044 = vmatprep.subr.mxu0 0.0
    %6045 = vmatpush2.msra.mxu0 0.0
    %6046 = vmatprep.mubr.f32.mxu0 0.0
    %6047 = vmatmul.mubr.f32.gmra.mxu0 %v5483
    %v6048 = vpop.f32.mrf.mxu0
    %v6049 = vadd.f32 0.0, %v6048
    %v6050 = vpop.f32.mrf.mxu0
    %v6051 = vadd.f32 0.0, %v6050
    %6052 = vdwg.mxu0
    %6053 = vmatprep.subr.mxu0 0.0
    %6054 = vmatpush1.msra.mxu0 0.0
    %6055 = vmatprep.subr.mxu0 0.0
    %6056 = vmatpush1.msra.mxu0 0.0
    %6057 = vmatprep.subr.mxu0 0.0
    %6058 = vmatpush1.msra.mxu0 0.0
    %6059 = vmatprep.subr.mxu0 0.0
    %6060 = vmatpush1.msra.mxu0 0.0
    %6061 = vmatprep.subr.mxu0 0.0
    %6062 = vmatpush1.msra.mxu0 0.0
    %6063 = vmatprep.subr.mxu0 0.0
    %6064 = vmatpush1.msra.mxu0 0.0
    %6065 = vmatprep.subr.mxu0 0.0
    %6066 = vmatpush1.msra.mxu0 0.0
    %6067 = vmatprep.subr.mxu0 %v5479
    %6068 = vmatpush1.msra.mxu0 %v5478
    %6069 = vmatprep.subr.mxu0 %v5459
    %6070 = vmatpush1.msra.mxu0 %v5458
    %6071 = vmatprep.subr.mxu0 %v5439
    %6072 = vmatpush1.msra.mxu0 %v5438
    %6073 = vmatprep.subr.mxu0 %v5419
    %6074 = vmatpush1.msra.mxu0 %v5418
    %6075 = vmatprep.subr.mxu0 %v5399
    %6076 = vmatpush1.msra.mxu0 %v5398
    %6077 = vmatprep.subr.mxu0 %v5379
    %6078 = vmatpush1.msra.mxu0 %v5378
    %6079 = vmatprep.subr.mxu0 %v5359
    %6080 = vmatpush1.msra.mxu0 %v5358
    %6081 = vmatprep.subr.mxu0 %v5339
    %6082 = vmatpush1.msra.mxu0 %v5338
    %6083 = vmatprep.subr.mxu0 %v5319
    %6084 = vmatpush1.msra.mxu0 %v5318
    %6085 = vmatprep.subr.mxu0 0.0
    %6086 = vmatpush2.msra.mxu0 0.0
    %6087 = vmatprep.subr.mxu0 0.0
    %6088 = vmatpush2.msra.mxu0 0.0
    %6089 = vmatprep.subr.mxu0 0.0
    %6090 = vmatpush2.msra.mxu0 0.0
    %6091 = vmatprep.subr.mxu0 0.0
    %6092 = vmatpush2.msra.mxu0 0.0
    %6093 = vmatprep.subr.mxu0 0.0
    %6094 = vmatpush2.msra.mxu0 0.0
    %6095 = vmatprep.subr.mxu0 0.0
    %6096 = vmatpush2.msra.mxu0 0.0
    %6097 = vmatprep.subr.mxu0 0.0
    %6098 = vmatpush2.msra.mxu0 0.0
    %6099 = vmatprep.subr.mxu0 0.0
    %6100 = vmatpush2.msra.mxu0 0.0
    %6101 = vmatprep.subr.mxu0 0.0
    %6102 = vmatpush2.msra.mxu0 0.0
    %6103 = vmatprep.subr.mxu0 0.0
    %6104 = vmatpush2.msra.mxu0 0.0
    %6105 = vmatprep.subr.mxu0 0.0
    %6106 = vmatpush2.msra.mxu0 0.0
    %6107 = vmatprep.subr.mxu0 0.0
    %6108 = vmatpush2.msra.mxu0 0.0
    %6109 = vmatprep.subr.mxu0 0.0
    %6110 = vmatpush2.msra.mxu0 0.0
    %6111 = vmatprep.subr.mxu0 0.0
    %6112 = vmatpush2.msra.mxu0 0.0
    %6113 = vmatprep.subr.mxu0 0.0
    %6114 = vmatpush2.msra.mxu0 0.0
    %6115 = vmatprep.subr.mxu0 0.0
    %6116 = vmatpush2.msra.mxu0 0.0
    %6117 = vmatprep.mubr.f32.mxu0 0.0
    %6118 = vmatmul.mubr.f32.gmra.mxu0 %v5483
    %v6119 = vpop.f32.mrf.mxu0
    %v6120 = vadd.f32 0.0, %v6119
    %v6121 = vpop.f32.mrf.mxu0
    %v6122 = vadd.f32 0.0, %v6121
    %6123 = vdwg.mxu0
    %6124 = vmatprep.subr.mxu0 0.0
    %6125 = vmatpush1.msra.mxu0 0.0
    %6126 = vmatprep.subr.mxu0 0.0
    %6127 = vmatpush1.msra.mxu0 0.0
    %6128 = vmatprep.subr.mxu0 0.0
    %6129 = vmatpush1.msra.mxu0 0.0
    %6130 = vmatprep.subr.mxu0 0.0
    %6131 = vmatpush1.msra.mxu0 0.0
    %6132 = vmatprep.subr.mxu0 0.0
    %6133 = vmatpush1.msra.mxu0 0.0
    %6134 = vmatprep.subr.mxu0 0.0
    %6135 = vmatpush1.msra.mxu0 0.0
    %6136 = vmatprep.subr.mxu0 0.0
    %6137 = vmatpush1.msra.mxu0 0.0
    %6138 = vmatprep.subr.mxu0 %v5481
    %6139 = vmatpush1.msra.mxu0 %v5480
    %6140 = vmatprep.subr.mxu0 %v5461
    %6141 = vmatpush1.msra.mxu0 %v5460
    %6142 = vmatprep.subr.mxu0 %v5441
    %6143 = vmatpush1.msra.mxu0 %v5440
    %6144 = vmatprep.subr.mxu0 %v5421
    %6145 = vmatpush1.msra.mxu0 %v5420
    %6146 = vmatprep.subr.mxu0 %v5401
    %6147 = vmatpush1.msra.mxu0 %v5400
    %6148 = vmatprep.subr.mxu0 %v5381
    %6149 = vmatpush1.msra.mxu0 %v5380
    %6150 = vmatprep.subr.mxu0 %v5361
    %6151 = vmatpush1.msra.mxu0 %v5360
    %6152 = vmatprep.subr.mxu0 %v5341
    %6153 = vmatpush1.msra.mxu0 %v5340
    %6154 = vmatprep.subr.mxu0 %v5321
    %6155 = vmatpush1.msra.mxu0 %v5320
    %6156 = vmatprep.subr.mxu0 0.0
    %6157 = vmatpush2.msra.mxu0 0.0
    %6158 = vmatprep.subr.mxu0 0.0
    %6159 = vmatpush2.msra.mxu0 0.0
    %6160 = vmatprep.subr.mxu0 0.0
    %6161 = vmatpush2.msra.mxu0 0.0
    %6162 = vmatprep.subr.mxu0 0.0
    %6163 = vmatpush2.msra.mxu0 0.0
    %6164 = vmatprep.subr.mxu0 0.0
    %6165 = vmatpush2.msra.mxu0 0.0
    %6166 = vmatprep.subr.mxu0 0.0
    %6167 = vmatpush2.msra.mxu0 0.0
    %6168 = vmatprep.subr.mxu0 0.0
    %6169 = vmatpush2.msra.mxu0 0.0
    %6170 = vmatprep.subr.mxu0 0.0
    %6171 = vmatpush2.msra.mxu0 0.0
    %6172 = vmatprep.subr.mxu0 0.0
    %6173 = vmatpush2.msra.mxu0 0.0
    %6174 = vmatprep.subr.mxu0 0.0
    %6175 = vmatpush2.msra.mxu0 0.0
    %6176 = vmatprep.subr.mxu0 0.0
    %6177 = vmatpush2.msra.mxu0 0.0
    %6178 = vmatprep.subr.mxu0 0.0
    %6179 = vmatpush2.msra.mxu0 0.0
    %6180 = vmatprep.subr.mxu0 0.0
    %6181 = vmatpush2.msra.mxu0 0.0
    %6182 = vmatprep.subr.mxu0 0.0
    %6183 = vmatpush2.msra.mxu0 0.0
    %6184 = vmatprep.subr.mxu0 0.0
    %6185 = vmatpush2.msra.mxu0 0.0
    %6186 = vmatprep.subr.mxu0 0.0
    %6187 = vmatpush2.msra.mxu0 0.0
    %6188 = vmatprep.mubr.f32.mxu0 0.0
    %6189 = vmatmul.mubr.f32.gmra.mxu0 %v5483
    %v6190 = vpop.f32.mrf.mxu0
    %v6191 = vadd.f32 0.0, %v6190
    %v6192 = vpop.f32.mrf.mxu0
    %v6193 = vadd.f32 0.0, %v6192
    %6194 = vdwg.mxu0
    %vm6195 = vcmp.ge.f32.partialorder %v5552, 0.0
    %vm6196 = vcmp.ge.f32.partialorder %v5554, 0.0
    %vm6197 = vcmp.ge.f32.partialorder %v5623, 0.0
    %vm6198 = vcmp.ge.f32.partialorder %v5625, 0.0
    %vm6199 = vcmp.ge.f32.partialorder %v5694, 0.0
    %vm6200 = vcmp.ge.f32.partialorder %v5696, 0.0
    %vm6201 = vcmp.ge.f32.partialorder %v5765, 0.0
    %vm6202 = vcmp.ge.f32.partialorder %v5767, 0.0
    %vm6203 = vcmp.ge.f32.partialorder %v5836, 0.0
    %vm6204 = vcmp.ge.f32.partialorder %v5838, 0.0
    %vm6205 = vcmp.ge.f32.partialorder %v5907, 0.0
    %vm6206 = vcmp.ge.f32.partialorder %v5909, 0.0
    %vm6207 = vcmp.ge.f32.partialorder %v5978, 0.0
    %vm6208 = vcmp.ge.f32.partialorder %v5980, 0.0
    %vm6209 = vcmp.ge.f32.partialorder %v6049, 0.0
    %vm6210 = vcmp.ge.f32.partialorder %v6051, 0.0
    %vm6211 = vcmp.ge.f32.partialorder %v6120, 0.0
    %vm6212 = vcmp.ge.f32.partialorder %v6122, 0.0
    %vm6213 = vcmp.ge.f32.partialorder %v6191, 0.0
    %vm6214 = vcmp.ge.f32.partialorder %v6193, 0.0
    %v6215 = vmul.f32 %v4003, %v5552
    %v6216 = vmul.f32 %v4003, %v5554
    %v6217 = vmul.f32 %v4003, %v5623
    %v6218 = vmul.f32 %v4003, %v5625
    %v6219 = vmul.f32 %v4003, %v5694
    %v6220 = vmul.f32 %v4003, %v5696
    %v6221 = vmul.f32 %v4003, %v5765
    %v6222 = vmul.f32 %v4003, %v5767
    %v6223 = vmul.f32 %v4003, %v5836
    %v6224 = vmul.f32 %v4003, %v5838
    %v6225 = vmul.f32 %v4003, %v5907
    %v6226 = vmul.f32 %v4003, %v5909
    %v6227 = vmul.f32 %v4003, %v5978
    %v6228 = vmul.f32 %v4003, %v5980
    %v6229 = vmul.f32 %v4003, %v6049
    %v6230 = vmul.f32 %v4003, %v6051
    %v6231 = vmul.f32 %v4003, %v6120
    %v6232 = vmul.f32 %v4003, %v6122
    %v6233 = vmul.f32 %v4003, %v6191
    %v6234 = vmul.f32 %v4003, %v6193
    %v6235 = vsel %vm6195, %v5552, %v6215
    %v6236 = vsel %vm6196, %v5554, %v6216
    %v6237 = vsel %vm6197, %v5623, %v6217
    %v6238 = vsel %vm6198, %v5625, %v6218
    %v6239 = vsel %vm6199, %v5694, %v6219
    %v6240 = vsel %vm6200, %v5696, %v6220
    %v6241 = vsel %vm6201, %v5765, %v6221
    %v6242 = vsel %vm6202, %v5767, %v6222
    %v6243 = vsel %vm6203, %v5836, %v6223
    %v6244 = vsel %vm6204, %v5838, %v6224
    %v6245 = vsel %vm6205, %v5907, %v6225
    %v6246 = vsel %vm6206, %v5909, %v6226
    %v6247 = vsel %vm6207, %v5978, %v6227
    %v6248 = vsel %vm6208, %v5980, %v6228
    %v6249 = vsel %vm6209, %v6049, %v6229
    %v6250 = vsel %vm6210, %v6051, %v6230
    %v6251 = vsel %vm6211, %v6120, %v6231
    %v6252 = vsel %vm6212, %v6122, %v6232
    %v6253 = vsel %vm6213, %v6191, %v6233
    %v6254 = vsel %vm6214, %v6193, %v6234
    %v6255 = vld [vmem:[#allocation5] ss:$2 sm:$0xff]
    %v6256 = vld [vmem:[%s4045] ss:$2 sm:$0xff]
    %v6257 = vld [vmem:[%s4047] ss:$2 sm:$0xf]
    %v6258 = vld [vmem:[%s4049] ss:$2 sm:$0xff]
    %v6259 = vld [vmem:[%s4051] ss:$2 sm:$0xff]
    %v6260 = vld [vmem:[%s4053] ss:$2 sm:$0xf]
    %vm6261 = vcmp.eq.s32.totalorder %v6255, 0
    %vm6262 = vcmp.eq.s32.totalorder %v6256, 0
    %vm6263 = vcmp.eq.s32.totalorder %v6257, 0
    %vm6264 = vcmp.eq.s32.totalorder %v6255, 31
    %vm6265 = vcmp.eq.s32.totalorder %v6256, 31
    %vm6266 = vcmp.eq.s32.totalorder %v6257, 31
    %vm6267 = vcmp.eq.s32.totalorder %v6258, 0
    %vm6268 = vcmp.eq.s32.totalorder %v6259, 0
    %vm6269 = vcmp.eq.s32.totalorder %v6260, 0
    %6270 = vrot.lane.b32.xlu0 %v6235, 1
    %v6271 = vpop.permute.xlu0 %6270
    %6272 = vrot.lane.b32.xlu0 %v6236, 1
    %v6273 = vpop.permute.xlu0 %6272
    %6274 = vrot.lane.b32.xlu0 %v6237, 1
    %v6275 = vpop.permute.xlu0 %6274
    %6276 = vrot.lane.b32.xlu0 %v6238, 1
    %v6277 = vpop.permute.xlu0 %6276
    %6278 = vrot.lane.b32.xlu0 %v6239, 1
    %v6279 = vpop.permute.xlu0 %6278
    %6280 = vrot.lane.b32.xlu0 %v6240, 1
    %v6281 = vpop.permute.xlu0 %6280
    %6282 = vrot.lane.b32.xlu0 %v6241, 1
    %v6283 = vpop.permute.xlu0 %6282
    %6284 = vrot.lane.b32.xlu0 %v6242, 1
    %v6285 = vpop.permute.xlu0 %6284
    %6286 = vrot.lane.b32.xlu0 %v6243, 1
    %v6287 = vpop.permute.xlu0 %6286
    %6288 = vrot.lane.b32.xlu0 %v6244, 1
    %v6289 = vpop.permute.xlu0 %6288
    %6290 = vrot.lane.b32.xlu0 %v6245, 1
    %v6291 = vpop.permute.xlu0 %6290
    %6292 = vrot.lane.b32.xlu0 %v6246, 1
    %v6293 = vpop.permute.xlu0 %6292
    %6294 = vrot.lane.b32.xlu0 %v6247, 1
    %v6295 = vpop.permute.xlu0 %6294
    %6296 = vrot.lane.b32.xlu0 %v6248, 1
    %v6297 = vpop.permute.xlu0 %6296
    %6298 = vrot.lane.b32.xlu0 %v6249, 1
    %v6299 = vpop.permute.xlu0 %6298
    %6300 = vrot.lane.b32.xlu0 %v6250, 1
    %v6301 = vpop.permute.xlu0 %6300
    %6302 = vrot.lane.b32.xlu0 %v6251, 1
    %v6303 = vpop.permute.xlu0 %6302
    %6304 = vrot.lane.b32.xlu0 %v6252, 1
    %v6305 = vpop.permute.xlu0 %6304
    %6306 = vrot.lane.b32.xlu0 %v6253, 1
    %v6307 = vpop.permute.xlu0 %6306
    %6308 = vrot.lane.b32.xlu0 %v6254, 1
    %v6309 = vpop.permute.xlu0 %6308
    %v6310 = vsel %vm4104, %v6307, %v6309
    %v6311 = vsel %vm4104, %v6305, %v6307
    %v6312 = vsel %vm4104, %v6303, %v6305
    %v6313 = vsel %vm4104, %v6301, %v6303
    %v6314 = vsel %vm4104, %v6299, %v6301
    %v6315 = vsel %vm4104, %v6297, %v6299
    %v6316 = vsel %vm4104, %v6295, %v6297
    %v6317 = vsel %vm4104, %v6293, %v6295
    %v6318 = vsel %vm4104, %v6291, %v6293
    %v6319 = vsel %vm4104, %v6289, %v6291
    %v6320 = vsel %vm4104, %v6287, %v6289
    %v6321 = vsel %vm4104, %v6285, %v6287
    %v6322 = vsel %vm4104, %v6283, %v6285
    %v6323 = vsel %vm4104, %v6281, %v6283
    %v6324 = vsel %vm4104, %v6279, %v6281
    %v6325 = vsel %vm4104, %v6277, %v6279
    %v6326 = vsel %vm4104, %v6275, %v6277
    %v6327 = vsel %vm4104, %v6273, %v6275
    %v6328 = vsel %vm4104, %v6271, %v6273
    %v6329 = vsel %vm4104, %v6309, %v6271
    %v6330 = vsel %vm6267, 1, 0
    %v6331 = vsel %vm6268, 1, 0
    %v6332 = vsel %vm6269, 1, 0
    %v6333 = vlaneseq
    %v6334 = vshrl.u32 %v6333, 7
    %v6335 = vsub.s32 0, %v6334
    %v6336 = vrot.slane %v6330, %v6335
    %v6337 = vlaneseq
    %v6338 = vshrl.u32 %v6337, 7
    %v6339 = vsub.s32 1, %v6338
    %v6340 = vrot.slane %v6330, %v6339
    %v6341 = vlaneseq
    %v6342 = vshrl.u32 %v6341, 7
    %v6343 = vsub.s32 2, %v6342
    %v6344 = vrot.slane %v6330, %v6343
    %v6345 = vlaneseq
    %v6346 = vshrl.u32 %v6345, 7
    %v6347 = vsub.s32 3, %v6346
    %v6348 = vrot.slane %v6330, %v6347
    %v6349 = vlaneseq
    %v6350 = vshrl.u32 %v6349, 7
    %v6351 = vsub.s32 4, %v6350
    %v6352 = vrot.slane %v6330, %v6351
    %v6353 = vlaneseq
    %v6354 = vshrl.u32 %v6353, 7
    %v6355 = vsub.s32 5, %v6354
    %v6356 = vrot.slane %v6330, %v6355
    %v6357 = vlaneseq
    %v6358 = vshrl.u32 %v6357, 7
    %v6359 = vsub.s32 6, %v6358
    %v6360 = vrot.slane %v6330, %v6359
    %v6361 = vlaneseq
    %v6362 = vshrl.u32 %v6361, 7
    %v6363 = vsub.s32 7, %v6362
    %v6364 = vrot.slane %v6330, %v6363
    %v6365 = vlaneseq
    %v6366 = vshrl.u32 %v6365, 7
    %v6367 = vsub.s32 0, %v6366
    %v6368 = vrot.slane %v6331, %v6367
    %v6369 = vlaneseq
    %v6370 = vshrl.u32 %v6369, 7
    %v6371 = vsub.s32 1, %v6370
    %v6372 = vrot.slane %v6331, %v6371
    %v6373 = vlaneseq
    %v6374 = vshrl.u32 %v6373, 7
    %v6375 = vsub.s32 2, %v6374
    %v6376 = vrot.slane %v6331, %v6375
    %v6377 = vlaneseq
    %v6378 = vshrl.u32 %v6377, 7
    %v6379 = vsub.s32 3, %v6378
    %v6380 = vrot.slane %v6331, %v6379
    %v6381 = vlaneseq
    %v6382 = vshrl.u32 %v6381, 7
    %v6383 = vsub.s32 4, %v6382
    %v6384 = vrot.slane %v6331, %v6383
    %v6385 = vlaneseq
    %v6386 = vshrl.u32 %v6385, 7
    %v6387 = vsub.s32 5, %v6386
    %v6388 = vrot.slane %v6331, %v6387
    %v6389 = vlaneseq
    %v6390 = vshrl.u32 %v6389, 7
    %v6391 = vsub.s32 6, %v6390
    %v6392 = vrot.slane %v6331, %v6391
    %v6393 = vlaneseq
    %v6394 = vshrl.u32 %v6393, 7
    %v6395 = vsub.s32 7, %v6394
    %v6396 = vrot.slane %v6331, %v6395
    %v6397 = vlaneseq
    %v6398 = vshrl.u32 %v6397, 7
    %v6399 = vsub.s32 0, %v6398
    %v6400 = vrot.slane %v6332, %v6399
    %v6401 = vlaneseq
    %v6402 = vshrl.u32 %v6401, 7
    %v6403 = vsub.s32 1, %v6402
    %v6404 = vrot.slane %v6332, %v6403
    %v6405 = vlaneseq
    %v6406 = vshrl.u32 %v6405, 7
    %v6407 = vsub.s32 2, %v6406
    %v6408 = vrot.slane %v6332, %v6407
    %v6409 = vlaneseq
    %v6410 = vshrl.u32 %v6409, 7
    %v6411 = vsub.s32 3, %v6410
    %v6412 = vrot.slane %v6332, %v6411
    %vm6413 = vcmp.eq.s32.totalorder %v6336, 1
    %vm6414 = vcmp.eq.s32.totalorder %v6340, 1
    %vm6415 = vcmp.eq.s32.totalorder %v6344, 1
    %vm6416 = vcmp.eq.s32.totalorder %v6348, 1
    %vm6417 = vcmp.eq.s32.totalorder %v6352, 1
    %vm6418 = vcmp.eq.s32.totalorder %v6356, 1
    %vm6419 = vcmp.eq.s32.totalorder %v6360, 1
    %vm6420 = vcmp.eq.s32.totalorder %v6364, 1
    %vm6421 = vcmp.eq.s32.totalorder %v6368, 1
    %vm6422 = vcmp.eq.s32.totalorder %v6372, 1
    %vm6423 = vcmp.eq.s32.totalorder %v6376, 1
    %vm6424 = vcmp.eq.s32.totalorder %v6380, 1
    %vm6425 = vcmp.eq.s32.totalorder %v6384, 1
    %vm6426 = vcmp.eq.s32.totalorder %v6388, 1
    %vm6427 = vcmp.eq.s32.totalorder %v6392, 1
    %vm6428 = vcmp.eq.s32.totalorder %v6396, 1
    %vm6429 = vcmp.eq.s32.totalorder %v6400, 1
    %vm6430 = vcmp.eq.s32.totalorder %v6404, 1
    %vm6431 = vcmp.eq.s32.totalorder %v6408, 1
    %vm6432 = vcmp.eq.s32.totalorder %v6412, 1
    %v6433 = vsel %vm6413, %v6235, %v6329
    %v6434 = vsel %vm6414, %v6236, %v6328
    %v6435 = vsel %vm6415, %v6237, %v6327
    %v6436 = vsel %vm6416, %v6238, %v6326
    %v6437 = vsel %vm6417, %v6239, %v6325
    %v6438 = vsel %vm6418, %v6240, %v6324
    %v6439 = vsel %vm6419, %v6241, %v6323
    %v6440 = vsel %vm6420, %v6242, %v6322
    %v6441 = vsel %vm6421, %v6243, %v6321
    %v6442 = vsel %vm6422, %v6244, %v6320
    %v6443 = vsel %vm6423, %v6245, %v6319
    %v6444 = vsel %vm6424, %v6246, %v6318
    %v6445 = vsel %vm6425, %v6247, %v6317
    %v6446 = vsel %vm6426, %v6248, %v6316
    %v6447 = vsel %vm6427, %v6249, %v6315
    %v6448 = vsel %vm6428, %v6250, %v6314
    %v6449 = vsel %vm6429, %v6251, %v6313
    %v6450 = vsel %vm6430, %v6252, %v6312
    %v6451 = vsel %vm6431, %v6253, %v6311
    %v6452 = vsel %vm6432, %v6254, %v6310
    %6453 = vst [vmem:[#allocation2 + $0x1e0] sm:$0xff] %v6433
    %6454 = vst [vmem:[#allocation2 + $0x1e8] sm:$0xff] %v6434
    %6455 = vst [vmem:[#allocation2 + $0x1f0] sm:$0xff] %v6435
    %6456 = vst [vmem:[#allocation2 + $0x1f8] sm:$0xff] %v6436
    %6457 = vst [vmem:[#allocation2 + $0x200] sm:$0xff] %v6437
    %6458 = vst [vmem:[#allocation2 + $0x208] sm:$0xff] %v6438
    %6459 = vst [vmem:[#allocation2 + $0x210] sm:$0xff] %v6439
    %6460 = vst [vmem:[#allocation2 + $0x218] sm:$0xff] %v6440
    %6461 = vst [vmem:[#allocation2 + $0x220] sm:$0xff] %v6441
    %6462 = vst [vmem:[#allocation2 + $0x228] sm:$0xff] %v6442
    %6463 = vst [vmem:[#allocation2 + $0x230] sm:$0xff] %v6443
    %6464 = vst [vmem:[#allocation2 + $0x238] sm:$0xff] %v6444
    %6465 = vst [vmem:[#allocation2 + $0x240] sm:$0xff] %v6445
    %6466 = vst [vmem:[#allocation2 + $0x248] sm:$0xff] %v6446
    %6467 = vst [vmem:[#allocation2 + $0x250] sm:$0xff] %v6447
    %6468 = vst [vmem:[#allocation2 + $0x258] sm:$0xff] %v6448
    %6469 = vst [vmem:[#allocation2 + $0x260] sm:$0xff] %v6449
    %6470 = vst [vmem:[#allocation2 + $0x268] sm:$0xff] %v6450
    %6471 = vst [vmem:[#allocation2 + $0x270] sm:$0xff] %v6451
    %6472 = vst [vmem:[#allocation2 + $0x278] sm:$0xff] %v6452
    %6473 = vrot.lane.b32.xlu0 %v6433, 34
    %v6474 = vpop.permute.xlu0 %6473
    %6475 = vrot.lane.b32.xlu0 %v6434, 34
    %v6476 = vpop.permute.xlu0 %6475
    %6477 = vrot.lane.b32.xlu0 %v6435, 34
    %v6478 = vpop.permute.xlu0 %6477
    %6479 = vrot.lane.b32.xlu0 %v6436, 34
    %v6480 = vpop.permute.xlu0 %6479
    %6481 = vrot.lane.b32.xlu0 %v6437, 34
    %v6482 = vpop.permute.xlu0 %6481
    %6483 = vrot.lane.b32.xlu0 %v6438, 34
    %v6484 = vpop.permute.xlu0 %6483
    %6485 = vrot.lane.b32.xlu0 %v6439, 34
    %v6486 = vpop.permute.xlu0 %6485
    %6487 = vrot.lane.b32.xlu0 %v6440, 34
    %v6488 = vpop.permute.xlu0 %6487
    %6489 = vrot.lane.b32.xlu0 %v6441, 34
    %v6490 = vpop.permute.xlu0 %6489
    %6491 = vrot.lane.b32.xlu0 %v6442, 34
    %v6492 = vpop.permute.xlu0 %6491
    %6493 = vrot.lane.b32.xlu0 %v6443, 34
    %v6494 = vpop.permute.xlu0 %6493
    %6495 = vrot.lane.b32.xlu0 %v6444, 34
    %v6496 = vpop.permute.xlu0 %6495
    %6497 = vrot.lane.b32.xlu0 %v6445, 34
    %v6498 = vpop.permute.xlu0 %6497
    %6499 = vrot.lane.b32.xlu0 %v6446, 34
    %v6500 = vpop.permute.xlu0 %6499
    %6501 = vrot.lane.b32.xlu0 %v6447, 34
    %v6502 = vpop.permute.xlu0 %6501
    %6503 = vrot.lane.b32.xlu0 %v6448, 34
    %v6504 = vpop.permute.xlu0 %6503
    %6505 = vrot.lane.b32.xlu0 %v6449, 34
    %v6506 = vpop.permute.xlu0 %6505
    %6507 = vrot.lane.b32.xlu0 %v6450, 34
    %v6508 = vpop.permute.xlu0 %6507
    %6509 = vrot.lane.b32.xlu0 %v6451, 34
    %v6510 = vpop.permute.xlu0 %6509
    %6511 = vrot.lane.b32.xlu0 %v6452, 34
    %v6512 = vpop.permute.xlu0 %6511
    %v6513 = vsel %vm4308, %v6510, %v6512
    %v6514 = vsel %vm4308, %v6508, %v6510
    %v6515 = vsel %vm4308, %v6506, %v6508
    %v6516 = vsel %vm4308, %v6504, %v6506
    %v6517 = vsel %vm4308, %v6502, %v6504
    %v6518 = vsel %vm4308, %v6500, %v6502
    %v6519 = vsel %vm4308, %v6498, %v6500
    %v6520 = vsel %vm4308, %v6496, %v6498
    %v6521 = vsel %vm4308, %v6494, %v6496
    %v6522 = vsel %vm4308, %v6492, %v6494
    %v6523 = vsel %vm4308, %v6490, %v6492
    %v6524 = vsel %vm4308, %v6488, %v6490
    %v6525 = vsel %vm4308, %v6486, %v6488
    %v6526 = vsel %vm4308, %v6484, %v6486
    %v6527 = vsel %vm4308, %v6482, %v6484
    %v6528 = vsel %vm4308, %v6480, %v6482
    %v6529 = vsel %vm4308, %v6478, %v6480
    %v6530 = vsel %vm4308, %v6476, %v6478
    %v6531 = vsel %vm4308, %v6474, %v6476
    %v6532 = vsel %vm4308, %v6512, %v6474
    %v6533 = vsel %vm6261, 1, 0
    %v6534 = vsel %vm6262, 1, 0
    %v6535 = vsel %vm6263, 1, 0
    %v6536 = vlaneseq
    %v6537 = vshrl.u32 %v6536, 7
    %v6538 = vsub.s32 0, %v6537
    %v6539 = vrot.slane %v6533, %v6538
    %v6540 = vlaneseq
    %v6541 = vshrl.u32 %v6540, 7
    %v6542 = vsub.s32 1, %v6541
    %v6543 = vrot.slane %v6533, %v6542
    %v6544 = vlaneseq
    %v6545 = vshrl.u32 %v6544, 7
    %v6546 = vsub.s32 2, %v6545
    %v6547 = vrot.slane %v6533, %v6546
    %v6548 = vlaneseq
    %v6549 = vshrl.u32 %v6548, 7
    %v6550 = vsub.s32 3, %v6549
    %v6551 = vrot.slane %v6533, %v6550
    %v6552 = vlaneseq
    %v6553 = vshrl.u32 %v6552, 7
    %v6554 = vsub.s32 4, %v6553
    %v6555 = vrot.slane %v6533, %v6554
    %v6556 = vlaneseq
    %v6557 = vshrl.u32 %v6556, 7
    %v6558 = vsub.s32 5, %v6557
    %v6559 = vrot.slane %v6533, %v6558
    %v6560 = vlaneseq
    %v6561 = vshrl.u32 %v6560, 7
    %v6562 = vsub.s32 6, %v6561
    %v6563 = vrot.slane %v6533, %v6562
    %v6564 = vlaneseq
    %v6565 = vshrl.u32 %v6564, 7
    %v6566 = vsub.s32 7, %v6565
    %v6567 = vrot.slane %v6533, %v6566
    %v6568 = vlaneseq
    %v6569 = vshrl.u32 %v6568, 7
    %v6570 = vsub.s32 0, %v6569
    %v6571 = vrot.slane %v6534, %v6570
    %v6572 = vlaneseq
    %v6573 = vshrl.u32 %v6572, 7
    %v6574 = vsub.s32 1, %v6573
    %v6575 = vrot.slane %v6534, %v6574
    %v6576 = vlaneseq
    %v6577 = vshrl.u32 %v6576, 7
    %v6578 = vsub.s32 2, %v6577
    %v6579 = vrot.slane %v6534, %v6578
    %v6580 = vlaneseq
    %v6581 = vshrl.u32 %v6580, 7
    %v6582 = vsub.s32 3, %v6581
    %v6583 = vrot.slane %v6534, %v6582
    %v6584 = vlaneseq
    %v6585 = vshrl.u32 %v6584, 7
    %v6586 = vsub.s32 4, %v6585
    %v6587 = vrot.slane %v6534, %v6586
    %v6588 = vlaneseq
    %v6589 = vshrl.u32 %v6588, 7
    %v6590 = vsub.s32 5, %v6589
    %v6591 = vrot.slane %v6534, %v6590
    %v6592 = vlaneseq
    %v6593 = vshrl.u32 %v6592, 7
    %v6594 = vsub.s32 6, %v6593
    %v6595 = vrot.slane %v6534, %v6594
    %v6596 = vlaneseq
    %v6597 = vshrl.u32 %v6596, 7
    %v6598 = vsub.s32 7, %v6597
    %v6599 = vrot.slane %v6534, %v6598
    %v6600 = vlaneseq
    %v6601 = vshrl.u32 %v6600, 7
    %v6602 = vsub.s32 0, %v6601
    %v6603 = vrot.slane %v6535, %v6602
    %v6604 = vlaneseq
    %v6605 = vshrl.u32 %v6604, 7
    %v6606 = vsub.s32 1, %v6605
    %v6607 = vrot.slane %v6535, %v6606
    %v6608 = vlaneseq
    %v6609 = vshrl.u32 %v6608, 7
    %v6610 = vsub.s32 2, %v6609
    %v6611 = vrot.slane %v6535, %v6610
    %v6612 = vlaneseq
    %v6613 = vshrl.u32 %v6612, 7
    %v6614 = vsub.s32 3, %v6613
    %v6615 = vrot.slane %v6535, %v6614
    %vm6616 = vcmp.eq.s32.totalorder %v6539, 1
    %vm6617 = vcmp.eq.s32.totalorder %v6543, 1
    %vm6618 = vcmp.eq.s32.totalorder %v6547, 1
    %vm6619 = vcmp.eq.s32.totalorder %v6551, 1
    %vm6620 = vcmp.eq.s32.totalorder %v6555, 1
    %vm6621 = vcmp.eq.s32.totalorder %v6559, 1
    %vm6622 = vcmp.eq.s32.totalorder %v6563, 1
    %vm6623 = vcmp.eq.s32.totalorder %v6567, 1
    %vm6624 = vcmp.eq.s32.totalorder %v6571, 1
    %vm6625 = vcmp.eq.s32.totalorder %v6575, 1
    %vm6626 = vcmp.eq.s32.totalorder %v6579, 1
    %vm6627 = vcmp.eq.s32.totalorder %v6583, 1
    %vm6628 = vcmp.eq.s32.totalorder %v6587, 1
    %vm6629 = vcmp.eq.s32.totalorder %v6591, 1
    %vm6630 = vcmp.eq.s32.totalorder %v6595, 1
    %vm6631 = vcmp.eq.s32.totalorder %v6599, 1
    %vm6632 = vcmp.eq.s32.totalorder %v6603, 1
    %vm6633 = vcmp.eq.s32.totalorder %v6607, 1
    %vm6634 = vcmp.eq.s32.totalorder %v6611, 1
    %vm6635 = vcmp.eq.s32.totalorder %v6615, 1
    %v6636 = vsel %vm6616, %v6433, %v6532
    %v6637 = vsel %vm6617, %v6434, %v6531
    %v6638 = vsel %vm6618, %v6435, %v6530
    %v6639 = vsel %vm6619, %v6436, %v6529
    %v6640 = vsel %vm6620, %v6437, %v6528
    %v6641 = vsel %vm6621, %v6438, %v6527
    %v6642 = vsel %vm6622, %v6439, %v6526
    %v6643 = vsel %vm6623, %v6440, %v6525
    %v6644 = vsel %vm6624, %v6441, %v6524
    %v6645 = vsel %vm6625, %v6442, %v6523
    %v6646 = vsel %vm6626, %v6443, %v6522
    %v6647 = vsel %vm6627, %v6444, %v6521
    %v6648 = vsel %vm6628, %v6445, %v6520
    %v6649 = vsel %vm6629, %v6446, %v6519
    %v6650 = vsel %vm6630, %v6447, %v6518
    %v6651 = vsel %vm6631, %v6448, %v6517
    %v6652 = vsel %vm6632, %v6449, %v6516
    %v6653 = vsel %vm6633, %v6450, %v6515
    %v6654 = vsel %vm6634, %v6451, %v6514
    %v6655 = vsel %vm6635, %v6452, %v6513
    %6656 = vst [vmem:[#allocation2] sm:$0xff] %v6636
    %6657 = vst [vmem:[#allocation2 + $0x8] sm:$0xff] %v6637
    %6658 = vst [vmem:[#allocation2 + $0x10] sm:$0xff] %v6638
    %6659 = vst [vmem:[#allocation2 + $0x18] sm:$0xff] %v6639
    %6660 = vst [vmem:[#allocation2 + $0x20] sm:$0xff] %v6640
    %6661 = vst [vmem:[#allocation2 + $0x28] sm:$0xff] %v6641
    %6662 = vst [vmem:[#allocation2 + $0x30] sm:$0xff] %v6642
    %6663 = vst [vmem:[#allocation2 + $0x38] sm:$0xff] %v6643
    %6664 = vst [vmem:[#allocation2 + $0x40] sm:$0xff] %v6644
    %6665 = vst [vmem:[#allocation2 + $0x48] sm:$0xff] %v6645
    %6666 = vst [vmem:[#allocation2 + $0x50] sm:$0xff] %v6646
    %6667 = vst [vmem:[#allocation2 + $0x58] sm:$0xff] %v6647
    %6668 = vst [vmem:[#allocation2 + $0x60] sm:$0xff] %v6648
    %6669 = vst [vmem:[#allocation2 + $0x68] sm:$0xff] %v6649
    %6670 = vst [vmem:[#allocation2 + $0x70] sm:$0xff] %v6650
    %6671 = vst [vmem:[#allocation2 + $0x78] sm:$0xff] %v6651
    %6672 = vst [vmem:[#allocation2 + $0x80] sm:$0xff] %v6652
    %6673 = vst [vmem:[#allocation2 + $0x88] sm:$0xff] %v6653
    %6674 = vst [vmem:[#allocation2 + $0x90] sm:$0xff] %v6654
    %6675 = vst [vmem:[#allocation2 + $0x98] sm:$0xff] %v6655
    %6676 = vrot.lane.b32.xlu0 %v6433, 94
    %v6677 = vpop.permute.xlu0 %6676
    %6678 = vrot.lane.b32.xlu0 %v6434, 94
    %v6679 = vpop.permute.xlu0 %6678
    %6680 = vrot.lane.b32.xlu0 %v6435, 94
    %v6681 = vpop.permute.xlu0 %6680
    %6682 = vrot.lane.b32.xlu0 %v6436, 94
    %v6683 = vpop.permute.xlu0 %6682
    %6684 = vrot.lane.b32.xlu0 %v6437, 94
    %v6685 = vpop.permute.xlu0 %6684
    %6686 = vrot.lane.b32.xlu0 %v6438, 94
    %v6687 = vpop.permute.xlu0 %6686
    %6688 = vrot.lane.b32.xlu0 %v6439, 94
    %v6689 = vpop.permute.xlu0 %6688
    %6690 = vrot.lane.b32.xlu0 %v6440, 94
    %v6691 = vpop.permute.xlu0 %6690
    %6692 = vrot.lane.b32.xlu0 %v6441, 94
    %v6693 = vpop.permute.xlu0 %6692
    %6694 = vrot.lane.b32.xlu0 %v6442, 94
    %v6695 = vpop.permute.xlu0 %6694
    %6696 = vrot.lane.b32.xlu0 %v6443, 94
    %v6697 = vpop.permute.xlu0 %6696
    %6698 = vrot.lane.b32.xlu0 %v6444, 94
    %v6699 = vpop.permute.xlu0 %6698
    %6700 = vrot.lane.b32.xlu0 %v6445, 94
    %v6701 = vpop.permute.xlu0 %6700
    %6702 = vrot.lane.b32.xlu0 %v6446, 94
    %v6703 = vpop.permute.xlu0 %6702
    %6704 = vrot.lane.b32.xlu0 %v6447, 94
    %v6705 = vpop.permute.xlu0 %6704
    %6706 = vrot.lane.b32.xlu0 %v6448, 94
    %v6707 = vpop.permute.xlu0 %6706
    %6708 = vrot.lane.b32.xlu0 %v6449, 94
    %v6709 = vpop.permute.xlu0 %6708
    %6710 = vrot.lane.b32.xlu0 %v6450, 94
    %v6711 = vpop.permute.xlu0 %6710
    %6712 = vrot.lane.b32.xlu0 %v6451, 94
    %v6713 = vpop.permute.xlu0 %6712
    %6714 = vrot.lane.b32.xlu0 %v6452, 94
    %v6715 = vpop.permute.xlu0 %6714
    %v6716 = vsel %vm2642, %v6713, %v6715
    %v6717 = vsel %vm2642, %v6711, %v6713
    %v6718 = vsel %vm2642, %v6709, %v6711
    %v6719 = vsel %vm2642, %v6707, %v6709
    %v6720 = vsel %vm2642, %v6705, %v6707
    %v6721 = vsel %vm2642, %v6703, %v6705
    %v6722 = vsel %vm2642, %v6701, %v6703
    %v6723 = vsel %vm2642, %v6699, %v6701
    %v6724 = vsel %vm2642, %v6697, %v6699
    %v6725 = vsel %vm2642, %v6695, %v6697
    %v6726 = vsel %vm2642, %v6693, %v6695
    %v6727 = vsel %vm2642, %v6691, %v6693
    %v6728 = vsel %vm2642, %v6689, %v6691
    %v6729 = vsel %vm2642, %v6687, %v6689
    %v6730 = vsel %vm2642, %v6685, %v6687
    %v6731 = vsel %vm2642, %v6683, %v6685
    %v6732 = vsel %vm2642, %v6681, %v6683
    %v6733 = vsel %vm2642, %v6679, %v6681
    %v6734 = vsel %vm2642, %v6677, %v6679
    %v6735 = vsel %vm2642, %v6715, %v6677
    %v6736 = vsel %vm6264, 1, 0
    %v6737 = vsel %vm6265, 1, 0
    %v6738 = vsel %vm6266, 1, 0
    %v6739 = vlaneseq
    %v6740 = vshrl.u32 %v6739, 7
    %v6741 = vsub.s32 0, %v6740
    %v6742 = vrot.slane %v6736, %v6741
    %v6743 = vlaneseq
    %v6744 = vshrl.u32 %v6743, 7
    %v6745 = vsub.s32 1, %v6744
    %v6746 = vrot.slane %v6736, %v6745
    %v6747 = vlaneseq
    %v6748 = vshrl.u32 %v6747, 7
    %v6749 = vsub.s32 2, %v6748
    %v6750 = vrot.slane %v6736, %v6749
    %v6751 = vlaneseq
    %v6752 = vshrl.u32 %v6751, 7
    %v6753 = vsub.s32 3, %v6752
    %v6754 = vrot.slane %v6736, %v6753
    %v6755 = vlaneseq
    %v6756 = vshrl.u32 %v6755, 7
    %v6757 = vsub.s32 4, %v6756
    %v6758 = vrot.slane %v6736, %v6757
    %v6759 = vlaneseq
    %v6760 = vshrl.u32 %v6759, 7
    %v6761 = vsub.s32 5, %v6760
    %v6762 = vrot.slane %v6736, %v6761
    %v6763 = vlaneseq
    %v6764 = vshrl.u32 %v6763, 7
    %v6765 = vsub.s32 6, %v6764
    %v6766 = vrot.slane %v6736, %v6765
    %v6767 = vlaneseq
    %v6768 = vshrl.u32 %v6767, 7
    %v6769 = vsub.s32 7, %v6768
    %v6770 = vrot.slane %v6736, %v6769
    %v6771 = vlaneseq
    %v6772 = vshrl.u32 %v6771, 7
    %v6773 = vsub.s32 0, %v6772
    %v6774 = vrot.slane %v6737, %v6773
    %v6775 = vlaneseq
    %v6776 = vshrl.u32 %v6775, 7
    %v6777 = vsub.s32 1, %v6776
    %v6778 = vrot.slane %v6737, %v6777
    %v6779 = vlaneseq
    %v6780 = vshrl.u32 %v6779, 7
    %v6781 = vsub.s32 2, %v6780
    %v6782 = vrot.slane %v6737, %v6781
    %v6783 = vlaneseq
    %v6784 = vshrl.u32 %v6783, 7
    %v6785 = vsub.s32 3, %v6784
    %v6786 = vrot.slane %v6737, %v6785
    %v6787 = vlaneseq
    %v6788 = vshrl.u32 %v6787, 7
    %v6789 = vsub.s32 4, %v6788
    %v6790 = vrot.slane %v6737, %v6789
    %v6791 = vlaneseq
    %v6792 = vshrl.u32 %v6791, 7
    %v6793 = vsub.s32 5, %v6792
    %v6794 = vrot.slane %v6737, %v6793
    %v6795 = vlaneseq
    %v6796 = vshrl.u32 %v6795, 7
    %v6797 = vsub.s32 6, %v6796
    %v6798 = vrot.slane %v6737, %v6797
    %v6799 = vlaneseq
    %v6800 = vshrl.u32 %v6799, 7
    %v6801 = vsub.s32 7, %v6800
    %v6802 = vrot.slane %v6737, %v6801
    %v6803 = vlaneseq
    %v6804 = vshrl.u32 %v6803, 7
    %v6805 = vsub.s32 0, %v6804
    %v6806 = vrot.slane %v6738, %v6805
    %v6807 = vlaneseq
    %v6808 = vshrl.u32 %v6807, 7
    %v6809 = vsub.s32 1, %v6808
    %v6810 = vrot.slane %v6738, %v6809
    %v6811 = vlaneseq
    %v6812 = vshrl.u32 %v6811, 7
    %v6813 = vsub.s32 2, %v6812
    %v6814 = vrot.slane %v6738, %v6813
    %v6815 = vlaneseq
    %v6816 = vshrl.u32 %v6815, 7
    %v6817 = vsub.s32 3, %v6816
    %v6818 = vrot.slane %v6738, %v6817
    %vm6819 = vcmp.eq.s32.totalorder %v6742, 1
    %vm6820 = vcmp.eq.s32.totalorder %v6746, 1
    %vm6821 = vcmp.eq.s32.totalorder %v6750, 1
    %vm6822 = vcmp.eq.s32.totalorder %v6754, 1
    %vm6823 = vcmp.eq.s32.totalorder %v6758, 1
    %vm6824 = vcmp.eq.s32.totalorder %v6762, 1
    %vm6825 = vcmp.eq.s32.totalorder %v6766, 1
    %vm6826 = vcmp.eq.s32.totalorder %v6770, 1
    %vm6827 = vcmp.eq.s32.totalorder %v6774, 1
    %vm6828 = vcmp.eq.s32.totalorder %v6778, 1
    %vm6829 = vcmp.eq.s32.totalorder %v6782, 1
    %vm6830 = vcmp.eq.s32.totalorder %v6786, 1
    %vm6831 = vcmp.eq.s32.totalorder %v6790, 1
    %vm6832 = vcmp.eq.s32.totalorder %v6794, 1
    %vm6833 = vcmp.eq.s32.totalorder %v6798, 1
    %vm6834 = vcmp.eq.s32.totalorder %v6802, 1
    %vm6835 = vcmp.eq.s32.totalorder %v6806, 1
    %vm6836 = vcmp.eq.s32.totalorder %v6810, 1
    %vm6837 = vcmp.eq.s32.totalorder %v6814, 1
    %vm6838 = vcmp.eq.s32.totalorder %v6818, 1
    %v6839 = vsel %vm6819, %v6433, %v6734
    %v6840 = vsel %vm6820, %v6434, %v6733
    %v6841 = vsel %vm6821, %v6435, %v6732
    %v6842 = vsel %vm6822, %v6436, %v6731
    %v6843 = vsel %vm6823, %v6437, %v6730
    %v6844 = vsel %vm6824, %v6438, %v6729
    %v6845 = vsel %vm6825, %v6439, %v6728
    %v6846 = vsel %vm6826, %v6440, %v6727
    %v6847 = vsel %vm6827, %v6441, %v6726
    %v6848 = vsel %vm6828, %v6442, %v6725
    %v6849 = vsel %vm6829, %v6443, %v6724
    %v6850 = vsel %vm6830, %v6444, %v6723
    %v6851 = vsel %vm6831, %v6445, %v6722
    %v6852 = vsel %vm6832, %v6446, %v6721
    %v6853 = vsel %vm6833, %v6447, %v6720
    %v6854 = vsel %vm6834, %v6448, %v6719
    %v6855 = vsel %vm6835, %v6449, %v6718
    %v6856 = vsel %vm6836, %v6450, %v6717
    %v6857 = vsel %vm6837, %v6451, %v6716
    %v6858 = vsel %vm6838, %v6452, %v6735
    %6859 = vst [vmem:[#allocation2 + $0x3c0] sm:$0xff] %v6839
    %6860 = vst [vmem:[#allocation2 + $0x3c8] sm:$0xff] %v6840
    %6861 = vst [vmem:[#allocation2 + $0x3d0] sm:$0xff] %v6841
    %6862 = vst [vmem:[#allocation2 + $0x3d8] sm:$0xff] %v6842
    %6863 = vst [vmem:[#allocation2 + $0x3e0] sm:$0xff] %v6843
    %6864 = vst [vmem:[#allocation2 + $0x3e8] sm:$0xff] %v6844
    %6865 = vst [vmem:[#allocation2 + $0x3f0] sm:$0xff] %v6845
    %6866 = vst [vmem:[#allocation2 + $0x3f8] sm:$0xff] %v6846
    %6867 = vst [vmem:[#allocation2 + $0x400] sm:$0xff] %v6847
    %6868 = vst [vmem:[#allocation2 + $0x408] sm:$0xff] %v6848
    %6869 = vst [vmem:[#allocation2 + $0x410] sm:$0xff] %v6849
    %6870 = vst [vmem:[#allocation2 + $0x418] sm:$0xff] %v6850
    %6871 = vst [vmem:[#allocation2 + $0x420] sm:$0xff] %v6851
    %6872 = vst [vmem:[#allocation2 + $0x428] sm:$0xff] %v6852
    %6873 = vst [vmem:[#allocation2 + $0x430] sm:$0xff] %v6853
    %6874 = vst [vmem:[#allocation2 + $0x438] sm:$0xff] %v6854
    %6875 = vst [vmem:[#allocation2 + $0x440] sm:$0xff] %v6855
    %6876 = vst [vmem:[#allocation2 + $0x448] sm:$0xff] %v6856
    %6877 = vst [vmem:[#allocation2 + $0x450] sm:$0xff] %v6857
    %6878 = vst [vmem:[#allocation2 + $0x458] sm:$0xff] %v6858
    %6879 = vst [vmem:[#allocation2 + $0x280] sm:$0xff] %v6235
    %6880 = vst [vmem:[#allocation2 + $0x288] sm:$0xff] %v6236
    %6881 = vst [vmem:[#allocation2 + $0x290] sm:$0xff] %v6237
    %6882 = vst [vmem:[#allocation2 + $0x298] sm:$0xff] %v6238
    %6883 = vst [vmem:[#allocation2 + $0x2a0] sm:$0xff] %v6239
    %6884 = vst [vmem:[#allocation2 + $0x2a8] sm:$0xff] %v6240
    %6885 = vst [vmem:[#allocation2 + $0x2b0] sm:$0xff] %v6241
    %6886 = vst [vmem:[#allocation2 + $0x2b8] sm:$0xff] %v6242
    %6887 = vst [vmem:[#allocation2 + $0x2c0] sm:$0xff] %v6243
    %6888 = vst [vmem:[#allocation2 + $0x2c8] sm:$0xff] %v6244
    %6889 = vst [vmem:[#allocation2 + $0x2d0] sm:$0xff] %v6245
    %6890 = vst [vmem:[#allocation2 + $0x2d8] sm:$0xff] %v6246
    %6891 = vst [vmem:[#allocation2 + $0x2e0] sm:$0xff] %v6247
    %6892 = vst [vmem:[#allocation2 + $0x2e8] sm:$0xff] %v6248
    %6893 = vst [vmem:[#allocation2 + $0x2f0] sm:$0xff] %v6249
    %6894 = vst [vmem:[#allocation2 + $0x2f8] sm:$0xff] %v6250
    %6895 = vst [vmem:[#allocation2 + $0x300] sm:$0xff] %v6251
    %6896 = vst [vmem:[#allocation2 + $0x308] sm:$0xff] %v6252
    %6897 = vst [vmem:[#allocation2 + $0x310] sm:$0xff] %v6253
    %6898 = vst [vmem:[#allocation2 + $0x318] sm:$0xff] %v6254
    %6899 = vrot.lane.b32.xlu0 %v6235, 34
    %v6900 = vpop.permute.xlu0 %6899
    %6901 = vrot.lane.b32.xlu0 %v6236, 34
    %v6902 = vpop.permute.xlu0 %6901
    %6903 = vrot.lane.b32.xlu0 %v6237, 34
    %v6904 = vpop.permute.xlu0 %6903
    %6905 = vrot.lane.b32.xlu0 %v6238, 34
    %v6906 = vpop.permute.xlu0 %6905
    %6907 = vrot.lane.b32.xlu0 %v6239, 34
    %v6908 = vpop.permute.xlu0 %6907
    %6909 = vrot.lane.b32.xlu0 %v6240, 34
    %v6910 = vpop.permute.xlu0 %6909
    %6911 = vrot.lane.b32.xlu0 %v6241, 34
    %v6912 = vpop.permute.xlu0 %6911
    %6913 = vrot.lane.b32.xlu0 %v6242, 34
    %v6914 = vpop.permute.xlu0 %6913
    %6915 = vrot.lane.b32.xlu0 %v6243, 34
    %v6916 = vpop.permute.xlu0 %6915
    %6917 = vrot.lane.b32.xlu0 %v6244, 34
    %v6918 = vpop.permute.xlu0 %6917
    %6919 = vrot.lane.b32.xlu0 %v6245, 34
    %v6920 = vpop.permute.xlu0 %6919
    %6921 = vrot.lane.b32.xlu0 %v6246, 34
    %v6922 = vpop.permute.xlu0 %6921
    %6923 = vrot.lane.b32.xlu0 %v6247, 34
    %v6924 = vpop.permute.xlu0 %6923
    %6925 = vrot.lane.b32.xlu0 %v6248, 34
    %v6926 = vpop.permute.xlu0 %6925
    %6927 = vrot.lane.b32.xlu0 %v6249, 34
    %v6928 = vpop.permute.xlu0 %6927
    %6929 = vrot.lane.b32.xlu0 %v6250, 34
    %v6930 = vpop.permute.xlu0 %6929
    %6931 = vrot.lane.b32.xlu0 %v6251, 34
    %v6932 = vpop.permute.xlu0 %6931
    %6933 = vrot.lane.b32.xlu0 %v6252, 34
    %v6934 = vpop.permute.xlu0 %6933
    %6935 = vrot.lane.b32.xlu0 %v6253, 34
    %v6936 = vpop.permute.xlu0 %6935
    %6937 = vrot.lane.b32.xlu0 %v6254, 34
    %v6938 = vpop.permute.xlu0 %6937
    %v6939 = vsel %vm4308, %v6936, %v6938
    %v6940 = vsel %vm4308, %v6934, %v6936
    %v6941 = vsel %vm4308, %v6932, %v6934
    %v6942 = vsel %vm4308, %v6930, %v6932
    %v6943 = vsel %vm4308, %v6928, %v6930
    %v6944 = vsel %vm4308, %v6926, %v6928
    %v6945 = vsel %vm4308, %v6924, %v6926
    %v6946 = vsel %vm4308, %v6922, %v6924
    %v6947 = vsel %vm4308, %v6920, %v6922
    %v6948 = vsel %vm4308, %v6918, %v6920
    %v6949 = vsel %vm4308, %v6916, %v6918
    %v6950 = vsel %vm4308, %v6914, %v6916
    %v6951 = vsel %vm4308, %v6912, %v6914
    %v6952 = vsel %vm4308, %v6910, %v6912
    %v6953 = vsel %vm4308, %v6908, %v6910
    %v6954 = vsel %vm4308, %v6906, %v6908
    %v6955 = vsel %vm4308, %v6904, %v6906
    %v6956 = vsel %vm4308, %v6902, %v6904
    %v6957 = vsel %vm4308, %v6900, %v6902
    %v6958 = vsel %vm4308, %v6938, %v6900
    %v6959 = vsel %vm6616, %v6235, %v6958
    %v6960 = vsel %vm6617, %v6236, %v6957
    %v6961 = vsel %vm6618, %v6237, %v6956
    %v6962 = vsel %vm6619, %v6238, %v6955
    %v6963 = vsel %vm6620, %v6239, %v6954
    %v6964 = vsel %vm6621, %v6240, %v6953
    %v6965 = vsel %vm6622, %v6241, %v6952
    %v6966 = vsel %vm6623, %v6242, %v6951
    %v6967 = vsel %vm6624, %v6243, %v6950
    %v6968 = vsel %vm6625, %v6244, %v6949
    %v6969 = vsel %vm6626, %v6245, %v6948
    %v6970 = vsel %vm6627, %v6246, %v6947
    %v6971 = vsel %vm6628, %v6247, %v6946
    %v6972 = vsel %vm6629, %v6248, %v6945
    %v6973 = vsel %vm6630, %v6249, %v6944
    %v6974 = vsel %vm6631, %v6250, %v6943
    %v6975 = vsel %vm6632, %v6251, %v6942
    %v6976 = vsel %vm6633, %v6252, %v6941
    %v6977 = vsel %vm6634, %v6253, %v6940
    %v6978 = vsel %vm6635, %v6254, %v6939
    %6979 = vst [vmem:[#allocation2 + $0xa0] sm:$0xff] %v6959
    %6980 = vst [vmem:[#allocation2 + $0xa8] sm:$0xff] %v6960
    %6981 = vst [vmem:[#allocation2 + $0xb0] sm:$0xff] %v6961
    %6982 = vst [vmem:[#allocation2 + $0xb8] sm:$0xff] %v6962
    %6983 = vst [vmem:[#allocation2 + $0xc0] sm:$0xff] %v6963
    %6984 = vst [vmem:[#allocation2 + $0xc8] sm:$0xff] %v6964
    %6985 = vst [vmem:[#allocation2 + $0xd0] sm:$0xff] %v6965
    %6986 = vst [vmem:[#allocation2 + $0xd8] sm:$0xff] %v6966
    %6987 = vst [vmem:[#allocation2 + $0xe0] sm:$0xff] %v6967
    %6988 = vst [vmem:[#allocation2 + $0xe8] sm:$0xff] %v6968
    %6989 = vst [vmem:[#allocation2 + $0xf0] sm:$0xff] %v6969
    %6990 = vst [vmem:[#allocation2 + $0xf8] sm:$0xff] %v6970
    %6991 = vst [vmem:[#allocation2 + $0x100] sm:$0xff] %v6971
    %6992 = vst [vmem:[#allocation2 + $0x108] sm:$0xff] %v6972
    %6993 = vst [vmem:[#allocation2 + $0x110] sm:$0xff] %v6973
    %6994 = vst [vmem:[#allocation2 + $0x118] sm:$0xff] %v6974
    %6995 = vst [vmem:[#allocation2 + $0x120] sm:$0xff] %v6975
    %6996 = vst [vmem:[#allocation2 + $0x128] sm:$0xff] %v6976
    %6997 = vst [vmem:[#allocation2 + $0x130] sm:$0xff] %v6977
    %6998 = vst [vmem:[#allocation2 + $0x138] sm:$0xff] %v6978
    %6999 = vrot.lane.b32.xlu0 %v6235, 94
    %v7000 = vpop.permute.xlu0 %6999
    %7001 = vrot.lane.b32.xlu0 %v6236, 94
    %v7002 = vpop.permute.xlu0 %7001
    %7003 = vrot.lane.b32.xlu0 %v6237, 94
    %v7004 = vpop.permute.xlu0 %7003
    %7005 = vrot.lane.b32.xlu0 %v6238, 94
    %v7006 = vpop.permute.xlu0 %7005
    %7007 = vrot.lane.b32.xlu0 %v6239, 94
    %v7008 = vpop.permute.xlu0 %7007
    %7009 = vrot.lane.b32.xlu0 %v6240, 94
    %v7010 = vpop.permute.xlu0 %7009
    %7011 = vrot.lane.b32.xlu0 %v6241, 94
    %v7012 = vpop.permute.xlu0 %7011
    %7013 = vrot.lane.b32.xlu0 %v6242, 94
    %v7014 = vpop.permute.xlu0 %7013
    %7015 = vrot.lane.b32.xlu0 %v6243, 94
    %v7016 = vpop.permute.xlu0 %7015
    %7017 = vrot.lane.b32.xlu0 %v6244, 94
    %v7018 = vpop.permute.xlu0 %7017
    %7019 = vrot.lane.b32.xlu0 %v6245, 94
    %v7020 = vpop.permute.xlu0 %7019
    %7021 = vrot.lane.b32.xlu0 %v6246, 94
    %v7022 = vpop.permute.xlu0 %7021
    %7023 = vrot.lane.b32.xlu0 %v6247, 94
    %v7024 = vpop.permute.xlu0 %7023
    %7025 = vrot.lane.b32.xlu0 %v6248, 94
    %v7026 = vpop.permute.xlu0 %7025
    %7027 = vrot.lane.b32.xlu0 %v6249, 94
    %v7028 = vpop.permute.xlu0 %7027
    %7029 = vrot.lane.b32.xlu0 %v6250, 94
    %v7030 = vpop.permute.xlu0 %7029
    %7031 = vrot.lane.b32.xlu0 %v6251, 94
    %v7032 = vpop.permute.xlu0 %7031
    %7033 = vrot.lane.b32.xlu0 %v6252, 94
    %v7034 = vpop.permute.xlu0 %7033
    %7035 = vrot.lane.b32.xlu0 %v6253, 94
    %v7036 = vpop.permute.xlu0 %7035
    %7037 = vrot.lane.b32.xlu0 %v6254, 94
    %v7038 = vpop.permute.xlu0 %7037
    %v7039 = vsel %vm2642, %v7036, %v7038
    %v7040 = vsel %vm2642, %v7034, %v7036
    %v7041 = vsel %vm2642, %v7032, %v7034
    %v7042 = vsel %vm2642, %v7030, %v7032
    %v7043 = vsel %vm2642, %v7028, %v7030
    %v7044 = vsel %vm2642, %v7026, %v7028
    %v7045 = vsel %vm2642, %v7024, %v7026
    %v7046 = vsel %vm2642, %v7022, %v7024
    %v7047 = vsel %vm2642, %v7020, %v7022
    %v7048 = vsel %vm2642, %v7018, %v7020
    %v7049 = vsel %vm2642, %v7016, %v7018
    %v7050 = vsel %vm2642, %v7014, %v7016
    %v7051 = vsel %vm2642, %v7012, %v7014
    %v7052 = vsel %vm2642, %v7010, %v7012
    %v7053 = vsel %vm2642, %v7008, %v7010
    %v7054 = vsel %vm2642, %v7006, %v7008
    %v7055 = vsel %vm2642, %v7004, %v7006
    %v7056 = vsel %vm2642, %v7002, %v7004
    %v7057 = vsel %vm2642, %v7000, %v7002
    %v7058 = vsel %vm2642, %v7038, %v7000
    %v7059 = vsel %vm6819, %v6235, %v7057
    %v7060 = vsel %vm6820, %v6236, %v7056
    %v7061 = vsel %vm6821, %v6237, %v7055
    %v7062 = vsel %vm6822, %v6238, %v7054
    %v7063 = vsel %vm6823, %v6239, %v7053
    %v7064 = vsel %vm6824, %v6240, %v7052
    %v7065 = vsel %vm6825, %v6241, %v7051
    %v7066 = vsel %vm6826, %v6242, %v7050
    %v7067 = vsel %vm6827, %v6243, %v7049
    %v7068 = vsel %vm6828, %v6244, %v7048
    %v7069 = vsel %vm6829, %v6245, %v7047
    %v7070 = vsel %vm6830, %v6246, %v7046
    %v7071 = vsel %vm6831, %v6247, %v7045
    %v7072 = vsel %vm6832, %v6248, %v7044
    %v7073 = vsel %vm6833, %v6249, %v7043
    %v7074 = vsel %vm6834, %v6250, %v7042
    %v7075 = vsel %vm6835, %v6251, %v7041
    %v7076 = vsel %vm6836, %v6252, %v7040
    %v7077 = vsel %vm6837, %v6253, %v7039
    %v7078 = vsel %vm6838, %v6254, %v7058
    %7079 = vst [vmem:[#allocation2 + $0x460] sm:$0xff] %v7059
    %7080 = vst [vmem:[#allocation2 + $0x468] sm:$0xff] %v7060
    %7081 = vst [vmem:[#allocation2 + $0x470] sm:$0xff] %v7061
    %7082 = vst [vmem:[#allocation2 + $0x478] sm:$0xff] %v7062
    %7083 = vst [vmem:[#allocation2 + $0x480] sm:$0xff] %v7063
    %7084 = vst [vmem:[#allocation2 + $0x488] sm:$0xff] %v7064
    %7085 = vst [vmem:[#allocation2 + $0x490] sm:$0xff] %v7065
    %7086 = vst [vmem:[#allocation2 + $0x498] sm:$0xff] %v7066
    %7087 = vst [vmem:[#allocation2 + $0x4a0] sm:$0xff] %v7067
    %7088 = vst [vmem:[#allocation2 + $0x4a8] sm:$0xff] %v7068
    %7089 = vst [vmem:[#allocation2 + $0x4b0] sm:$0xff] %v7069
    %7090 = vst [vmem:[#allocation2 + $0x4b8] sm:$0xff] %v7070
    %7091 = vst [vmem:[#allocation2 + $0x4c0] sm:$0xff] %v7071
    %7092 = vst [vmem:[#allocation2 + $0x4c8] sm:$0xff] %v7072
    %7093 = vst [vmem:[#allocation2 + $0x4d0] sm:$0xff] %v7073
    %7094 = vst [vmem:[#allocation2 + $0x4d8] sm:$0xff] %v7074
    %7095 = vst [vmem:[#allocation2 + $0x4e0] sm:$0xff] %v7075
    %7096 = vst [vmem:[#allocation2 + $0x4e8] sm:$0xff] %v7076
    %7097 = vst [vmem:[#allocation2 + $0x4f0] sm:$0xff] %v7077
    %7098 = vst [vmem:[#allocation2 + $0x4f8] sm:$0xff] %v7078
    %vm7099 = vcmp.eq.s32.totalorder %v6258, 31
    %vm7100 = vcmp.eq.s32.totalorder %v6259, 31
    %vm7101 = vcmp.eq.s32.totalorder %v6260, 31
    %7102 = vrot.lane.b32.xlu0 %v6235, 127
    %v7103 = vpop.permute.xlu0 %7102
    %7104 = vrot.lane.b32.xlu0 %v6236, 127
    %v7105 = vpop.permute.xlu0 %7104
    %7106 = vrot.lane.b32.xlu0 %v6237, 127
    %v7107 = vpop.permute.xlu0 %7106
    %7108 = vrot.lane.b32.xlu0 %v6238, 127
    %v7109 = vpop.permute.xlu0 %7108
    %7110 = vrot.lane.b32.xlu0 %v6239, 127
    %v7111 = vpop.permute.xlu0 %7110
    %7112 = vrot.lane.b32.xlu0 %v6240, 127
    %v7113 = vpop.permute.xlu0 %7112
    %7114 = vrot.lane.b32.xlu0 %v6241, 127
    %v7115 = vpop.permute.xlu0 %7114
    %7116 = vrot.lane.b32.xlu0 %v6242, 127
    %v7117 = vpop.permute.xlu0 %7116
    %7118 = vrot.lane.b32.xlu0 %v6243, 127
    %v7119 = vpop.permute.xlu0 %7118
    %7120 = vrot.lane.b32.xlu0 %v6244, 127
    %v7121 = vpop.permute.xlu0 %7120
    %7122 = vrot.lane.b32.xlu0 %v6245, 127
    %v7123 = vpop.permute.xlu0 %7122
    %7124 = vrot.lane.b32.xlu0 %v6246, 127
    %v7125 = vpop.permute.xlu0 %7124
    %7126 = vrot.lane.b32.xlu0 %v6247, 127
    %v7127 = vpop.permute.xlu0 %7126
    %7128 = vrot.lane.b32.xlu0 %v6248, 127
    %v7129 = vpop.permute.xlu0 %7128
    %7130 = vrot.lane.b32.xlu0 %v6249, 127
    %v7131 = vpop.permute.xlu0 %7130
    %7132 = vrot.lane.b32.xlu0 %v6250, 127
    %v7133 = vpop.permute.xlu0 %7132
    %7134 = vrot.lane.b32.xlu0 %v6251, 127
    %v7135 = vpop.permute.xlu0 %7134
    %7136 = vrot.lane.b32.xlu0 %v6252, 127
    %v7137 = vpop.permute.xlu0 %7136
    %7138 = vrot.lane.b32.xlu0 %v6253, 127
    %v7139 = vpop.permute.xlu0 %7138
    %7140 = vrot.lane.b32.xlu0 %v6254, 127
    %v7141 = vpop.permute.xlu0 %7140
    %v7142 = vsel %vm2480, %v7139, %v7141
    %v7143 = vsel %vm2480, %v7137, %v7139
    %v7144 = vsel %vm2480, %v7135, %v7137
    %v7145 = vsel %vm2480, %v7133, %v7135
    %v7146 = vsel %vm2480, %v7131, %v7133
    %v7147 = vsel %vm2480, %v7129, %v7131
    %v7148 = vsel %vm2480, %v7127, %v7129
    %v7149 = vsel %vm2480, %v7125, %v7127
    %v7150 = vsel %vm2480, %v7123, %v7125
    %v7151 = vsel %vm2480, %v7121, %v7123
    %v7152 = vsel %vm2480, %v7119, %v7121
    %v7153 = vsel %vm2480, %v7117, %v7119
    %v7154 = vsel %vm2480, %v7115, %v7117
    %v7155 = vsel %vm2480, %v7113, %v7115
    %v7156 = vsel %vm2480, %v7111, %v7113
    %v7157 = vsel %vm2480, %v7109, %v7111
    %v7158 = vsel %vm2480, %v7107, %v7109
    %v7159 = vsel %vm2480, %v7105, %v7107
    %v7160 = vsel %vm2480, %v7103, %v7105
    %v7161 = vsel %vm2480, %v7141, %v7103
    %v7162 = vsel %vm7099, 1, 0
    %v7163 = vsel %vm7100, 1, 0
    %v7164 = vsel %vm7101, 1, 0
    %v7165 = vlaneseq
    %v7166 = vshrl.u32 %v7165, 7
    %v7167 = vsub.s32 0, %v7166
    %v7168 = vrot.slane %v7162, %v7167
    %v7169 = vlaneseq
    %v7170 = vshrl.u32 %v7169, 7
    %v7171 = vsub.s32 1, %v7170
    %v7172 = vrot.slane %v7162, %v7171
    %v7173 = vlaneseq
    %v7174 = vshrl.u32 %v7173, 7
    %v7175 = vsub.s32 2, %v7174
    %v7176 = vrot.slane %v7162, %v7175
    %v7177 = vlaneseq
    %v7178 = vshrl.u32 %v7177, 7
    %v7179 = vsub.s32 3, %v7178
    %v7180 = vrot.slane %v7162, %v7179
    %v7181 = vlaneseq
    %v7182 = vshrl.u32 %v7181, 7
    %v7183 = vsub.s32 4, %v7182
    %v7184 = vrot.slane %v7162, %v7183
    %v7185 = vlaneseq
    %v7186 = vshrl.u32 %v7185, 7
    %v7187 = vsub.s32 5, %v7186
    %v7188 = vrot.slane %v7162, %v7187
    %v7189 = vlaneseq
    %v7190 = vshrl.u32 %v7189, 7
    %v7191 = vsub.s32 6, %v7190
    %v7192 = vrot.slane %v7162, %v7191
    %v7193 = vlaneseq
    %v7194 = vshrl.u32 %v7193, 7
    %v7195 = vsub.s32 7, %v7194
    %v7196 = vrot.slane %v7162, %v7195
    %v7197 = vlaneseq
    %v7198 = vshrl.u32 %v7197, 7
    %v7199 = vsub.s32 0, %v7198
    %v7200 = vrot.slane %v7163, %v7199
    %v7201 = vlaneseq
    %v7202 = vshrl.u32 %v7201, 7
    %v7203 = vsub.s32 1, %v7202
    %v7204 = vrot.slane %v7163, %v7203
    %v7205 = vlaneseq
    %v7206 = vshrl.u32 %v7205, 7
    %v7207 = vsub.s32 2, %v7206
    %v7208 = vrot.slane %v7163, %v7207
    %v7209 = vlaneseq
    %v7210 = vshrl.u32 %v7209, 7
    %v7211 = vsub.s32 3, %v7210
    %v7212 = vrot.slane %v7163, %v7211
    %v7213 = vlaneseq
    %v7214 = vshrl.u32 %v7213, 7
    %v7215 = vsub.s32 4, %v7214
    %v7216 = vrot.slane %v7163, %v7215
    %v7217 = vlaneseq
    %v7218 = vshrl.u32 %v7217, 7
    %v7219 = vsub.s32 5, %v7218
    %v7220 = vrot.slane %v7163, %v7219
    %v7221 = vlaneseq
    %v7222 = vshrl.u32 %v7221, 7
    %v7223 = vsub.s32 6, %v7222
    %v7224 = vrot.slane %v7163, %v7223
    %v7225 = vlaneseq
    %v7226 = vshrl.u32 %v7225, 7
    %v7227 = vsub.s32 7, %v7226
    %v7228 = vrot.slane %v7163, %v7227
    %v7229 = vlaneseq
    %v7230 = vshrl.u32 %v7229, 7
    %v7231 = vsub.s32 0, %v7230
    %v7232 = vrot.slane %v7164, %v7231
    %v7233 = vlaneseq
    %v7234 = vshrl.u32 %v7233, 7
    %v7235 = vsub.s32 1, %v7234
    %v7236 = vrot.slane %v7164, %v7235
    %v7237 = vlaneseq
    %v7238 = vshrl.u32 %v7237, 7
    %v7239 = vsub.s32 2, %v7238
    %v7240 = vrot.slane %v7164, %v7239
    %v7241 = vlaneseq
    %v7242 = vshrl.u32 %v7241, 7
    %v7243 = vsub.s32 3, %v7242
    %v7244 = vrot.slane %v7164, %v7243
    %vm7245 = vcmp.eq.s32.totalorder %v7168, 1
    %vm7246 = vcmp.eq.s32.totalorder %v7172, 1
    %vm7247 = vcmp.eq.s32.totalorder %v7176, 1
    %vm7248 = vcmp.eq.s32.totalorder %v7180, 1
    %vm7249 = vcmp.eq.s32.totalorder %v7184, 1
    %vm7250 = vcmp.eq.s32.totalorder %v7188, 1
    %vm7251 = vcmp.eq.s32.totalorder %v7192, 1
    %vm7252 = vcmp.eq.s32.totalorder %v7196, 1
    %vm7253 = vcmp.eq.s32.totalorder %v7200, 1
    %vm7254 = vcmp.eq.s32.totalorder %v7204, 1
    %vm7255 = vcmp.eq.s32.totalorder %v7208, 1
    %vm7256 = vcmp.eq.s32.totalorder %v7212, 1
    %vm7257 = vcmp.eq.s32.totalorder %v7216, 1
    %vm7258 = vcmp.eq.s32.totalorder %v7220, 1
    %vm7259 = vcmp.eq.s32.totalorder %v7224, 1
    %vm7260 = vcmp.eq.s32.totalorder %v7228, 1
    %vm7261 = vcmp.eq.s32.totalorder %v7232, 1
    %vm7262 = vcmp.eq.s32.totalorder %v7236, 1
    %vm7263 = vcmp.eq.s32.totalorder %v7240, 1
    %vm7264 = vcmp.eq.s32.totalorder %v7244, 1
    %v7265 = vsel %vm7245, %v6235, %v7160
    %v7266 = vsel %vm7246, %v6236, %v7159
    %v7267 = vsel %vm7247, %v6237, %v7158
    %v7268 = vsel %vm7248, %v6238, %v7157
    %v7269 = vsel %vm7249, %v6239, %v7156
    %v7270 = vsel %vm7250, %v6240, %v7155
    %v7271 = vsel %vm7251, %v6241, %v7154
    %v7272 = vsel %vm7252, %v6242, %v7153
    %v7273 = vsel %vm7253, %v6243, %v7152
    %v7274 = vsel %vm7254, %v6244, %v7151
    %v7275 = vsel %vm7255, %v6245, %v7150
    %v7276 = vsel %vm7256, %v6246, %v7149
    %v7277 = vsel %vm7257, %v6247, %v7148
    %v7278 = vsel %vm7258, %v6248, %v7147
    %v7279 = vsel %vm7259, %v6249, %v7146
    %v7280 = vsel %vm7260, %v6250, %v7145
    %v7281 = vsel %vm7261, %v6251, %v7144
    %v7282 = vsel %vm7262, %v6252, %v7143
    %v7283 = vsel %vm7263, %v6253, %v7142
    %v7284 = vsel %vm7264, %v6254, %v7161
    %7285 = vst [vmem:[#allocation2 + $0x320] sm:$0xff] %v7265
    %7286 = vst [vmem:[#allocation2 + $0x328] sm:$0xff] %v7266
    %7287 = vst [vmem:[#allocation2 + $0x330] sm:$0xff] %v7267
    %7288 = vst [vmem:[#allocation2 + $0x338] sm:$0xff] %v7268
    %7289 = vst [vmem:[#allocation2 + $0x340] sm:$0xff] %v7269
    %7290 = vst [vmem:[#allocation2 + $0x348] sm:$0xff] %v7270
    %7291 = vst [vmem:[#allocation2 + $0x350] sm:$0xff] %v7271
    %7292 = vst [vmem:[#allocation2 + $0x358] sm:$0xff] %v7272
    %7293 = vst [vmem:[#allocation2 + $0x360] sm:$0xff] %v7273
    %7294 = vst [vmem:[#allocation2 + $0x368] sm:$0xff] %v7274
    %7295 = vst [vmem:[#allocation2 + $0x370] sm:$0xff] %v7275
    %7296 = vst [vmem:[#allocation2 + $0x378] sm:$0xff] %v7276
    %7297 = vst [vmem:[#allocation2 + $0x380] sm:$0xff] %v7277
    %7298 = vst [vmem:[#allocation2 + $0x388] sm:$0xff] %v7278
    %7299 = vst [vmem:[#allocation2 + $0x390] sm:$0xff] %v7279
    %7300 = vst [vmem:[#allocation2 + $0x398] sm:$0xff] %v7280
    %7301 = vst [vmem:[#allocation2 + $0x3a0] sm:$0xff] %v7281
    %7302 = vst [vmem:[#allocation2 + $0x3a8] sm:$0xff] %v7282
    %7303 = vst [vmem:[#allocation2 + $0x3b0] sm:$0xff] %v7283
    %7304 = vst [vmem:[#allocation2 + $0x3b8] sm:$0xff] %v7284
    %7305 = vrot.lane.b32.xlu0 %v7265, 34
    %v7306 = vpop.permute.xlu0 %7305
    %7307 = vrot.lane.b32.xlu0 %v7266, 34
    %v7308 = vpop.permute.xlu0 %7307
    %7309 = vrot.lane.b32.xlu0 %v7267, 34
    %v7310 = vpop.permute.xlu0 %7309
    %7311 = vrot.lane.b32.xlu0 %v7268, 34
    %v7312 = vpop.permute.xlu0 %7311
    %7313 = vrot.lane.b32.xlu0 %v7269, 34
    %v7314 = vpop.permute.xlu0 %7313
    %7315 = vrot.lane.b32.xlu0 %v7270, 34
    %v7316 = vpop.permute.xlu0 %7315
    %7317 = vrot.lane.b32.xlu0 %v7271, 34
    %v7318 = vpop.permute.xlu0 %7317
    %7319 = vrot.lane.b32.xlu0 %v7272, 34
    %v7320 = vpop.permute.xlu0 %7319
    %7321 = vrot.lane.b32.xlu0 %v7273, 34
    %v7322 = vpop.permute.xlu0 %7321
    %7323 = vrot.lane.b32.xlu0 %v7274, 34
    %v7324 = vpop.permute.xlu0 %7323
    %7325 = vrot.lane.b32.xlu0 %v7275, 34
    %v7326 = vpop.permute.xlu0 %7325
    %7327 = vrot.lane.b32.xlu0 %v7276, 34
    %v7328 = vpop.permute.xlu0 %7327
    %7329 = vrot.lane.b32.xlu0 %v7277, 34
    %v7330 = vpop.permute.xlu0 %7329
    %7331 = vrot.lane.b32.xlu0 %v7278, 34
    %v7332 = vpop.permute.xlu0 %7331
    %7333 = vrot.lane.b32.xlu0 %v7279, 34
    %v7334 = vpop.permute.xlu0 %7333
    %7335 = vrot.lane.b32.xlu0 %v7280, 34
    %v7336 = vpop.permute.xlu0 %7335
    %7337 = vrot.lane.b32.xlu0 %v7281, 34
    %v7338 = vpop.permute.xlu0 %7337
    %7339 = vrot.lane.b32.xlu0 %v7282, 34
    %v7340 = vpop.permute.xlu0 %7339
    %7341 = vrot.lane.b32.xlu0 %v7283, 34
    %v7342 = vpop.permute.xlu0 %7341
    %7343 = vrot.lane.b32.xlu0 %v7284, 34
    %v7344 = vpop.permute.xlu0 %7343
    %v7345 = vsel %vm4308, %v7342, %v7344
    %v7346 = vsel %vm4308, %v7340, %v7342
    %v7347 = vsel %vm4308, %v7338, %v7340
    %v7348 = vsel %vm4308, %v7336, %v7338
    %v7349 = vsel %vm4308, %v7334, %v7336
    %v7350 = vsel %vm4308, %v7332, %v7334
    %v7351 = vsel %vm4308, %v7330, %v7332
    %v7352 = vsel %vm4308, %v7328, %v7330
    %v7353 = vsel %vm4308, %v7326, %v7328
    %v7354 = vsel %vm4308, %v7324, %v7326
    %v7355 = vsel %vm4308, %v7322, %v7324
    %v7356 = vsel %vm4308, %v7320, %v7322
    %v7357 = vsel %vm4308, %v7318, %v7320
    %v7358 = vsel %vm4308, %v7316, %v7318
    %v7359 = vsel %vm4308, %v7314, %v7316
    %v7360 = vsel %vm4308, %v7312, %v7314
    %v7361 = vsel %vm4308, %v7310, %v7312
    %v7362 = vsel %vm4308, %v7308, %v7310
    %v7363 = vsel %vm4308, %v7306, %v7308
    %v7364 = vsel %vm4308, %v7344, %v7306
    %v7365 = vsel %vm6616, %v7265, %v7364
    %v7366 = vsel %vm6617, %v7266, %v7363
    %v7367 = vsel %vm6618, %v7267, %v7362
    %v7368 = vsel %vm6619, %v7268, %v7361
    %v7369 = vsel %vm6620, %v7269, %v7360
    %v7370 = vsel %vm6621, %v7270, %v7359
    %v7371 = vsel %vm6622, %v7271, %v7358
    %v7372 = vsel %vm6623, %v7272, %v7357
    %v7373 = vsel %vm6624, %v7273, %v7356
    %v7374 = vsel %vm6625, %v7274, %v7355
    %v7375 = vsel %vm6626, %v7275, %v7354
    %v7376 = vsel %vm6627, %v7276, %v7353
    %v7377 = vsel %vm6628, %v7277, %v7352
    %v7378 = vsel %vm6629, %v7278, %v7351
    %v7379 = vsel %vm6630, %v7279, %v7350
    %v7380 = vsel %vm6631, %v7280, %v7349
    %v7381 = vsel %vm6632, %v7281, %v7348
    %v7382 = vsel %vm6633, %v7282, %v7347
    %v7383 = vsel %vm6634, %v7283, %v7346
    %v7384 = vsel %vm6635, %v7284, %v7345
    %7385 = vst [vmem:[#allocation2 + $0x140] sm:$0xff] %v7365
    %7386 = vst [vmem:[#allocation2 + $0x148] sm:$0xff] %v7366
    %7387 = vst [vmem:[#allocation2 + $0x150] sm:$0xff] %v7367
    %7388 = vst [vmem:[#allocation2 + $0x158] sm:$0xff] %v7368
    %7389 = vst [vmem:[#allocation2 + $0x160] sm:$0xff] %v7369
    %7390 = vst [vmem:[#allocation2 + $0x168] sm:$0xff] %v7370
    %7391 = vst [vmem:[#allocation2 + $0x170] sm:$0xff] %v7371
    %7392 = vst [vmem:[#allocation2 + $0x178] sm:$0xff] %v7372
    %7393 = vst [vmem:[#allocation2 + $0x180] sm:$0xff] %v7373
    %7394 = vst [vmem:[#allocation2 + $0x188] sm:$0xff] %v7374
    %7395 = vst [vmem:[#allocation2 + $0x190] sm:$0xff] %v7375
    %7396 = vst [vmem:[#allocation2 + $0x198] sm:$0xff] %v7376
    %7397 = vst [vmem:[#allocation2 + $0x1a0] sm:$0xff] %v7377
    %7398 = vst [vmem:[#allocation2 + $0x1a8] sm:$0xff] %v7378
    %7399 = vst [vmem:[#allocation2 + $0x1b0] sm:$0xff] %v7379
    %7400 = vst [vmem:[#allocation2 + $0x1b8] sm:$0xff] %v7380
    %7401 = vst [vmem:[#allocation2 + $0x1c0] sm:$0xff] %v7381
    %7402 = vst [vmem:[#allocation2 + $0x1c8] sm:$0xff] %v7382
    %7403 = vst [vmem:[#allocation2 + $0x1d0] sm:$0xff] %v7383
    %7404 = vst [vmem:[#allocation2 + $0x1d8] sm:$0xff] %v7384
    %7405 = vrot.lane.b32.xlu0 %v7265, 94
    %v7406 = vpop.permute.xlu0 %7405
    %7407 = vrot.lane.b32.xlu0 %v7266, 94
    %v7408 = vpop.permute.xlu0 %7407
    %7409 = vrot.lane.b32.xlu0 %v7267, 94
    %v7410 = vpop.permute.xlu0 %7409
    %7411 = vrot.lane.b32.xlu0 %v7268, 94
    %v7412 = vpop.permute.xlu0 %7411
    %7413 = vrot.lane.b32.xlu0 %v7269, 94
    %v7414 = vpop.permute.xlu0 %7413
    %7415 = vrot.lane.b32.xlu0 %v7270, 94
    %v7416 = vpop.permute.xlu0 %7415
    %7417 = vrot.lane.b32.xlu0 %v7271, 94
    %v7418 = vpop.permute.xlu0 %7417
    %7419 = vrot.lane.b32.xlu0 %v7272, 94
    %v7420 = vpop.permute.xlu0 %7419
    %7421 = vrot.lane.b32.xlu0 %v7273, 94
    %v7422 = vpop.permute.xlu0 %7421
    %7423 = vrot.lane.b32.xlu0 %v7274, 94
    %v7424 = vpop.permute.xlu0 %7423
    %7425 = vrot.lane.b32.xlu0 %v7275, 94
    %v7426 = vpop.permute.xlu0 %7425
    %7427 = vrot.lane.b32.xlu0 %v7276, 94
    %v7428 = vpop.permute.xlu0 %7427
    %7429 = vrot.lane.b32.xlu0 %v7277, 94
    %v7430 = vpop.permute.xlu0 %7429
    %7431 = vrot.lane.b32.xlu0 %v7278, 94
    %v7432 = vpop.permute.xlu0 %7431
    %7433 = vrot.lane.b32.xlu0 %v7279, 94
    %v7434 = vpop.permute.xlu0 %7433
    %7435 = vrot.lane.b32.xlu0 %v7280, 94
    %v7436 = vpop.permute.xlu0 %7435
    %7437 = vrot.lane.b32.xlu0 %v7281, 94
    %v7438 = vpop.permute.xlu0 %7437
    %7439 = vrot.lane.b32.xlu0 %v7282, 94
    %v7440 = vpop.permute.xlu0 %7439
    %7441 = vrot.lane.b32.xlu0 %v7283, 94
    %v7442 = vpop.permute.xlu0 %7441
    %7443 = vrot.lane.b32.xlu0 %v7284, 94
    %v7444 = vpop.permute.xlu0 %7443
    %v7445 = vsel %vm2642, %v7442, %v7444
    %v7446 = vsel %vm2642, %v7440, %v7442
    %v7447 = vsel %vm2642, %v7438, %v7440
    %v7448 = vsel %vm2642, %v7436, %v7438
    %v7449 = vsel %vm2642, %v7434, %v7436
    %v7450 = vsel %vm2642, %v7432, %v7434
    %v7451 = vsel %vm2642, %v7430, %v7432
    %v7452 = vsel %vm2642, %v7428, %v7430
    %v7453 = vsel %vm2642, %v7426, %v7428
    %v7454 = vsel %vm2642, %v7424, %v7426
    %v7455 = vsel %vm2642, %v7422, %v7424
    %v7456 = vsel %vm2642, %v7420, %v7422
    %v7457 = vsel %vm2642, %v7418, %v7420
    %v7458 = vsel %vm2642, %v7416, %v7418
    %v7459 = vsel %vm2642, %v7414, %v7416
    %v7460 = vsel %vm2642, %v7412, %v7414
    %v7461 = vsel %vm2642, %v7410, %v7412
    %v7462 = vsel %vm2642, %v7408, %v7410
    %v7463 = vsel %vm2642, %v7406, %v7408
    %v7464 = vsel %vm2642, %v7444, %v7406
    %v7465 = vsel %vm6819, %v7265, %v7463
    %v7466 = vsel %vm6820, %v7266, %v7462
    %v7467 = vsel %vm6821, %v7267, %v7461
    %v7468 = vsel %vm6822, %v7268, %v7460
    %v7469 = vsel %vm6823, %v7269, %v7459
    %v7470 = vsel %vm6824, %v7270, %v7458
    %v7471 = vsel %vm6825, %v7271, %v7457
    %v7472 = vsel %vm6826, %v7272, %v7456
    %v7473 = vsel %vm6827, %v7273, %v7455
    %v7474 = vsel %vm6828, %v7274, %v7454
    %v7475 = vsel %vm6829, %v7275, %v7453
    %v7476 = vsel %vm6830, %v7276, %v7452
    %v7477 = vsel %vm6831, %v7277, %v7451
    %v7478 = vsel %vm6832, %v7278, %v7450
    %v7479 = vsel %vm6833, %v7279, %v7449
    %v7480 = vsel %vm6834, %v7280, %v7448
    %v7481 = vsel %vm6835, %v7281, %v7447
    %v7482 = vsel %vm6836, %v7282, %v7446
    %v7483 = vsel %vm6837, %v7283, %v7445
    %v7484 = vsel %vm6838, %v7284, %v7464
    %7485 = vst [vmem:[#allocation2 + $0x500] sm:$0xff] %v7465
    %7486 = vst [vmem:[#allocation2 + $0x508] sm:$0xff] %v7466
    %7487 = vst [vmem:[#allocation2 + $0x510] sm:$0xff] %v7467
    %7488 = vst [vmem:[#allocation2 + $0x518] sm:$0xff] %v7468
    %7489 = vst [vmem:[#allocation2 + $0x520] sm:$0xff] %v7469
    %7490 = vst [vmem:[#allocation2 + $0x528] sm:$0xff] %v7470
    %7491 = vst [vmem:[#allocation2 + $0x530] sm:$0xff] %v7471
    %7492 = vst [vmem:[#allocation2 + $0x538] sm:$0xff] %v7472
    %7493 = vst [vmem:[#allocation2 + $0x540] sm:$0xff] %v7473
    %7494 = vst [vmem:[#allocation2 + $0x548] sm:$0xff] %v7474
    %7495 = vst [vmem:[#allocation2 + $0x550] sm:$0xff] %v7475
    %7496 = vst [vmem:[#allocation2 + $0x558] sm:$0xff] %v7476
    %7497 = vst [vmem:[#allocation2 + $0x560] sm:$0xff] %v7477
    %7498 = vst [vmem:[#allocation2 + $0x568] sm:$0xff] %v7478
    %7499 = vst [vmem:[#allocation2 + $0x570] sm:$0xff] %v7479
    %7500 = vst [vmem:[#allocation2 + $0x578] sm:$0xff] %v7480
    %7501 = vst [vmem:[#allocation2 + $0x580] sm:$0xff] %v7481
    %7502 = vst [vmem:[#allocation2 + $0x588] sm:$0xff] %v7482
    %7503 = vst [vmem:[#allocation2 + $0x590] sm:$0xff] %v7483
    %7504 = vst [vmem:[#allocation2 + $0x598] sm:$0xff] %v7484
    %v7505 = vld [vmem:[%s5] sm:$0xff]
    %v7506 = vld [vmem:[#allocation2] sm:$0xff]
    %v7507 = vld [vmem:[#allocation2 + $0x8] sm:$0xff]
    %v7508 = vld [vmem:[#allocation2 + $0x10] sm:$0xff]
    %v7509 = vld [vmem:[#allocation2 + $0x18] sm:$0xff]
    %v7510 = vld [vmem:[#allocation2 + $0x20] sm:$0xff]
    %v7511 = vld [vmem:[#allocation2 + $0x28] sm:$0xff]
    %v7512 = vld [vmem:[#allocation2 + $0x30] sm:$0xff]
    %v7513 = vld [vmem:[#allocation2 + $0x38] sm:$0xff]
    %v7514 = vld [vmem:[#allocation2 + $0x40] sm:$0xff]
    %v7515 = vld [vmem:[#allocation2 + $0x48] sm:$0xff]
    %v7516 = vld [vmem:[#allocation2 + $0x50] sm:$0xff]
    %v7517 = vld [vmem:[#allocation2 + $0x58] sm:$0xff]
    %v7518 = vld [vmem:[#allocation2 + $0x60] sm:$0xff]
    %v7519 = vld [vmem:[#allocation2 + $0x68] sm:$0xff]
    %v7520 = vld [vmem:[#allocation2 + $0x70] sm:$0xff]
    %v7521 = vld [vmem:[#allocation2 + $0x78] sm:$0xff]
    %v7522 = vld [vmem:[#allocation2 + $0x80] sm:$0xff]
    %v7523 = vld [vmem:[#allocation2 + $0x88] sm:$0xff]
    %v7524 = vld [vmem:[#allocation2 + $0x90] sm:$0xff]
    %v7525 = vld [vmem:[#allocation2 + $0x98] sm:$0xff]
    %v7526 = vld [vmem:[#allocation2 + $0xa0] sm:$0xff]
    %v7527 = vld [vmem:[#allocation2 + $0xa8] sm:$0xff]
    %v7528 = vld [vmem:[#allocation2 + $0xb0] sm:$0xff]
    %v7529 = vld [vmem:[#allocation2 + $0xb8] sm:$0xff]
    %v7530 = vld [vmem:[#allocation2 + $0xc0] sm:$0xff]
    %v7531 = vld [vmem:[#allocation2 + $0xc8] sm:$0xff]
    %v7532 = vld [vmem:[#allocation2 + $0xd0] sm:$0xff]
    %v7533 = vld [vmem:[#allocation2 + $0xd8] sm:$0xff]
    %v7534 = vld [vmem:[#allocation2 + $0xe0] sm:$0xff]
    %v7535 = vld [vmem:[#allocation2 + $0xe8] sm:$0xff]
    %v7536 = vld [vmem:[#allocation2 + $0xf0] sm:$0xff]
    %v7537 = vld [vmem:[#allocation2 + $0xf8] sm:$0xff]
    %v7538 = vld [vmem:[#allocation2 + $0x100] sm:$0xff]
    %v7539 = vld [vmem:[#allocation2 + $0x108] sm:$0xff]
    %v7540 = vld [vmem:[#allocation2 + $0x110] sm:$0xff]
    %v7541 = vld [vmem:[#allocation2 + $0x118] sm:$0xff]
    %v7542 = vld [vmem:[#allocation2 + $0x120] sm:$0xff]
    %v7543 = vld [vmem:[#allocation2 + $0x128] sm:$0xff]
    %v7544 = vld [vmem:[#allocation2 + $0x130] sm:$0xff]
    %v7545 = vld [vmem:[#allocation2 + $0x138] sm:$0xff]
    %v7546 = vld [vmem:[#allocation2 + $0x140] sm:$0xff]
    %v7547 = vld [vmem:[#allocation2 + $0x148] sm:$0xff]
    %v7548 = vld [vmem:[#allocation2 + $0x150] sm:$0xff]
    %v7549 = vld [vmem:[#allocation2 + $0x158] sm:$0xff]
    %v7550 = vld [vmem:[#allocation2 + $0x160] sm:$0xff]
    %v7551 = vld [vmem:[#allocation2 + $0x168] sm:$0xff]
    %v7552 = vld [vmem:[#allocation2 + $0x170] sm:$0xff]
    %v7553 = vld [vmem:[#allocation2 + $0x178] sm:$0xff]
    %v7554 = vld [vmem:[#allocation2 + $0x180] sm:$0xff]
    %v7555 = vld [vmem:[#allocation2 + $0x188] sm:$0xff]
    %v7556 = vld [vmem:[#allocation2 + $0x190] sm:$0xff]
    %v7557 = vld [vmem:[#allocation2 + $0x198] sm:$0xff]
    %v7558 = vld [vmem:[#allocation2 + $0x1a0] sm:$0xff]
    %v7559 = vld [vmem:[#allocation2 + $0x1a8] sm:$0xff]
    %v7560 = vld [vmem:[#allocation2 + $0x1b0] sm:$0xff]
    %v7561 = vld [vmem:[#allocation2 + $0x1b8] sm:$0xff]
    %v7562 = vld [vmem:[#allocation2 + $0x1c0] sm:$0xff]
    %v7563 = vld [vmem:[#allocation2 + $0x1c8] sm:$0xff]
    %v7564 = vld [vmem:[#allocation2 + $0x1d0] sm:$0xff]
    %v7565 = vld [vmem:[#allocation2 + $0x1d8] sm:$0xff]
    %v7566 = vld [vmem:[#allocation2 + $0x1e0] sm:$0xff]
    %v7567 = vld [vmem:[#allocation2 + $0x1e8] sm:$0xff]
    %v7568 = vld [vmem:[#allocation2 + $0x1f0] sm:$0xff]
    %v7569 = vld [vmem:[#allocation2 + $0x1f8] sm:$0xff]
    %v7570 = vld [vmem:[#allocation2 + $0x200] sm:$0xff]
    %v7571 = vld [vmem:[#allocation2 + $0x208] sm:$0xff]
    %v7572 = vld [vmem:[#allocation2 + $0x210] sm:$0xff]
    %v7573 = vld [vmem:[#allocation2 + $0x218] sm:$0xff]
    %v7574 = vld [vmem:[#allocation2 + $0x220] sm:$0xff]
    %v7575 = vld [vmem:[#allocation2 + $0x228] sm:$0xff]
    %v7576 = vld [vmem:[#allocation2 + $0x230] sm:$0xff]
    %v7577 = vld [vmem:[#allocation2 + $0x238] sm:$0xff]
    %v7578 = vld [vmem:[#allocation2 + $0x240] sm:$0xff]
    %v7579 = vld [vmem:[#allocation2 + $0x248] sm:$0xff]
    %v7580 = vld [vmem:[#allocation2 + $0x250] sm:$0xff]
    %v7581 = vld [vmem:[#allocation2 + $0x258] sm:$0xff]
    %v7582 = vld [vmem:[#allocation2 + $0x260] sm:$0xff]
    %v7583 = vld [vmem:[#allocation2 + $0x268] sm:$0xff]
    %v7584 = vld [vmem:[#allocation2 + $0x270] sm:$0xff]
    %v7585 = vld [vmem:[#allocation2 + $0x278] sm:$0xff]
    %v7586 = vld [vmem:[#allocation2 + $0x280] sm:$0xff]
    %v7587 = vld [vmem:[#allocation2 + $0x288] sm:$0xff]
    %v7588 = vld [vmem:[#allocation2 + $0x290] sm:$0xff]
    %v7589 = vld [vmem:[#allocation2 + $0x298] sm:$0xff]
    %v7590 = vld [vmem:[#allocation2 + $0x2a0] sm:$0xff]
    %v7591 = vld [vmem:[#allocation2 + $0x2a8] sm:$0xff]
    %v7592 = vld [vmem:[#allocation2 + $0x2b0] sm:$0xff]
    %v7593 = vld [vmem:[#allocation2 + $0x2b8] sm:$0xff]
    %v7594 = vld [vmem:[#allocation2 + $0x2c0] sm:$0xff]
    %v7595 = vld [vmem:[#allocation2 + $0x2c8] sm:$0xff]
    %v7596 = vld [vmem:[#allocation2 + $0x2d0] sm:$0xff]
    %v7597 = vld [vmem:[#allocation2 + $0x2d8] sm:$0xff]
    %v7598 = vld [vmem:[#allocation2 + $0x2e0] sm:$0xff]
    %v7599 = vld [vmem:[#allocation2 + $0x2e8] sm:$0xff]
    %v7600 = vld [vmem:[#allocation2 + $0x2f0] sm:$0xff]
    %v7601 = vld [vmem:[#allocation2 + $0x2f8] sm:$0xff]
    %v7602 = vld [vmem:[#allocation2 + $0x300] sm:$0xff]
    %v7603 = vld [vmem:[#allocation2 + $0x308] sm:$0xff]
    %v7604 = vld [vmem:[#allocation2 + $0x310] sm:$0xff]
    %v7605 = vld [vmem:[#allocation2 + $0x318] sm:$0xff]
    %v7606 = vld [vmem:[#allocation2 + $0x320] sm:$0xff]
    %v7607 = vld [vmem:[#allocation2 + $0x328] sm:$0xff]
    %v7608 = vld [vmem:[#allocation2 + $0x330] sm:$0xff]
    %v7609 = vld [vmem:[#allocation2 + $0x338] sm:$0xff]
    %v7610 = vld [vmem:[#allocation2 + $0x340] sm:$0xff]
    %v7611 = vld [vmem:[#allocation2 + $0x348] sm:$0xff]
    %v7612 = vld [vmem:[#allocation2 + $0x350] sm:$0xff]
    %v7613 = vld [vmem:[#allocation2 + $0x358] sm:$0xff]
    %v7614 = vld [vmem:[#allocation2 + $0x360] sm:$0xff]
    %v7615 = vld [vmem:[#allocation2 + $0x368] sm:$0xff]
    %v7616 = vld [vmem:[#allocation2 + $0x370] sm:$0xff]
    %v7617 = vld [vmem:[#allocation2 + $0x378] sm:$0xff]
    %v7618 = vld [vmem:[#allocation2 + $0x380] sm:$0xff]
    %v7619 = vld [vmem:[#allocation2 + $0x388] sm:$0xff]
    %v7620 = vld [vmem:[#allocation2 + $0x390] sm:$0xff]
    %v7621 = vld [vmem:[#allocation2 + $0x398] sm:$0xff]
    %v7622 = vld [vmem:[#allocation2 + $0x3a0] sm:$0xff]
    %v7623 = vld [vmem:[#allocation2 + $0x3a8] sm:$0xff]
    %v7624 = vld [vmem:[#allocation2 + $0x3b0] sm:$0xff]
    %v7625 = vld [vmem:[#allocation2 + $0x3b8] sm:$0xff]
    %v7626 = vld [vmem:[#allocation2 + $0x3c0] sm:$0xff]
    %v7627 = vld [vmem:[#allocation2 + $0x3c8] sm:$0xff]
    %v7628 = vld [vmem:[#allocation2 + $0x3d0] sm:$0xff]
    %v7629 = vld [vmem:[#allocation2 + $0x3d8] sm:$0xff]
    %v7630 = vld [vmem:[#allocation2 + $0x3e0] sm:$0xff]
    %v7631 = vld [vmem:[#allocation2 + $0x3e8] sm:$0xff]
    %v7632 = vld [vmem:[#allocation2 + $0x3f0] sm:$0xff]
    %v7633 = vld [vmem:[#allocation2 + $0x3f8] sm:$0xff]
    %v7634 = vld [vmem:[#allocation2 + $0x400] sm:$0xff]
    %v7635 = vld [vmem:[#allocation2 + $0x408] sm:$0xff]
    %v7636 = vld [vmem:[#allocation2 + $0x410] sm:$0xff]
    %v7637 = vld [vmem:[#allocation2 + $0x418] sm:$0xff]
    %v7638 = vld [vmem:[#allocation2 + $0x420] sm:$0xff]
    %v7639 = vld [vmem:[#allocation2 + $0x428] sm:$0xff]
    %v7640 = vld [vmem:[#allocation2 + $0x430] sm:$0xff]
    %v7641 = vld [vmem:[#allocation2 + $0x438] sm:$0xff]
    %v7642 = vld [vmem:[#allocation2 + $0x440] sm:$0xff]
    %v7643 = vld [vmem:[#allocation2 + $0x448] sm:$0xff]
    %v7644 = vld [vmem:[#allocation2 + $0x450] sm:$0xff]
    %v7645 = vld [vmem:[#allocation2 + $0x458] sm:$0xff]
    %v7646 = vld [vmem:[#allocation2 + $0x460] sm:$0xff]
    %v7647 = vld [vmem:[#allocation2 + $0x468] sm:$0xff]
    %v7648 = vld [vmem:[#allocation2 + $0x470] sm:$0xff]
    %v7649 = vld [vmem:[#allocation2 + $0x478] sm:$0xff]
    %v7650 = vld [vmem:[#allocation2 + $0x480] sm:$0xff]
    %v7651 = vld [vmem:[#allocation2 + $0x488] sm:$0xff]
    %v7652 = vld [vmem:[#allocation2 + $0x490] sm:$0xff]
    %v7653 = vld [vmem:[#allocation2 + $0x498] sm:$0xff]
    %v7654 = vld [vmem:[#allocation2 + $0x4a0] sm:$0xff]
    %v7655 = vld [vmem:[#allocation2 + $0x4a8] sm:$0xff]
    %v7656 = vld [vmem:[#allocation2 + $0x4b0] sm:$0xff]
    %v7657 = vld [vmem:[#allocation2 + $0x4b8] sm:$0xff]
    %v7658 = vld [vmem:[#allocation2 + $0x4c0] sm:$0xff]
    %v7659 = vld [vmem:[#allocation2 + $0x4c8] sm:$0xff]
    %v7660 = vld [vmem:[#allocation2 + $0x4d0] sm:$0xff]
    %v7661 = vld [vmem:[#allocation2 + $0x4d8] sm:$0xff]
    %v7662 = vld [vmem:[#allocation2 + $0x4e0] sm:$0xff]
    %v7663 = vld [vmem:[#allocation2 + $0x4e8] sm:$0xff]
    %v7664 = vld [vmem:[#allocation2 + $0x4f0] sm:$0xff]
    %v7665 = vld [vmem:[#allocation2 + $0x4f8] sm:$0xff]
    %v7666 = vld [vmem:[#allocation2 + $0x500] sm:$0xff]
    %v7667 = vld [vmem:[#allocation2 + $0x508] sm:$0xff]
    %v7668 = vld [vmem:[#allocation2 + $0x510] sm:$0xff]
    %v7669 = vld [vmem:[#allocation2 + $0x518] sm:$0xff]
    %v7670 = vld [vmem:[#allocation2 + $0x520] sm:$0xff]
    %v7671 = vld [vmem:[#allocation2 + $0x528] sm:$0xff]
    %v7672 = vld [vmem:[#allocation2 + $0x530] sm:$0xff]
    %v7673 = vld [vmem:[#allocation2 + $0x538] sm:$0xff]
    %v7674 = vld [vmem:[#allocation2 + $0x540] sm:$0xff]
    %v7675 = vld [vmem:[#allocation2 + $0x548] sm:$0xff]
    %v7676 = vld [vmem:[#allocation2 + $0x550] sm:$0xff]
    %v7677 = vld [vmem:[#allocation2 + $0x558] sm:$0xff]
    %v7678 = vld [vmem:[#allocation2 + $0x560] sm:$0xff]
    %v7679 = vld [vmem:[#allocation2 + $0x568] sm:$0xff]
    %v7680 = vld [vmem:[#allocation2 + $0x570] sm:$0xff]
    %v7681 = vld [vmem:[#allocation2 + $0x578] sm:$0xff]
    %v7682 = vld [vmem:[#allocation2 + $0x580] sm:$0xff]
    %v7683 = vld [vmem:[#allocation2 + $0x588] sm:$0xff]
    %v7684 = vld [vmem:[#allocation2 + $0x590] sm:$0xff]
    %v7685 = vld [vmem:[#allocation2 + $0x598] sm:$0xff]
    %v7687 = vsel %vm3269, %v7505, 0
    %7689 = vmatprep.subr.mxu0 0.0
    %7690 = vmatpush1.msra.mxu0 0.0
    %7691 = vmatprep.subr.mxu0 0.0
    %7692 = vmatpush1.msra.mxu0 0.0
    %7693 = vmatprep.subr.mxu0 0.0
    %7694 = vmatpush1.msra.mxu0 0.0
    %7695 = vmatprep.subr.mxu0 0.0
    %7696 = vmatpush1.msra.mxu0 0.0
    %7697 = vmatprep.subr.mxu0 0.0
    %7698 = vmatpush1.msra.mxu0 0.0
    %7699 = vmatprep.subr.mxu0 0.0
    %7700 = vmatpush1.msra.mxu0 0.0
    %7701 = vmatprep.subr.mxu0 0.0
    %7702 = vmatpush1.msra.mxu0 0.0
    %7703 = vmatprep.subr.mxu0 %v7667
    %7704 = vmatpush1.msra.mxu0 %v7666
    %7705 = vmatprep.subr.mxu0 %v7647
    %7706 = vmatpush1.msra.mxu0 %v7646
    %7707 = vmatprep.subr.mxu0 %v7627
    %7708 = vmatpush1.msra.mxu0 %v7626
    %7709 = vmatprep.subr.mxu0 %v7607
    %7710 = vmatpush1.msra.mxu0 %v7606
    %7711 = vmatprep.subr.mxu0 %v7587
    %7712 = vmatpush1.msra.mxu0 %v7586
    %7713 = vmatprep.subr.mxu0 %v7567
    %7714 = vmatpush1.msra.mxu0 %v7566
    %7715 = vmatprep.subr.mxu0 %v7547
    %7716 = vmatpush1.msra.mxu0 %v7546
    %7717 = vmatprep.subr.mxu0 %v7527
    %7718 = vmatpush1.msra.mxu0 %v7526
    %7719 = vmatprep.subr.mxu0 %v7507
    %7720 = vmatpush1.msra.mxu0 %v7506
    %7721 = vmatprep.subr.mxu0 0.0
    %7722 = vmatpush2.msra.mxu0 0.0
    %7723 = vmatprep.subr.mxu0 0.0
    %7724 = vmatpush2.msra.mxu0 0.0
    %7725 = vmatprep.subr.mxu0 0.0
    %7726 = vmatpush2.msra.mxu0 0.0
    %7727 = vmatprep.subr.mxu0 0.0
    %7728 = vmatpush2.msra.mxu0 0.0
    %7729 = vmatprep.subr.mxu0 0.0
    %7730 = vmatpush2.msra.mxu0 0.0
    %7731 = vmatprep.subr.mxu0 0.0
    %7732 = vmatpush2.msra.mxu0 0.0
    %7733 = vmatprep.subr.mxu0 0.0
    %7734 = vmatpush2.msra.mxu0 0.0
    %7735 = vmatprep.subr.mxu0 0.0
    %7736 = vmatpush2.msra.mxu0 0.0
    %7737 = vmatprep.subr.mxu0 0.0
    %7738 = vmatpush2.msra.mxu0 0.0
    %7739 = vmatprep.subr.mxu0 0.0
    %7740 = vmatpush2.msra.mxu0 0.0
    %7741 = vmatprep.subr.mxu0 0.0
    %7742 = vmatpush2.msra.mxu0 0.0
    %7743 = vmatprep.subr.mxu0 0.0
    %7744 = vmatpush2.msra.mxu0 0.0
    %7745 = vmatprep.subr.mxu0 0.0
    %7746 = vmatpush2.msra.mxu0 0.0
    %7747 = vmatprep.subr.mxu0 0.0
    %7748 = vmatpush2.msra.mxu0 0.0
    %7749 = vmatprep.subr.mxu0 0.0
    %7750 = vmatpush2.msra.mxu0 0.0
    %7751 = vmatprep.subr.mxu0 0.0
    %7752 = vmatpush2.msra.mxu0 0.0
    %7753 = vmatprep.mubr.f32.mxu0 0.0
    %7754 = vmatmul.mubr.f32.gmra.mxu0 %v7687
    %v7755 = vpop.f32.mrf.mxu0
    %v7756 = vadd.f32 0.0, %v7755
    %v7757 = vpop.f32.mrf.mxu0
    %v7758 = vadd.f32 0.0, %v7757
    %7759 = vdwg.mxu0
    %7760 = vmatprep.subr.mxu0 0.0
    %7761 = vmatpush1.msra.mxu0 0.0
    %7762 = vmatprep.subr.mxu0 0.0
    %7763 = vmatpush1.msra.mxu0 0.0
    %7764 = vmatprep.subr.mxu0 0.0
    %7765 = vmatpush1.msra.mxu0 0.0
    %7766 = vmatprep.subr.mxu0 0.0
    %7767 = vmatpush1.msra.mxu0 0.0
    %7768 = vmatprep.subr.mxu0 0.0
    %7769 = vmatpush1.msra.mxu0 0.0
    %7770 = vmatprep.subr.mxu0 0.0
    %7771 = vmatpush1.msra.mxu0 0.0
    %7772 = vmatprep.subr.mxu0 0.0
    %7773 = vmatpush1.msra.mxu0 0.0
    %7774 = vmatprep.subr.mxu0 %v7669
    %7775 = vmatpush1.msra.mxu0 %v7668
    %7776 = vmatprep.subr.mxu0 %v7649
    %7777 = vmatpush1.msra.mxu0 %v7648
    %7778 = vmatprep.subr.mxu0 %v7629
    %7779 = vmatpush1.msra.mxu0 %v7628
    %7780 = vmatprep.subr.mxu0 %v7609
    %7781 = vmatpush1.msra.mxu0 %v7608
    %7782 = vmatprep.subr.mxu0 %v7589
    %7783 = vmatpush1.msra.mxu0 %v7588
    %7784 = vmatprep.subr.mxu0 %v7569
    %7785 = vmatpush1.msra.mxu0 %v7568
    %7786 = vmatprep.subr.mxu0 %v7549
    %7787 = vmatpush1.msra.mxu0 %v7548
    %7788 = vmatprep.subr.mxu0 %v7529
    %7789 = vmatpush1.msra.mxu0 %v7528
    %7790 = vmatprep.subr.mxu0 %v7509
    %7791 = vmatpush1.msra.mxu0 %v7508
    %7792 = vmatprep.subr.mxu0 0.0
    %7793 = vmatpush2.msra.mxu0 0.0
    %7794 = vmatprep.subr.mxu0 0.0
    %7795 = vmatpush2.msra.mxu0 0.0
    %7796 = vmatprep.subr.mxu0 0.0
    %7797 = vmatpush2.msra.mxu0 0.0
    %7798 = vmatprep.subr.mxu0 0.0
    %7799 = vmatpush2.msra.mxu0 0.0
    %7800 = vmatprep.subr.mxu0 0.0
    %7801 = vmatpush2.msra.mxu0 0.0
    %7802 = vmatprep.subr.mxu0 0.0
    %7803 = vmatpush2.msra.mxu0 0.0
    %7804 = vmatprep.subr.mxu0 0.0
    %7805 = vmatpush2.msra.mxu0 0.0
    %7806 = vmatprep.subr.mxu0 0.0
    %7807 = vmatpush2.msra.mxu0 0.0
    %7808 = vmatprep.subr.mxu0 0.0
    %7809 = vmatpush2.msra.mxu0 0.0
    %7810 = vmatprep.subr.mxu0 0.0
    %7811 = vmatpush2.msra.mxu0 0.0
    %7812 = vmatprep.subr.mxu0 0.0
    %7813 = vmatpush2.msra.mxu0 0.0
    %7814 = vmatprep.subr.mxu0 0.0
    %7815 = vmatpush2.msra.mxu0 0.0
    %7816 = vmatprep.subr.mxu0 0.0
    %7817 = vmatpush2.msra.mxu0 0.0
    %7818 = vmatprep.subr.mxu0 0.0
    %7819 = vmatpush2.msra.mxu0 0.0
    %7820 = vmatprep.subr.mxu0 0.0
    %7821 = vmatpush2.msra.mxu0 0.0
    %7822 = vmatprep.subr.mxu0 0.0
    %7823 = vmatpush2.msra.mxu0 0.0
    %7824 = vmatprep.mubr.f32.mxu0 0.0
    %7825 = vmatmul.mubr.f32.gmra.mxu0 %v7687
    %v7826 = vpop.f32.mrf.mxu0
    %v7827 = vadd.f32 0.0, %v7826
    %v7828 = vpop.f32.mrf.mxu0
    %v7829 = vadd.f32 0.0, %v7828
    %7830 = vdwg.mxu0
    %7831 = vmatprep.subr.mxu0 0.0
    %7832 = vmatpush1.msra.mxu0 0.0
    %7833 = vmatprep.subr.mxu0 0.0
    %7834 = vmatpush1.msra.mxu0 0.0
    %7835 = vmatprep.subr.mxu0 0.0
    %7836 = vmatpush1.msra.mxu0 0.0
    %7837 = vmatprep.subr.mxu0 0.0
    %7838 = vmatpush1.msra.mxu0 0.0
    %7839 = vmatprep.subr.mxu0 0.0
    %7840 = vmatpush1.msra.mxu0 0.0
    %7841 = vmatprep.subr.mxu0 0.0
    %7842 = vmatpush1.msra.mxu0 0.0
    %7843 = vmatprep.subr.mxu0 0.0
    %7844 = vmatpush1.msra.mxu0 0.0
    %7845 = vmatprep.subr.mxu0 %v7671
    %7846 = vmatpush1.msra.mxu0 %v7670
    %7847 = vmatprep.subr.mxu0 %v7651
    %7848 = vmatpush1.msra.mxu0 %v7650
    %7849 = vmatprep.subr.mxu0 %v7631
    %7850 = vmatpush1.msra.mxu0 %v7630
    %7851 = vmatprep.subr.mxu0 %v7611
    %7852 = vmatpush1.msra.mxu0 %v7610
    %7853 = vmatprep.subr.mxu0 %v7591
    %7854 = vmatpush1.msra.mxu0 %v7590
    %7855 = vmatprep.subr.mxu0 %v7571
    %7856 = vmatpush1.msra.mxu0 %v7570
    %7857 = vmatprep.subr.mxu0 %v7551
    %7858 = vmatpush1.msra.mxu0 %v7550
    %7859 = vmatprep.subr.mxu0 %v7531
    %7860 = vmatpush1.msra.mxu0 %v7530
    %7861 = vmatprep.subr.mxu0 %v7511
    %7862 = vmatpush1.msra.mxu0 %v7510
    %7863 = vmatprep.subr.mxu0 0.0
    %7864 = vmatpush2.msra.mxu0 0.0
    %7865 = vmatprep.subr.mxu0 0.0
    %7866 = vmatpush2.msra.mxu0 0.0
    %7867 = vmatprep.subr.mxu0 0.0
    %7868 = vmatpush2.msra.mxu0 0.0
    %7869 = vmatprep.subr.mxu0 0.0
    %7870 = vmatpush2.msra.mxu0 0.0
    %7871 = vmatprep.subr.mxu0 0.0
    %7872 = vmatpush2.msra.mxu0 0.0
    %7873 = vmatprep.subr.mxu0 0.0
    %7874 = vmatpush2.msra.mxu0 0.0
    %7875 = vmatprep.subr.mxu0 0.0
    %7876 = vmatpush2.msra.mxu0 0.0
    %7877 = vmatprep.subr.mxu0 0.0
    %7878 = vmatpush2.msra.mxu0 0.0
    %7879 = vmatprep.subr.mxu0 0.0
    %7880 = vmatpush2.msra.mxu0 0.0
    %7881 = vmatprep.subr.mxu0 0.0
    %7882 = vmatpush2.msra.mxu0 0.0
    %7883 = vmatprep.subr.mxu0 0.0
    %7884 = vmatpush2.msra.mxu0 0.0
    %7885 = vmatprep.subr.mxu0 0.0
    %7886 = vmatpush2.msra.mxu0 0.0
    %7887 = vmatprep.subr.mxu0 0.0
    %7888 = vmatpush2.msra.mxu0 0.0
    %7889 = vmatprep.subr.mxu0 0.0
    %7890 = vmatpush2.msra.mxu0 0.0
    %7891 = vmatprep.subr.mxu0 0.0
    %7892 = vmatpush2.msra.mxu0 0.0
    %7893 = vmatprep.subr.mxu0 0.0
    %7894 = vmatpush2.msra.mxu0 0.0
    %7895 = vmatprep.mubr.f32.mxu0 0.0
    %7896 = vmatmul.mubr.f32.gmra.mxu0 %v7687
    %v7897 = vpop.f32.mrf.mxu0
    %v7898 = vadd.f32 0.0, %v7897
    %v7899 = vpop.f32.mrf.mxu0
    %v7900 = vadd.f32 0.0, %v7899
    %7901 = vdwg.mxu0
    %7902 = vmatprep.subr.mxu0 0.0
    %7903 = vmatpush1.msra.mxu0 0.0
    %7904 = vmatprep.subr.mxu0 0.0
    %7905 = vmatpush1.msra.mxu0 0.0
    %7906 = vmatprep.subr.mxu0 0.0
    %7907 = vmatpush1.msra.mxu0 0.0
    %7908 = vmatprep.subr.mxu0 0.0
    %7909 = vmatpush1.msra.mxu0 0.0
    %7910 = vmatprep.subr.mxu0 0.0
    %7911 = vmatpush1.msra.mxu0 0.0
    %7912 = vmatprep.subr.mxu0 0.0
    %7913 = vmatpush1.msra.mxu0 0.0
    %7914 = vmatprep.subr.mxu0 0.0
    %7915 = vmatpush1.msra.mxu0 0.0
    %7916 = vmatprep.subr.mxu0 %v7673
    %7917 = vmatpush1.msra.mxu0 %v7672
    %7918 = vmatprep.subr.mxu0 %v7653
    %7919 = vmatpush1.msra.mxu0 %v7652
    %7920 = vmatprep.subr.mxu0 %v7633
    %7921 = vmatpush1.msra.mxu0 %v7632
    %7922 = vmatprep.subr.mxu0 %v7613
    %7923 = vmatpush1.msra.mxu0 %v7612
    %7924 = vmatprep.subr.mxu0 %v7593
    %7925 = vmatpush1.msra.mxu0 %v7592
    %7926 = vmatprep.subr.mxu0 %v7573
    %7927 = vmatpush1.msra.mxu0 %v7572
    %7928 = vmatprep.subr.mxu0 %v7553
    %7929 = vmatpush1.msra.mxu0 %v7552
    %7930 = vmatprep.subr.mxu0 %v7533
    %7931 = vmatpush1.msra.mxu0 %v7532
    %7932 = vmatprep.subr.mxu0 %v7513
    %7933 = vmatpush1.msra.mxu0 %v7512
    %7934 = vmatprep.subr.mxu0 0.0
    %7935 = vmatpush2.msra.mxu0 0.0
    %7936 = vmatprep.subr.mxu0 0.0
    %7937 = vmatpush2.msra.mxu0 0.0
    %7938 = vmatprep.subr.mxu0 0.0
    %7939 = vmatpush2.msra.mxu0 0.0
    %7940 = vmatprep.subr.mxu0 0.0
    %7941 = vmatpush2.msra.mxu0 0.0
    %7942 = vmatprep.subr.mxu0 0.0
    %7943 = vmatpush2.msra.mxu0 0.0
    %7944 = vmatprep.subr.mxu0 0.0
    %7945 = vmatpush2.msra.mxu0 0.0
    %7946 = vmatprep.subr.mxu0 0.0
    %7947 = vmatpush2.msra.mxu0 0.0
    %7948 = vmatprep.subr.mxu0 0.0
    %7949 = vmatpush2.msra.mxu0 0.0
    %7950 = vmatprep.subr.mxu0 0.0
    %7951 = vmatpush2.msra.mxu0 0.0
    %7952 = vmatprep.subr.mxu0 0.0
    %7953 = vmatpush2.msra.mxu0 0.0
    %7954 = vmatprep.subr.mxu0 0.0
    %7955 = vmatpush2.msra.mxu0 0.0
    %7956 = vmatprep.subr.mxu0 0.0
    %7957 = vmatpush2.msra.mxu0 0.0
    %7958 = vmatprep.subr.mxu0 0.0
    %7959 = vmatpush2.msra.mxu0 0.0
    %7960 = vmatprep.subr.mxu0 0.0
    %7961 = vmatpush2.msra.mxu0 0.0
    %7962 = vmatprep.subr.mxu0 0.0
    %7963 = vmatpush2.msra.mxu0 0.0
    %7964 = vmatprep.subr.mxu0 0.0
    %7965 = vmatpush2.msra.mxu0 0.0
    %7966 = vmatprep.mubr.f32.mxu0 0.0
    %7967 = vmatmul.mubr.f32.gmra.mxu0 %v7687
    %v7968 = vpop.f32.mrf.mxu0
    %v7969 = vadd.f32 0.0, %v7968
    %v7970 = vpop.f32.mrf.mxu0
    %v7971 = vadd.f32 0.0, %v7970
    %7972 = vdwg.mxu0
    %7973 = vmatprep.subr.mxu0 0.0
    %7974 = vmatpush1.msra.mxu0 0.0
    %7975 = vmatprep.subr.mxu0 0.0
    %7976 = vmatpush1.msra.mxu0 0.0
    %7977 = vmatprep.subr.mxu0 0.0
    %7978 = vmatpush1.msra.mxu0 0.0
    %7979 = vmatprep.subr.mxu0 0.0
    %7980 = vmatpush1.msra.mxu0 0.0
    %7981 = vmatprep.subr.mxu0 0.0
    %7982 = vmatpush1.msra.mxu0 0.0
    %7983 = vmatprep.subr.mxu0 0.0
    %7984 = vmatpush1.msra.mxu0 0.0
    %7985 = vmatprep.subr.mxu0 0.0
    %7986 = vmatpush1.msra.mxu0 0.0
    %7987 = vmatprep.subr.mxu0 %v7675
    %7988 = vmatpush1.msra.mxu0 %v7674
    %7989 = vmatprep.subr.mxu0 %v7655
    %7990 = vmatpush1.msra.mxu0 %v7654
    %7991 = vmatprep.subr.mxu0 %v7635
    %7992 = vmatpush1.msra.mxu0 %v7634
    %7993 = vmatprep.subr.mxu0 %v7615
    %7994 = vmatpush1.msra.mxu0 %v7614
    %7995 = vmatprep.subr.mxu0 %v7595
    %7996 = vmatpush1.msra.mxu0 %v7594
    %7997 = vmatprep.subr.mxu0 %v7575
    %7998 = vmatpush1.msra.mxu0 %v7574
    %7999 = vmatprep.subr.mxu0 %v7555
    %8000 = vmatpush1.msra.mxu0 %v7554
    %8001 = vmatprep.subr.mxu0 %v7535
    %8002 = vmatpush1.msra.mxu0 %v7534
    %8003 = vmatprep.subr.mxu0 %v7515
    %8004 = vmatpush1.msra.mxu0 %v7514
    %8005 = vmatprep.subr.mxu0 0.0
    %8006 = vmatpush2.msra.mxu0 0.0
    %8007 = vmatprep.subr.mxu0 0.0
    %8008 = vmatpush2.msra.mxu0 0.0
    %8009 = vmatprep.subr.mxu0 0.0
    %8010 = vmatpush2.msra.mxu0 0.0
    %8011 = vmatprep.subr.mxu0 0.0
    %8012 = vmatpush2.msra.mxu0 0.0
    %8013 = vmatprep.subr.mxu0 0.0
    %8014 = vmatpush2.msra.mxu0 0.0
    %8015 = vmatprep.subr.mxu0 0.0
    %8016 = vmatpush2.msra.mxu0 0.0
    %8017 = vmatprep.subr.mxu0 0.0
    %8018 = vmatpush2.msra.mxu0 0.0
    %8019 = vmatprep.subr.mxu0 0.0
    %8020 = vmatpush2.msra.mxu0 0.0
    %8021 = vmatprep.subr.mxu0 0.0
    %8022 = vmatpush2.msra.mxu0 0.0
    %8023 = vmatprep.subr.mxu0 0.0
    %8024 = vmatpush2.msra.mxu0 0.0
    %8025 = vmatprep.subr.mxu0 0.0
    %8026 = vmatpush2.msra.mxu0 0.0
    %8027 = vmatprep.subr.mxu0 0.0
    %8028 = vmatpush2.msra.mxu0 0.0
    %8029 = vmatprep.subr.mxu0 0.0
    %8030 = vmatpush2.msra.mxu0 0.0
    %8031 = vmatprep.subr.mxu0 0.0
    %8032 = vmatpush2.msra.mxu0 0.0
    %8033 = vmatprep.subr.mxu0 0.0
    %8034 = vmatpush2.msra.mxu0 0.0
    %8035 = vmatprep.subr.mxu0 0.0
    %8036 = vmatpush2.msra.mxu0 0.0
    %8037 = vmatprep.mubr.f32.mxu0 0.0
    %8038 = vmatmul.mubr.f32.gmra.mxu0 %v7687
    %v8039 = vpop.f32.mrf.mxu0
    %v8040 = vadd.f32 0.0, %v8039
    %v8041 = vpop.f32.mrf.mxu0
    %v8042 = vadd.f32 0.0, %v8041
    %8043 = vdwg.mxu0
    %8044 = vmatprep.subr.mxu0 0.0
    %8045 = vmatpush1.msra.mxu0 0.0
    %8046 = vmatprep.subr.mxu0 0.0
    %8047 = vmatpush1.msra.mxu0 0.0
    %8048 = vmatprep.subr.mxu0 0.0
    %8049 = vmatpush1.msra.mxu0 0.0
    %8050 = vmatprep.subr.mxu0 0.0
    %8051 = vmatpush1.msra.mxu0 0.0
    %8052 = vmatprep.subr.mxu0 0.0
    %8053 = vmatpush1.msra.mxu0 0.0
    %8054 = vmatprep.subr.mxu0 0.0
    %8055 = vmatpush1.msra.mxu0 0.0
    %8056 = vmatprep.subr.mxu0 0.0
    %8057 = vmatpush1.msra.mxu0 0.0
    %8058 = vmatprep.subr.mxu0 %v7677
    %8059 = vmatpush1.msra.mxu0 %v7676
    %8060 = vmatprep.subr.mxu0 %v7657
    %8061 = vmatpush1.msra.mxu0 %v7656
    %8062 = vmatprep.subr.mxu0 %v7637
    %8063 = vmatpush1.msra.mxu0 %v7636
    %8064 = vmatprep.subr.mxu0 %v7617
    %8065 = vmatpush1.msra.mxu0 %v7616
    %8066 = vmatprep.subr.mxu0 %v7597
    %8067 = vmatpush1.msra.mxu0 %v7596
    %8068 = vmatprep.subr.mxu0 %v7577
    %8069 = vmatpush1.msra.mxu0 %v7576
    %8070 = vmatprep.subr.mxu0 %v7557
    %8071 = vmatpush1.msra.mxu0 %v7556
    %8072 = vmatprep.subr.mxu0 %v7537
    %8073 = vmatpush1.msra.mxu0 %v7536
    %8074 = vmatprep.subr.mxu0 %v7517
    %8075 = vmatpush1.msra.mxu0 %v7516
    %8076 = vmatprep.subr.mxu0 0.0
    %8077 = vmatpush2.msra.mxu0 0.0
    %8078 = vmatprep.subr.mxu0 0.0
    %8079 = vmatpush2.msra.mxu0 0.0
    %8080 = vmatprep.subr.mxu0 0.0
    %8081 = vmatpush2.msra.mxu0 0.0
    %8082 = vmatprep.subr.mxu0 0.0
    %8083 = vmatpush2.msra.mxu0 0.0
    %8084 = vmatprep.subr.mxu0 0.0
    %8085 = vmatpush2.msra.mxu0 0.0
    %8086 = vmatprep.subr.mxu0 0.0
    %8087 = vmatpush2.msra.mxu0 0.0
    %8088 = vmatprep.subr.mxu0 0.0
    %8089 = vmatpush2.msra.mxu0 0.0
    %8090 = vmatprep.subr.mxu0 0.0
    %8091 = vmatpush2.msra.mxu0 0.0
    %8092 = vmatprep.subr.mxu0 0.0
    %8093 = vmatpush2.msra.mxu0 0.0
    %8094 = vmatprep.subr.mxu0 0.0
    %8095 = vmatpush2.msra.mxu0 0.0
    %8096 = vmatprep.subr.mxu0 0.0
    %8097 = vmatpush2.msra.mxu0 0.0
    %8098 = vmatprep.subr.mxu0 0.0
    %8099 = vmatpush2.msra.mxu0 0.0
    %8100 = vmatprep.subr.mxu0 0.0
    %8101 = vmatpush2.msra.mxu0 0.0
    %8102 = vmatprep.subr.mxu0 0.0
    %8103 = vmatpush2.msra.mxu0 0.0
    %8104 = vmatprep.subr.mxu0 0.0
    %8105 = vmatpush2.msra.mxu0 0.0
    %8106 = vmatprep.subr.mxu0 0.0
    %8107 = vmatpush2.msra.mxu0 0.0
    %8108 = vmatprep.mubr.f32.mxu0 0.0
    %8109 = vmatmul.mubr.f32.gmra.mxu0 %v7687
    %v8110 = vpop.f32.mrf.mxu0
    %v8111 = vadd.f32 0.0, %v8110
    %v8112 = vpop.f32.mrf.mxu0
    %v8113 = vadd.f32 0.0, %v8112
    %8114 = vdwg.mxu0
    %8115 = vmatprep.subr.mxu0 0.0
    %8116 = vmatpush1.msra.mxu0 0.0
    %8117 = vmatprep.subr.mxu0 0.0
    %8118 = vmatpush1.msra.mxu0 0.0
    %8119 = vmatprep.subr.mxu0 0.0
    %8120 = vmatpush1.msra.mxu0 0.0
    %8121 = vmatprep.subr.mxu0 0.0
    %8122 = vmatpush1.msra.mxu0 0.0
    %8123 = vmatprep.subr.mxu0 0.0
    %8124 = vmatpush1.msra.mxu0 0.0
    %8125 = vmatprep.subr.mxu0 0.0
    %8126 = vmatpush1.msra.mxu0 0.0
    %8127 = vmatprep.subr.mxu0 0.0
    %8128 = vmatpush1.msra.mxu0 0.0
    %8129 = vmatprep.subr.mxu0 %v7679
    %8130 = vmatpush1.msra.mxu0 %v7678
    %8131 = vmatprep.subr.mxu0 %v7659
    %8132 = vmatpush1.msra.mxu0 %v7658
    %8133 = vmatprep.subr.mxu0 %v7639
    %8134 = vmatpush1.msra.mxu0 %v7638
    %8135 = vmatprep.subr.mxu0 %v7619
    %8136 = vmatpush1.msra.mxu0 %v7618
    %8137 = vmatprep.subr.mxu0 %v7599
    %8138 = vmatpush1.msra.mxu0 %v7598
    %8139 = vmatprep.subr.mxu0 %v7579
    %8140 = vmatpush1.msra.mxu0 %v7578
    %8141 = vmatprep.subr.mxu0 %v7559
    %8142 = vmatpush1.msra.mxu0 %v7558
    %8143 = vmatprep.subr.mxu0 %v7539
    %8144 = vmatpush1.msra.mxu0 %v7538
    %8145 = vmatprep.subr.mxu0 %v7519
    %8146 = vmatpush1.msra.mxu0 %v7518
    %8147 = vmatprep.subr.mxu0 0.0
    %8148 = vmatpush2.msra.mxu0 0.0
    %8149 = vmatprep.subr.mxu0 0.0
    %8150 = vmatpush2.msra.mxu0 0.0
    %8151 = vmatprep.subr.mxu0 0.0
    %8152 = vmatpush2.msra.mxu0 0.0
    %8153 = vmatprep.subr.mxu0 0.0
    %8154 = vmatpush2.msra.mxu0 0.0
    %8155 = vmatprep.subr.mxu0 0.0
    %8156 = vmatpush2.msra.mxu0 0.0
    %8157 = vmatprep.subr.mxu0 0.0
    %8158 = vmatpush2.msra.mxu0 0.0
    %8159 = vmatprep.subr.mxu0 0.0
    %8160 = vmatpush2.msra.mxu0 0.0
    %8161 = vmatprep.subr.mxu0 0.0
    %8162 = vmatpush2.msra.mxu0 0.0
    %8163 = vmatprep.subr.mxu0 0.0
    %8164 = vmatpush2.msra.mxu0 0.0
    %8165 = vmatprep.subr.mxu0 0.0
    %8166 = vmatpush2.msra.mxu0 0.0
    %8167 = vmatprep.subr.mxu0 0.0
    %8168 = vmatpush2.msra.mxu0 0.0
    %8169 = vmatprep.subr.mxu0 0.0
    %8170 = vmatpush2.msra.mxu0 0.0
    %8171 = vmatprep.subr.mxu0 0.0
    %8172 = vmatpush2.msra.mxu0 0.0
    %8173 = vmatprep.subr.mxu0 0.0
    %8174 = vmatpush2.msra.mxu0 0.0
    %8175 = vmatprep.subr.mxu0 0.0
    %8176 = vmatpush2.msra.mxu0 0.0
    %8177 = vmatprep.subr.mxu0 0.0
    %8178 = vmatpush2.msra.mxu0 0.0
    %8179 = vmatprep.mubr.f32.mxu0 0.0
    %8180 = vmatmul.mubr.f32.gmra.mxu0 %v7687
    %v8181 = vpop.f32.mrf.mxu0
    %v8182 = vadd.f32 0.0, %v8181
    %v8183 = vpop.f32.mrf.mxu0
    %v8184 = vadd.f32 0.0, %v8183
    %8185 = vdwg.mxu0
    %8186 = vmatprep.subr.mxu0 0.0
    %8187 = vmatpush1.msra.mxu0 0.0
    %8188 = vmatprep.subr.mxu0 0.0
    %8189 = vmatpush1.msra.mxu0 0.0
    %8190 = vmatprep.subr.mxu0 0.0
    %8191 = vmatpush1.msra.mxu0 0.0
    %8192 = vmatprep.subr.mxu0 0.0
    %8193 = vmatpush1.msra.mxu0 0.0
    %8194 = vmatprep.subr.mxu0 0.0
    %8195 = vmatpush1.msra.mxu0 0.0
    %8196 = vmatprep.subr.mxu0 0.0
    %8197 = vmatpush1.msra.mxu0 0.0
    %8198 = vmatprep.subr.mxu0 0.0
    %8199 = vmatpush1.msra.mxu0 0.0
    %8200 = vmatprep.subr.mxu0 %v7681
    %8201 = vmatpush1.msra.mxu0 %v7680
    %8202 = vmatprep.subr.mxu0 %v7661
    %8203 = vmatpush1.msra.mxu0 %v7660
    %8204 = vmatprep.subr.mxu0 %v7641
    %8205 = vmatpush1.msra.mxu0 %v7640
    %8206 = vmatprep.subr.mxu0 %v7621
    %8207 = vmatpush1.msra.mxu0 %v7620
    %8208 = vmatprep.subr.mxu0 %v7601
    %8209 = vmatpush1.msra.mxu0 %v7600
    %8210 = vmatprep.subr.mxu0 %v7581
    %8211 = vmatpush1.msra.mxu0 %v7580
    %8212 = vmatprep.subr.mxu0 %v7561
    %8213 = vmatpush1.msra.mxu0 %v7560
    %8214 = vmatprep.subr.mxu0 %v7541
    %8215 = vmatpush1.msra.mxu0 %v7540
    %8216 = vmatprep.subr.mxu0 %v7521
    %8217 = vmatpush1.msra.mxu0 %v7520
    %8218 = vmatprep.subr.mxu0 0.0
    %8219 = vmatpush2.msra.mxu0 0.0
    %8220 = vmatprep.subr.mxu0 0.0
    %8221 = vmatpush2.msra.mxu0 0.0
    %8222 = vmatprep.subr.mxu0 0.0
    %8223 = vmatpush2.msra.mxu0 0.0
    %8224 = vmatprep.subr.mxu0 0.0
    %8225 = vmatpush2.msra.mxu0 0.0
    %8226 = vmatprep.subr.mxu0 0.0
    %8227 = vmatpush2.msra.mxu0 0.0
    %8228 = vmatprep.subr.mxu0 0.0
    %8229 = vmatpush2.msra.mxu0 0.0
    %8230 = vmatprep.subr.mxu0 0.0
    %8231 = vmatpush2.msra.mxu0 0.0
    %8232 = vmatprep.subr.mxu0 0.0
    %8233 = vmatpush2.msra.mxu0 0.0
    %8234 = vmatprep.subr.mxu0 0.0
    %8235 = vmatpush2.msra.mxu0 0.0
    %8236 = vmatprep.subr.mxu0 0.0
    %8237 = vmatpush2.msra.mxu0 0.0
    %8238 = vmatprep.subr.mxu0 0.0
    %8239 = vmatpush2.msra.mxu0 0.0
    %8240 = vmatprep.subr.mxu0 0.0
    %8241 = vmatpush2.msra.mxu0 0.0
    %8242 = vmatprep.subr.mxu0 0.0
    %8243 = vmatpush2.msra.mxu0 0.0
    %8244 = vmatprep.subr.mxu0 0.0
    %8245 = vmatpush2.msra.mxu0 0.0
    %8246 = vmatprep.subr.mxu0 0.0
    %8247 = vmatpush2.msra.mxu0 0.0
    %8248 = vmatprep.subr.mxu0 0.0
    %8249 = vmatpush2.msra.mxu0 0.0
    %8250 = vmatprep.mubr.f32.mxu0 0.0
    %8251 = vmatmul.mubr.f32.gmra.mxu0 %v7687
    %v8252 = vpop.f32.mrf.mxu0
    %v8253 = vadd.f32 0.0, %v8252
    %v8254 = vpop.f32.mrf.mxu0
    %v8255 = vadd.f32 0.0, %v8254
    %8256 = vdwg.mxu0
    %8257 = vmatprep.subr.mxu0 0.0
    %8258 = vmatpush1.msra.mxu0 0.0
    %8259 = vmatprep.subr.mxu0 0.0
    %8260 = vmatpush1.msra.mxu0 0.0
    %8261 = vmatprep.subr.mxu0 0.0
    %8262 = vmatpush1.msra.mxu0 0.0
    %8263 = vmatprep.subr.mxu0 0.0
    %8264 = vmatpush1.msra.mxu0 0.0
    %8265 = vmatprep.subr.mxu0 0.0
    %8266 = vmatpush1.msra.mxu0 0.0
    %8267 = vmatprep.subr.mxu0 0.0
    %8268 = vmatpush1.msra.mxu0 0.0
    %8269 = vmatprep.subr.mxu0 0.0
    %8270 = vmatpush1.msra.mxu0 0.0
    %8271 = vmatprep.subr.mxu0 %v7683
    %8272 = vmatpush1.msra.mxu0 %v7682
    %8273 = vmatprep.subr.mxu0 %v7663
    %8274 = vmatpush1.msra.mxu0 %v7662
    %8275 = vmatprep.subr.mxu0 %v7643
    %8276 = vmatpush1.msra.mxu0 %v7642
    %8277 = vmatprep.subr.mxu0 %v7623
    %8278 = vmatpush1.msra.mxu0 %v7622
    %8279 = vmatprep.subr.mxu0 %v7603
    %8280 = vmatpush1.msra.mxu0 %v7602
    %8281 = vmatprep.subr.mxu0 %v7583
    %8282 = vmatpush1.msra.mxu0 %v7582
    %8283 = vmatprep.subr.mxu0 %v7563
    %8284 = vmatpush1.msra.mxu0 %v7562
    %8285 = vmatprep.subr.mxu0 %v7543
    %8286 = vmatpush1.msra.mxu0 %v7542
    %8287 = vmatprep.subr.mxu0 %v7523
    %8288 = vmatpush1.msra.mxu0 %v7522
    %8289 = vmatprep.subr.mxu0 0.0
    %8290 = vmatpush2.msra.mxu0 0.0
    %8291 = vmatprep.subr.mxu0 0.0
    %8292 = vmatpush2.msra.mxu0 0.0
    %8293 = vmatprep.subr.mxu0 0.0
    %8294 = vmatpush2.msra.mxu0 0.0
    %8295 = vmatprep.subr.mxu0 0.0
    %8296 = vmatpush2.msra.mxu0 0.0
    %8297 = vmatprep.subr.mxu0 0.0
    %8298 = vmatpush2.msra.mxu0 0.0
    %8299 = vmatprep.subr.mxu0 0.0
    %8300 = vmatpush2.msra.mxu0 0.0
    %8301 = vmatprep.subr.mxu0 0.0
    %8302 = vmatpush2.msra.mxu0 0.0
    %8303 = vmatprep.subr.mxu0 0.0
    %8304 = vmatpush2.msra.mxu0 0.0
    %8305 = vmatprep.subr.mxu0 0.0
    %8306 = vmatpush2.msra.mxu0 0.0
    %8307 = vmatprep.subr.mxu0 0.0
    %8308 = vmatpush2.msra.mxu0 0.0
    %8309 = vmatprep.subr.mxu0 0.0
    %8310 = vmatpush2.msra.mxu0 0.0
    %8311 = vmatprep.subr.mxu0 0.0
    %8312 = vmatpush2.msra.mxu0 0.0
    %8313 = vmatprep.subr.mxu0 0.0
    %8314 = vmatpush2.msra.mxu0 0.0
    %8315 = vmatprep.subr.mxu0 0.0
    %8316 = vmatpush2.msra.mxu0 0.0
    %8317 = vmatprep.subr.mxu0 0.0
    %8318 = vmatpush2.msra.mxu0 0.0
    %8319 = vmatprep.subr.mxu0 0.0
    %8320 = vmatpush2.msra.mxu0 0.0
    %8321 = vmatprep.mubr.f32.mxu0 0.0
    %8322 = vmatmul.mubr.f32.gmra.mxu0 %v7687
    %v8323 = vpop.f32.mrf.mxu0
    %v8324 = vadd.f32 0.0, %v8323
    %v8325 = vpop.f32.mrf.mxu0
    %v8326 = vadd.f32 0.0, %v8325
    %8327 = vdwg.mxu0
    %8328 = vmatprep.subr.mxu0 0.0
    %8329 = vmatpush1.msra.mxu0 0.0
    %8330 = vmatprep.subr.mxu0 0.0
    %8331 = vmatpush1.msra.mxu0 0.0
    %8332 = vmatprep.subr.mxu0 0.0
    %8333 = vmatpush1.msra.mxu0 0.0
    %8334 = vmatprep.subr.mxu0 0.0
    %8335 = vmatpush1.msra.mxu0 0.0
    %8336 = vmatprep.subr.mxu0 0.0
    %8337 = vmatpush1.msra.mxu0 0.0
    %8338 = vmatprep.subr.mxu0 0.0
    %8339 = vmatpush1.msra.mxu0 0.0
    %8340 = vmatprep.subr.mxu0 0.0
    %8341 = vmatpush1.msra.mxu0 0.0
    %8342 = vmatprep.subr.mxu0 %v7685
    %8343 = vmatpush1.msra.mxu0 %v7684
    %8344 = vmatprep.subr.mxu0 %v7665
    %8345 = vmatpush1.msra.mxu0 %v7664
    %8346 = vmatprep.subr.mxu0 %v7645
    %8347 = vmatpush1.msra.mxu0 %v7644
    %8348 = vmatprep.subr.mxu0 %v7625
    %8349 = vmatpush1.msra.mxu0 %v7624
    %8350 = vmatprep.subr.mxu0 %v7605
    %8351 = vmatpush1.msra.mxu0 %v7604
    %8352 = vmatprep.subr.mxu0 %v7585
    %8353 = vmatpush1.msra.mxu0 %v7584
    %8354 = vmatprep.subr.mxu0 %v7565
    %8355 = vmatpush1.msra.mxu0 %v7564
    %8356 = vmatprep.subr.mxu0 %v7545
    %8357 = vmatpush1.msra.mxu0 %v7544
    %8358 = vmatprep.subr.mxu0 %v7525
    %8359 = vmatpush1.msra.mxu0 %v7524
    %8360 = vmatprep.subr.mxu0 0.0
    %8361 = vmatpush2.msra.mxu0 0.0
    %8362 = vmatprep.subr.mxu0 0.0
    %8363 = vmatpush2.msra.mxu0 0.0
    %8364 = vmatprep.subr.mxu0 0.0
    %8365 = vmatpush2.msra.mxu0 0.0
    %8366 = vmatprep.subr.mxu0 0.0
    %8367 = vmatpush2.msra.mxu0 0.0
    %8368 = vmatprep.subr.mxu0 0.0
    %8369 = vmatpush2.msra.mxu0 0.0
    %8370 = vmatprep.subr.mxu0 0.0
    %8371 = vmatpush2.msra.mxu0 0.0
    %8372 = vmatprep.subr.mxu0 0.0
    %8373 = vmatpush2.msra.mxu0 0.0
    %8374 = vmatprep.subr.mxu0 0.0
    %8375 = vmatpush2.msra.mxu0 0.0
    %8376 = vmatprep.subr.mxu0 0.0
    %8377 = vmatpush2.msra.mxu0 0.0
    %8378 = vmatprep.subr.mxu0 0.0
    %8379 = vmatpush2.msra.mxu0 0.0
    %8380 = vmatprep.subr.mxu0 0.0
    %8381 = vmatpush2.msra.mxu0 0.0
    %8382 = vmatprep.subr.mxu0 0.0
    %8383 = vmatpush2.msra.mxu0 0.0
    %8384 = vmatprep.subr.mxu0 0.0
    %8385 = vmatpush2.msra.mxu0 0.0
    %8386 = vmatprep.subr.mxu0 0.0
    %8387 = vmatpush2.msra.mxu0 0.0
    %8388 = vmatprep.subr.mxu0 0.0
    %8389 = vmatpush2.msra.mxu0 0.0
    %8390 = vmatprep.subr.mxu0 0.0
    %8391 = vmatpush2.msra.mxu0 0.0
    %8392 = vmatprep.mubr.f32.mxu0 0.0
    %8393 = vmatmul.mubr.f32.gmra.mxu0 %v7687
    %v8394 = vpop.f32.mrf.mxu0
    %v8395 = vadd.f32 0.0, %v8394
    %v8396 = vpop.f32.mrf.mxu0
    %v8397 = vadd.f32 0.0, %v8396
    %8398 = vdwg.mxu0
    %8399 = vst [vmem:[%s7] sm:$0xff] %v7756
    %8400 = vst [vmem:[%s7 + $0x8] sm:$0xff] %v7758
    %8401 = vst [vmem:[%s7 + $0x10] sm:$0xff] %v7827
    %8402 = vst [vmem:[%s7 + $0x18] sm:$0xff] %v7829
    %8403 = vst [vmem:[%s7 + $0x20] sm:$0xff] %v7898
    %8404 = vst [vmem:[%s7 + $0x28] sm:$0xff] %v7900
    %8405 = vst [vmem:[%s7 + $0x30] sm:$0xff] %v7969
    %8406 = vst [vmem:[%s7 + $0x38] sm:$0xff] %v7971
    %8407 = vst [vmem:[%s7 + $0x40] sm:$0xff] %v8040
    %8408 = vst [vmem:[%s7 + $0x48] sm:$0xff] %v8042
    %8409 = vst [vmem:[%s7 + $0x50] sm:$0xff] %v8111
    %8410 = vst [vmem:[%s7 + $0x58] sm:$0xff] %v8113
    %8411 = vst [vmem:[%s7 + $0x60] sm:$0xff] %v8182
    %8412 = vst [vmem:[%s7 + $0x68] sm:$0xff] %v8184
    %8413 = vst [vmem:[%s7 + $0x70] sm:$0xff] %v8253
    %8414 = vst [vmem:[%s7 + $0x78] sm:$0xff] %v8255
    %8415 = vst [vmem:[%s7 + $0x80] sm:$0xff] %v8324
    %8416 = vst [vmem:[%s7 + $0x88] sm:$0xff] %v8326
    %8417 = vst [vmem:[%s7 + $0x90] sm:$0xff] %v8395
    %8418 = vst [vmem:[%s7 + $0x98] sm:$0xff] %v8397
    // Predicated region
    $region34: #{make_feat_2_img.1} parent=1 // pred_check
      _
    $region35: #{make_feat_2_img.1} parent=1 // pred_check_branch
      %8420 = sbr.rel (0) target = $region37
    $region36: #{make_feat_2_img.1} parent=1 // pred_region
      _
    $region37: #{make_feat_2_img.1} parent=1 // pred_fallthru
      _
    // Predicated region
    $region38: #{make_feat_2_img.1} parent=1 // pred_check
      _
    $region39: #{make_feat_2_img.1} parent=1 // pred_check_branch
      %8422 = sbr.rel (0) target = $region41
    $region40: #{make_feat_2_img.1} parent=1 // pred_region
      _
    $region41: #{make_feat_2_img.1} parent=1 // pred_fallthru
      _
    %8423 = vsyncpa [#allocation6], 1

</llo_original>
